<compile_context>
chip_gen: v5e
topology: v5e:2x2
jax: 0.10.0
libtpu: 0.0.40
codegen_flags: <defaults>
</compile_context>

<pallas_src>
import functools

import jax
import jax.numpy as jnp
from jax.experimental import pallas as pl
from jax.experimental.pallas import tpu as pltpu

MAX_DIM = 64 * 16
ENC_DIM = 8
ENC_LAYERS = 3
DEC_DIM = 8
DEC_LAYERS = 3
N_ATTRS = 4
SHORTCUT_LAYERS = 1
IMG_SIZE = 32

TILE_M_MAX = 512          # large row tiles: per-grid-step overhead amortized
BN_EPS = 1e-5
LRELU_SLOPE = 0.2         # assumption for Conv2dBlock 'lrelu'


# ----------------------------------------------------------------------------
# small helpers
# ----------------------------------------------------------------------------
def _round_up(x, m):
    return ((x + m - 1) // m) * m


def _choose_tile(m):
    """Row tile + padded row count.  Single block for small M; otherwise at least
    two grid steps (v7x megacore) with rows capped at TILE_M_MAX."""
    mp = _round_up(m, 16)
    if mp <= 256:
        return mp, mp
    tile = min(TILE_M_MAX, _round_up(mp // 2, 16))
    mp = _round_up(mp, tile)
    return tile, mp


def _pad_rows_to(x2d, mp):
    m = x2d.shape[0]
    if mp == m:
        return x2d
    return jnp.pad(x2d, ((0, mp - m), (0, 0)))


def _apply_act(y, act):
    if act == "relu":
        return jnp.maximum(y, 0.0)
    if act == "lrelu":
        return jnp.where(y >= 0.0, y, LRELU_SLOPE * y)
    if act == "sigmoid":
        return 1.0 / (1.0 + jnp.exp(-y))     # f32 path, numerically fine
    if act == "tanh":
        return jnp.tanh(y)
    return y


# ----------------------------------------------------------------------------
# Pallas kernels
# ----------------------------------------------------------------------------
def _matmul_kernel(a_ref, b_ref, o_ref):
    o_ref[...] = jnp.dot(a_ref[...], b_ref[...], preferred_element_type=jnp.float32)


def _matmul_stats_kernel(a_ref, b_ref, o_ref, s_ref, q_ref):
    """bf16 MXU matmul with fused per-channel sum / sum-of-squares accumulation
    (training-mode BN statistics).  Zero-padded rows contribute 0 to both sums."""
    @pl.when(pl.program_id(0) == 0)
    def _():
        s_ref[...] = jnp.zeros_like(s_ref)
        q_ref[...] = jnp.zeros_like(q_ref)

    y = jnp.dot(a_ref[...], b_ref[...], preferred_element_type=jnp.float32)
    o_ref[...] = y
    s_ref[...] += jnp.sum(y, axis=0, keepdims=True)
    q_ref[...] += jnp.sum(y * y, axis=0, keepdims=True)


def _affine_act_kernel(x_ref, s_ref, b_ref, o_ref, *, act):
    o_ref[...] = _apply_act(x_ref[...] * s_ref[...] + b_ref[...], act)


def _affine_sigmoid_mul_kernel(x_ref, s_ref, b_ref, m_ref, o_ref):
    """BN affine + sigmoid + elementwise multiply (STU reset/update gates fused
    with the r * state_hat product)."""
    g = 1.0 / (1.0 + jnp.exp(-(x_ref[...] * s_ref[...] + b_ref[...])))
    o_ref[...] = g * m_ref[...]


def _gru_update_kernel(yh_ref, s_ref, b_ref, z_ref, sh_ref, o_ref):
    """BN affine + tanh for the hidden conv, fused with the GRU output combine
    (1 - z) * state_hat + z * hidden."""
    h = jnp.tanh(yh_ref[...] * s_ref[...] + b_ref[...])
    z = z_ref[...]
    o_ref[...] = (1.0 - z) * sh_ref[...] + z * h


# ----------------------------------------------------------------------------
# pallas_call wrappers
# ----------------------------------------------------------------------------
def pallas_matmul(a_padded, b, tile, *, with_stats):
    """(MP, K) @ (K, N) -> (MP, N) in bf16 on the MXU with f32 accumulation.
    Optionally returns fused per-channel (sum, sumsq) for BatchNorm."""
    mp, k = a_padded.shape
    n = b.shape[1]
    a_bf = a_padded.astype(jnp.bfloat16)
    b_bf = b.astype(jnp.bfloat16)
    grid = (mp // tile,)
    in_specs = [pl.BlockSpec((tile, k), lambda i: (i, 0)),
                pl.BlockSpec((k, n), lambda i: (0, 0))]
    if with_stats:
        return pl.pallas_call(
            _matmul_stats_kernel,
            out_shape=(jax.ShapeDtypeStruct((mp, n), jnp.float32),
                       jax.ShapeDtypeStruct((1, n), jnp.float32),
                       jax.ShapeDtypeStruct((1, n), jnp.float32)),
            grid=grid,
            in_specs=in_specs,
            out_specs=(pl.BlockSpec((tile, n), lambda i: (i, 0)),
                       pl.BlockSpec((1, n), lambda i: (0, 0)),
                       pl.BlockSpec((1, n), lambda i: (0, 0))),
            compiler_params=pltpu.CompilerParams(dimension_semantics=("arbitrary",)),
        )(a_bf, b_bf)
    return pl.pallas_call(
        _matmul_kernel,
        out_shape=jax.ShapeDtypeStruct((mp, n), jnp.float32),
        grid=grid,
        in_specs=in_specs,
        out_specs=pl.BlockSpec((tile, n), lambda i: (i, 0)),
        compiler_params=pltpu.CompilerParams(dimension_semantics=("parallel",)),
    )(a_bf, b_bf)


def pallas_affine_act(y_p, scale, bias, act, tile):
    mp, c = y_p.shape
    return pl.pallas_call(
        functools.partial(_affine_act_kernel, act=act),
        out_shape=jax.ShapeDtypeStruct((mp, c), jnp.float32),
        grid=(mp // tile,),
        in_specs=[pl.BlockSpec((tile, c), lambda i: (i, 0)),
                  pl.BlockSpec((1, c), lambda i: (0, 0)),
                  pl.BlockSpec((1, c), lambda i: (0, 0))],
        out_specs=pl.BlockSpec((tile, c), lambda i: (i, 0)),
        compiler_params=pltpu.CompilerParams(dimension_semantics=("parallel",)),
    )(y_p, scale.reshape(1, c).astype(jnp.float32),
      bias.reshape(1, c).astype(jnp.float32))


def pallas_affine_sigmoid_mul(y_p, scale, bias, mul_p, tile):
    mp, c = y_p.shape
    return pl.pallas_call(
        _affine_sigmoid_mul_kernel,
        out_shape=jax.ShapeDtypeStruct((mp, c), jnp.float32),
        grid=(mp // tile,),
        in_specs=[pl.BlockSpec((tile, c), lambda i: (i, 0)),
                  pl.BlockSpec((1, c), lambda i: (0, 0)),
                  pl.BlockSpec((1, c), lambda i: (0, 0)),
                  pl.BlockSpec((tile, c), lambda i: (i, 0))],
        out_specs=pl.BlockSpec((tile, c), lambda i: (i, 0)),
        compiler_params=pltpu.CompilerParams(dimension_semantics=("parallel",)),
    )(y_p, scale.reshape(1, c).astype(jnp.float32),
      bias.reshape(1, c).astype(jnp.float32), mul_p)


def pallas_gru_update(yh_p, scale, bias, z_p, sh_p, tile):
    mp, c = yh_p.shape
    return pl.pallas_call(
        _gru_update_kernel,
        out_shape=jax.ShapeDtypeStruct((mp, c), jnp.float32),
        grid=(mp // tile,),
        in_specs=[pl.BlockSpec((tile, c), lambda i: (i, 0)),
                  pl.BlockSpec((1, c), lambda i: (0, 0)),
                  pl.BlockSpec((1, c), lambda i: (0, 0)),
                  pl.BlockSpec((tile, c), lambda i: (i, 0)),
                  pl.BlockSpec((tile, c), lambda i: (i, 0))],
        out_specs=pl.BlockSpec((tile, c), lambda i: (i, 0)),
        compiler_params=pltpu.CompilerParams(dimension_semantics=("parallel",)),
    )(yh_p, scale.reshape(1, c).astype(jnp.float32),
      bias.reshape(1, c).astype(jnp.float32), z_p, sh_p)


# ----------------------------------------------------------------------------
# conv / transposed-conv building blocks (glue: im2col / weight packing; compute: Pallas)
# ----------------------------------------------------------------------------
def _im2col(x, kh, kw, stride, pad):
    """x: NHWC -> patches (N*OH*OW, KH*KW*C), row-major over (N, OH, OW)."""
    # TODO(synk): fold im2col into the matmul kernel via a spatial index_map to
    # remove this XLA-side intermediate entirely.
    if pad > 0:
        x = jnp.pad(x, ((0, 0), (pad, pad), (pad, pad), (0, 0)))
    n, h, w, c = x.shape
    oh = (h - kh) // stride + 1
    ow = (w - kw) // stride + 1
    cols = []
    for i in range(kh):
        for j in range(kw):
            cols.append(x[:, i:i + (oh - 1) * stride + 1:stride,
                           j:j + (ow - 1) * stride + 1:stride, :])
    p = jnp.stack(cols, axis=3)                      # (n, oh, ow, kh*kw, c)
    return p.reshape(n * oh * ow, kh * kw * c), (n, oh, ow)


def _conv_matmul(x, w2d, kh, kw, stride, pad, with_stats):
    """im2col + one Pallas matmul (with optional fused BN statistics).
    Rows are padded ONCE here and kept padded through the affine kernel."""
    patches, (n, oh, ow) = _im2col(x, kh, kw, stride, pad)
    m = patches.shape[0]
    tile, mp = _choose_tile(m)
    patches = _pad_rows_to(patches, mp)
    res = pallas_matmul(patches, w2d, tile, with_stats=with_stats)
    return res, (n, oh, ow, m, mp, tile)


def conv_block(x, w, *, stride, pad, act, gamma=None, beta=None, conv_bias=None):
    """Conv2d(bias=False) [+ BatchNorm2d (batch stats)] + activation."""
    kh, kw, cin, cout = w.shape
    with_stats = gamma is not None
    res, (n, oh, ow, m, mp, tile) = _conv_matmul(
        x, w.reshape(kh * kw * cin, cout), kh, kw, stride, pad, with_stats)
    if with_stats:
        y_p, s, q = res
        mean = s[0] / m
        var = jnp.maximum(q[0] / m - mean * mean, 0.0)
        scale = gamma * jax.lax.rsqrt(var + BN_EPS)
        bias = beta - mean * scale
    else:
        y_p = res
        scale = jnp.ones((cout,), jnp.float32)
        bias = conv_bias if conv_bias is not None else jnp.zeros((cout,), jnp.float32)
    y_p = pallas_affine_act(y_p, scale, bias, act, tile)
    return y_p[:m].reshape(n, oh, ow, cout)


def _deconv_weight_4x4_s2(w):
    """Re-pack a 4x4 / stride-2 / pad-1 transposed-conv kernel (stored in the
    forward-conv-of-the-dilated-input HWIO layout, same convention as before)
    into a (9*cin, 4*cout) matrix: a plain 3x3 stride-1 pad-1 conv followed by a
    2x pixel shuffle then reproduces the transposed conv exactly, with no
    zero-dilated input and a 4x lane-denser output."""
    kh, kw, cin, cout = w.shape
    assert (kh, kw) == (4, 4)
    parts = []
    for dy in range(2):
        for dx in range(2):
            sub = w[dy::2, dx::2]                                    # (2,2,cin,cout)
            parts.append(jnp.pad(sub, ((dy, 1 - dy), (dx, 1 - dx), (0, 0), (0, 0))))
    wb = jnp.stack(parts, axis=3)                                    # (3,3,cin,4,cout)
    return wb.reshape(9 * cin, 4 * cout)


def _pixel_shuffle2(y2d, n, ih, iw, cout):
    y = y2d.reshape(n, ih, iw, 2, 2, cout)
    y = jnp.transpose(y, (0, 1, 3, 2, 4, 5))
    return y.reshape(n, 2 * ih, 2 * iw, cout)


def deconv4x4_s2_block(x, w, *, act, gamma=None, beta=None, conv_bias=None):
    """ConvTranspose2d(4,2,1) [+ BN (batch stats)] + activation, via the sub-pixel
    (pixel-shuffle) decomposition."""
    _, _, cin, cout = w.shape
    wb = _deconv_weight_4x4_s2(w)                                    # (9*cin, 4*cout)
    with_stats = gamma is not None
    res, (n, ih, iw, m, mp, tile) = _conv_matmul(x, wb, 3, 3, 1, 1, with_stats)
    if with_stats:
        y_p, s, q = res
        # each of the 4 column groups holds one output-pixel parity of every channel
        s_c = s[0].reshape(4, cout).sum(axis=0)
        q_c = q[0].reshape(4, cout).sum(axis=0)
        cnt = 4.0 * m
        mean = s_c / cnt
        var = jnp.maximum(q_c / cnt - mean * mean, 0.0)
        scale = gamma * jax.lax.rsqrt(var + BN_EPS)
        bias = beta - mean * scale
        y_p = pallas_affine_act(y_p, jnp.tile(scale, 4), jnp.tile(bias, 4), act, tile)
    else:
        y_p = res
        if act != "none" or conv_bias is not None:
            scale = jnp.ones((4 * cout,), jnp.float32)
            bias = (jnp.tile(conv_bias, 4) if conv_bias is not None
                    else jnp.zeros((4 * cout,), jnp.float32))
            y_p = pallas_affine_act(y_p, scale, bias, act, tile)
    return _pixel_shuffle2(y_p[:m], n, ih, iw, cout)


# ----------------------------------------------------------------------------
# deterministic parameter construction (shapes follow Generator.__init__)
# ----------------------------------------------------------------------------
def init_params(seed=0):
    key = jax.random.PRNGKey(seed)
    keys = iter(jax.random.split(key, 128))

    def w(shape, scale=0.1):
        return scale * jax.random.normal(next(keys), shape, jnp.float32)

    def bn(c):
        g = 1.0 + 0.1 * jax.random.normal(next(keys), (c,), jnp.float32)
        b = 0.1 * jax.random.normal(next(keys), (c,), jnp.float32)
        return g, b

    params = {}
    # encoder: 3 -> 8 -> 16 -> 32, each Conv(4,4,s2,p1)+BN+LReLU
    enc = []
    cin = 3
    for i in range(ENC_LAYERS):
        cout = min(ENC_DIM * 2 ** i, MAX_DIM)
        g, b = bn(cout)
        enc.append((w((4, 4, cin, cout)), g, b))
        cin = cout
    params["enc"] = enc

    # one ConvGRUCell (in_dim = out_dim = enc_dim * 2**(enc_layers-2) = 16)
    conv_dim = min(ENC_DIM * 2 ** (ENC_LAYERS - 2), MAX_DIM)
    g_r, b_r = bn(conv_dim)
    g_z, b_z = bn(conv_dim)
    g_h, b_h = bn(conv_dim)
    params["stu"] = [dict(
        w_up=w((4, 4, conv_dim * 2 + N_ATTRS, conv_dim)),   # ConvTranspose(36->16,4,2,1)
        w_r=w((3, 3, conv_dim * 2, conv_dim)), g_r=g_r, b_r=b_r,
        w_z=w((3, 3, conv_dim * 2, conv_dim)), g_z=g_z, b_z=b_z,
        w_h=w((3, 3, conv_dim * 2, conv_dim)), g_h=g_h, b_h=b_h,
    )]

    # decoder
    dec = []
    n_in = cin + N_ATTRS                                   # 36
    n_out = min(DEC_DIM * 2 ** (DEC_LAYERS - 1), MAX_DIM)  # 32
    g, b = bn(n_out)
    dec.append((w((4, 4, n_in, n_out)), g, b))
    n_in = n_out
    n_in = n_in + n_in // 2                                # 48 (shortcut concat)
    n_out = min(DEC_DIM * 2 ** (DEC_LAYERS - 2), MAX_DIM)  # 16
    g, b = bn(n_out)
    dec.append((w((4, 4, n_in, n_out)), g, b))
    n_in = n_out
    g, b = bn(n_in // 4)
    dec.append((w((4, 4, n_in, n_in // 4)), g, b))         # 16 -> 4
    dec.append((w((3, 3, n_in // 4, 3)),
                0.1 * jax.random.normal(next(keys), (3,), jnp.float32)))  # 4 -> 3, tanh
    params["dec"] = dec
    return params


# ----------------------------------------------------------------------------
# Generator forward (mode='enc-dec')
# ----------------------------------------------------------------------------
def generator_forward(params, x_nchw, a):
    x = jnp.transpose(x_nchw, (0, 2, 3, 1)).astype(jnp.float32)  # NCHW -> NHWC
    n = x.shape[0]

    # ---- encode ----
    zs = []
    z = x
    for (wgt, g, b) in params["enc"]:
        z = conv_block(z, wgt, stride=2, pad=1, act="lrelu", gamma=g, beta=b)
        zs.append(z)

    # ---- decode layer 0 ----
    h0, w0 = zs[-1].shape[1], zs[-1].shape[2]
    attr = jnp.broadcast_to(a[:, None, None, :], (n, h0, w0, N_ATTRS))
    out = jnp.concatenate([zs[-1], attr], axis=-1)
    dw, dg, db = params["dec"][0]
    out = deconv4x4_s2_block(out, dw, act="relu", gamma=dg, beta=db)

    # ---- STU ConvGRU (shortcut layer 1) ----
    stu = params["stu"][0]
    inp = zs[-2]
    state_cat = jnp.concatenate([zs[-1], attr], axis=-1)                  # 36 ch
    state_hat = deconv4x4_s2_block(state_cat, stu["w_up"], act="none")    # (n,8,8,16)
    conv_dim = state_hat.shape[-1]

    # fused reset+update gate conv: one im2col, one matmul, one BN-stats epilogue
    cat_rz = jnp.concatenate([inp, state_hat], axis=-1)                   # 32 ch
    w_rz = jnp.concatenate([stu["w_r"], stu["w_z"]], axis=-1)             # (3,3,32,32)
    g_rz = jnp.concatenate([stu["g_r"], stu["g_z"]])
    b_rz = jnp.concatenate([stu["b_r"], stu["b_z"]])
    (y_rz, s_rz, q_rz), (_, oh, ow, m, mp, tile) = _conv_matmul(
        cat_rz, w_rz.reshape(9 * 2 * conv_dim, 2 * conv_dim), 3, 3, 1, 1, True)
    mean = s_rz[0] / m
    var = jnp.maximum(q_rz[0] / m - mean * mean, 0.0)
    scale_rz = g_rz * jax.lax.rsqrt(var + BN_EPS)
    bias_rz = b_rz - mean * scale_rz

    sh2d = state_hat.reshape(m, conv_dim)
    mul = jnp.concatenate([sh2d, jnp.ones_like(sh2d)], axis=-1)   # [state_hat | 1]
    gz = pallas_affine_sigmoid_mul(y_rz, scale_rz, bias_rz,
                                   _pad_rows_to(mul, mp), tile)[:m]
    new_state2d = gz[:, :conv_dim]            # r * state_hat
    z2d = gz[:, conv_dim:]                    # update gate z = sigmoid(...)

    # hidden conv + fused GRU output combine
    cat_h = jnp.concatenate([inp, new_state2d.reshape(n, oh, ow, conv_dim)], axis=-1)
    (y_h, s_h, q_h), (_, _, _, m2, mp2, tile2) = _conv_matmul(
        cat_h, stu["w_h"].reshape(9 * 2 * conv_dim, conv_dim), 3, 3, 1, 1, True)
    mean_h = s_h[0] / m2
    var_h = jnp.maximum(q_h[0] / m2 - mean_h * mean_h, 0.0)
    scale_h = stu["g_h"] * jax.lax.rsqrt(var_h + BN_EPS)
    bias_h = stu["b_h"] - mean_h * scale_h
    stu_out2d = pallas_gru_update(y_h, scale_h, bias_h,
                                  _pad_rows_to(z2d, mp2),
                                  _pad_rows_to(sh2d, mp2), tile2)[:m2]
    stu_out = stu_out2d.reshape(n, oh, ow, conv_dim)

    # ---- decode layer 1 (shortcut concat) ----
    out = jnp.concatenate([out, stu_out], axis=-1)
    dw, dg, db = params["dec"][1]
    out = deconv4x4_s2_block(out, dw, act="relu", gamma=dg, beta=db)

    # ---- remaining decoder layers ----
    dw, dg, db = params["dec"][2]
    out = deconv4x4_s2_block(out, dw, act="relu", gamma=dg, beta=db)
    w_last, b_last = params["dec"][3]
    out = conv_block(out, w_last, stride=1, pad=1, act="tanh", conv_bias=b_last)

    return jnp.transpose(out, (0, 3, 1, 2))  # NHWC -> NCHW


# ----------------------------------------------------------------------------
if __name__ == "__main__":
    key = jax.random.PRNGKey(0)
    kx, ka = jax.random.split(key)
    x = jax.random.normal(kx, (2, 3, IMG_SIZE, IMG_SIZE), jnp.float32)    # NCHW input
    a = jax.random.bernoulli(ka, 0.5, (2, N_ATTRS)).astype(jnp.float32)   # attributes

    params = init_params(0)
    fwd = jax.jit(generator_forward)
    out = jax.block_until_ready(fwd(params, x, a))

    assert out.shape == (2, 3, IMG_SIZE, IMG_SIZE), out.shape
    assert bool(jnp.all(jnp.isfinite(out)))
    print("KERNEL_OK")
</pallas_src>

<mosaic_0001>
module attributes {stable_mosaic.version = 11 : i64} {
  func.func @_matmul_stats_kernel(%arg0: i32, %arg1: memref<256x48xbf16, #tpu.memory_space<vmem>>, %arg2: memref<48x8xbf16, #tpu.memory_space<vmem>>, %arg3: memref<256x8xf32, #tpu.memory_space<vmem>>, %arg4: memref<1x8xf32, #tpu.memory_space<vmem>>, %arg5: memref<1x8xf32, #tpu.memory_space<vmem>>) attributes {dimension_semantics = [#tpu.dimension_semantics<arbitrary>], iteration_bounds = array<i64: 2>, scalar_prefetch = 0 : i64, scratch_operands = 0 : i64, tpu.core_type = #tpu.core_type<tc>, window_params = [{transform_indices = @transform_0, window_bounds = array<i64: 256, 48>}, {pipeline_mode = #tpu.pipeline_mode<synchronous>, transform_indices = @transform_1, window_bounds = array<i64: 48, 8>}, {transform_indices = @transform_2, window_bounds = array<i64: 256, 8>}, {pipeline_mode = #tpu.pipeline_mode<synchronous>, transform_indices = @transform_3, window_bounds = array<i64: 1, 8>}, {pipeline_mode = #tpu.pipeline_mode<synchronous>, transform_indices = @transform_4, window_bounds = array<i64: 1, 8>}]} {
    %c0_i32 = arith.constant 0 : i32
    %0 = arith.cmpi eq, %arg0, %c0_i32 : i32
    %1 = arith.extui %0 : i1 to i32
    %c0_i32_0 = arith.constant 0 : i32
    %2 = arith.cmpi ne, %1, %c0_i32_0 : i32
    scf.if %2 {
      %cst_16 = arith.constant 0.000000e+00 : f32
      %18 = vector.broadcast %cst_16 : f32 to vector<1x8xf32>
      %c0_17 = arith.constant 0 : index
      %c0_18 = arith.constant 0 : index
      %19 = vector.load %arg4[%c0_17, %c0_18] : memref<1x8xf32, #tpu.memory_space<vmem>>, vector<1x8xf32>
      tpu.vector_store %arg4[%c0_17, %c0_18], %18 {strides = array<i32>} : memref<1x8xf32, #tpu.memory_space<vmem>>, vector<1x8xf32>,
      %cst_19 = arith.constant 0.000000e+00 : f32
      %20 = vector.broadcast %cst_19 : f32 to vector<1x8xf32>
      %c0_20 = arith.constant 0 : index
      %c0_21 = arith.constant 0 : index
      %21 = vector.load %arg5[%c0_20, %c0_21] : memref<1x8xf32, #tpu.memory_space<vmem>>, vector<1x8xf32>
      tpu.vector_store %arg5[%c0_20, %c0_21], %20 {strides = array<i32>} : memref<1x8xf32, #tpu.memory_space<vmem>>, vector<1x8xf32>,
    } else {
    }
    %c0 = arith.constant 0 : index
    %c0_1 = arith.constant 0 : index
    %3 = vector.load %arg1[%c0, %c0_1] : memref<256x48xbf16, #tpu.memory_space<vmem>>, vector<256x48xbf16>
    %c0_2 = arith.constant 0 : index
    %c0_3 = arith.constant 0 : index
    %4 = vector.load %arg2[%c0_2, %c0_3] : memref<48x8xbf16, #tpu.memory_space<vmem>>, vector<48x8xbf16>
    %cst = arith.constant dense<0.000000e+00> : vector<256x8xf32>
    %5 = tpu.matmul %3, %4, %cst {dimension_numbers = #tpu.dot_dimension_numbers<[1], [0], [0], [1], [0, 0, 1, 1], [], []>} : vector<256x48xbf16>, vector<48x8xbf16>, vector<256x8xf32> -> vector<256x8xf32>
    %c0_4 = arith.constant 0 : index
    %c0_5 = arith.constant 0 : index
    %6 = vector.load %arg3[%c0_4, %c0_5] : memref<256x8xf32, #tpu.memory_space<vmem>>, vector<256x8xf32>
    tpu.vector_store %arg3[%c0_4, %c0_5], %5 {strides = array<i32>} : memref<256x8xf32, #tpu.memory_space<vmem>>, vector<256x8xf32>,
    %c0_6 = arith.constant 0 : index
    %c0_7 = arith.constant 0 : index
    %7 = vector.load %arg4[%c0_6, %c0_7] : memref<1x8xf32, #tpu.memory_space<vmem>>, vector<1x8xf32>
    %cst_8 = arith.constant dense<0.000000e+00> : vector<8xf32>
    %8 = vector.multi_reduction <add>, %5, %cst_8 [0] : vector<256x8xf32> to vector<8xf32>
    %9 = vector.shape_cast %8 : vector<8xf32> to vector<1x8xf32>
    %10 = arith.addf %7, %9 : vector<1x8xf32>
    %c0_9 = arith.constant 0 : index
    %c0_10 = arith.constant 0 : index
    %11 = vector.load %arg4[%c0_9, %c0_10] : memref<1x8xf32, #tpu.memory_space<vmem>>, vector<1x8xf32>
    tpu.vector_store %arg4[%c0_9, %c0_10], %10 {strides = array<i32>} : memref<1x8xf32, #tpu.memory_space<vmem>>, vector<1x8xf32>,
    %c0_11 = arith.constant 0 : index
    %c0_12 = arith.constant 0 : index
    %12 = vector.load %arg5[%c0_11, %c0_12] : memref<1x8xf32, #tpu.memory_space<vmem>>, vector<1x8xf32>
    %13 = arith.mulf %5, %5 : vector<256x8xf32>
    %cst_13 = arith.constant dense<0.000000e+00> : vector<8xf32>
    %14 = vector.multi_reduction <add>, %13, %cst_13 [0] : vector<256x8xf32> to vector<8xf32>
    %15 = vector.shape_cast %14 : vector<8xf32> to vector<1x8xf32>
    %16 = arith.addf %12, %15 : vector<1x8xf32>
    %c0_14 = arith.constant 0 : index
    %c0_15 = arith.constant 0 : index
    %17 = vector.load %arg5[%c0_14, %c0_15] : memref<1x8xf32, #tpu.memory_space<vmem>>, vector<1x8xf32>
    tpu.vector_store %arg5[%c0_14, %c0_15], %16 {strides = array<i32>} : memref<1x8xf32, #tpu.memory_space<vmem>>, vector<1x8xf32>,
    return
  }
  func.func @transform_0(%arg0: i32) -> (i32, i32) {
    %c0_i32 = arith.constant 0 : i32
    %c0_i32_0 = arith.constant 0 : i32
    return %arg0, %c0_i32 : i32, i32
  }
  func.func @transform_1(%arg0: i32) -> (i32, i32) {
    %c0_i32 = arith.constant 0 : i32
    %c0_i32_0 = arith.constant 0 : i32
    %c0_i32_1 = arith.constant 0 : i32
    return %c0_i32, %c0_i32_0 : i32, i32
  }
  func.func @transform_2(%arg0: i32) -> (i32, i32) {
    %c0_i32 = arith.constant 0 : i32
    %c0_i32_0 = arith.constant 0 : i32
    return %arg0, %c0_i32 : i32, i32
  }
  func.func @transform_3(%arg0: i32) -> (i32, i32) {
    %c0_i32 = arith.constant 0 : i32
    %c0_i32_0 = arith.constant 0 : i32
    %c0_i32_1 = arith.constant 0 : i32
    return %c0_i32, %c0_i32_0 : i32, i32
  }
  func.func @transform_4(%arg0: i32) -> (i32, i32) {
    %c0_i32 = arith.constant 0 : i32
    %c0_i32_0 = arith.constant 0 : i32
    %c0_i32_1 = arith.constant 0 : i32
    return %c0_i32, %c0_i32_0 : i32, i32
  }
}

module attributes {stable_mosaic.version = 11 : i64} {
  func.func @_affine_act_kernel(%arg0: i32, %arg1: memref<256x8xf32, #tpu.memory_space<vmem>>, %arg2: memref<1x8xf32, #tpu.memory_space<vmem>>, %arg3: memref<1x8xf32, #tpu.memory_space<vmem>>, %arg4: memref<256x8xf32, #tpu.memory_space<vmem>>) attributes {dimension_semantics = [#tpu.dimension_semantics<parallel>], iteration_bounds = array<i64: 2>, scalar_prefetch = 0 : i64, scratch_operands = 0 : i64, tpu.core_type = #tpu.core_type<tc>, window_params = [{transform_indices = @transform_0, window_bounds = array<i64: 256, 8>}, {pipeline_mode = #tpu.pipeline_mode<synchronous>, transform_indices = @transform_1, window_bounds = array<i64: 1, 8>}, {pipeline_mode = #tpu.pipeline_mode<synchronous>, transform_indices = @transform_2, window_bounds = array<i64: 1, 8>}, {transform_indices = @transform_3, window_bounds = array<i64: 256, 8>}]} {
    %c0 = arith.constant 0 : index
    %c0_0 = arith.constant 0 : index
    %0 = vector.load %arg1[%c0, %c0_0] : memref<256x8xf32, #tpu.memory_space<vmem>>, vector<256x8xf32>
    %c0_1 = arith.constant 0 : index
    %c0_2 = arith.constant 0 : index
    %1 = vector.load %arg2[%c0_1, %c0_2] : memref<1x8xf32, #tpu.memory_space<vmem>>, vector<1x8xf32>
    %2 = vector.broadcast %1 : vector<1x8xf32> to vector<256x8xf32>
    %3 = arith.mulf %0, %2 : vector<256x8xf32>
    %c0_3 = arith.constant 0 : index
    %c0_4 = arith.constant 0 : index
    %4 = vector.load %arg3[%c0_3, %c0_4] : memref<1x8xf32, #tpu.memory_space<vmem>>, vector<1x8xf32>
    %5 = vector.broadcast %4 : vector<1x8xf32> to vector<256x8xf32>
    %6 = arith.addf %3, %5 : vector<256x8xf32>
    %cst = arith.constant 0.000000e+00 : f32
    %7 = vector.broadcast %cst : f32 to vector<256x8xf32>
    %8 = arith.cmpf oge, %6, %7 : vector<256x8xf32>
    %cst_5 = arith.constant 2.000000e-01 : f32
    %9 = vector.broadcast %cst_5 : f32 to vector<256x8xf32>
    %10 = arith.mulf %9, %6 : vector<256x8xf32>
    %11 = arith.select %8, %6, %10 : vector<256x8xi1>, vector<256x8xf32>
    %c0_6 = arith.constant 0 : index
    %c0_7 = arith.constant 0 : index
    %12 = vector.load %arg4[%c0_6, %c0_7] : memref<256x8xf32, #tpu.memory_space<vmem>>, vector<256x8xf32>
    tpu.vector_store %arg4[%c0_6, %c0_7], %11 {strides = array<i32>} : memref<256x8xf32, #tpu.memory_space<vmem>>, vector<256x8xf32>,
    return
  }
  func.func @transform_0(%arg0: i32) -> (i32, i32) {
    %c0_i32 = arith.constant 0 : i32
    %c0_i32_0 = arith.constant 0 : i32
    return %arg0, %c0_i32 : i32, i32
  }
  func.func @transform_1(%arg0: i32) -> (i32, i32) {
    %c0_i32 = arith.constant 0 : i32
    %c0_i32_0 = arith.constant 0 : i32
    %c0_i32_1 = arith.constant 0 : i32
    return %c0_i32, %c0_i32_0 : i32, i32
  }
  func.func @transform_2(%arg0: i32) -> (i32, i32) {
    %c0_i32 = arith.constant 0 : i32
    %c0_i32_0 = arith.constant 0 : i32
    %c0_i32_1 = arith.constant 0 : i32
    return %c0_i32, %c0_i32_0 : i32, i32
  }
  func.func @transform_3(%arg0: i32) -> (i32, i32) {
    %c0_i32 = arith.constant 0 : i32
    %c0_i32_0 = arith.constant 0 : i32
    return %arg0, %c0_i32 : i32, i32
  }
}

module attributes {stable_mosaic.version = 11 : i64} {
  func.func @_matmul_stats_kernel(%arg0: i32, %arg1: memref<128x128xbf16, #tpu.memory_space<vmem>>, %arg2: memref<128x16xbf16, #tpu.memory_space<vmem>>, %arg3: memref<128x16xf32, #tpu.memory_space<vmem>>, %arg4: memref<1x16xf32, #tpu.memory_space<vmem>>, %arg5: memref<1x16xf32, #tpu.memory_space<vmem>>) attributes {dimension_semantics = [#tpu.dimension_semantics<arbitrary>], iteration_bounds = array<i64: 1>, scalar_prefetch = 0 : i64, scratch_operands = 0 : i64, tpu.core_type = #tpu.core_type<tc>, window_params = [{transform_indices = @transform_0, window_bounds = array<i64: 128, 128>}, {pipeline_mode = #tpu.pipeline_mode<synchronous>, transform_indices = @transform_1, window_bounds = array<i64: 128, 16>}, {transform_indices = @transform_2, window_bounds = array<i64: 128, 16>}, {pipeline_mode = #tpu.pipeline_mode<synchronous>, transform_indices = @transform_3, window_bounds = array<i64: 1, 16>}, {pipeline_mode = #tpu.pipeline_mode<synchronous>, transform_indices = @transform_4, window_bounds = array<i64: 1, 16>}]} {
    %c0_i32 = arith.constant 0 : i32
    %0 = arith.cmpi eq, %arg0, %c0_i32 : i32
    %1 = arith.extui %0 : i1 to i32
    %c0_i32_0 = arith.constant 0 : i32
    %2 = arith.cmpi ne, %1, %c0_i32_0 : i32
    scf.if %2 {
      %cst_16 = arith.constant 0.000000e+00 : f32
      %18 = vector.broadcast %cst_16 : f32 to vector<1x16xf32>
      %c0_17 = arith.constant 0 : index
      %c0_18 = arith.constant 0 : index
      %19 = vector.load %arg4[%c0_17, %c0_18] : memref<1x16xf32, #tpu.memory_space<vmem>>, vector<1x16xf32>
      tpu.vector_store %arg4[%c0_17, %c0_18], %18 {strides = array<i32>} : memref<1x16xf32, #tpu.memory_space<vmem>>, vector<1x16xf32>,
      %cst_19 = arith.constant 0.000000e+00 : f32
      %20 = vector.broadcast %cst_19 : f32 to vector<1x16xf32>
      %c0_20 = arith.constant 0 : index
      %c0_21 = arith.constant 0 : index
      %21 = vector.load %arg5[%c0_20, %c0_21] : memref<1x16xf32, #tpu.memory_space<vmem>>, vector<1x16xf32>
      tpu.vector_store %arg5[%c0_20, %c0_21], %20 {strides = array<i32>} : memref<1x16xf32, #tpu.memory_space<vmem>>, vector<1x16xf32>,
    } else {
    }
    %c0 = arith.constant 0 : index
    %c0_1 = arith.constant 0 : index
    %3 = vector.load %arg1[%c0, %c0_1] : memref<128x128xbf16, #tpu.memory_space<vmem>>, vector<128x128xbf16>
    %c0_2 = arith.constant 0 : index
    %c0_3 = arith.constant 0 : index
    %4 = vector.load %arg2[%c0_2, %c0_3] : memref<128x16xbf16, #tpu.memory_space<vmem>>, vector<128x16xbf16>
    %cst = arith.constant dense<0.000000e+00> : vector<128x16xf32>
    %5 = tpu.matmul %3, %4, %cst {dimension_numbers = #tpu.dot_dimension_numbers<[1], [0], [0], [1], [0, 0, 1, 1], [], []>} : vector<128x128xbf16>, vector<128x16xbf16>, vector<128x16xf32> -> vector<128x16xf32>
    %c0_4 = arith.constant 0 : index
    %c0_5 = arith.constant 0 : index
    %6 = vector.load %arg3[%c0_4, %c0_5] : memref<128x16xf32, #tpu.memory_space<vmem>>, vector<128x16xf32>
    tpu.vector_store %arg3[%c0_4, %c0_5], %5 {strides = array<i32>} : memref<128x16xf32, #tpu.memory_space<vmem>>, vector<128x16xf32>,
    %c0_6 = arith.constant 0 : index
    %c0_7 = arith.constant 0 : index
    %7 = vector.load %arg4[%c0_6, %c0_7] : memref<1x16xf32, #tpu.memory_space<vmem>>, vector<1x16xf32>
    %cst_8 = arith.constant dense<0.000000e+00> : vector<16xf32>
    %8 = vector.multi_reduction <add>, %5, %cst_8 [0] : vector<128x16xf32> to vector<16xf32>
    %9 = vector.shape_cast %8 : vector<16xf32> to vector<1x16xf32>
    %10 = arith.addf %7, %9 : vector<1x16xf32>
    %c0_9 = arith.constant 0 : index
    %c0_10 = arith.constant 0 : index
    %11 = vector.load %arg4[%c0_9, %c0_10] : memref<1x16xf32, #tpu.memory_space<vmem>>, vector<1x16xf32>
    tpu.vector_store %arg4[%c0_9, %c0_10], %10 {strides = array<i32>} : memref<1x16xf32, #tpu.memory_space<vmem>>, vector<1x16xf32>,
    %c0_11 = arith.constant 0 : index
    %c0_12 = arith.constant 0 : index
    %12 = vector.load %arg5[%c0_11, %c0_12] : memref<1x16xf32, #tpu.memory_space<vmem>>, vector<1x16xf32>
    %13 = arith.mulf %5, %5 : vector<128x16xf32>
    %cst_13 = arith.constant dense<0.000000e+00> : vector<16xf32>
    %14 = vector.multi_reduction <add>, %13, %cst_13 [0] : vector<128x16xf32> to vector<16xf32>
    %15 = vector.shape_cast %14 : vector<16xf32> to vector<1x16xf32>
    %16 = arith.addf %12, %15 : vector<1x16xf32>
    %c0_14 = arith.constant 0 : index
    %c0_15 = arith.constant 0 : index
    %17 = vector.load %arg5[%c0_14, %c0_15] : memref<1x16xf32, #tpu.memory_space<vmem>>, vector<1x16xf32>
    tpu.vector_store %arg5[%c0_14, %c0_15], %16 {strides = array<i32>} : memref<1x16xf32, #tpu.memory_space<vmem>>, vector<1x16xf32>,
    return
  }
  func.func @transform_0(%arg0: i32) -> (i32, i32) {
    %c0_i32 = arith.constant 0 : i32
    %c0_i32_0 = arith.constant 0 : i32
    return %arg0, %c0_i32 : i32, i32
  }
  func.func @transform_1(%arg0: i32) -> (i32, i32) {
    %c0_i32 = arith.constant 0 : i32
    %c0_i32_0 = arith.constant 0 : i32
    %c0_i32_1 = arith.constant 0 : i32
    return %c0_i32, %c0_i32_0 : i32, i32
  }
  func.func @transform_2(%arg0: i32) -> (i32, i32) {
    %c0_i32 = arith.constant 0 : i32
    %c0_i32_0 = arith.constant 0 : i32
    return %arg0, %c0_i32 : i32, i32
  }
  func.func @transform_3(%arg0: i32) -> (i32, i32) {
    %c0_i32 = arith.constant 0 : i32
    %c0_i32_0 = arith.constant 0 : i32
    %c0_i32_1 = arith.constant 0 : i32
    return %c0_i32, %c0_i32_0 : i32, i32
  }
  func.func @transform_4(%arg0: i32) -> (i32, i32) {
    %c0_i32 = arith.constant 0 : i32
    %c0_i32_0 = arith.constant 0 : i32
    %c0_i32_1 = arith.constant 0 : i32
    return %c0_i32, %c0_i32_0 : i32, i32
  }
}

module attributes {stable_mosaic.version = 11 : i64} {
  func.func @_affine_act_kernel(%arg0: i32, %arg1: memref<128x16xf32, #tpu.memory_space<vmem>>, %arg2: memref<1x16xf32, #tpu.memory_space<vmem>>, %arg3: memref<1x16xf32, #tpu.memory_space<vmem>>, %arg4: memref<128x16xf32, #tpu.memory_space<vmem>>) attributes {dimension_semantics = [#tpu.dimension_semantics<parallel>], iteration_bounds = array<i64: 1>, scalar_prefetch = 0 : i64, scratch_operands = 0 : i64, tpu.core_type = #tpu.core_type<tc>, window_params = [{transform_indices = @transform_0, window_bounds = array<i64: 128, 16>}, {pipeline_mode = #tpu.pipeline_mode<synchronous>, transform_indices = @transform_1, window_bounds = array<i64: 1, 16>}, {pipeline_mode = #tpu.pipeline_mode<synchronous>, transform_indices = @transform_2, window_bounds = array<i64: 1, 16>}, {transform_indices = @transform_3, window_bounds = array<i64: 128, 16>}]} {
    %c0 = arith.constant 0 : index
    %c0_0 = arith.constant 0 : index
    %0 = vector.load %arg1[%c0, %c0_0] : memref<128x16xf32, #tpu.memory_space<vmem>>, vector<128x16xf32>
    %c0_1 = arith.constant 0 : index
    %c0_2 = arith.constant 0 : index
    %1 = vector.load %arg2[%c0_1, %c0_2] : memref<1x16xf32, #tpu.memory_space<vmem>>, vector<1x16xf32>
    %2 = vector.broadcast %1 : vector<1x16xf32> to vector<128x16xf32>
    %3 = arith.mulf %0, %2 : vector<128x16xf32>
    %c0_3 = arith.constant 0 : index
    %c0_4 = arith.constant 0 : index
    %4 = vector.load %arg3[%c0_3, %c0_4] : memref<1x16xf32, #tpu.memory_space<vmem>>, vector<1x16xf32>
    %5 = vector.broadcast %4 : vector<1x16xf32> to vector<128x16xf32>
    %6 = arith.addf %3, %5 : vector<128x16xf32>
    %cst = arith.constant 0.000000e+00 : f32
    %7 = vector.broadcast %cst : f32 to vector<128x16xf32>
    %8 = arith.cmpf oge, %6, %7 : vector<128x16xf32>
    %cst_5 = arith.constant 2.000000e-01 : f32
    %9 = vector.broadcast %cst_5 : f32 to vector<128x16xf32>
    %10 = arith.mulf %9, %6 : vector<128x16xf32>
    %11 = arith.select %8, %6, %10 : vector<128x16xi1>, vector<128x16xf32>
    %c0_6 = arith.constant 0 : index
    %c0_7 = arith.constant 0 : index
    %12 = vector.load %arg4[%c0_6, %c0_7] : memref<128x16xf32, #tpu.memory_space<vmem>>, vector<128x16xf32>
    tpu.vector_store %arg4[%c0_6, %c0_7], %11 {strides = array<i32>} : memref<128x16xf32, #tpu.memory_space<vmem>>, vector<128x16xf32>,
    return
  }
  func.func @transform_0(%arg0: i32) -> (i32, i32) {
    %c0_i32 = arith.constant 0 : i32
    %c0_i32_0 = arith.constant 0 : i32
    return %arg0, %c0_i32 : i32, i32
  }
  func.func @transform_1(%arg0: i32) -> (i32, i32) {
    %c0_i32 = arith.constant 0 : i32
    %c0_i32_0 = arith.constant 0 : i32
    %c0_i32_1 = arith.constant 0 : i32
    return %c0_i32, %c0_i32_0 : i32, i32
  }
  func.func @transform_2(%arg0: i32) -> (i32, i32) {
    %c0_i32 = arith.constant 0 : i32
    %c0_i32_0 = arith.constant 0 : i32
    %c0_i32_1 = arith.constant 0 : i32
    return %c0_i32, %c0_i32_0 : i32, i32
  }
  func.func @transform_3(%arg0: i32) -> (i32, i32) {
    %c0_i32 = arith.constant 0 : i32
    %c0_i32_0 = arith.constant 0 : i32
    return %arg0, %c0_i32 : i32, i32
  }
}

module attributes {stable_mosaic.version = 11 : i64} {
  func.func @_affine_act_kernel(%arg0: i32, %arg1: memref<32x32xf32, #tpu.memory_space<vmem>>, %arg2: memref<1x32xf32, #tpu.memory_space<vmem>>, %arg3: memref<1x32xf32, #tpu.memory_space<vmem>>, %arg4: memref<32x32xf32, #tpu.memory_space<vmem>>) attributes {dimension_semantics = [#tpu.dimension_semantics<parallel>], iteration_bounds = array<i64: 1>, scalar_prefetch = 0 : i64, scratch_operands = 0 : i64, tpu.core_type = #tpu.core_type<tc>, window_params = [{transform_indices = @transform_0, window_bounds = array<i64: 32, 32>}, {pipeline_mode = #tpu.pipeline_mode<synchronous>, transform_indices = @transform_1, window_bounds = array<i64: 1, 32>}, {pipeline_mode = #tpu.pipeline_mode<synchronous>, transform_indices = @transform_2, window_bounds = array<i64: 1, 32>}, {transform_indices = @transform_3, window_bounds = array<i64: 32, 32>}]} {
    %c0 = arith.constant 0 : index
    %c0_0 = arith.constant 0 : index
    %0 = vector.load %arg1[%c0, %c0_0] : memref<32x32xf32, #tpu.memory_space<vmem>>, vector<32x32xf32>
    %c0_1 = arith.constant 0 : index
    %c0_2 = arith.constant 0 : index
    %1 = vector.load %arg2[%c0_1, %c0_2] : memref<1x32xf32, #tpu.memory_space<vmem>>, vector<1x32xf32>
    %2 = vector.broadcast %1 : vector<1x32xf32> to vector<32x32xf32>
    %3 = arith.mulf %0, %2 : vector<32x32xf32>
    %c0_3 = arith.constant 0 : index
    %c0_4 = arith.constant 0 : index
    %4 = vector.load %arg3[%c0_3, %c0_4] : memref<1x32xf32, #tpu.memory_space<vmem>>, vector<1x32xf32>
    %5 = vector.broadcast %4 : vector<1x32xf32> to vector<32x32xf32>
    %6 = arith.addf %3, %5 : vector<32x32xf32>
    %cst = arith.constant 0.000000e+00 : f32
    %7 = vector.broadcast %cst : f32 to vector<32x32xf32>
    %8 = arith.cmpf oge, %6, %7 : vector<32x32xf32>
    %cst_5 = arith.constant 2.000000e-01 : f32
    %9 = vector.broadcast %cst_5 : f32 to vector<32x32xf32>
    %10 = arith.mulf %9, %6 : vector<32x32xf32>
    %11 = arith.select %8, %6, %10 : vector<32x32xi1>, vector<32x32xf32>
    %c0_6 = arith.constant 0 : index
    %c0_7 = arith.constant 0 : index
    %12 = vector.load %arg4[%c0_6, %c0_7] : memref<32x32xf32, #tpu.memory_space<vmem>>, vector<32x32xf32>
    tpu.vector_store %arg4[%c0_6, %c0_7], %11 {strides = array<i32>} : memref<32x32xf32, #tpu.memory_space<vmem>>, vector<32x32xf32>,
    return
  }
  func.func @transform_0(%arg0: i32) -> (i32, i32) {
    %c0_i32 = arith.constant 0 : i32
    %c0_i32_0 = arith.constant 0 : i32
    return %arg0, %c0_i32 : i32, i32
  }
  func.func @transform_1(%arg0: i32) -> (i32, i32) {
    %c0_i32 = arith.constant 0 : i32
    %c0_i32_0 = arith.constant 0 : i32
    %c0_i32_1 = arith.constant 0 : i32
    return %c0_i32, %c0_i32_0 : i32, i32
  }
  func.func @transform_2(%arg0: i32) -> (i32, i32) {
    %c0_i32 = arith.constant 0 : i32
    %c0_i32_0 = arith.constant 0 : i32
    %c0_i32_1 = arith.constant 0 : i32
    return %c0_i32, %c0_i32_0 : i32, i32
  }
  func.func @transform_3(%arg0: i32) -> (i32, i32) {
    %c0_i32 = arith.constant 0 : i32
    %c0_i32_0 = arith.constant 0 : i32
    return %arg0, %c0_i32 : i32, i32
  }
}

module attributes {stable_mosaic.version = 11 : i64} {
  func.func @_matmul_stats_kernel(%arg0: i32, %arg1: memref<32x256xbf16, #tpu.memory_space<vmem>>, %arg2: memref<256x32xbf16, #tpu.memory_space<vmem>>, %arg3: memref<32x32xf32, #tpu.memory_space<vmem>>, %arg4: memref<1x32xf32, #tpu.memory_space<vmem>>, %arg5: memref<1x32xf32, #tpu.memory_space<vmem>>) attributes {dimension_semantics = [#tpu.dimension_semantics<arbitrary>], iteration_bounds = array<i64: 1>, scalar_prefetch = 0 : i64, scratch_operands = 0 : i64, tpu.core_type = #tpu.core_type<tc>, window_params = [{transform_indices = @transform_0, window_bounds = array<i64: 32, 256>}, {pipeline_mode = #tpu.pipeline_mode<synchronous>, transform_indices = @transform_1, window_bounds = array<i64: 256, 32>}, {transform_indices = @transform_2, window_bounds = array<i64: 32, 32>}, {pipeline_mode = #tpu.pipeline_mode<synchronous>, transform_indices = @transform_3, window_bounds = array<i64: 1, 32>}, {pipeline_mode = #tpu.pipeline_mode<synchronous>, transform_indices = @transform_4, window_bounds = array<i64: 1, 32>}]} {
    %c0_i32 = arith.constant 0 : i32
    %0 = arith.cmpi eq, %arg0, %c0_i32 : i32
    %1 = arith.extui %0 : i1 to i32
    %c0_i32_0 = arith.constant 0 : i32
    %2 = arith.cmpi ne, %1, %c0_i32_0 : i32
    scf.if %2 {
      %cst_16 = arith.constant 0.000000e+00 : f32
      %18 = vector.broadcast %cst_16 : f32 to vector<1x32xf32>
      %c0_17 = arith.constant 0 : index
      %c0_18 = arith.constant 0 : index
      %19 = vector.load %arg4[%c0_17, %c0_18] : memref<1x32xf32, #tpu.memory_space<vmem>>, vector<1x32xf32>
      tpu.vector_store %arg4[%c0_17, %c0_18], %18 {strides = array<i32>} : memref<1x32xf32, #tpu.memory_space<vmem>>, vector<1x32xf32>,
      %cst_19 = arith.constant 0.000000e+00 : f32
      %20 = vector.broadcast %cst_19 : f32 to vector<1x32xf32>
      %c0_20 = arith.constant 0 : index
      %c0_21 = arith.constant 0 : index
      %21 = vector.load %arg5[%c0_20, %c0_21] : memref<1x32xf32, #tpu.memory_space<vmem>>, vector<1x32xf32>
      tpu.vector_store %arg5[%c0_20, %c0_21], %20 {strides = array<i32>} : memref<1x32xf32, #tpu.memory_space<vmem>>, vector<1x32xf32>,
    } else {
    }
    %c0 = arith.constant 0 : index
    %c0_1 = arith.constant 0 : index
    %3 = vector.load %arg1[%c0, %c0_1] : memref<32x256xbf16, #tpu.memory_space<vmem>>, vector<32x256xbf16>
    %c0_2 = arith.constant 0 : index
    %c0_3 = arith.constant 0 : index
    %4 = vector.load %arg2[%c0_2, %c0_3] : memref<256x32xbf16, #tpu.memory_space<vmem>>, vector<256x32xbf16>
    %cst = arith.constant dense<0.000000e+00> : vector<32x32xf32>
    %5 = tpu.matmul %3, %4, %cst {dimension_numbers = #tpu.dot_dimension_numbers<[1], [0], [0], [1], [0, 0, 1, 1], [], []>} : vector<32x256xbf16>, vector<256x32xbf16>, vector<32x32xf32> -> vector<32x32xf32>
    %c0_4 = arith.constant 0 : index
    %c0_5 = arith.constant 0 : index
    %6 = vector.load %arg3[%c0_4, %c0_5] : memref<32x32xf32, #tpu.memory_space<vmem>>, vector<32x32xf32>
    tpu.vector_store %arg3[%c0_4, %c0_5], %5 {strides = array<i32>} : memref<32x32xf32, #tpu.memory_space<vmem>>, vector<32x32xf32>,
    %c0_6 = arith.constant 0 : index
    %c0_7 = arith.constant 0 : index
    %7 = vector.load %arg4[%c0_6, %c0_7] : memref<1x32xf32, #tpu.memory_space<vmem>>, vector<1x32xf32>
    %cst_8 = arith.constant dense<0.000000e+00> : vector<32xf32>
    %8 = vector.multi_reduction <add>, %5, %cst_8 [0] : vector<32x32xf32> to vector<32xf32>
    %9 = vector.shape_cast %8 : vector<32xf32> to vector<1x32xf32>
    %10 = arith.addf %7, %9 : vector<1x32xf32>
    %c0_9 = arith.constant 0 : index
    %c0_10 = arith.constant 0 : index
    %11 = vector.load %arg4[%c0_9, %c0_10] : memref<1x32xf32, #tpu.memory_space<vmem>>, vector<1x32xf32>
    tpu.vector_store %arg4[%c0_9, %c0_10], %10 {strides = array<i32>} : memref<1x32xf32, #tpu.memory_space<vmem>>, vector<1x32xf32>,
    %c0_11 = arith.constant 0 : index
    %c0_12 = arith.constant 0 : index
    %12 = vector.load %arg5[%c0_11, %c0_12] : memref<1x32xf32, #tpu.memory_space<vmem>>, vector<1x32xf32>
    %13 = arith.mulf %5, %5 : vector<32x32xf32>
    %cst_13 = arith.constant dense<0.000000e+00> : vector<32xf32>
    %14 = vector.multi_reduction <add>, %13, %cst_13 [0] : vector<32x32xf32> to vector<32xf32>
    %15 = vector.shape_cast %14 : vector<32xf32> to vector<1x32xf32>
    %16 = arith.addf %12, %15 : vector<1x32xf32>
    %c0_14 = arith.constant 0 : index
    %c0_15 = arith.constant 0 : index
    %17 = vector.load %arg5[%c0_14, %c0_15] : memref<1x32xf32, #tpu.memory_space<vmem>>, vector<1x32xf32>
    tpu.vector_store %arg5[%c0_14, %c0_15], %16 {strides = array<i32>} : memref<1x32xf32, #tpu.memory_space<vmem>>, vector<1x32xf32>,
    return
  }
  func.func @transform_0(%arg0: i32) -> (i32, i32) {
    %c0_i32 = arith.constant 0 : i32
    %c0_i32_0 = arith.constant 0 : i32
    return %arg0, %c0_i32 : i32, i32
  }
  func.func @transform_1(%arg0: i32) -> (i32, i32) {
    %c0_i32 = arith.constant 0 : i32
    %c0_i32_0 = arith.constant 0 : i32
    %c0_i32_1 = arith.constant 0 : i32
    return %c0_i32, %c0_i32_0 : i32, i32
  }
  func.func @transform_2(%arg0: i32) -> (i32, i32) {
    %c0_i32 = arith.constant 0 : i32
    %c0_i32_0 = arith.constant 0 : i32
    return %arg0, %c0_i32 : i32, i32
  }
  func.func @transform_3(%arg0: i32) -> (i32, i32) {
    %c0_i32 = arith.constant 0 : i32
    %c0_i32_0 = arith.constant 0 : i32
    %c0_i32_1 = arith.constant 0 : i32
    return %c0_i32, %c0_i32_0 : i32, i32
  }
  func.func @transform_4(%arg0: i32) -> (i32, i32) {
    %c0_i32 = arith.constant 0 : i32
    %c0_i32_0 = arith.constant 0 : i32
    %c0_i32_1 = arith.constant 0 : i32
    return %c0_i32, %c0_i32_0 : i32, i32
  }
}

module attributes {stable_mosaic.version = 11 : i64} {
  func.func @_matmul_stats_kernel(%arg0: i32, %arg1: memref<32x324xbf16, #tpu.memory_space<vmem>>, %arg2: memref<324x128xbf16, #tpu.memory_space<vmem>>, %arg3: memref<32x128xf32, #tpu.memory_space<vmem>>, %arg4: memref<1x128xf32, #tpu.memory_space<vmem>>, %arg5: memref<1x128xf32, #tpu.memory_space<vmem>>) attributes {dimension_semantics = [#tpu.dimension_semantics<arbitrary>], iteration_bounds = array<i64: 1>, scalar_prefetch = 0 : i64, scratch_operands = 0 : i64, tpu.core_type = #tpu.core_type<tc>, window_params = [{transform_indices = @transform_0, window_bounds = array<i64: 32, 324>}, {pipeline_mode = #tpu.pipeline_mode<synchronous>, transform_indices = @transform_1, window_bounds = array<i64: 324, 128>}, {transform_indices = @transform_2, window_bounds = array<i64: 32, 128>}, {pipeline_mode = #tpu.pipeline_mode<synchronous>, transform_indices = @transform_3, window_bounds = array<i64: 1, 128>}, {pipeline_mode = #tpu.pipeline_mode<synchronous>, transform_indices = @transform_4, window_bounds = array<i64: 1, 128>}]} {
    %c0_i32 = arith.constant 0 : i32
    %0 = arith.cmpi eq, %arg0, %c0_i32 : i32
    %1 = arith.extui %0 : i1 to i32
    %c0_i32_0 = arith.constant 0 : i32
    %2 = arith.cmpi ne, %1, %c0_i32_0 : i32
    scf.if %2 {
      %cst_16 = arith.constant 0.000000e+00 : f32
      %18 = vector.broadcast %cst_16 : f32 to vector<1x128xf32>
      %c0_17 = arith.constant 0 : index
      %c0_18 = arith.constant 0 : index
      %19 = vector.load %arg4[%c0_17, %c0_18] : memref<1x128xf32, #tpu.memory_space<vmem>>, vector<1x128xf32>
      tpu.vector_store %arg4[%c0_17, %c0_18], %18 {strides = array<i32>} : memref<1x128xf32, #tpu.memory_space<vmem>>, vector<1x128xf32>,
      %cst_19 = arith.constant 0.000000e+00 : f32
      %20 = vector.broadcast %cst_19 : f32 to vector<1x128xf32>
      %c0_20 = arith.constant 0 : index
      %c0_21 = arith.constant 0 : index
      %21 = vector.load %arg5[%c0_20, %c0_21] : memref<1x128xf32, #tpu.memory_space<vmem>>, vector<1x128xf32>
      tpu.vector_store %arg5[%c0_20, %c0_21], %20 {strides = array<i32>} : memref<1x128xf32, #tpu.memory_space<vmem>>, vector<1x128xf32>,
    } else {
    }
    %c0 = arith.constant 0 : index
    %c0_1 = arith.constant 0 : index
    %3 = vector.load %arg1[%c0, %c0_1] : memref<32x324xbf16, #tpu.memory_space<vmem>>, vector<32x324xbf16>
    %c0_2 = arith.constant 0 : index
    %c0_3 = arith.constant 0 : index
    %4 = vector.load %arg2[%c0_2, %c0_3] : memref<324x128xbf16, #tpu.memory_space<vmem>>, vector<324x128xbf16>
    %cst = arith.constant dense<0.000000e+00> : vector<32x128xf32>
    %5 = tpu.matmul %3, %4, %cst {dimension_numbers = #tpu.dot_dimension_numbers<[1], [0], [0], [1], [0, 0, 1, 1], [], []>} : vector<32x324xbf16>, vector<324x128xbf16>, vector<32x128xf32> -> vector<32x128xf32>
    %c0_4 = arith.constant 0 : index
    %c0_5 = arith.constant 0 : index
    %6 = vector.load %arg3[%c0_4, %c0_5] : memref<32x128xf32, #tpu.memory_space<vmem>>, vector<32x128xf32>
    tpu.vector_store %arg3[%c0_4, %c0_5], %5 {strides = array<i32>} : memref<32x128xf32, #tpu.memory_space<vmem>>, vector<32x128xf32>,
    %c0_6 = arith.constant 0 : index
    %c0_7 = arith.constant 0 : index
    %7 = vector.load %arg4[%c0_6, %c0_7] : memref<1x128xf32, #tpu.memory_space<vmem>>, vector<1x128xf32>
    %cst_8 = arith.constant dense<0.000000e+00> : vector<128xf32>
    %8 = vector.multi_reduction <add>, %5, %cst_8 [0] : vector<32x128xf32> to vector<128xf32>
    %9 = vector.shape_cast %8 : vector<128xf32> to vector<1x128xf32>
    %10 = arith.addf %7, %9 : vector<1x128xf32>
    %c0_9 = arith.constant 0 : index
    %c0_10 = arith.constant 0 : index
    %11 = vector.load %arg4[%c0_9, %c0_10] : memref<1x128xf32, #tpu.memory_space<vmem>>, vector<1x128xf32>
    tpu.vector_store %arg4[%c0_9, %c0_10], %10 {strides = array<i32>} : memref<1x128xf32, #tpu.memory_space<vmem>>, vector<1x128xf32>,
    %c0_11 = arith.constant 0 : index
    %c0_12 = arith.constant 0 : index
    %12 = vector.load %arg5[%c0_11, %c0_12] : memref<1x128xf32, #tpu.memory_space<vmem>>, vector<1x128xf32>
    %13 = arith.mulf %5, %5 : vector<32x128xf32>
    %cst_13 = arith.constant dense<0.000000e+00> : vector<128xf32>
    %14 = vector.multi_reduction <add>, %13, %cst_13 [0] : vector<32x128xf32> to vector<128xf32>
    %15 = vector.shape_cast %14 : vector<128xf32> to vector<1x128xf32>
    %16 = arith.addf %12, %15 : vector<1x128xf32>
    %c0_14 = arith.constant 0 : index
    %c0_15 = arith.constant 0 : index
    %17 = vector.load %arg5[%c0_14, %c0_15] : memref<1x128xf32, #tpu.memory_space<vmem>>, vector<1x128xf32>
    tpu.vector_store %arg5[%c0_14, %c0_15], %16 {strides = array<i32>} : memref<1x128xf32, #tpu.memory_space<vmem>>, vector<1x128xf32>,
    return
  }
  func.func @transform_0(%arg0: i32) -> (i32, i32) {
    %c0_i32 = arith.constant 0 : i32
    %c0_i32_0 = arith.constant 0 : i32
    return %arg0, %c0_i32 : i32, i32
  }
  func.func @transform_1(%arg0: i32) -> (i32, i32) {
    %c0_i32 = arith.constant 0 : i32
    %c0_i32_0 = arith.constant 0 : i32
    %c0_i32_1 = arith.constant 0 : i32
    return %c0_i32, %c0_i32_0 : i32, i32
  }
  func.func @transform_2(%arg0: i32) -> (i32, i32) {
    %c0_i32 = arith.constant 0 : i32
    %c0_i32_0 = arith.constant 0 : i32
    return %arg0, %c0_i32 : i32, i32
  }
  func.func @transform_3(%arg0: i32) -> (i32, i32) {
    %c0_i32 = arith.constant 0 : i32
    %c0_i32_0 = arith.constant 0 : i32
    %c0_i32_1 = arith.constant 0 : i32
    return %c0_i32, %c0_i32_0 : i32, i32
  }
  func.func @transform_4(%arg0: i32) -> (i32, i32) {
    %c0_i32 = arith.constant 0 : i32
    %c0_i32_0 = arith.constant 0 : i32
    %c0_i32_1 = arith.constant 0 : i32
    return %c0_i32, %c0_i32_0 : i32, i32
  }
}

module attributes {stable_mosaic.version = 11 : i64} {
  func.func @_affine_act_kernel(%arg0: i32, %arg1: memref<32x128xf32, #tpu.memory_space<vmem>>, %arg2: memref<1x128xf32, #tpu.memory_space<vmem>>, %arg3: memref<1x128xf32, #tpu.memory_space<vmem>>, %arg4: memref<32x128xf32, #tpu.memory_space<vmem>>) attributes {dimension_semantics = [#tpu.dimension_semantics<parallel>], iteration_bounds = array<i64: 1>, scalar_prefetch = 0 : i64, scratch_operands = 0 : i64, tpu.core_type = #tpu.core_type<tc>, window_params = [{transform_indices = @transform_0, window_bounds = array<i64: 32, 128>}, {pipeline_mode = #tpu.pipeline_mode<synchronous>, transform_indices = @transform_1, window_bounds = array<i64: 1, 128>}, {pipeline_mode = #tpu.pipeline_mode<synchronous>, transform_indices = @transform_2, window_bounds = array<i64: 1, 128>}, {transform_indices = @transform_3, window_bounds = array<i64: 32, 128>}]} {
    %c0 = arith.constant 0 : index
    %c0_0 = arith.constant 0 : index
    %0 = vector.load %arg1[%c0, %c0_0] : memref<32x128xf32, #tpu.memory_space<vmem>>, vector<32x128xf32>
    %c0_1 = arith.constant 0 : index
    %c0_2 = arith.constant 0 : index
    %1 = vector.load %arg2[%c0_1, %c0_2] : memref<1x128xf32, #tpu.memory_space<vmem>>, vector<1x128xf32>
    %2 = vector.broadcast %1 : vector<1x128xf32> to vector<32x128xf32>
    %3 = arith.mulf %0, %2 : vector<32x128xf32>
    %c0_3 = arith.constant 0 : index
    %c0_4 = arith.constant 0 : index
    %4 = vector.load %arg3[%c0_3, %c0_4] : memref<1x128xf32, #tpu.memory_space<vmem>>, vector<1x128xf32>
    %5 = vector.broadcast %4 : vector<1x128xf32> to vector<32x128xf32>
    %6 = arith.addf %3, %5 : vector<32x128xf32>
    %cst = arith.constant 0.000000e+00 : f32
    %7 = vector.broadcast %cst : f32 to vector<32x128xf32>
    %8 = arith.maximumf %6, %7 : vector<32x128xf32>
    %c0_5 = arith.constant 0 : index
    %c0_6 = arith.constant 0 : index
    %9 = vector.load %arg4[%c0_5, %c0_6] : memref<32x128xf32, #tpu.memory_space<vmem>>, vector<32x128xf32>
    tpu.vector_store %arg4[%c0_5, %c0_6], %8 {strides = array<i32>} : memref<32x128xf32, #tpu.memory_space<vmem>>, vector<32x128xf32>,
    return
  }
  func.func @transform_0(%arg0: i32) -> (i32, i32) {
    %c0_i32 = arith.constant 0 : i32
    %c0_i32_0 = arith.constant 0 : i32
    return %arg0, %c0_i32 : i32, i32
  }
  func.func @transform_1(%arg0: i32) -> (i32, i32) {
    %c0_i32 = arith.constant 0 : i32
    %c0_i32_0 = arith.constant 0 : i32
    %c0_i32_1 = arith.constant 0 : i32
    return %c0_i32, %c0_i32_0 : i32, i32
  }
  func.func @transform_2(%arg0: i32) -> (i32, i32) {
    %c0_i32 = arith.constant 0 : i32
    %c0_i32_0 = arith.constant 0 : i32
    %c0_i32_1 = arith.constant 0 : i32
    return %c0_i32, %c0_i32_0 : i32, i32
  }
  func.func @transform_3(%arg0: i32) -> (i32, i32) {
    %c0_i32 = arith.constant 0 : i32
    %c0_i32_0 = arith.constant 0 : i32
    return %arg0, %c0_i32 : i32, i32
  }
}

module attributes {stable_mosaic.version = 11 : i64} {
  func.func @_matmul_kernel(%arg0: i32, %arg1: memref<32x324xbf16, #tpu.memory_space<vmem>>, %arg2: memref<324x64xbf16, #tpu.memory_space<vmem>>, %arg3: memref<32x64xf32, #tpu.memory_space<vmem>>) attributes {dimension_semantics = [#tpu.dimension_semantics<parallel>], iteration_bounds = array<i64: 1>, scalar_prefetch = 0 : i64, scratch_operands = 0 : i64, tpu.core_type = #tpu.core_type<tc>, window_params = [{transform_indices = @transform_0, window_bounds = array<i64: 32, 324>}, {pipeline_mode = #tpu.pipeline_mode<synchronous>, transform_indices = @transform_1, window_bounds = array<i64: 324, 64>}, {transform_indices = @transform_2, window_bounds = array<i64: 32, 64>}]} {
    %c0 = arith.constant 0 : index
    %c0_0 = arith.constant 0 : index
    %0 = vector.load %arg1[%c0, %c0_0] : memref<32x324xbf16, #tpu.memory_space<vmem>>, vector<32x324xbf16>
    %c0_1 = arith.constant 0 : index
    %c0_2 = arith.constant 0 : index
    %1 = vector.load %arg2[%c0_1, %c0_2] : memref<324x64xbf16, #tpu.memory_space<vmem>>, vector<324x64xbf16>
    %cst = arith.constant dense<0.000000e+00> : vector<32x64xf32>
    %2 = tpu.matmul %0, %1, %cst {dimension_numbers = #tpu.dot_dimension_numbers<[1], [0], [0], [1], [0, 0, 1, 1], [], []>} : vector<32x324xbf16>, vector<324x64xbf16>, vector<32x64xf32> -> vector<32x64xf32>
    %c0_3 = arith.constant 0 : index
    %c0_4 = arith.constant 0 : index
    %3 = vector.load %arg3[%c0_3, %c0_4] : memref<32x64xf32, #tpu.memory_space<vmem>>, vector<32x64xf32>
    tpu.vector_store %arg3[%c0_3, %c0_4], %2 {strides = array<i32>} : memref<32x64xf32, #tpu.memory_space<vmem>>, vector<32x64xf32>,
    return
  }
  func.func @transform_0(%arg0: i32) -> (i32, i32) {
    %c0_i32 = arith.constant 0 : i32
    %c0_i32_0 = arith.constant 0 : i32
    return %arg0, %c0_i32 : i32, i32
  }
  func.func @transform_1(%arg0: i32) -> (i32, i32) {
    %c0_i32 = arith.constant 0 : i32
    %c0_i32_0 = arith.constant 0 : i32
    %c0_i32_1 = arith.constant 0 : i32
    return %c0_i32, %c0_i32_0 : i32, i32
  }
  func.func @transform_2(%arg0: i32) -> (i32, i32) {
    %c0_i32 = arith.constant 0 : i32
    %c0_i32_0 = arith.constant 0 : i32
    return %arg0, %c0_i32 : i32, i32
  }
}

module attributes {stable_mosaic.version = 11 : i64} {
  func.func @_affine_sigmoid_mul_kernel(%arg0: i32, %arg1: memref<128x32xf32, #tpu.memory_space<vmem>>, %arg2: memref<1x32xf32, #tpu.memory_space<vmem>>, %arg3: memref<1x32xf32, #tpu.memory_space<vmem>>, %arg4: memref<128x32xf32, #tpu.memory_space<vmem>>, %arg5: memref<128x32xf32, #tpu.memory_space<vmem>>) attributes {dimension_semantics = [#tpu.dimension_semantics<parallel>], iteration_bounds = array<i64: 1>, scalar_prefetch = 0 : i64, scratch_operands = 0 : i64, tpu.core_type = #tpu.core_type<tc>, window_params = [{transform_indices = @transform_0, window_bounds = array<i64: 128, 32>}, {pipeline_mode = #tpu.pipeline_mode<synchronous>, transform_indices = @transform_1, window_bounds = array<i64: 1, 32>}, {pipeline_mode = #tpu.pipeline_mode<synchronous>, transform_indices = @transform_2, window_bounds = array<i64: 1, 32>}, {transform_indices = @transform_3, window_bounds = array<i64: 128, 32>}, {transform_indices = @transform_4, window_bounds = array<i64: 128, 32>}]} {
    %c0 = arith.constant 0 : index
    %c0_0 = arith.constant 0 : index
    %0 = vector.load %arg1[%c0, %c0_0] : memref<128x32xf32, #tpu.memory_space<vmem>>, vector<128x32xf32>
    %c0_1 = arith.constant 0 : index
    %c0_2 = arith.constant 0 : index
    %1 = vector.load %arg2[%c0_1, %c0_2] : memref<1x32xf32, #tpu.memory_space<vmem>>, vector<1x32xf32>
    %2 = vector.broadcast %1 : vector<1x32xf32> to vector<128x32xf32>
    %3 = arith.mulf %0, %2 : vector<128x32xf32>
    %c0_3 = arith.constant 0 : index
    %c0_4 = arith.constant 0 : index
    %4 = vector.load %arg3[%c0_3, %c0_4] : memref<1x32xf32, #tpu.memory_space<vmem>>, vector<1x32xf32>
    %5 = vector.broadcast %4 : vector<1x32xf32> to vector<128x32xf32>
    %6 = arith.addf %3, %5 : vector<128x32xf32>
    %cst = arith.constant 0.000000e+00 : f32
    %7 = vector.broadcast %cst : f32 to vector<128x32xf32>
    %8 = arith.subf %7, %6 : vector<128x32xf32>
    %9 = math.exp %8 : vector<128x32xf32>
    %cst_5 = arith.constant 1.000000e+00 : f32
    %10 = vector.broadcast %cst_5 : f32 to vector<128x32xf32>
    %11 = arith.addf %10, %9 : vector<128x32xf32>
    %cst_6 = arith.constant 1.000000e+00 : f32
    %12 = vector.broadcast %cst_6 : f32 to vector<128x32xf32>
    %13 = arith.divf %12, %11 : vector<128x32xf32>
    %c0_7 = arith.constant 0 : index
    %c0_8 = arith.constant 0 : index
    %14 = vector.load %arg4[%c0_7, %c0_8] : memref<128x32xf32, #tpu.memory_space<vmem>>, vector<128x32xf32>
    %15 = arith.mulf %13, %14 : vector<128x32xf32>
    %c0_9 = arith.constant 0 : index
    %c0_10 = arith.constant 0 : index
    %16 = vector.load %arg5[%c0_9, %c0_10] : memref<128x32xf32, #tpu.memory_space<vmem>>, vector<128x32xf32>
    tpu.vector_store %arg5[%c0_9, %c0_10], %15 {strides = array<i32>} : memref<128x32xf32, #tpu.memory_space<vmem>>, vector<128x32xf32>,
    return
  }
  func.func @transform_0(%arg0: i32) -> (i32, i32) {
    %c0_i32 = arith.constant 0 : i32
    %c0_i32_0 = arith.constant 0 : i32
    return %arg0, %c0_i32 : i32, i32
  }
  func.func @transform_1(%arg0: i32) -> (i32, i32) {
    %c0_i32 = arith.constant 0 : i32
    %c0_i32_0 = arith.constant 0 : i32
    %c0_i32_1 = arith.constant 0 : i32
    return %c0_i32, %c0_i32_0 : i32, i32
  }
  func.func @transform_2(%arg0: i32) -> (i32, i32) {
    %c0_i32 = arith.constant 0 : i32
    %c0_i32_0 = arith.constant 0 : i32
    %c0_i32_1 = arith.constant 0 : i32
    return %c0_i32, %c0_i32_0 : i32, i32
  }
  func.func @transform_3(%arg0: i32) -> (i32, i32) {
    %c0_i32 = arith.constant 0 : i32
    %c0_i32_0 = arith.constant 0 : i32
    return %arg0, %c0_i32 : i32, i32
  }
  func.func @transform_4(%arg0: i32) -> (i32, i32) {
    %c0_i32 = arith.constant 0 : i32
    %c0_i32_0 = arith.constant 0 : i32
    return %arg0, %c0_i32 : i32, i32
  }
}

module attributes {stable_mosaic.version = 11 : i64} {
  func.func @_matmul_stats_kernel(%arg0: i32, %arg1: memref<128x288xbf16, #tpu.memory_space<vmem>>, %arg2: memref<288x32xbf16, #tpu.memory_space<vmem>>, %arg3: memref<128x32xf32, #tpu.memory_space<vmem>>, %arg4: memref<1x32xf32, #tpu.memory_space<vmem>>, %arg5: memref<1x32xf32, #tpu.memory_space<vmem>>) attributes {dimension_semantics = [#tpu.dimension_semantics<arbitrary>], iteration_bounds = array<i64: 1>, scalar_prefetch = 0 : i64, scratch_operands = 0 : i64, tpu.core_type = #tpu.core_type<tc>, window_params = [{transform_indices = @transform_0, window_bounds = array<i64: 128, 288>}, {pipeline_mode = #tpu.pipeline_mode<synchronous>, transform_indices = @transform_1, window_bounds = array<i64: 288, 32>}, {transform_indices = @transform_2, window_bounds = array<i64: 128, 32>}, {pipeline_mode = #tpu.pipeline_mode<synchronous>, transform_indices = @transform_3, window_bounds = array<i64: 1, 32>}, {pipeline_mode = #tpu.pipeline_mode<synchronous>, transform_indices = @transform_4, window_bounds = array<i64: 1, 32>}]} {
    %c0_i32 = arith.constant 0 : i32
    %0 = arith.cmpi eq, %arg0, %c0_i32 : i32
    %1 = arith.extui %0 : i1 to i32
    %c0_i32_0 = arith.constant 0 : i32
    %2 = arith.cmpi ne, %1, %c0_i32_0 : i32
    scf.if %2 {
      %cst_16 = arith.constant 0.000000e+00 : f32
      %18 = vector.broadcast %cst_16 : f32 to vector<1x32xf32>
      %c0_17 = arith.constant 0 : index
      %c0_18 = arith.constant 0 : index
      %19 = vector.load %arg4[%c0_17, %c0_18] : memref<1x32xf32, #tpu.memory_space<vmem>>, vector<1x32xf32>
      tpu.vector_store %arg4[%c0_17, %c0_18], %18 {strides = array<i32>} : memref<1x32xf32, #tpu.memory_space<vmem>>, vector<1x32xf32>,
      %cst_19 = arith.constant 0.000000e+00 : f32
      %20 = vector.broadcast %cst_19 : f32 to vector<1x32xf32>
      %c0_20 = arith.constant 0 : index
      %c0_21 = arith.constant 0 : index
      %21 = vector.load %arg5[%c0_20, %c0_21] : memref<1x32xf32, #tpu.memory_space<vmem>>, vector<1x32xf32>
      tpu.vector_store %arg5[%c0_20, %c0_21], %20 {strides = array<i32>} : memref<1x32xf32, #tpu.memory_space<vmem>>, vector<1x32xf32>,
    } else {
    }
    %c0 = arith.constant 0 : index
    %c0_1 = arith.constant 0 : index
    %3 = vector.load %arg1[%c0, %c0_1] : memref<128x288xbf16, #tpu.memory_space<vmem>>, vector<128x288xbf16>
    %c0_2 = arith.constant 0 : index
    %c0_3 = arith.constant 0 : index
    %4 = vector.load %arg2[%c0_2, %c0_3] : memref<288x32xbf16, #tpu.memory_space<vmem>>, vector<288x32xbf16>
    %cst = arith.constant dense<0.000000e+00> : vector<128x32xf32>
    %5 = tpu.matmul %3, %4, %cst {dimension_numbers = #tpu.dot_dimension_numbers<[1], [0], [0], [1], [0, 0, 1, 1], [], []>} : vector<128x288xbf16>, vector<288x32xbf16>, vector<128x32xf32> -> vector<128x32xf32>
    %c0_4 = arith.constant 0 : index
    %c0_5 = arith.constant 0 : index
    %6 = vector.load %arg3[%c0_4, %c0_5] : memref<128x32xf32, #tpu.memory_space<vmem>>, vector<128x32xf32>
    tpu.vector_store %arg3[%c0_4, %c0_5], %5 {strides = array<i32>} : memref<128x32xf32, #tpu.memory_space<vmem>>, vector<128x32xf32>,
    %c0_6 = arith.constant 0 : index
    %c0_7 = arith.constant 0 : index
    %7 = vector.load %arg4[%c0_6, %c0_7] : memref<1x32xf32, #tpu.memory_space<vmem>>, vector<1x32xf32>
    %cst_8 = arith.constant dense<0.000000e+00> : vector<32xf32>
    %8 = vector.multi_reduction <add>, %5, %cst_8 [0] : vector<128x32xf32> to vector<32xf32>
    %9 = vector.shape_cast %8 : vector<32xf32> to vector<1x32xf32>
    %10 = arith.addf %7, %9 : vector<1x32xf32>
    %c0_9 = arith.constant 0 : index
    %c0_10 = arith.constant 0 : index
    %11 = vector.load %arg4[%c0_9, %c0_10] : memref<1x32xf32, #tpu.memory_space<vmem>>, vector<1x32xf32>
    tpu.vector_store %arg4[%c0_9, %c0_10], %10 {strides = array<i32>} : memref<1x32xf32, #tpu.memory_space<vmem>>, vector<1x32xf32>,
    %c0_11 = arith.constant 0 : index
    %c0_12 = arith.constant 0 : index
    %12 = vector.load %arg5[%c0_11, %c0_12] : memref<1x32xf32, #tpu.memory_space<vmem>>, vector<1x32xf32>
    %13 = arith.mulf %5, %5 : vector<128x32xf32>
    %cst_13 = arith.constant dense<0.000000e+00> : vector<32xf32>
    %14 = vector.multi_reduction <add>, %13, %cst_13 [0] : vector<128x32xf32> to vector<32xf32>
    %15 = vector.shape_cast %14 : vector<32xf32> to vector<1x32xf32>
    %16 = arith.addf %12, %15 : vector<1x32xf32>
    %c0_14 = arith.constant 0 : index
    %c0_15 = arith.constant 0 : index
    %17 = vector.load %arg5[%c0_14, %c0_15] : memref<1x32xf32, #tpu.memory_space<vmem>>, vector<1x32xf32>
    tpu.vector_store %arg5[%c0_14, %c0_15], %16 {strides = array<i32>} : memref<1x32xf32, #tpu.memory_space<vmem>>, vector<1x32xf32>,
    return
  }
  func.func @transform_0(%arg0: i32) -> (i32, i32) {
    %c0_i32 = arith.constant 0 : i32
    %c0_i32_0 = arith.constant 0 : i32
    return %arg0, %c0_i32 : i32, i32
  }
  func.func @transform_1(%arg0: i32) -> (i32, i32) {
    %c0_i32 = arith.constant 0 : i32
    %c0_i32_0 = arith.constant 0 : i32
    %c0_i32_1 = arith.constant 0 : i32
    return %c0_i32, %c0_i32_0 : i32, i32
  }
  func.func @transform_2(%arg0: i32) -> (i32, i32) {
    %c0_i32 = arith.constant 0 : i32
    %c0_i32_0 = arith.constant 0 : i32
    return %arg0, %c0_i32 : i32, i32
  }
  func.func @transform_3(%arg0: i32) -> (i32, i32) {
    %c0_i32 = arith.constant 0 : i32
    %c0_i32_0 = arith.constant 0 : i32
    %c0_i32_1 = arith.constant 0 : i32
    return %c0_i32, %c0_i32_0 : i32, i32
  }
  func.func @transform_4(%arg0: i32) -> (i32, i32) {
    %c0_i32 = arith.constant 0 : i32
    %c0_i32_0 = arith.constant 0 : i32
    %c0_i32_1 = arith.constant 0 : i32
    return %c0_i32, %c0_i32_0 : i32, i32
  }
}

module attributes {stable_mosaic.version = 11 : i64} {
  func.func @_matmul_stats_kernel(%arg0: i32, %arg1: memref<128x288xbf16, #tpu.memory_space<vmem>>, %arg2: memref<288x16xbf16, #tpu.memory_space<vmem>>, %arg3: memref<128x16xf32, #tpu.memory_space<vmem>>, %arg4: memref<1x16xf32, #tpu.memory_space<vmem>>, %arg5: memref<1x16xf32, #tpu.memory_space<vmem>>) attributes {dimension_semantics = [#tpu.dimension_semantics<arbitrary>], iteration_bounds = array<i64: 1>, scalar_prefetch = 0 : i64, scratch_operands = 0 : i64, tpu.core_type = #tpu.core_type<tc>, window_params = [{transform_indices = @transform_0, window_bounds = array<i64: 128, 288>}, {pipeline_mode = #tpu.pipeline_mode<synchronous>, transform_indices = @transform_1, window_bounds = array<i64: 288, 16>}, {transform_indices = @transform_2, window_bounds = array<i64: 128, 16>}, {pipeline_mode = #tpu.pipeline_mode<synchronous>, transform_indices = @transform_3, window_bounds = array<i64: 1, 16>}, {pipeline_mode = #tpu.pipeline_mode<synchronous>, transform_indices = @transform_4, window_bounds = array<i64: 1, 16>}]} {
    %c0_i32 = arith.constant 0 : i32
    %0 = arith.cmpi eq, %arg0, %c0_i32 : i32
    %1 = arith.extui %0 : i1 to i32
    %c0_i32_0 = arith.constant 0 : i32
    %2 = arith.cmpi ne, %1, %c0_i32_0 : i32
    scf.if %2 {
      %cst_16 = arith.constant 0.000000e+00 : f32
      %18 = vector.broadcast %cst_16 : f32 to vector<1x16xf32>
      %c0_17 = arith.constant 0 : index
      %c0_18 = arith.constant 0 : index
      %19 = vector.load %arg4[%c0_17, %c0_18] : memref<1x16xf32, #tpu.memory_space<vmem>>, vector<1x16xf32>
      tpu.vector_store %arg4[%c0_17, %c0_18], %18 {strides = array<i32>} : memref<1x16xf32, #tpu.memory_space<vmem>>, vector<1x16xf32>,
      %cst_19 = arith.constant 0.000000e+00 : f32
      %20 = vector.broadcast %cst_19 : f32 to vector<1x16xf32>
      %c0_20 = arith.constant 0 : index
      %c0_21 = arith.constant 0 : index
      %21 = vector.load %arg5[%c0_20, %c0_21] : memref<1x16xf32, #tpu.memory_space<vmem>>, vector<1x16xf32>
      tpu.vector_store %arg5[%c0_20, %c0_21], %20 {strides = array<i32>} : memref<1x16xf32, #tpu.memory_space<vmem>>, vector<1x16xf32>,
    } else {
    }
    %c0 = arith.constant 0 : index
    %c0_1 = arith.constant 0 : index
    %3 = vector.load %arg1[%c0, %c0_1] : memref<128x288xbf16, #tpu.memory_space<vmem>>, vector<128x288xbf16>
    %c0_2 = arith.constant 0 : index
    %c0_3 = arith.constant 0 : index
    %4 = vector.load %arg2[%c0_2, %c0_3] : memref<288x16xbf16, #tpu.memory_space<vmem>>, vector<288x16xbf16>
    %cst = arith.constant dense<0.000000e+00> : vector<128x16xf32>
    %5 = tpu.matmul %3, %4, %cst {dimension_numbers = #tpu.dot_dimension_numbers<[1], [0], [0], [1], [0, 0, 1, 1], [], []>} : vector<128x288xbf16>, vector<288x16xbf16>, vector<128x16xf32> -> vector<128x16xf32>
    %c0_4 = arith.constant 0 : index
    %c0_5 = arith.constant 0 : index
    %6 = vector.load %arg3[%c0_4, %c0_5] : memref<128x16xf32, #tpu.memory_space<vmem>>, vector<128x16xf32>
    tpu.vector_store %arg3[%c0_4, %c0_5], %5 {strides = array<i32>} : memref<128x16xf32, #tpu.memory_space<vmem>>, vector<128x16xf32>,
    %c0_6 = arith.constant 0 : index
    %c0_7 = arith.constant 0 : index
    %7 = vector.load %arg4[%c0_6, %c0_7] : memref<1x16xf32, #tpu.memory_space<vmem>>, vector<1x16xf32>
    %cst_8 = arith.constant dense<0.000000e+00> : vector<16xf32>
    %8 = vector.multi_reduction <add>, %5, %cst_8 [0] : vector<128x16xf32> to vector<16xf32>
    %9 = vector.shape_cast %8 : vector<16xf32> to vector<1x16xf32>
    %10 = arith.addf %7, %9 : vector<1x16xf32>
    %c0_9 = arith.constant 0 : index
    %c0_10 = arith.constant 0 : index
    %11 = vector.load %arg4[%c0_9, %c0_10] : memref<1x16xf32, #tpu.memory_space<vmem>>, vector<1x16xf32>
    tpu.vector_store %arg4[%c0_9, %c0_10], %10 {strides = array<i32>} : memref<1x16xf32, #tpu.memory_space<vmem>>, vector<1x16xf32>,
    %c0_11 = arith.constant 0 : index
    %c0_12 = arith.constant 0 : index
    %12 = vector.load %arg5[%c0_11, %c0_12] : memref<1x16xf32, #tpu.memory_space<vmem>>, vector<1x16xf32>
    %13 = arith.mulf %5, %5 : vector<128x16xf32>
    %cst_13 = arith.constant dense<0.000000e+00> : vector<16xf32>
    %14 = vector.multi_reduction <add>, %13, %cst_13 [0] : vector<128x16xf32> to vector<16xf32>
    %15 = vector.shape_cast %14 : vector<16xf32> to vector<1x16xf32>
    %16 = arith.addf %12, %15 : vector<1x16xf32>
    %c0_14 = arith.constant 0 : index
    %c0_15 = arith.constant 0 : index
    %17 = vector.load %arg5[%c0_14, %c0_15] : memref<1x16xf32, #tpu.memory_space<vmem>>, vector<1x16xf32>
    tpu.vector_store %arg5[%c0_14, %c0_15], %16 {strides = array<i32>} : memref<1x16xf32, #tpu.memory_space<vmem>>, vector<1x16xf32>,
    return
  }
  func.func @transform_0(%arg0: i32) -> (i32, i32) {
    %c0_i32 = arith.constant 0 : i32
    %c0_i32_0 = arith.constant 0 : i32
    return %arg0, %c0_i32 : i32, i32
  }
  func.func @transform_1(%arg0: i32) -> (i32, i32) {
    %c0_i32 = arith.constant 0 : i32
    %c0_i32_0 = arith.constant 0 : i32
    %c0_i32_1 = arith.constant 0 : i32
    return %c0_i32, %c0_i32_0 : i32, i32
  }
  func.func @transform_2(%arg0: i32) -> (i32, i32) {
    %c0_i32 = arith.constant 0 : i32
    %c0_i32_0 = arith.constant 0 : i32
    return %arg0, %c0_i32 : i32, i32
  }
  func.func @transform_3(%arg0: i32) -> (i32, i32) {
    %c0_i32 = arith.constant 0 : i32
    %c0_i32_0 = arith.constant 0 : i32
    %c0_i32_1 = arith.constant 0 : i32
    return %c0_i32, %c0_i32_0 : i32, i32
  }
  func.func @transform_4(%arg0: i32) -> (i32, i32) {
    %c0_i32 = arith.constant 0 : i32
    %c0_i32_0 = arith.constant 0 : i32
    %c0_i32_1 = arith.constant 0 : i32
    return %c0_i32, %c0_i32_0 : i32, i32
  }
}

module attributes {stable_mosaic.version = 11 : i64} {
  func.func @_gru_update_kernel(%arg0: i32, %arg1: memref<128x16xf32, #tpu.memory_space<vmem>>, %arg2: memref<1x16xf32, #tpu.memory_space<vmem>>, %arg3: memref<1x16xf32, #tpu.memory_space<vmem>>, %arg4: memref<128x16xf32, #tpu.memory_space<vmem>>, %arg5: memref<128x16xf32, #tpu.memory_space<vmem>>, %arg6: memref<128x16xf32, #tpu.memory_space<vmem>>) attributes {dimension_semantics = [#tpu.dimension_semantics<parallel>], iteration_bounds = array<i64: 1>, scalar_prefetch = 0 : i64, scratch_operands = 0 : i64, tpu.core_type = #tpu.core_type<tc>, window_params = [{transform_indices = @transform_0, window_bounds = array<i64: 128, 16>}, {pipeline_mode = #tpu.pipeline_mode<synchronous>, transform_indices = @transform_1, window_bounds = array<i64: 1, 16>}, {pipeline_mode = #tpu.pipeline_mode<synchronous>, transform_indices = @transform_2, window_bounds = array<i64: 1, 16>}, {transform_indices = @transform_3, window_bounds = array<i64: 128, 16>}, {transform_indices = @transform_4, window_bounds = array<i64: 128, 16>}, {transform_indices = @transform_5, window_bounds = array<i64: 128, 16>}]} {
    %c0 = arith.constant 0 : index
    %c0_0 = arith.constant 0 : index
    %0 = vector.load %arg1[%c0, %c0_0] : memref<128x16xf32, #tpu.memory_space<vmem>>, vector<128x16xf32>
    %c0_1 = arith.constant 0 : index
    %c0_2 = arith.constant 0 : index
    %1 = vector.load %arg2[%c0_1, %c0_2] : memref<1x16xf32, #tpu.memory_space<vmem>>, vector<1x16xf32>
    %2 = vector.broadcast %1 : vector<1x16xf32> to vector<128x16xf32>
    %3 = arith.mulf %0, %2 : vector<128x16xf32>
    %c0_3 = arith.constant 0 : index
    %c0_4 = arith.constant 0 : index
    %4 = vector.load %arg3[%c0_3, %c0_4] : memref<1x16xf32, #tpu.memory_space<vmem>>, vector<1x16xf32>
    %5 = vector.broadcast %4 : vector<1x16xf32> to vector<128x16xf32>
    %6 = arith.addf %3, %5 : vector<128x16xf32>
    %7 = math.tanh %6 : vector<128x16xf32>
    %c0_5 = arith.constant 0 : index
    %c0_6 = arith.constant 0 : index
    %8 = vector.load %arg4[%c0_5, %c0_6] : memref<128x16xf32, #tpu.memory_space<vmem>>, vector<128x16xf32>
    %cst = arith.constant 1.000000e+00 : f32
    %9 = vector.broadcast %cst : f32 to vector<128x16xf32>
    %10 = arith.subf %9, %8 : vector<128x16xf32>
    %c0_7 = arith.constant 0 : index
    %c0_8 = arith.constant 0 : index
    %11 = vector.load %arg5[%c0_7, %c0_8] : memref<128x16xf32, #tpu.memory_space<vmem>>, vector<128x16xf32>
    %12 = arith.mulf %10, %11 : vector<128x16xf32>
    %13 = arith.mulf %8, %7 : vector<128x16xf32>
    %14 = arith.addf %12, %13 : vector<128x16xf32>
    %c0_9 = arith.constant 0 : index
    %c0_10 = arith.constant 0 : index
    %15 = vector.load %arg6[%c0_9, %c0_10] : memref<128x16xf32, #tpu.memory_space<vmem>>, vector<128x16xf32>
    tpu.vector_store %arg6[%c0_9, %c0_10], %14 {strides = array<i32>} : memref<128x16xf32, #tpu.memory_space<vmem>>, vector<128x16xf32>,
    return
  }
  func.func @transform_0(%arg0: i32) -> (i32, i32) {
    %c0_i32 = arith.constant 0 : i32
    %c0_i32_0 = arith.constant 0 : i32
    return %arg0, %c0_i32 : i32, i32
  }
  func.func @transform_1(%arg0: i32) -> (i32, i32) {
    %c0_i32 = arith.constant 0 : i32
    %c0_i32_0 = arith.constant 0 : i32
    %c0_i32_1 = arith.constant 0 : i32
    return %c0_i32, %c0_i32_0 : i32, i32
  }
  func.func @transform_2(%arg0: i32) -> (i32, i32) {
    %c0_i32 = arith.constant 0 : i32
    %c0_i32_0 = arith.constant 0 : i32
    %c0_i32_1 = arith.constant 0 : i32
    return %c0_i32, %c0_i32_0 : i32, i32
  }
  func.func @transform_3(%arg0: i32) -> (i32, i32) {
    %c0_i32 = arith.constant 0 : i32
    %c0_i32_0 = arith.constant 0 : i32
    return %arg0, %c0_i32 : i32, i32
  }
  func.func @transform_4(%arg0: i32) -> (i32, i32) {
    %c0_i32 = arith.constant 0 : i32
    %c0_i32_0 = arith.constant 0 : i32
    return %arg0, %c0_i32 : i32, i32
  }
  func.func @transform_5(%arg0: i32) -> (i32, i32) {
    %c0_i32 = arith.constant 0 : i32
    %c0_i32_0 = arith.constant 0 : i32
    return %arg0, %c0_i32 : i32, i32
  }
}

module attributes {stable_mosaic.version = 11 : i64} {
  func.func @_matmul_stats_kernel(%arg0: i32, %arg1: memref<128x432xbf16, #tpu.memory_space<vmem>>, %arg2: memref<432x64xbf16, #tpu.memory_space<vmem>>, %arg3: memref<128x64xf32, #tpu.memory_space<vmem>>, %arg4: memref<1x64xf32, #tpu.memory_space<vmem>>, %arg5: memref<1x64xf32, #tpu.memory_space<vmem>>) attributes {dimension_semantics = [#tpu.dimension_semantics<arbitrary>], iteration_bounds = array<i64: 1>, scalar_prefetch = 0 : i64, scratch_operands = 0 : i64, tpu.core_type = #tpu.core_type<tc>, window_params = [{transform_indices = @transform_0, window_bounds = array<i64: 128, 432>}, {pipeline_mode = #tpu.pipeline_mode<synchronous>, transform_indices = @transform_1, window_bounds = array<i64: 432, 64>}, {transform_indices = @transform_2, window_bounds = array<i64: 128, 64>}, {pipeline_mode = #tpu.pipeline_mode<synchronous>, transform_indices = @transform_3, window_bounds = array<i64: 1, 64>}, {pipeline_mode = #tpu.pipeline_mode<synchronous>, transform_indices = @transform_4, window_bounds = array<i64: 1, 64>}]} {
    %c0_i32 = arith.constant 0 : i32
    %0 = arith.cmpi eq, %arg0, %c0_i32 : i32
    %1 = arith.extui %0 : i1 to i32
    %c0_i32_0 = arith.constant 0 : i32
    %2 = arith.cmpi ne, %1, %c0_i32_0 : i32
    scf.if %2 {
      %cst_16 = arith.constant 0.000000e+00 : f32
      %18 = vector.broadcast %cst_16 : f32 to vector<1x64xf32>
      %c0_17 = arith.constant 0 : index
      %c0_18 = arith.constant 0 : index
      %19 = vector.load %arg4[%c0_17, %c0_18] : memref<1x64xf32, #tpu.memory_space<vmem>>, vector<1x64xf32>
      tpu.vector_store %arg4[%c0_17, %c0_18], %18 {strides = array<i32>} : memref<1x64xf32, #tpu.memory_space<vmem>>, vector<1x64xf32>,
      %cst_19 = arith.constant 0.000000e+00 : f32
      %20 = vector.broadcast %cst_19 : f32 to vector<1x64xf32>
      %c0_20 = arith.constant 0 : index
      %c0_21 = arith.constant 0 : index
      %21 = vector.load %arg5[%c0_20, %c0_21] : memref<1x64xf32, #tpu.memory_space<vmem>>, vector<1x64xf32>
      tpu.vector_store %arg5[%c0_20, %c0_21], %20 {strides = array<i32>} : memref<1x64xf32, #tpu.memory_space<vmem>>, vector<1x64xf32>,
    } else {
    }
    %c0 = arith.constant 0 : index
    %c0_1 = arith.constant 0 : index
    %3 = vector.load %arg1[%c0, %c0_1] : memref<128x432xbf16, #tpu.memory_space<vmem>>, vector<128x432xbf16>
    %c0_2 = arith.constant 0 : index
    %c0_3 = arith.constant 0 : index
    %4 = vector.load %arg2[%c0_2, %c0_3] : memref<432x64xbf16, #tpu.memory_space<vmem>>, vector<432x64xbf16>
    %cst = arith.constant dense<0.000000e+00> : vector<128x64xf32>
    %5 = tpu.matmul %3, %4, %cst {dimension_numbers = #tpu.dot_dimension_numbers<[1], [0], [0], [1], [0, 0, 1, 1], [], []>} : vector<128x432xbf16>, vector<432x64xbf16>, vector<128x64xf32> -> vector<128x64xf32>
    %c0_4 = arith.constant 0 : index
    %c0_5 = arith.constant 0 : index
    %6 = vector.load %arg3[%c0_4, %c0_5] : memref<128x64xf32, #tpu.memory_space<vmem>>, vector<128x64xf32>
    tpu.vector_store %arg3[%c0_4, %c0_5], %5 {strides = array<i32>} : memref<128x64xf32, #tpu.memory_space<vmem>>, vector<128x64xf32>,
    %c0_6 = arith.constant 0 : index
    %c0_7 = arith.constant 0 : index
    %7 = vector.load %arg4[%c0_6, %c0_7] : memref<1x64xf32, #tpu.memory_space<vmem>>, vector<1x64xf32>
    %cst_8 = arith.constant dense<0.000000e+00> : vector<64xf32>
    %8 = vector.multi_reduction <add>, %5, %cst_8 [0] : vector<128x64xf32> to vector<64xf32>
    %9 = vector.shape_cast %8 : vector<64xf32> to vector<1x64xf32>
    %10 = arith.addf %7, %9 : vector<1x64xf32>
    %c0_9 = arith.constant 0 : index
    %c0_10 = arith.constant 0 : index
    %11 = vector.load %arg4[%c0_9, %c0_10] : memref<1x64xf32, #tpu.memory_space<vmem>>, vector<1x64xf32>
    tpu.vector_store %arg4[%c0_9, %c0_10], %10 {strides = array<i32>} : memref<1x64xf32, #tpu.memory_space<vmem>>, vector<1x64xf32>,
    %c0_11 = arith.constant 0 : index
    %c0_12 = arith.constant 0 : index
    %12 = vector.load %arg5[%c0_11, %c0_12] : memref<1x64xf32, #tpu.memory_space<vmem>>, vector<1x64xf32>
    %13 = arith.mulf %5, %5 : vector<128x64xf32>
    %cst_13 = arith.constant dense<0.000000e+00> : vector<64xf32>
    %14 = vector.multi_reduction <add>, %13, %cst_13 [0] : vector<128x64xf32> to vector<64xf32>
    %15 = vector.shape_cast %14 : vector<64xf32> to vector<1x64xf32>
    %16 = arith.addf %12, %15 : vector<1x64xf32>
    %c0_14 = arith.constant 0 : index
    %c0_15 = arith.constant 0 : index
    %17 = vector.load %arg5[%c0_14, %c0_15] : memref<1x64xf32, #tpu.memory_space<vmem>>, vector<1x64xf32>
    tpu.vector_store %arg5[%c0_14, %c0_15], %16 {strides = array<i32>} : memref<1x64xf32, #tpu.memory_space<vmem>>, vector<1x64xf32>,
    return
  }
  func.func @transform_0(%arg0: i32) -> (i32, i32) {
    %c0_i32 = arith.constant 0 : i32
    %c0_i32_0 = arith.constant 0 : i32
    return %arg0, %c0_i32 : i32, i32
  }
  func.func @transform_1(%arg0: i32) -> (i32, i32) {
    %c0_i32 = arith.constant 0 : i32
    %c0_i32_0 = arith.constant 0 : i32
    %c0_i32_1 = arith.constant 0 : i32
    return %c0_i32, %c0_i32_0 : i32, i32
  }
  func.func @transform_2(%arg0: i32) -> (i32, i32) {
    %c0_i32 = arith.constant 0 : i32
    %c0_i32_0 = arith.constant 0 : i32
    return %arg0, %c0_i32 : i32, i32
  }
  func.func @transform_3(%arg0: i32) -> (i32, i32) {
    %c0_i32 = arith.constant 0 : i32
    %c0_i32_0 = arith.constant 0 : i32
    %c0_i32_1 = arith.constant 0 : i32
    return %c0_i32, %c0_i32_0 : i32, i32
  }
  func.func @transform_4(%arg0: i32) -> (i32, i32) {
    %c0_i32 = arith.constant 0 : i32
    %c0_i32_0 = arith.constant 0 : i32
    %c0_i32_1 = arith.constant 0 : i32
    return %c0_i32, %c0_i32_0 : i32, i32
  }
}

module attributes {stable_mosaic.version = 11 : i64} {
  func.func @_affine_act_kernel(%arg0: i32, %arg1: memref<128x64xf32, #tpu.memory_space<vmem>>, %arg2: memref<1x64xf32, #tpu.memory_space<vmem>>, %arg3: memref<1x64xf32, #tpu.memory_space<vmem>>, %arg4: memref<128x64xf32, #tpu.memory_space<vmem>>) attributes {dimension_semantics = [#tpu.dimension_semantics<parallel>], iteration_bounds = array<i64: 1>, scalar_prefetch = 0 : i64, scratch_operands = 0 : i64, tpu.core_type = #tpu.core_type<tc>, window_params = [{transform_indices = @transform_0, window_bounds = array<i64: 128, 64>}, {pipeline_mode = #tpu.pipeline_mode<synchronous>, transform_indices = @transform_1, window_bounds = array<i64: 1, 64>}, {pipeline_mode = #tpu.pipeline_mode<synchronous>, transform_indices = @transform_2, window_bounds = array<i64: 1, 64>}, {transform_indices = @transform_3, window_bounds = array<i64: 128, 64>}]} {
    %c0 = arith.constant 0 : index
    %c0_0 = arith.constant 0 : index
    %0 = vector.load %arg1[%c0, %c0_0] : memref<128x64xf32, #tpu.memory_space<vmem>>, vector<128x64xf32>
    %c0_1 = arith.constant 0 : index
    %c0_2 = arith.constant 0 : index
    %1 = vector.load %arg2[%c0_1, %c0_2] : memref<1x64xf32, #tpu.memory_space<vmem>>, vector<1x64xf32>
    %2 = vector.broadcast %1 : vector<1x64xf32> to vector<128x64xf32>
    %3 = arith.mulf %0, %2 : vector<128x64xf32>
    %c0_3 = arith.constant 0 : index
    %c0_4 = arith.constant 0 : index
    %4 = vector.load %arg3[%c0_3, %c0_4] : memref<1x64xf32, #tpu.memory_space<vmem>>, vector<1x64xf32>
    %5 = vector.broadcast %4 : vector<1x64xf32> to vector<128x64xf32>
    %6 = arith.addf %3, %5 : vector<128x64xf32>
    %cst = arith.constant 0.000000e+00 : f32
    %7 = vector.broadcast %cst : f32 to vector<128x64xf32>
    %8 = arith.maximumf %6, %7 : vector<128x64xf32>
    %c0_5 = arith.constant 0 : index
    %c0_6 = arith.constant 0 : index
    %9 = vector.load %arg4[%c0_5, %c0_6] : memref<128x64xf32, #tpu.memory_space<vmem>>, vector<128x64xf32>
    tpu.vector_store %arg4[%c0_5, %c0_6], %8 {strides = array<i32>} : memref<128x64xf32, #tpu.memory_space<vmem>>, vector<128x64xf32>,
    return
  }
  func.func @transform_0(%arg0: i32) -> (i32, i32) {
    %c0_i32 = arith.constant 0 : i32
    %c0_i32_0 = arith.constant 0 : i32
    return %arg0, %c0_i32 : i32, i32
  }
  func.func @transform_1(%arg0: i32) -> (i32, i32) {
    %c0_i32 = arith.constant 0 : i32
    %c0_i32_0 = arith.constant 0 : i32
    %c0_i32_1 = arith.constant 0 : i32
    return %c0_i32, %c0_i32_0 : i32, i32
  }
  func.func @transform_2(%arg0: i32) -> (i32, i32) {
    %c0_i32 = arith.constant 0 : i32
    %c0_i32_0 = arith.constant 0 : i32
    %c0_i32_1 = arith.constant 0 : i32
    return %c0_i32, %c0_i32_0 : i32, i32
  }
  func.func @transform_3(%arg0: i32) -> (i32, i32) {
    %c0_i32 = arith.constant 0 : i32
    %c0_i32_0 = arith.constant 0 : i32
    return %arg0, %c0_i32 : i32, i32
  }
}

module attributes {stable_mosaic.version = 11 : i64} {
  func.func @_matmul_stats_kernel(%arg0: i32, %arg1: memref<256x144xbf16, #tpu.memory_space<vmem>>, %arg2: memref<144x16xbf16, #tpu.memory_space<vmem>>, %arg3: memref<256x16xf32, #tpu.memory_space<vmem>>, %arg4: memref<1x16xf32, #tpu.memory_space<vmem>>, %arg5: memref<1x16xf32, #tpu.memory_space<vmem>>) attributes {dimension_semantics = [#tpu.dimension_semantics<arbitrary>], iteration_bounds = array<i64: 2>, scalar_prefetch = 0 : i64, scratch_operands = 0 : i64, tpu.core_type = #tpu.core_type<tc>, window_params = [{transform_indices = @transform_0, window_bounds = array<i64: 256, 144>}, {pipeline_mode = #tpu.pipeline_mode<synchronous>, transform_indices = @transform_1, window_bounds = array<i64: 144, 16>}, {transform_indices = @transform_2, window_bounds = array<i64: 256, 16>}, {pipeline_mode = #tpu.pipeline_mode<synchronous>, transform_indices = @transform_3, window_bounds = array<i64: 1, 16>}, {pipeline_mode = #tpu.pipeline_mode<synchronous>, transform_indices = @transform_4, window_bounds = array<i64: 1, 16>}]} {
    %c0_i32 = arith.constant 0 : i32
    %0 = arith.cmpi eq, %arg0, %c0_i32 : i32
    %1 = arith.extui %0 : i1 to i32
    %c0_i32_0 = arith.constant 0 : i32
    %2 = arith.cmpi ne, %1, %c0_i32_0 : i32
    scf.if %2 {
      %cst_16 = arith.constant 0.000000e+00 : f32
      %18 = vector.broadcast %cst_16 : f32 to vector<1x16xf32>
      %c0_17 = arith.constant 0 : index
      %c0_18 = arith.constant 0 : index
      %19 = vector.load %arg4[%c0_17, %c0_18] : memref<1x16xf32, #tpu.memory_space<vmem>>, vector<1x16xf32>
      tpu.vector_store %arg4[%c0_17, %c0_18], %18 {strides = array<i32>} : memref<1x16xf32, #tpu.memory_space<vmem>>, vector<1x16xf32>,
      %cst_19 = arith.constant 0.000000e+00 : f32
      %20 = vector.broadcast %cst_19 : f32 to vector<1x16xf32>
      %c0_20 = arith.constant 0 : index
      %c0_21 = arith.constant 0 : index
      %21 = vector.load %arg5[%c0_20, %c0_21] : memref<1x16xf32, #tpu.memory_space<vmem>>, vector<1x16xf32>
      tpu.vector_store %arg5[%c0_20, %c0_21], %20 {strides = array<i32>} : memref<1x16xf32, #tpu.memory_space<vmem>>, vector<1x16xf32>,
    } else {
    }
    %c0 = arith.constant 0 : index
    %c0_1 = arith.constant 0 : index
    %3 = vector.load %arg1[%c0, %c0_1] : memref<256x144xbf16, #tpu.memory_space<vmem>>, vector<256x144xbf16>
    %c0_2 = arith.constant 0 : index
    %c0_3 = arith.constant 0 : index
    %4 = vector.load %arg2[%c0_2, %c0_3] : memref<144x16xbf16, #tpu.memory_space<vmem>>, vector<144x16xbf16>
    %cst = arith.constant dense<0.000000e+00> : vector<256x16xf32>
    %5 = tpu.matmul %3, %4, %cst {dimension_numbers = #tpu.dot_dimension_numbers<[1], [0], [0], [1], [0, 0, 1, 1], [], []>} : vector<256x144xbf16>, vector<144x16xbf16>, vector<256x16xf32> -> vector<256x16xf32>
    %c0_4 = arith.constant 0 : index
    %c0_5 = arith.constant 0 : index
    %6 = vector.load %arg3[%c0_4, %c0_5] : memref<256x16xf32, #tpu.memory_space<vmem>>, vector<256x16xf32>
    tpu.vector_store %arg3[%c0_4, %c0_5], %5 {strides = array<i32>} : memref<256x16xf32, #tpu.memory_space<vmem>>, vector<256x16xf32>,
    %c0_6 = arith.constant 0 : index
    %c0_7 = arith.constant 0 : index
    %7 = vector.load %arg4[%c0_6, %c0_7] : memref<1x16xf32, #tpu.memory_space<vmem>>, vector<1x16xf32>
    %cst_8 = arith.constant dense<0.000000e+00> : vector<16xf32>
    %8 = vector.multi_reduction <add>, %5, %cst_8 [0] : vector<256x16xf32> to vector<16xf32>
    %9 = vector.shape_cast %8 : vector<16xf32> to vector<1x16xf32>
    %10 = arith.addf %7, %9 : vector<1x16xf32>
    %c0_9 = arith.constant 0 : index
    %c0_10 = arith.constant 0 : index
    %11 = vector.load %arg4[%c0_9, %c0_10] : memref<1x16xf32, #tpu.memory_space<vmem>>, vector<1x16xf32>
    tpu.vector_store %arg4[%c0_9, %c0_10], %10 {strides = array<i32>} : memref<1x16xf32, #tpu.memory_space<vmem>>, vector<1x16xf32>,
    %c0_11 = arith.constant 0 : index
    %c0_12 = arith.constant 0 : index
    %12 = vector.load %arg5[%c0_11, %c0_12] : memref<1x16xf32, #tpu.memory_space<vmem>>, vector<1x16xf32>
    %13 = arith.mulf %5, %5 : vector<256x16xf32>
    %cst_13 = arith.constant dense<0.000000e+00> : vector<16xf32>
    %14 = vector.multi_reduction <add>, %13, %cst_13 [0] : vector<256x16xf32> to vector<16xf32>
    %15 = vector.shape_cast %14 : vector<16xf32> to vector<1x16xf32>
    %16 = arith.addf %12, %15 : vector<1x16xf32>
    %c0_14 = arith.constant 0 : index
    %c0_15 = arith.constant 0 : index
    %17 = vector.load %arg5[%c0_14, %c0_15] : memref<1x16xf32, #tpu.memory_space<vmem>>, vector<1x16xf32>
    tpu.vector_store %arg5[%c0_14, %c0_15], %16 {strides = array<i32>} : memref<1x16xf32, #tpu.memory_space<vmem>>, vector<1x16xf32>,
    return
  }
  func.func @transform_0(%arg0: i32) -> (i32, i32) {
    %c0_i32 = arith.constant 0 : i32
    %c0_i32_0 = arith.constant 0 : i32
    return %arg0, %c0_i32 : i32, i32
  }
  func.func @transform_1(%arg0: i32) -> (i32, i32) {
    %c0_i32 = arith.constant 0 : i32
    %c0_i32_0 = arith.constant 0 : i32
    %c0_i32_1 = arith.constant 0 : i32
    return %c0_i32, %c0_i32_0 : i32, i32
  }
  func.func @transform_2(%arg0: i32) -> (i32, i32) {
    %c0_i32 = arith.constant 0 : i32
    %c0_i32_0 = arith.constant 0 : i32
    return %arg0, %c0_i32 : i32, i32
  }
  func.func @transform_3(%arg0: i32) -> (i32, i32) {
    %c0_i32 = arith.constant 0 : i32
    %c0_i32_0 = arith.constant 0 : i32
    %c0_i32_1 = arith.constant 0 : i32
    return %c0_i32, %c0_i32_0 : i32, i32
  }
  func.func @transform_4(%arg0: i32) -> (i32, i32) {
    %c0_i32 = arith.constant 0 : i32
    %c0_i32_0 = arith.constant 0 : i32
    %c0_i32_1 = arith.constant 0 : i32
    return %c0_i32, %c0_i32_0 : i32, i32
  }
}

module attributes {stable_mosaic.version = 11 : i64} {
  func.func @_affine_act_kernel(%arg0: i32, %arg1: memref<256x16xf32, #tpu.memory_space<vmem>>, %arg2: memref<1x16xf32, #tpu.memory_space<vmem>>, %arg3: memref<1x16xf32, #tpu.memory_space<vmem>>, %arg4: memref<256x16xf32, #tpu.memory_space<vmem>>) attributes {dimension_semantics = [#tpu.dimension_semantics<parallel>], iteration_bounds = array<i64: 2>, scalar_prefetch = 0 : i64, scratch_operands = 0 : i64, tpu.core_type = #tpu.core_type<tc>, window_params = [{transform_indices = @transform_0, window_bounds = array<i64: 256, 16>}, {pipeline_mode = #tpu.pipeline_mode<synchronous>, transform_indices = @transform_1, window_bounds = array<i64: 1, 16>}, {pipeline_mode = #tpu.pipeline_mode<synchronous>, transform_indices = @transform_2, window_bounds = array<i64: 1, 16>}, {transform_indices = @transform_3, window_bounds = array<i64: 256, 16>}]} {
    %c0 = arith.constant 0 : index
    %c0_0 = arith.constant 0 : index
    %0 = vector.load %arg1[%c0, %c0_0] : memref<256x16xf32, #tpu.memory_space<vmem>>, vector<256x16xf32>
    %c0_1 = arith.constant 0 : index
    %c0_2 = arith.constant 0 : index
    %1 = vector.load %arg2[%c0_1, %c0_2] : memref<1x16xf32, #tpu.memory_space<vmem>>, vector<1x16xf32>
    %2 = vector.broadcast %1 : vector<1x16xf32> to vector<256x16xf32>
    %3 = arith.mulf %0, %2 : vector<256x16xf32>
    %c0_3 = arith.constant 0 : index
    %c0_4 = arith.constant 0 : index
    %4 = vector.load %arg3[%c0_3, %c0_4] : memref<1x16xf32, #tpu.memory_space<vmem>>, vector<1x16xf32>
    %5 = vector.broadcast %4 : vector<1x16xf32> to vector<256x16xf32>
    %6 = arith.addf %3, %5 : vector<256x16xf32>
    %cst = arith.constant 0.000000e+00 : f32
    %7 = vector.broadcast %cst : f32 to vector<256x16xf32>
    %8 = arith.maximumf %6, %7 : vector<256x16xf32>
    %c0_5 = arith.constant 0 : index
    %c0_6 = arith.constant 0 : index
    %9 = vector.load %arg4[%c0_5, %c0_6] : memref<256x16xf32, #tpu.memory_space<vmem>>, vector<256x16xf32>
    tpu.vector_store %arg4[%c0_5, %c0_6], %8 {strides = array<i32>} : memref<256x16xf32, #tpu.memory_space<vmem>>, vector<256x16xf32>,
    return
  }
  func.func @transform_0(%arg0: i32) -> (i32, i32) {
    %c0_i32 = arith.constant 0 : i32
    %c0_i32_0 = arith.constant 0 : i32
    return %arg0, %c0_i32 : i32, i32
  }
  func.func @transform_1(%arg0: i32) -> (i32, i32) {
    %c0_i32 = arith.constant 0 : i32
    %c0_i32_0 = arith.constant 0 : i32
    %c0_i32_1 = arith.constant 0 : i32
    return %c0_i32, %c0_i32_0 : i32, i32
  }
  func.func @transform_2(%arg0: i32) -> (i32, i32) {
    %c0_i32 = arith.constant 0 : i32
    %c0_i32_0 = arith.constant 0 : i32
    %c0_i32_1 = arith.constant 0 : i32
    return %c0_i32, %c0_i32_0 : i32, i32
  }
  func.func @transform_3(%arg0: i32) -> (i32, i32) {
    %c0_i32 = arith.constant 0 : i32
    %c0_i32_0 = arith.constant 0 : i32
    return %arg0, %c0_i32 : i32, i32
  }
}

module attributes {stable_mosaic.version = 11 : i64} {
  func.func @_matmul_kernel(%arg0: i32, %arg1: memref<512x36xbf16, #tpu.memory_space<vmem>>, %arg2: memref<36x3xbf16, #tpu.memory_space<vmem>>, %arg3: memref<512x3xf32, #tpu.memory_space<vmem>>) attributes {dimension_semantics = [#tpu.dimension_semantics<parallel>], iteration_bounds = array<i64: 4>, scalar_prefetch = 0 : i64, scratch_operands = 0 : i64, tpu.core_type = #tpu.core_type<tc>, window_params = [{transform_indices = @transform_0, window_bounds = array<i64: 512, 36>}, {pipeline_mode = #tpu.pipeline_mode<synchronous>, transform_indices = @transform_1, window_bounds = array<i64: 36, 3>}, {transform_indices = @transform_2, window_bounds = array<i64: 512, 3>}]} {
    %c0 = arith.constant 0 : index
    %c0_0 = arith.constant 0 : index
    %0 = vector.load %arg1[%c0, %c0_0] : memref<512x36xbf16, #tpu.memory_space<vmem>>, vector<512x36xbf16>
    %c0_1 = arith.constant 0 : index
    %c0_2 = arith.constant 0 : index
    %1 = vector.load %arg2[%c0_1, %c0_2] : memref<36x3xbf16, #tpu.memory_space<vmem>>, vector<36x3xbf16>
    %cst = arith.constant dense<0.000000e+00> : vector<512x3xf32>
    %2 = tpu.matmul %0, %1, %cst {dimension_numbers = #tpu.dot_dimension_numbers<[1], [0], [0], [1], [0, 0, 1, 1], [], []>} : vector<512x36xbf16>, vector<36x3xbf16>, vector<512x3xf32> -> vector<512x3xf32>
    %c0_3 = arith.constant 0 : index
    %c0_4 = arith.constant 0 : index
    %3 = vector.load %arg3[%c0_3, %c0_4] : memref<512x3xf32, #tpu.memory_space<vmem>>, vector<512x3xf32>
    tpu.vector_store %arg3[%c0_3, %c0_4], %2 {strides = array<i32>} : memref<512x3xf32, #tpu.memory_space<vmem>>, vector<512x3xf32>,
    return
  }
  func.func @transform_0(%arg0: i32) -> (i32, i32) {
    %c0_i32 = arith.constant 0 : i32
    %c0_i32_0 = arith.constant 0 : i32
    return %arg0, %c0_i32 : i32, i32
  }
  func.func @transform_1(%arg0: i32) -> (i32, i32) {
    %c0_i32 = arith.constant 0 : i32
    %c0_i32_0 = arith.constant 0 : i32
    %c0_i32_1 = arith.constant 0 : i32
    return %c0_i32, %c0_i32_0 : i32, i32
  }
  func.func @transform_2(%arg0: i32) -> (i32, i32) {
    %c0_i32 = arith.constant 0 : i32
    %c0_i32_0 = arith.constant 0 : i32
    return %arg0, %c0_i32 : i32, i32
  }
}

module attributes {stable_mosaic.version = 11 : i64} {
  func.func @_affine_act_kernel(%arg0: i32, %arg1: memref<512x3xf32, #tpu.memory_space<vmem>>, %arg2: memref<1x3xf32, #tpu.memory_space<vmem>>, %arg3: memref<1x3xf32, #tpu.memory_space<vmem>>, %arg4: memref<512x3xf32, #tpu.memory_space<vmem>>) attributes {dimension_semantics = [#tpu.dimension_semantics<parallel>], iteration_bounds = array<i64: 4>, scalar_prefetch = 0 : i64, scratch_operands = 0 : i64, tpu.core_type = #tpu.core_type<tc>, window_params = [{transform_indices = @transform_0, window_bounds = array<i64: 512, 3>}, {pipeline_mode = #tpu.pipeline_mode<synchronous>, transform_indices = @transform_1, window_bounds = array<i64: 1, 3>}, {pipeline_mode = #tpu.pipeline_mode<synchronous>, transform_indices = @transform_2, window_bounds = array<i64: 1, 3>}, {transform_indices = @transform_3, window_bounds = array<i64: 512, 3>}]} {
    %c0 = arith.constant 0 : index
    %c0_0 = arith.constant 0 : index
    %0 = vector.load %arg1[%c0, %c0_0] : memref<512x3xf32, #tpu.memory_space<vmem>>, vector<512x3xf32>
    %c0_1 = arith.constant 0 : index
    %c0_2 = arith.constant 0 : index
    %1 = vector.load %arg2[%c0_1, %c0_2] : memref<1x3xf32, #tpu.memory_space<vmem>>, vector<1x3xf32>
    %2 = vector.broadcast %1 : vector<1x3xf32> to vector<512x3xf32>
    %3 = arith.mulf %0, %2 : vector<512x3xf32>
    %c0_3 = arith.constant 0 : index
    %c0_4 = arith.constant 0 : index
    %4 = vector.load %arg3[%c0_3, %c0_4] : memref<1x3xf32, #tpu.memory_space<vmem>>, vector<1x3xf32>
    %5 = vector.broadcast %4 : vector<1x3xf32> to vector<512x3xf32>
    %6 = arith.addf %3, %5 : vector<512x3xf32>
    %7 = math.tanh %6 : vector<512x3xf32>
    %c0_5 = arith.constant 0 : index
    %c0_6 = arith.constant 0 : index
    %8 = vector.load %arg4[%c0_5, %c0_6] : memref<512x3xf32, #tpu.memory_space<vmem>>, vector<512x3xf32>
    tpu.vector_store %arg4[%c0_5, %c0_6], %7 {strides = array<i32>} : memref<512x3xf32, #tpu.memory_space<vmem>>, vector<512x3xf32>,
    return
  }
  func.func @transform_0(%arg0: i32) -> (i32, i32) {
    %c0_i32 = arith.constant 0 : i32
    %c0_i32_0 = arith.constant 0 : i32
    return %arg0, %c0_i32 : i32, i32
  }
  func.func @transform_1(%arg0: i32) -> (i32, i32) {
    %c0_i32 = arith.constant 0 : i32
    %c0_i32_0 = arith.constant 0 : i32
    %c0_i32_1 = arith.constant 0 : i32
    return %c0_i32, %c0_i32_0 : i32, i32
  }
  func.func @transform_2(%arg0: i32) -> (i32, i32) {
    %c0_i32 = arith.constant 0 : i32
    %c0_i32_0 = arith.constant 0 : i32
    %c0_i32_1 = arith.constant 0 : i32
    return %c0_i32, %c0_i32_0 : i32, i32
  }
  func.func @transform_3(%arg0: i32) -> (i32, i32) {
    %c0_i32 = arith.constant 0 : i32
    %c0_i32_0 = arith.constant 0 : i32
    return %arg0, %c0_i32 : i32, i32
  }
}

</mosaic_0001>

<llo_original>
// kernel: generator_forward.19
$region0: #{generator_forward.19}
  #allocation0 [shape = 'u32[]', space=smem, size = 0x4, offset = 0x4, fixed_abs, tag = 'smem constant byte address 0x4 - core index']
  #allocation1 [shape = 'u32[72,128]{1,0:T(1,128)}', space=vmem, size = 0x9000, scoped, tag = 'internal scratch']
  %s0 = inlined_call_operand.vmem [shape: bf16[512,48], index: 0, kind: input, shape index: {}]
  %s1 = inlined_call_operand.vmem [shape: bf16[48,8], index: 1, kind: input, shape index: {}]
  %s2 = inlined_call_operand.vmem [shape: f32[512,8], index: 2, kind: output, shape index: {0}]
  %s3 = inlined_call_operand.vmem [shape: f32[1,8], index: 3, kind: output, shape index: {1}]
  %s4 = inlined_call_operand.vmem [shape: f32[1,8], index: 4, kind: output, shape index: {2}]
  %5 = xla_tuple %s2, %s3, %s4
  %s6 = sld [smem:[#allocation0]]
  $region61: #{generator_forward.19} parent=0
    _
  %s8 = ssub.s32 1, %s6
  %s9 = scalar_select 0, %s8, %s6
  loop: start=0, step=1, limit=4
  $region2: #{generator_forward.19} parent=0 // loop_pre_header
    _
  $region3: #{generator_forward.19} parent=0 // loop_header
    %s11 = sphi 0, %s15
    %p12 = scmp.ge.s32.totalorder %s11, 4
    %s21 = sphi 0, %s23
    %s24 = sphi 0, %s21
    %s25 = sphi 0, %s24
    %s41 = sphi 0, %s25
    %s45 = sphi 0, %s45
    %s47 = sphi 0, %s45
    %s48 = sphi 0, %s47
    %s62 = sphi 0, %s48
    %s68 = sphi 0, %s70
    %s71 = sphi 0, %s68
    %s72 = sphi 0, %s71
    %s88 = sphi 0, %s72
    %s92 = sphi 0, %s92
    %s94 = sphi 0, %s92
    %s95 = sphi 0, %s94
    %s109 = sphi 0, %s95
    %s113 = sphi 0, %s113
    %s115 = sphi 0, %s113
    %s116 = sphi 0, %s115
    %s130 = sphi 0, %s116
  $region4: #{generator_forward.19} parent=0 // loop_header_branch
    %14 = sbr.rel (%p12) target = $region8
  $region5: #{generator_forward.19} parent=0 // loop_body
    %s16 = ssub.s32 %s11, 1
    %s17 = ssub.s32 %s11, 2
    %s18 = sadd.s32 %s11, 1
    %s19 = ssub.s32 %s11, %s18
    %p20 = scmp.eq.s32.totalorder %s19, 0
    %s22 = sadd.s32 %s21, 1
    %s23 = scalar_select %p20, %s21, %s22
    %p26 = pneg %p20
    %p27 = scmp.eq.s32.totalorder %s11, 1
    %p28 = por %p26, %p27
    %p29 = scmp.ne.s32.totalorder %s21, %s24
    %p30 = scmp.eq.s32.totalorder %s11, 0
    %p31 = por %p29, %p30
    %p32 = scmp.ne.s32.totalorder %s21, %s24
    %p33 = scmp.eq.s32.totalorder %s16, 1
    %p34 = por %p32, %p33
    %p35 = scmp.ne.s32.totalorder %s24, %s25
    %p36 = scmp.eq.s32.totalorder %s16, 0
    %p37 = por %p35, %p36
    %p38 = scmp.ne.s32.totalorder %s24, %s25
    %p39 = scmp.eq.s32.totalorder %s17, 1
    %p40 = por %p38, %p39
    %p42 = scmp.ne.s32.totalorder %s25, %s41
    %p43 = scmp.eq.s32.totalorder %s17, 0
    %p44 = por %p42, %p43
    %s46 = sadd.s32 %s45, 1
    %p49 = scmp.eq.s32.totalorder %s11, 1
    %p50 = scmp.ne.s32.totalorder %s45, %s47
    %p51 = scmp.eq.s32.totalorder %s11, 0
    %p52 = por %p50, %p51
    %p53 = scmp.ne.s32.totalorder %s45, %s47
    %p54 = scmp.eq.s32.totalorder %s16, 1
    %p55 = por %p53, %p54
    %p56 = scmp.ne.s32.totalorder %s47, %s48
    %p57 = scmp.eq.s32.totalorder %s16, 0
    %p58 = por %p56, %p57
    %p59 = scmp.ne.s32.totalorder %s47, %s48
    %p60 = scmp.eq.s32.totalorder %s17, 1
    %p61 = por %p59, %p60
    %p63 = scmp.ne.s32.totalorder %s48, %s62
    %p64 = scmp.eq.s32.totalorder %s17, 0
    %p65 = por %p63, %p64
    %s66 = ssub.s32 %s11, %s18
    %p67 = scmp.eq.s32.totalorder %s66, 0
    %s69 = sadd.s32 %s68, 1
    %s70 = scalar_select %p67, %s68, %s69
    %p73 = pneg %p67
    %p74 = scmp.eq.s32.totalorder %s11, 1
    %p75 = por %p73, %p74
    %p76 = scmp.ne.s32.totalorder %s68, %s71
    %p77 = scmp.eq.s32.totalorder %s11, 0
    %p78 = por %p76, %p77
    %p79 = scmp.ne.s32.totalorder %s68, %s71
    %p80 = scmp.eq.s32.totalorder %s16, 1
    %p81 = por %p79, %p80
    %p82 = scmp.ne.s32.totalorder %s71, %s72
    %p83 = scmp.eq.s32.totalorder %s16, 0
    %p84 = por %p82, %p83
    %p85 = scmp.ne.s32.totalorder %s71, %s72
    %p86 = scmp.eq.s32.totalorder %s17, 1
    %p87 = por %p85, %p86
    %p89 = scmp.ne.s32.totalorder %s72, %s88
    %p90 = scmp.eq.s32.totalorder %s17, 0
    %p91 = por %p89, %p90
    %s93 = sadd.s32 %s92, 1
    %p96 = scmp.eq.s32.totalorder %s11, 1
    %p97 = scmp.ne.s32.totalorder %s92, %s94
    %p98 = scmp.eq.s32.totalorder %s11, 0
    %p99 = por %p97, %p98
    %p100 = scmp.ne.s32.totalorder %s92, %s94
    %p101 = scmp.eq.s32.totalorder %s16, 1
    %p102 = por %p100, %p101
    %p103 = scmp.ne.s32.totalorder %s94, %s95
    %p104 = scmp.eq.s32.totalorder %s16, 0
    %p105 = por %p103, %p104
    %p106 = scmp.ne.s32.totalorder %s94, %s95
    %p107 = scmp.eq.s32.totalorder %s17, 1
    %p108 = por %p106, %p107
    %p110 = scmp.ne.s32.totalorder %s95, %s109
    %p111 = scmp.eq.s32.totalorder %s17, 0
    %p112 = por %p110, %p111
    %s114 = sadd.s32 %s113, 1
    %p117 = scmp.eq.s32.totalorder %s11, 1
    %p118 = scmp.ne.s32.totalorder %s113, %s115
    %p119 = scmp.eq.s32.totalorder %s11, 0
    %p120 = por %p118, %p119
    %p121 = scmp.ne.s32.totalorder %s113, %s115
    %p122 = scmp.eq.s32.totalorder %s16, 1
    %p123 = por %p121, %p122
    %p124 = scmp.ne.s32.totalorder %s115, %s116
    %p125 = scmp.eq.s32.totalorder %s16, 0
    %p126 = por %p124, %p125
    %p127 = scmp.ne.s32.totalorder %s115, %s116
    %p128 = scmp.eq.s32.totalorder %s17, 1
    %p129 = por %p127, %p128
    %p131 = scmp.ne.s32.totalorder %s116, %s130
    %p132 = scmp.eq.s32.totalorder %s17, 0
    %p133 = por %p131, %p132
    %p134 = scmp.le.s32.totalorder 1, %s11
    %p135 = scmp.lt.s32.totalorder %s11, 3
    %p136 = pnand %p134, %p135
    %p137 = pneg %p136
    // Predicated region
    $region9: #{generator_forward.19} parent=5 // pred_check
      _
    $region10: #{generator_forward.19} parent=5 // pred_check_branch
      %139 = sbr.rel (%p136) target = $region12
    $region11: #{generator_forward.19} parent=5 // pred_region
      %s140 = ssub.s32 %s11, 1
      // Predicated region
      $region13: #{generator_forward.19} parent=11 // pred_check
        %p141 = pneg %p58
      $region14: #{generator_forward.19} parent=11 // pred_check_branch
        %143 = sbr.rel (%p141) target = $region16
      $region15: #{generator_forward.19} parent=11 // pred_region
        _
      $region16: #{generator_forward.19} parent=11 // pred_fallthru
        _
    $region12: #{generator_forward.19} parent=5 // pred_fallthru
      _
    %p144 = scmp.lt.s32.totalorder %s11, 2
    // Predicated region
    $region17: #{generator_forward.19} parent=5 // pred_check
      %p145 = pneg %p144
    $region18: #{generator_forward.19} parent=5 // pred_check_branch
      %147 = sbr.rel (%p145) target = $region20
    $region19: #{generator_forward.19} parent=5 // pred_region
      // Predicated region
      $region21: #{generator_forward.19} parent=19 // pred_check
        %p148 = pneg %p31
      $region22: #{generator_forward.19} parent=19 // pred_check_branch
        %150 = sbr.rel (%p148) target = $region24
      $region23: #{generator_forward.19} parent=19 // pred_region
        %s151 = smul.u32 32, %s11
        %p152 = scmp.lt.s32.totalorder %s151, 63
        %s153 = scalar_select %p152, %s151, 63
        %s154 = smul.addr %s153, 4
        %s155 = scalar_lea.vmem %s0, %s154
        %s156 = smul.u32 32, %s11
      $region24: #{generator_forward.19} parent=19 // pred_fallthru
        _
    $region20: #{generator_forward.19} parent=5 // pred_fallthru
      _
    %p157 = scmp.le.s32.totalorder 1, %s11
    %p158 = scmp.lt.s32.totalorder %s11, 3
    %p159 = pnand %p157, %p158
    %p160 = pneg %p159
    // Predicated region
    $region25: #{generator_forward.19} parent=5 // pred_check
      _
    $region26: #{generator_forward.19} parent=5 // pred_check_branch
      %162 = sbr.rel (%p159) target = $region28
    $region27: #{generator_forward.19} parent=5 // pred_region
      %s163 = ssub.s32 %s11, 1
      %s164 = smul.u32 32, %s16
      %p165 = scmp.lt.s32.totalorder %s164, 63
      %s166 = scalar_select %p165, %s164, 63
      %s167 = smul.addr %s166, 4
      %s168 = scalar_lea.vmem %s0, %s167
      %p169 = pneg %p37
      %p170 = pneg %p34
      %p171 = pneg %p58
      %p172 = pneg %p55
      %p173 = pneg %p84
      %p174 = pneg %p81
      %s175 = smul.u32 32, %s16
      %p176 = scmp.lt.s32.totalorder %s175, 63
      %s177 = scalar_select %p176, %s175, 63
      %s178 = smul.addr %s177, 8
      %s179 = scalar_lea.vmem %s2, %s178
      %p180 = pneg %p105
      %p181 = pneg %p102
      %p182 = pneg %p126
      %p183 = pneg %p123
      %s184 = smul.u32 32, %s16
      %p185 = scmp.lt.s32.totalorder %s184, 63
      %s186 = scalar_select %p185, %s184, 63
      %s187 = smul.addr %s186, 4
      %s188 = scalar_lea.vmem %s0, %s187
      %s189 = smul.u32 32, %s16
      %s190 = smul.u32 32, %s16
      %p191 = scmp.lt.s32.totalorder %s190, 63
      %s192 = scalar_select %p191, %s190, 63
      %s193 = smul.addr %s192, 8
      %s194 = scalar_lea.vmem %s2, %s193
      %s195 = smul.u32 32, %s16
      %p197 = scmp.eq.s32.totalorder %s16, 0
      // Predicated region
      $region29: #{generator_forward.19} parent=27 // pred_check
        %p198 = pneg %p197
      $region30: #{generator_forward.19} parent=27 // pred_check_branch
        %200 = sbr.rel (%p198) target = $region32
      $region31: #{generator_forward.19} parent=27 // pred_region
        %vm201 = vcmask 57344
        %202 = vst.msk [vmem:[%s3] sm:$0x1] %vm201, 0.0
        %203 = vst.msk [vmem:[%s4] sm:$0x1] %vm201, 0.0
      $region32: #{generator_forward.19} parent=27 // pred_fallthru
        _
      %v204 = vld [vmem:[%s188] sm:$0xf]
      %v205 = vld [vmem:[%s188 + $0x4] sm:$0xf]
      %v206 = vld [vmem:[%s188 + $0x8] sm:$0xf]
      %v207 = vld [vmem:[%s188 + $0xc] sm:$0xf]
      %v208 = vld [vmem:[%s188 + $0x10] sm:$0xf]
      %v209 = vld [vmem:[%s188 + $0x14] sm:$0xf]
      %v210 = vld [vmem:[%s188 + $0x18] sm:$0xf]
      %v211 = vld [vmem:[%s188 + $0x1c] sm:$0xf]
      %v212 = vld [vmem:[%s188 + $0x20] sm:$0xf]
      %v213 = vld [vmem:[%s188 + $0x24] sm:$0xf]
      %v214 = vld [vmem:[%s188 + $0x28] sm:$0xf]
      %v215 = vld [vmem:[%s188 + $0x2c] sm:$0xf]
      %v216 = vld [vmem:[%s188 + $0x30] sm:$0xf]
      %v217 = vld [vmem:[%s188 + $0x34] sm:$0xf]
      %v218 = vld [vmem:[%s188 + $0x38] sm:$0xf]
      %v219 = vld [vmem:[%s188 + $0x3c] sm:$0xf]
      %v220 = vld [vmem:[%s188 + $0x40] sm:$0xf]
      %v221 = vld [vmem:[%s188 + $0x44] sm:$0xf]
      %v222 = vld [vmem:[%s188 + $0x48] sm:$0xf]
      %v223 = vld [vmem:[%s188 + $0x4c] sm:$0xf]
      %v224 = vld [vmem:[%s188 + $0x50] sm:$0xf]
      %v225 = vld [vmem:[%s188 + $0x54] sm:$0xf]
      %v226 = vld [vmem:[%s188 + $0x58] sm:$0xf]
      %v227 = vld [vmem:[%s188 + $0x5c] sm:$0xf]
      %v228 = vld [vmem:[%s188 + $0x60] sm:$0xf]
      %v229 = vld [vmem:[%s188 + $0x64] sm:$0xf]
      %v230 = vld [vmem:[%s188 + $0x68] sm:$0xf]
      %v231 = vld [vmem:[%s188 + $0x6c] sm:$0xf]
      %v232 = vld [vmem:[%s188 + $0x70] sm:$0xf]
      %v233 = vld [vmem:[%s188 + $0x74] sm:$0xf]
      %v234 = vld [vmem:[%s188 + $0x78] sm:$0xf]
      %v235 = vld [vmem:[%s188 + $0x7c] sm:$0xf]
      %v236 = vld [vmem:[%s1] sm:$0xf]
      %v237 = vld [vmem:[%s1 + $0x4] sm:$0xf]
      %v238 = vld [vmem:[%s1 + $0x8] sm:$0xf]
      %v239 = vld [vmem:[%s1 + $0xc] sm:$0xf]
      %v240 = vld [vmem:[%s1 + $0x10] sm:$0xf]
      %v241 = vld [vmem:[%s1 + $0x14] sm:$0xf]
      %v274 = vunpack.c.l.b16 %v204
      %v275 = vunpack.c.l.b16 %v205
      %v276 = vunpack.c.l.b16 %v206
      %v277 = vunpack.c.l.b16 %v207
      %v278 = vunpack.c.l.b16 %v208
      %v279 = vunpack.c.l.b16 %v209
      %v280 = vunpack.c.l.b16 %v210
      %v281 = vunpack.c.l.b16 %v211
      %v282 = vunpack.c.l.b16 %v212
      %v283 = vunpack.c.l.b16 %v213
      %v284 = vunpack.c.l.b16 %v214
      %v285 = vunpack.c.l.b16 %v215
      %v286 = vunpack.c.l.b16 %v216
      %v287 = vunpack.c.l.b16 %v217
      %v288 = vunpack.c.l.b16 %v218
      %v289 = vunpack.c.l.b16 %v219
      %v290 = vunpack.c.l.b16 %v220
      %v291 = vunpack.c.l.b16 %v221
      %v292 = vunpack.c.l.b16 %v222
      %v293 = vunpack.c.l.b16 %v223
      %v294 = vunpack.c.l.b16 %v224
      %v295 = vunpack.c.l.b16 %v225
      %v296 = vunpack.c.l.b16 %v226
      %v297 = vunpack.c.l.b16 %v227
      %v298 = vunpack.c.l.b16 %v228
      %v299 = vunpack.c.l.b16 %v229
      %v300 = vunpack.c.l.b16 %v230
      %v301 = vunpack.c.l.b16 %v231
      %v302 = vunpack.c.l.b16 %v232
      %v303 = vunpack.c.l.b16 %v233
      %v304 = vunpack.c.l.b16 %v234
      %v305 = vunpack.c.l.b16 %v235
      %v306 = vpack.c.b16 %v275, %v274
      %v307 = vpack.c.b16 %v277, %v276
      %v308 = vpack.c.b16 %v279, %v278
      %v309 = vpack.c.b16 %v281, %v280
      %v310 = vpack.c.b16 %v283, %v282
      %v311 = vpack.c.b16 %v285, %v284
      %v312 = vpack.c.b16 %v287, %v286
      %v313 = vpack.c.b16 %v289, %v288
      %v314 = vpack.c.b16 %v291, %v290
      %v315 = vpack.c.b16 %v293, %v292
      %v316 = vpack.c.b16 %v295, %v294
      %v317 = vpack.c.b16 %v297, %v296
      %v318 = vpack.c.b16 %v299, %v298
      %v319 = vpack.c.b16 %v301, %v300
      %v320 = vpack.c.b16 %v303, %v302
      %v321 = vpack.c.b16 %v305, %v304
      %v328 = vunpack.c.l.b16 %v236
      %v329 = vunpack.c.l.b16 %v237
      %v330 = vunpack.c.l.b16 %v238
      %v331 = vunpack.c.l.b16 %v239
      %v332 = vunpack.c.l.b16 %v240
      %v333 = vunpack.c.l.b16 %v241
      %v334 = vpack.c.b16 %v329, %v328
      %v335 = vpack.c.b16 %v331, %v330
      %v336 = vpack.c.b16 %v333, %v332
      %vm340 = vcmask 392192
      %v342 = vsel %vm340, %v306, 0
      %v345 = vsel %vm340, %v307, 0
      %v348 = vsel %vm340, %v308, 0
      %v351 = vsel %vm340, %v309, 0
      %v354 = vsel %vm340, %v310, 0
      %v357 = vsel %vm340, %v311, 0
      %v360 = vsel %vm340, %v312, 0
      %v363 = vsel %vm340, %v313, 0
      %v366 = vsel %vm340, %v314, 0
      %v369 = vsel %vm340, %v315, 0
      %v372 = vsel %vm340, %v316, 0
      %v375 = vsel %vm340, %v317, 0
      %v378 = vsel %vm340, %v318, 0
      %v381 = vsel %vm340, %v319, 0
      %v384 = vsel %vm340, %v320, 0
      %v387 = vsel %vm340, %v321, 0
      %389 = vmatpush.bf16.msra.mxu0 0
      %390 = vmatpush.bf16.msra.mxu0 0
      %391 = vmatpush.bf16.msra.mxu0 0
      %392 = vmatpush.bf16.msra.mxu0 0
      %393 = vmatpush.bf16.msra.mxu0 0
      %394 = vmatpush.bf16.msra.mxu0 %v336
      %395 = vmatpush.bf16.msra.mxu0 %v335
      %396 = vmatpush.bf16.msra.mxu0 %v334
      %397 = vmatmul.bf16.gmra.mxu0 %v342
      %v398 = vpop.f32.mrf.mxu0
      %v399 = vadd.f32 0.0, %v398
      %v400 = vpop.f32.mrf.mxu0
      %v401 = vadd.f32 0.0, %v400
      %402 = vmatmul.bf16.gmra.mxu0 %v345
      %v403 = vpop.f32.mrf.mxu0
      %v404 = vadd.f32 0.0, %v403
      %v405 = vpop.f32.mrf.mxu0
      %v406 = vadd.f32 0.0, %v405
      %407 = vmatmul.bf16.gmra.mxu0 %v348
      %v408 = vpop.f32.mrf.mxu0
      %v409 = vadd.f32 0.0, %v408
      %v410 = vpop.f32.mrf.mxu0
      %v411 = vadd.f32 0.0, %v410
      %412 = vmatmul.bf16.gmra.mxu0 %v351
      %v413 = vpop.f32.mrf.mxu0
      %v414 = vadd.f32 0.0, %v413
      %v415 = vpop.f32.mrf.mxu0
      %v416 = vadd.f32 0.0, %v415
      %417 = vmatmul.bf16.gmra.mxu0 %v354
      %v418 = vpop.f32.mrf.mxu0
      %v419 = vadd.f32 0.0, %v418
      %v420 = vpop.f32.mrf.mxu0
      %v421 = vadd.f32 0.0, %v420
      %422 = vmatmul.bf16.gmra.mxu0 %v357
      %v423 = vpop.f32.mrf.mxu0
      %v424 = vadd.f32 0.0, %v423
      %v425 = vpop.f32.mrf.mxu0
      %v426 = vadd.f32 0.0, %v425
      %427 = vmatmul.bf16.gmra.mxu0 %v360
      %v428 = vpop.f32.mrf.mxu0
      %v429 = vadd.f32 0.0, %v428
      %v430 = vpop.f32.mrf.mxu0
      %v431 = vadd.f32 0.0, %v430
      %432 = vmatmul.bf16.gmra.mxu0 %v363
      %v433 = vpop.f32.mrf.mxu0
      %v434 = vadd.f32 0.0, %v433
      %v435 = vpop.f32.mrf.mxu0
      %v436 = vadd.f32 0.0, %v435
      %437 = vmatmul.bf16.gmra.mxu0 %v366
      %v438 = vpop.f32.mrf.mxu0
      %v439 = vadd.f32 0.0, %v438
      %v440 = vpop.f32.mrf.mxu0
      %v441 = vadd.f32 0.0, %v440
      %442 = vmatmul.bf16.gmra.mxu0 %v369
      %v443 = vpop.f32.mrf.mxu0
      %v444 = vadd.f32 0.0, %v443
      %v445 = vpop.f32.mrf.mxu0
      %v446 = vadd.f32 0.0, %v445
      %447 = vmatmul.bf16.gmra.mxu0 %v372
      %v448 = vpop.f32.mrf.mxu0
      %v449 = vadd.f32 0.0, %v448
      %v450 = vpop.f32.mrf.mxu0
      %v451 = vadd.f32 0.0, %v450
      %452 = vmatmul.bf16.gmra.mxu0 %v375
      %v453 = vpop.f32.mrf.mxu0
      %v454 = vadd.f32 0.0, %v453
      %v455 = vpop.f32.mrf.mxu0
      %v456 = vadd.f32 0.0, %v455
      %457 = vmatmul.bf16.gmra.mxu0 %v378
      %v458 = vpop.f32.mrf.mxu0
      %v459 = vadd.f32 0.0, %v458
      %v460 = vpop.f32.mrf.mxu0
      %v461 = vadd.f32 0.0, %v460
      %462 = vmatmul.bf16.gmra.mxu0 %v381
      %v463 = vpop.f32.mrf.mxu0
      %v464 = vadd.f32 0.0, %v463
      %v465 = vpop.f32.mrf.mxu0
      %v466 = vadd.f32 0.0, %v465
      %467 = vmatmul.bf16.gmra.mxu0 %v384
      %v468 = vpop.f32.mrf.mxu0
      %v469 = vadd.f32 0.0, %v468
      %v470 = vpop.f32.mrf.mxu0
      %v471 = vadd.f32 0.0, %v470
      %472 = vmatmul.bf16.gmra.mxu0 %v387
      %v473 = vpop.f32.mrf.mxu0
      %v474 = vadd.f32 0.0, %v473
      %v475 = vpop.f32.mrf.mxu0
      %v476 = vadd.f32 0.0, %v475
      %477 = vdwg.mxu0
      %vm478 = vcmask 64512
      %479 = vst.msk [vmem:[%s194] sm:$0xff] %vm478, %v399
      %480 = vst.msk [vmem:[%s194 + $0x8] sm:$0xff] %vm478, %v401
      %481 = vst.msk [vmem:[%s194 + $0x10] sm:$0xff] %vm478, %v404
      %482 = vst.msk [vmem:[%s194 + $0x18] sm:$0xff] %vm478, %v406
      %483 = vst.msk [vmem:[%s194 + $0x20] sm:$0xff] %vm478, %v409
      %484 = vst.msk [vmem:[%s194 + $0x28] sm:$0xff] %vm478, %v411
      %485 = vst.msk [vmem:[%s194 + $0x30] sm:$0xff] %vm478, %v414
      %486 = vst.msk [vmem:[%s194 + $0x38] sm:$0xff] %vm478, %v416
      %487 = vst.msk [vmem:[%s194 + $0x40] sm:$0xff] %vm478, %v419
      %488 = vst.msk [vmem:[%s194 + $0x48] sm:$0xff] %vm478, %v421
      %489 = vst.msk [vmem:[%s194 + $0x50] sm:$0xff] %vm478, %v424
      %490 = vst.msk [vmem:[%s194 + $0x58] sm:$0xff] %vm478, %v426
      %491 = vst.msk [vmem:[%s194 + $0x60] sm:$0xff] %vm478, %v429
      %492 = vst.msk [vmem:[%s194 + $0x68] sm:$0xff] %vm478, %v431
      %493 = vst.msk [vmem:[%s194 + $0x70] sm:$0xff] %vm478, %v434
      %494 = vst.msk [vmem:[%s194 + $0x78] sm:$0xff] %vm478, %v436
      %495 = vst.msk [vmem:[%s194 + $0x80] sm:$0xff] %vm478, %v439
      %496 = vst.msk [vmem:[%s194 + $0x88] sm:$0xff] %vm478, %v441
      %497 = vst.msk [vmem:[%s194 + $0x90] sm:$0xff] %vm478, %v444
      %498 = vst.msk [vmem:[%s194 + $0x98] sm:$0xff] %vm478, %v446
      %499 = vst.msk [vmem:[%s194 + $0xa0] sm:$0xff] %vm478, %v449
      %500 = vst.msk [vmem:[%s194 + $0xa8] sm:$0xff] %vm478, %v451
      %501 = vst.msk [vmem:[%s194 + $0xb0] sm:$0xff] %vm478, %v454
      %502 = vst.msk [vmem:[%s194 + $0xb8] sm:$0xff] %vm478, %v456
      %503 = vst.msk [vmem:[%s194 + $0xc0] sm:$0xff] %vm478, %v459
      %504 = vst.msk [vmem:[%s194 + $0xc8] sm:$0xff] %vm478, %v461
      %505 = vst.msk [vmem:[%s194 + $0xd0] sm:$0xff] %vm478, %v464
      %506 = vst.msk [vmem:[%s194 + $0xd8] sm:$0xff] %vm478, %v466
      %507 = vst.msk [vmem:[%s194 + $0xe0] sm:$0xff] %vm478, %v469
      %508 = vst.msk [vmem:[%s194 + $0xe8] sm:$0xff] %vm478, %v471
      %509 = vst.msk [vmem:[%s194 + $0xf0] sm:$0xff] %vm478, %v474
      %510 = vst.msk [vmem:[%s194 + $0xf8] sm:$0xff] %vm478, %v476
      %v511 = vld [vmem:[%s3] sm:$0x1]
      %v512 = vsel %vm478, %v399, 0.0
      %v513 = vsel %vm478, %v401, 0.0
      %v514 = vadd.f32 %v512, %v513
      %v515 = vsel %vm478, %v404, 0.0
      %v516 = vadd.f32 %v514, %v515
      %v517 = vsel %vm478, %v406, 0.0
      %v518 = vadd.f32 %v516, %v517
      %v519 = vsel %vm478, %v409, 0.0
      %v520 = vadd.f32 %v518, %v519
      %v521 = vsel %vm478, %v411, 0.0
      %v522 = vadd.f32 %v520, %v521
      %v523 = vsel %vm478, %v414, 0.0
      %v524 = vadd.f32 %v522, %v523
      %v525 = vsel %vm478, %v416, 0.0
      %v526 = vadd.f32 %v524, %v525
      %v527 = vsel %vm478, %v419, 0.0
      %v528 = vadd.f32 %v526, %v527
      %v529 = vsel %vm478, %v421, 0.0
      %v530 = vadd.f32 %v528, %v529
      %v531 = vsel %vm478, %v424, 0.0
      %v532 = vadd.f32 %v530, %v531
      %v533 = vsel %vm478, %v426, 0.0
      %v534 = vadd.f32 %v532, %v533
      %v535 = vsel %vm478, %v429, 0.0
      %v536 = vadd.f32 %v534, %v535
      %v537 = vsel %vm478, %v431, 0.0
      %v538 = vadd.f32 %v536, %v537
      %v539 = vsel %vm478, %v434, 0.0
      %v540 = vadd.f32 %v538, %v539
      %v541 = vsel %vm478, %v436, 0.0
      %v542 = vadd.f32 %v540, %v541
      %v543 = vsel %vm478, %v439, 0.0
      %v544 = vadd.f32 %v542, %v543
      %v545 = vsel %vm478, %v441, 0.0
      %v546 = vadd.f32 %v544, %v545
      %v547 = vsel %vm478, %v444, 0.0
      %v548 = vadd.f32 %v546, %v547
      %v549 = vsel %vm478, %v446, 0.0
      %v550 = vadd.f32 %v548, %v549
      %v551 = vsel %vm478, %v449, 0.0
      %v552 = vadd.f32 %v550, %v551
      %v553 = vsel %vm478, %v451, 0.0
      %v554 = vadd.f32 %v552, %v553
      %v555 = vsel %vm478, %v454, 0.0
      %v556 = vadd.f32 %v554, %v555
      %v557 = vsel %vm478, %v456, 0.0
      %v558 = vadd.f32 %v556, %v557
      %v559 = vsel %vm478, %v459, 0.0
      %v560 = vadd.f32 %v558, %v559
      %v561 = vsel %vm478, %v461, 0.0
      %v562 = vadd.f32 %v560, %v561
      %v563 = vsel %vm478, %v464, 0.0
      %v564 = vadd.f32 %v562, %v563
      %v565 = vsel %vm478, %v466, 0.0
      %v566 = vadd.f32 %v564, %v565
      %v567 = vsel %vm478, %v469, 0.0
      %v568 = vadd.f32 %v566, %v567
      %v569 = vsel %vm478, %v471, 0.0
      %v570 = vadd.f32 %v568, %v569
      %v571 = vsel %vm478, %v474, 0.0
      %v572 = vadd.f32 %v570, %v571
      %v573 = vsel %vm478, %v476, 0.0
      %v574 = vadd.f32 %v572, %v573
      %v575 = vrot.slane %v574, 4
      %v576 = vadd.f32 %v574, %v575
      %v577 = vrot.slane %v576, 2
      %v578 = vadd.f32 %v576, %v577
      %v579 = vrot.slane %v578, 1
      %v580 = vadd.f32 %v578, %v579
      %v581 = vadd.f32 %v511, %v580
      %vm582 = vcmask 57344
      %583 = vst.msk [vmem:[%s3] sm:$0x1] %vm582, %v581
      %v584 = vld [vmem:[%s4] sm:$0x1]
      %v585 = vmul.f32 %v399, %v399
      %v586 = vmul.f32 %v401, %v401
      %v587 = vmul.f32 %v404, %v404
      %v588 = vmul.f32 %v406, %v406
      %v589 = vmul.f32 %v409, %v409
      %v590 = vmul.f32 %v411, %v411
      %v591 = vmul.f32 %v414, %v414
      %v592 = vmul.f32 %v416, %v416
      %v593 = vmul.f32 %v419, %v419
      %v594 = vmul.f32 %v421, %v421
      %v595 = vmul.f32 %v424, %v424
      %v596 = vmul.f32 %v426, %v426
      %v597 = vmul.f32 %v429, %v429
      %v598 = vmul.f32 %v431, %v431
      %v599 = vmul.f32 %v434, %v434
      %v600 = vmul.f32 %v436, %v436
      %v601 = vmul.f32 %v439, %v439
      %v602 = vmul.f32 %v441, %v441
      %v603 = vmul.f32 %v444, %v444
      %v604 = vmul.f32 %v446, %v446
      %v605 = vmul.f32 %v449, %v449
      %v606 = vmul.f32 %v451, %v451
      %v607 = vmul.f32 %v454, %v454
      %v608 = vmul.f32 %v456, %v456
      %v609 = vmul.f32 %v459, %v459
      %v610 = vmul.f32 %v461, %v461
      %v611 = vmul.f32 %v464, %v464
      %v612 = vmul.f32 %v466, %v466
      %v613 = vmul.f32 %v469, %v469
      %v614 = vmul.f32 %v471, %v471
      %v615 = vmul.f32 %v474, %v474
      %v616 = vmul.f32 %v476, %v476
      %v617 = vsel %vm478, %v585, 0.0
      %v618 = vsel %vm478, %v586, 0.0
      %v619 = vadd.f32 %v617, %v618
      %v620 = vsel %vm478, %v587, 0.0
      %v621 = vadd.f32 %v619, %v620
      %v622 = vsel %vm478, %v588, 0.0
      %v623 = vadd.f32 %v621, %v622
      %v624 = vsel %vm478, %v589, 0.0
      %v625 = vadd.f32 %v623, %v624
      %v626 = vsel %vm478, %v590, 0.0
      %v627 = vadd.f32 %v625, %v626
      %v628 = vsel %vm478, %v591, 0.0
      %v629 = vadd.f32 %v627, %v628
      %v630 = vsel %vm478, %v592, 0.0
      %v631 = vadd.f32 %v629, %v630
      %v632 = vsel %vm478, %v593, 0.0
      %v633 = vadd.f32 %v631, %v632
      %v634 = vsel %vm478, %v594, 0.0
      %v635 = vadd.f32 %v633, %v634
      %v636 = vsel %vm478, %v595, 0.0
      %v637 = vadd.f32 %v635, %v636
      %v638 = vsel %vm478, %v596, 0.0
      %v639 = vadd.f32 %v637, %v638
      %v640 = vsel %vm478, %v597, 0.0
      %v641 = vadd.f32 %v639, %v640
      %v642 = vsel %vm478, %v598, 0.0
      %v643 = vadd.f32 %v641, %v642
      %v644 = vsel %vm478, %v599, 0.0
      %v645 = vadd.f32 %v643, %v644
      %v646 = vsel %vm478, %v600, 0.0
      %v647 = vadd.f32 %v645, %v646
      %v648 = vsel %vm478, %v601, 0.0
      %v649 = vadd.f32 %v647, %v648
      %v650 = vsel %vm478, %v602, 0.0
      %v651 = vadd.f32 %v649, %v650
      %v652 = vsel %vm478, %v603, 0.0
      %v653 = vadd.f32 %v651, %v652
      %v654 = vsel %vm478, %v604, 0.0
      %v655 = vadd.f32 %v653, %v654
      %v656 = vsel %vm478, %v605, 0.0
      %v657 = vadd.f32 %v655, %v656
      %v658 = vsel %vm478, %v606, 0.0
      %v659 = vadd.f32 %v657, %v658
      %v660 = vsel %vm478, %v607, 0.0
      %v661 = vadd.f32 %v659, %v660
      %v662 = vsel %vm478, %v608, 0.0
      %v663 = vadd.f32 %v661, %v662
      %v664 = vsel %vm478, %v609, 0.0
      %v665 = vadd.f32 %v663, %v664
      %v666 = vsel %vm478, %v610, 0.0
      %v667 = vadd.f32 %v665, %v666
      %v668 = vsel %vm478, %v611, 0.0
      %v669 = vadd.f32 %v667, %v668
      %v670 = vsel %vm478, %v612, 0.0
      %v671 = vadd.f32 %v669, %v670
      %v672 = vsel %vm478, %v613, 0.0
      %v673 = vadd.f32 %v671, %v672
      %v674 = vsel %vm478, %v614, 0.0
      %v675 = vadd.f32 %v673, %v674
      %v676 = vsel %vm478, %v615, 0.0
      %v677 = vadd.f32 %v675, %v676
      %v678 = vsel %vm478, %v616, 0.0
      %v679 = vadd.f32 %v677, %v678
      %v680 = vrot.slane %v679, 4
      %v681 = vadd.f32 %v679, %v680
      %v682 = vrot.slane %v681, 2
      %v683 = vadd.f32 %v681, %v682
      %v684 = vrot.slane %v683, 1
      %v685 = vadd.f32 %v683, %v684
      %v686 = vadd.f32 %v584, %v685
      %687 = vst.msk [vmem:[%s4] sm:$0x1] %vm582, %v686
      %s688 = smul.u32 32, %s16
      %p689 = scmp.lt.s32.totalorder %s688, 63
      %s690 = scalar_select %p689, %s688, 63
      %s691 = smul.addr %s690, 8
      %s692 = scalar_lea.vmem %s2, %s691
      // Predicated region
      $region33: #{generator_forward.19} parent=27 // pred_check
        %p693 = pneg %p81
      $region34: #{generator_forward.19} parent=27 // pred_check_branch
        %695 = sbr.rel (%p693) target = $region36
      $region35: #{generator_forward.19} parent=27 // pred_region
        %s696 = smul.u32 32, %s16
      $region36: #{generator_forward.19} parent=27 // pred_fallthru
        _
      // Predicated region
      $region37: #{generator_forward.19} parent=27 // pred_check
        %p697 = pneg %p102
      $region38: #{generator_forward.19} parent=27 // pred_check_branch
        %699 = sbr.rel (%p697) target = $region40
      $region39: #{generator_forward.19} parent=27 // pred_region
        _
      $region40: #{generator_forward.19} parent=27 // pred_fallthru
        _
      // Predicated region
      $region41: #{generator_forward.19} parent=27 // pred_check
        %p700 = pneg %p123
      $region42: #{generator_forward.19} parent=27 // pred_check_branch
        %702 = sbr.rel (%p700) target = $region44
      $region43: #{generator_forward.19} parent=27 // pred_region
        _
      $region44: #{generator_forward.19} parent=27 // pred_fallthru
        _
      // Predicated region
      $region45: #{generator_forward.19} parent=27 // pred_check
        %p703 = pneg %p102
      $region46: #{generator_forward.19} parent=27 // pred_check_branch
        %705 = sbr.rel (%p703) target = $region48
      $region47: #{generator_forward.19} parent=27 // pred_region
        _
      $region48: #{generator_forward.19} parent=27 // pred_fallthru
        _
      // Predicated region
      $region49: #{generator_forward.19} parent=27 // pred_check
        %p706 = pneg %p123
      $region50: #{generator_forward.19} parent=27 // pred_check_branch
        %708 = sbr.rel (%p706) target = $region52
      $region51: #{generator_forward.19} parent=27 // pred_region
        _
      $region52: #{generator_forward.19} parent=27 // pred_fallthru
        _
    $region28: #{generator_forward.19} parent=5 // pred_fallthru
      _
    %p709 = scmp.le.s32.totalorder 2, %s11
    // Predicated region
    $region53: #{generator_forward.19} parent=5 // pred_check
      %p710 = pneg %p709
    $region54: #{generator_forward.19} parent=5 // pred_check_branch
      %712 = sbr.rel (%p710) target = $region56
    $region55: #{generator_forward.19} parent=5 // pred_region
      %s713 = ssub.s32 %s11, 2
      // Predicated region
      $region57: #{generator_forward.19} parent=55 // pred_check
        %p714 = pneg %p87
      $region58: #{generator_forward.19} parent=55 // pred_check_branch
        %716 = sbr.rel (%p714) target = $region60
      $region59: #{generator_forward.19} parent=55 // pred_region
        %s717 = smul.u32 32, %s17
        %p718 = scmp.lt.s32.totalorder %s717, 63
        %s719 = scalar_select %p718, %s717, 63
        %s720 = smul.addr %s719, 8
        %s721 = scalar_lea.vmem %s2, %s720
      $region60: #{generator_forward.19} parent=55 // pred_fallthru
        _
    $region56: #{generator_forward.19} parent=5 // pred_fallthru
      _
  $region6: #{generator_forward.19} parent=0 // loop_footer
    %s15 = sadd.s32 1, %s11
  $region7: #{generator_forward.19} parent=0 // loop_footer_branch
    %10 = sbr.rel target = $region3
  $region8: #{generator_forward.19} parent=0 // loop_exit
    _

// kernel: generator_forward.20
$region0: #{generator_forward.20}
  #allocation0 [shape = 'u32[]', space=smem, size = 0x4, offset = 0x4, fixed_abs, tag = 'smem constant byte address 0x4 - core index']
  #allocation1 [shape = 'u32[72,128]{1,0:T(1,128)}', space=vmem, size = 0x9000, scoped, tag = 'internal scratch']
  %s0 = inlined_call_operand.vmem [shape: f32[512,8], index: 0, kind: input, shape index: {}]
  %s1 = inlined_call_operand.vmem [shape: f32[1,8], index: 1, kind: input, shape index: {}]
  %s2 = inlined_call_operand.vmem [shape: f32[1,8], index: 2, kind: input, shape index: {}]
  %s3 = inlined_call_operand.vmem [shape: f32[512,8], index: 3, kind: output, shape index: {}]
  %s4 = sld [smem:[#allocation0]]
  $region45: #{generator_forward.20} parent=0
    _
  %s6 = ssub.s32 1, %s4
  %s7 = scalar_select 0, %s6, %s4
  loop: start=0, step=1, limit=4
  $region2: #{generator_forward.20} parent=0 // loop_pre_header
    _
  $region3: #{generator_forward.20} parent=0 // loop_header
    %s9 = sphi 0, %s13
    %p10 = scmp.ge.s32.totalorder %s9, 4
    %s19 = sphi 0, %s21
    %s22 = sphi 0, %s19
    %s23 = sphi 0, %s22
    %s39 = sphi 0, %s23
    %s43 = sphi 0, %s43
    %s45 = sphi 0, %s43
    %s46 = sphi 0, %s45
    %s60 = sphi 0, %s46
    %s64 = sphi 0, %s64
    %s66 = sphi 0, %s64
    %s67 = sphi 0, %s66
    %s81 = sphi 0, %s67
    %s87 = sphi 0, %s89
    %s90 = sphi 0, %s87
    %s91 = sphi 0, %s90
    %s107 = sphi 0, %s91
  $region4: #{generator_forward.20} parent=0 // loop_header_branch
    %12 = sbr.rel (%p10) target = $region8
  $region5: #{generator_forward.20} parent=0 // loop_body
    %s14 = ssub.s32 %s9, 1
    %s15 = ssub.s32 %s9, 2
    %s16 = sadd.s32 %s9, 1
    %s17 = ssub.s32 %s9, %s16
    %p18 = scmp.eq.s32.totalorder %s17, 0
    %s20 = sadd.s32 %s19, 1
    %s21 = scalar_select %p18, %s19, %s20
    %p24 = pneg %p18
    %p25 = scmp.eq.s32.totalorder %s9, 1
    %p26 = por %p24, %p25
    %p27 = scmp.ne.s32.totalorder %s19, %s22
    %p28 = scmp.eq.s32.totalorder %s9, 0
    %p29 = por %p27, %p28
    %p30 = scmp.ne.s32.totalorder %s19, %s22
    %p31 = scmp.eq.s32.totalorder %s14, 1
    %p32 = por %p30, %p31
    %p33 = scmp.ne.s32.totalorder %s22, %s23
    %p34 = scmp.eq.s32.totalorder %s14, 0
    %p35 = por %p33, %p34
    %p36 = scmp.ne.s32.totalorder %s22, %s23
    %p37 = scmp.eq.s32.totalorder %s15, 1
    %p38 = por %p36, %p37
    %p40 = scmp.ne.s32.totalorder %s23, %s39
    %p41 = scmp.eq.s32.totalorder %s15, 0
    %p42 = por %p40, %p41
    %s44 = sadd.s32 %s43, 1
    %p47 = scmp.eq.s32.totalorder %s9, 1
    %p48 = scmp.ne.s32.totalorder %s43, %s45
    %p49 = scmp.eq.s32.totalorder %s9, 0
    %p50 = por %p48, %p49
    %p51 = scmp.ne.s32.totalorder %s43, %s45
    %p52 = scmp.eq.s32.totalorder %s14, 1
    %p53 = por %p51, %p52
    %p54 = scmp.ne.s32.totalorder %s45, %s46
    %p55 = scmp.eq.s32.totalorder %s14, 0
    %p56 = por %p54, %p55
    %p57 = scmp.ne.s32.totalorder %s45, %s46
    %p58 = scmp.eq.s32.totalorder %s15, 1
    %p59 = por %p57, %p58
    %p61 = scmp.ne.s32.totalorder %s46, %s60
    %p62 = scmp.eq.s32.totalorder %s15, 0
    %p63 = por %p61, %p62
    %s65 = sadd.s32 %s64, 1
    %p68 = scmp.eq.s32.totalorder %s9, 1
    %p69 = scmp.ne.s32.totalorder %s64, %s66
    %p70 = scmp.eq.s32.totalorder %s9, 0
    %p71 = por %p69, %p70
    %p72 = scmp.ne.s32.totalorder %s64, %s66
    %p73 = scmp.eq.s32.totalorder %s14, 1
    %p74 = por %p72, %p73
    %p75 = scmp.ne.s32.totalorder %s66, %s67
    %p76 = scmp.eq.s32.totalorder %s14, 0
    %p77 = por %p75, %p76
    %p78 = scmp.ne.s32.totalorder %s66, %s67
    %p79 = scmp.eq.s32.totalorder %s15, 1
    %p80 = por %p78, %p79
    %p82 = scmp.ne.s32.totalorder %s67, %s81
    %p83 = scmp.eq.s32.totalorder %s15, 0
    %p84 = por %p82, %p83
    %s85 = ssub.s32 %s9, %s16
    %p86 = scmp.eq.s32.totalorder %s85, 0
    %s88 = sadd.s32 %s87, 1
    %s89 = scalar_select %p86, %s87, %s88
    %p92 = pneg %p86
    %p93 = scmp.eq.s32.totalorder %s9, 1
    %p94 = por %p92, %p93
    %p95 = scmp.ne.s32.totalorder %s87, %s90
    %p96 = scmp.eq.s32.totalorder %s9, 0
    %p97 = por %p95, %p96
    %p98 = scmp.ne.s32.totalorder %s87, %s90
    %p99 = scmp.eq.s32.totalorder %s14, 1
    %p100 = por %p98, %p99
    %p101 = scmp.ne.s32.totalorder %s90, %s91
    %p102 = scmp.eq.s32.totalorder %s14, 0
    %p103 = por %p101, %p102
    %p104 = scmp.ne.s32.totalorder %s90, %s91
    %p105 = scmp.eq.s32.totalorder %s15, 1
    %p106 = por %p104, %p105
    %p108 = scmp.ne.s32.totalorder %s91, %s107
    %p109 = scmp.eq.s32.totalorder %s15, 0
    %p110 = por %p108, %p109
    %p111 = scmp.le.s32.totalorder 1, %s9
    %p112 = scmp.lt.s32.totalorder %s9, 3
    %p113 = pnand %p111, %p112
    %p114 = pneg %p113
    // Predicated region
    $region9: #{generator_forward.20} parent=5 // pred_check
      _
    $region10: #{generator_forward.20} parent=5 // pred_check_branch
      %116 = sbr.rel (%p113) target = $region12
    $region11: #{generator_forward.20} parent=5 // pred_region
      %s117 = ssub.s32 %s9, 1
      // Predicated region
      $region13: #{generator_forward.20} parent=11 // pred_check
        %p118 = pneg %p56
      $region14: #{generator_forward.20} parent=11 // pred_check_branch
        %120 = sbr.rel (%p118) target = $region16
      $region15: #{generator_forward.20} parent=11 // pred_region
        _
      $region16: #{generator_forward.20} parent=11 // pred_fallthru
        _
      // Predicated region
      $region17: #{generator_forward.20} parent=11 // pred_check
        %p121 = pneg %p77
      $region18: #{generator_forward.20} parent=11 // pred_check_branch
        %123 = sbr.rel (%p121) target = $region20
      $region19: #{generator_forward.20} parent=11 // pred_region
        _
      $region20: #{generator_forward.20} parent=11 // pred_fallthru
        _
    $region12: #{generator_forward.20} parent=5 // pred_fallthru
      _
    %p124 = scmp.lt.s32.totalorder %s9, 2
    // Predicated region
    $region21: #{generator_forward.20} parent=5 // pred_check
      %p125 = pneg %p124
    $region22: #{generator_forward.20} parent=5 // pred_check_branch
      %127 = sbr.rel (%p125) target = $region24
    $region23: #{generator_forward.20} parent=5 // pred_region
      // Predicated region
      $region25: #{generator_forward.20} parent=23 // pred_check
        %p128 = pneg %p29
      $region26: #{generator_forward.20} parent=23 // pred_check_branch
        %130 = sbr.rel (%p128) target = $region28
      $region27: #{generator_forward.20} parent=23 // pred_region
        %s131 = smul.u32 32, %s9
        %p132 = scmp.lt.s32.totalorder %s131, 63
        %s133 = scalar_select %p132, %s131, 63
        %s134 = smul.addr %s133, 8
        %s135 = scalar_lea.vmem %s0, %s134
        %s136 = smul.u32 32, %s9
      $region28: #{generator_forward.20} parent=23 // pred_fallthru
        _
    $region24: #{generator_forward.20} parent=5 // pred_fallthru
      _
    %p137 = scmp.le.s32.totalorder 1, %s9
    %p138 = scmp.lt.s32.totalorder %s9, 3
    %p139 = pnand %p137, %p138
    %p140 = pneg %p139
    // Predicated region
    $region29: #{generator_forward.20} parent=5 // pred_check
      _
    $region30: #{generator_forward.20} parent=5 // pred_check_branch
      %142 = sbr.rel (%p139) target = $region32
    $region31: #{generator_forward.20} parent=5 // pred_region
      %s143 = ssub.s32 %s9, 1
      %s144 = smul.u32 32, %s14
      %p145 = scmp.lt.s32.totalorder %s144, 63
      %s146 = scalar_select %p145, %s144, 63
      %s147 = smul.addr %s146, 8
      %s148 = scalar_lea.vmem %s0, %s147
      %p149 = pneg %p35
      %p150 = pneg %p32
      %p151 = pneg %p56
      %p152 = pneg %p53
      %p153 = pneg %p77
      %p154 = pneg %p74
      %p155 = pneg %p103
      %p156 = pneg %p100
      %s157 = smul.u32 32, %s14
      %p158 = scmp.lt.s32.totalorder %s157, 63
      %s159 = scalar_select %p158, %s157, 63
      %s160 = smul.addr %s159, 8
      %s161 = scalar_lea.vmem %s3, %s160
      %s162 = smul.u32 32, %s14
      %p163 = scmp.lt.s32.totalorder %s162, 63
      %s164 = scalar_select %p163, %s162, 63
      %s165 = smul.addr %s164, 8
      %s166 = scalar_lea.vmem %s0, %s165
      %s167 = smul.u32 32, %s14
      %s168 = smul.u32 32, %s14
      %p169 = scmp.lt.s32.totalorder %s168, 63
      %s170 = scalar_select %p169, %s168, 63
      %s171 = smul.addr %s170, 8
      %s172 = scalar_lea.vmem %s3, %s171
      %s173 = smul.u32 32, %s14
      %v174 = vld [vmem:[%s166] sm:$0xff]
      %v175 = vld [vmem:[%s166 + $0x8] sm:$0xff]
      %v176 = vld [vmem:[%s166 + $0x10] sm:$0xff]
      %v177 = vld [vmem:[%s166 + $0x18] sm:$0xff]
      %v178 = vld [vmem:[%s166 + $0x20] sm:$0xff]
      %v179 = vld [vmem:[%s166 + $0x28] sm:$0xff]
      %v180 = vld [vmem:[%s166 + $0x30] sm:$0xff]
      %v181 = vld [vmem:[%s166 + $0x38] sm:$0xff]
      %v182 = vld [vmem:[%s166 + $0x40] sm:$0xff]
      %v183 = vld [vmem:[%s166 + $0x48] sm:$0xff]
      %v184 = vld [vmem:[%s166 + $0x50] sm:$0xff]
      %v185 = vld [vmem:[%s166 + $0x58] sm:$0xff]
      %v186 = vld [vmem:[%s166 + $0x60] sm:$0xff]
      %v187 = vld [vmem:[%s166 + $0x68] sm:$0xff]
      %v188 = vld [vmem:[%s166 + $0x70] sm:$0xff]
      %v189 = vld [vmem:[%s166 + $0x78] sm:$0xff]
      %v190 = vld [vmem:[%s166 + $0x80] sm:$0xff]
      %v191 = vld [vmem:[%s166 + $0x88] sm:$0xff]
      %v192 = vld [vmem:[%s166 + $0x90] sm:$0xff]
      %v193 = vld [vmem:[%s166 + $0x98] sm:$0xff]
      %v194 = vld [vmem:[%s166 + $0xa0] sm:$0xff]
      %v195 = vld [vmem:[%s166 + $0xa8] sm:$0xff]
      %v196 = vld [vmem:[%s166 + $0xb0] sm:$0xff]
      %v197 = vld [vmem:[%s166 + $0xb8] sm:$0xff]
      %v198 = vld [vmem:[%s166 + $0xc0] sm:$0xff]
      %v199 = vld [vmem:[%s166 + $0xc8] sm:$0xff]
      %v200 = vld [vmem:[%s166 + $0xd0] sm:$0xff]
      %v201 = vld [vmem:[%s166 + $0xd8] sm:$0xff]
      %v202 = vld [vmem:[%s166 + $0xe0] sm:$0xff]
      %v203 = vld [vmem:[%s166 + $0xe8] sm:$0xff]
      %v204 = vld [vmem:[%s166 + $0xf0] sm:$0xff]
      %v205 = vld [vmem:[%s166 + $0xf8] sm:$0xff]
      %v206 = vld [vmem:[%s1] sm:$0x1]
      %v208 = vperm.slane %v206, 0
      %v210 = vmul.f32 %v174, %v208
      %v211 = vmul.f32 %v175, %v208
      %v212 = vmul.f32 %v176, %v208
      %v213 = vmul.f32 %v177, %v208
      %v214 = vmul.f32 %v178, %v208
      %v215 = vmul.f32 %v179, %v208
      %v216 = vmul.f32 %v180, %v208
      %v217 = vmul.f32 %v181, %v208
      %v218 = vmul.f32 %v182, %v208
      %v219 = vmul.f32 %v183, %v208
      %v220 = vmul.f32 %v184, %v208
      %v221 = vmul.f32 %v185, %v208
      %v222 = vmul.f32 %v186, %v208
      %v223 = vmul.f32 %v187, %v208
      %v224 = vmul.f32 %v188, %v208
      %v225 = vmul.f32 %v189, %v208
      %v226 = vmul.f32 %v190, %v208
      %v227 = vmul.f32 %v191, %v208
      %v228 = vmul.f32 %v192, %v208
      %v229 = vmul.f32 %v193, %v208
      %v230 = vmul.f32 %v194, %v208
      %v231 = vmul.f32 %v195, %v208
      %v232 = vmul.f32 %v196, %v208
      %v233 = vmul.f32 %v197, %v208
      %v234 = vmul.f32 %v198, %v208
      %v235 = vmul.f32 %v199, %v208
      %v236 = vmul.f32 %v200, %v208
      %v237 = vmul.f32 %v201, %v208
      %v238 = vmul.f32 %v202, %v208
      %v239 = vmul.f32 %v203, %v208
      %v240 = vmul.f32 %v204, %v208
      %v241 = vmul.f32 %v205, %v208
      %v242 = vld [vmem:[%s2] sm:$0x1]
      %v244 = vperm.slane %v242, 0
      %v246 = vadd.f32 %v210, %v244
      %v247 = vadd.f32 %v211, %v244
      %v248 = vadd.f32 %v212, %v244
      %v249 = vadd.f32 %v213, %v244
      %v250 = vadd.f32 %v214, %v244
      %v251 = vadd.f32 %v215, %v244
      %v252 = vadd.f32 %v216, %v244
      %v253 = vadd.f32 %v217, %v244
      %v254 = vadd.f32 %v218, %v244
      %v255 = vadd.f32 %v219, %v244
      %v256 = vadd.f32 %v220, %v244
      %v257 = vadd.f32 %v221, %v244
      %v258 = vadd.f32 %v222, %v244
      %v259 = vadd.f32 %v223, %v244
      %v260 = vadd.f32 %v224, %v244
      %v261 = vadd.f32 %v225, %v244
      %v262 = vadd.f32 %v226, %v244
      %v263 = vadd.f32 %v227, %v244
      %v264 = vadd.f32 %v228, %v244
      %v265 = vadd.f32 %v229, %v244
      %v266 = vadd.f32 %v230, %v244
      %v267 = vadd.f32 %v231, %v244
      %v268 = vadd.f32 %v232, %v244
      %v269 = vadd.f32 %v233, %v244
      %v270 = vadd.f32 %v234, %v244
      %v271 = vadd.f32 %v235, %v244
      %v272 = vadd.f32 %v236, %v244
      %v273 = vadd.f32 %v237, %v244
      %v274 = vadd.f32 %v238, %v244
      %v275 = vadd.f32 %v239, %v244
      %v276 = vadd.f32 %v240, %v244
      %v277 = vadd.f32 %v241, %v244
      %vm278 = vcmp.ge.f32.partialorder %v246, 0.0
      %vm279 = vcmp.ge.f32.partialorder %v247, 0.0
      %vm280 = vcmp.ge.f32.partialorder %v248, 0.0
      %vm281 = vcmp.ge.f32.partialorder %v249, 0.0
      %vm282 = vcmp.ge.f32.partialorder %v250, 0.0
      %vm283 = vcmp.ge.f32.partialorder %v251, 0.0
      %vm284 = vcmp.ge.f32.partialorder %v252, 0.0
      %vm285 = vcmp.ge.f32.partialorder %v253, 0.0
      %vm286 = vcmp.ge.f32.partialorder %v254, 0.0
      %vm287 = vcmp.ge.f32.partialorder %v255, 0.0
      %vm288 = vcmp.ge.f32.partialorder %v256, 0.0
      %vm289 = vcmp.ge.f32.partialorder %v257, 0.0
      %vm290 = vcmp.ge.f32.partialorder %v258, 0.0
      %vm291 = vcmp.ge.f32.partialorder %v259, 0.0
      %vm292 = vcmp.ge.f32.partialorder %v260, 0.0
      %vm293 = vcmp.ge.f32.partialorder %v261, 0.0
      %vm294 = vcmp.ge.f32.partialorder %v262, 0.0
      %vm295 = vcmp.ge.f32.partialorder %v263, 0.0
      %vm296 = vcmp.ge.f32.partialorder %v264, 0.0
      %vm297 = vcmp.ge.f32.partialorder %v265, 0.0
      %vm298 = vcmp.ge.f32.partialorder %v266, 0.0
      %vm299 = vcmp.ge.f32.partialorder %v267, 0.0
      %vm300 = vcmp.ge.f32.partialorder %v268, 0.0
      %vm301 = vcmp.ge.f32.partialorder %v269, 0.0
      %vm302 = vcmp.ge.f32.partialorder %v270, 0.0
      %vm303 = vcmp.ge.f32.partialorder %v271, 0.0
      %vm304 = vcmp.ge.f32.partialorder %v272, 0.0
      %vm305 = vcmp.ge.f32.partialorder %v273, 0.0
      %vm306 = vcmp.ge.f32.partialorder %v274, 0.0
      %vm307 = vcmp.ge.f32.partialorder %v275, 0.0
      %vm308 = vcmp.ge.f32.partialorder %v276, 0.0
      %vm309 = vcmp.ge.f32.partialorder %v277, 0.0
      %v310 = vmul.f32 %v246, 0.2
      %v311 = vmul.f32 %v247, 0.2
      %v312 = vmul.f32 %v248, 0.2
      %v313 = vmul.f32 %v249, 0.2
      %v314 = vmul.f32 %v250, 0.2
      %v315 = vmul.f32 %v251, 0.2
      %v316 = vmul.f32 %v252, 0.2
      %v317 = vmul.f32 %v253, 0.2
      %v318 = vmul.f32 %v254, 0.2
      %v319 = vmul.f32 %v255, 0.2
      %v320 = vmul.f32 %v256, 0.2
      %v321 = vmul.f32 %v257, 0.2
      %v322 = vmul.f32 %v258, 0.2
      %v323 = vmul.f32 %v259, 0.2
      %v324 = vmul.f32 %v260, 0.2
      %v325 = vmul.f32 %v261, 0.2
      %v326 = vmul.f32 %v262, 0.2
      %v327 = vmul.f32 %v263, 0.2
      %v328 = vmul.f32 %v264, 0.2
      %v329 = vmul.f32 %v265, 0.2
      %v330 = vmul.f32 %v266, 0.2
      %v331 = vmul.f32 %v267, 0.2
      %v332 = vmul.f32 %v268, 0.2
      %v333 = vmul.f32 %v269, 0.2
      %v334 = vmul.f32 %v270, 0.2
      %v335 = vmul.f32 %v271, 0.2
      %v336 = vmul.f32 %v272, 0.2
      %v337 = vmul.f32 %v273, 0.2
      %v338 = vmul.f32 %v274, 0.2
      %v339 = vmul.f32 %v275, 0.2
      %v340 = vmul.f32 %v276, 0.2
      %v341 = vmul.f32 %v277, 0.2
      %v342 = vsel %vm278, %v246, %v310
      %v343 = vsel %vm279, %v247, %v311
      %v344 = vsel %vm280, %v248, %v312
      %v345 = vsel %vm281, %v249, %v313
      %v346 = vsel %vm282, %v250, %v314
      %v347 = vsel %vm283, %v251, %v315
      %v348 = vsel %vm284, %v252, %v316
      %v349 = vsel %vm285, %v253, %v317
      %v350 = vsel %vm286, %v254, %v318
      %v351 = vsel %vm287, %v255, %v319
      %v352 = vsel %vm288, %v256, %v320
      %v353 = vsel %vm289, %v257, %v321
      %v354 = vsel %vm290, %v258, %v322
      %v355 = vsel %vm291, %v259, %v323
      %v356 = vsel %vm292, %v260, %v324
      %v357 = vsel %vm293, %v261, %v325
      %v358 = vsel %vm294, %v262, %v326
      %v359 = vsel %vm295, %v263, %v327
      %v360 = vsel %vm296, %v264, %v328
      %v361 = vsel %vm297, %v265, %v329
      %v362 = vsel %vm298, %v266, %v330
      %v363 = vsel %vm299, %v267, %v331
      %v364 = vsel %vm300, %v268, %v332
      %v365 = vsel %vm301, %v269, %v333
      %v366 = vsel %vm302, %v270, %v334
      %v367 = vsel %vm303, %v271, %v335
      %v368 = vsel %vm304, %v272, %v336
      %v369 = vsel %vm305, %v273, %v337
      %v370 = vsel %vm306, %v274, %v338
      %v371 = vsel %vm307, %v275, %v339
      %v372 = vsel %vm308, %v276, %v340
      %v373 = vsel %vm309, %v277, %v341
      %vm374 = vcmask 64512
      %375 = vst.msk [vmem:[%s172] sm:$0xff] %vm374, %v342
      %376 = vst.msk [vmem:[%s172 + $0x8] sm:$0xff] %vm374, %v343
      %377 = vst.msk [vmem:[%s172 + $0x10] sm:$0xff] %vm374, %v344
      %378 = vst.msk [vmem:[%s172 + $0x18] sm:$0xff] %vm374, %v345
      %379 = vst.msk [vmem:[%s172 + $0x20] sm:$0xff] %vm374, %v346
      %380 = vst.msk [vmem:[%s172 + $0x28] sm:$0xff] %vm374, %v347
      %381 = vst.msk [vmem:[%s172 + $0x30] sm:$0xff] %vm374, %v348
      %382 = vst.msk [vmem:[%s172 + $0x38] sm:$0xff] %vm374, %v349
      %383 = vst.msk [vmem:[%s172 + $0x40] sm:$0xff] %vm374, %v350
      %384 = vst.msk [vmem:[%s172 + $0x48] sm:$0xff] %vm374, %v351
      %385 = vst.msk [vmem:[%s172 + $0x50] sm:$0xff] %vm374, %v352
      %386 = vst.msk [vmem:[%s172 + $0x58] sm:$0xff] %vm374, %v353
      %387 = vst.msk [vmem:[%s172 + $0x60] sm:$0xff] %vm374, %v354
      %388 = vst.msk [vmem:[%s172 + $0x68] sm:$0xff] %vm374, %v355
      %389 = vst.msk [vmem:[%s172 + $0x70] sm:$0xff] %vm374, %v356
      %390 = vst.msk [vmem:[%s172 + $0x78] sm:$0xff] %vm374, %v357
      %391 = vst.msk [vmem:[%s172 + $0x80] sm:$0xff] %vm374, %v358
      %392 = vst.msk [vmem:[%s172 + $0x88] sm:$0xff] %vm374, %v359
      %393 = vst.msk [vmem:[%s172 + $0x90] sm:$0xff] %vm374, %v360
      %394 = vst.msk [vmem:[%s172 + $0x98] sm:$0xff] %vm374, %v361
      %395 = vst.msk [vmem:[%s172 + $0xa0] sm:$0xff] %vm374, %v362
      %396 = vst.msk [vmem:[%s172 + $0xa8] sm:$0xff] %vm374, %v363
      %397 = vst.msk [vmem:[%s172 + $0xb0] sm:$0xff] %vm374, %v364
      %398 = vst.msk [vmem:[%s172 + $0xb8] sm:$0xff] %vm374, %v365
      %399 = vst.msk [vmem:[%s172 + $0xc0] sm:$0xff] %vm374, %v366
      %400 = vst.msk [vmem:[%s172 + $0xc8] sm:$0xff] %vm374, %v367
      %401 = vst.msk [vmem:[%s172 + $0xd0] sm:$0xff] %vm374, %v368
      %402 = vst.msk [vmem:[%s172 + $0xd8] sm:$0xff] %vm374, %v369
      %403 = vst.msk [vmem:[%s172 + $0xe0] sm:$0xff] %vm374, %v370
      %404 = vst.msk [vmem:[%s172 + $0xe8] sm:$0xff] %vm374, %v371
      %405 = vst.msk [vmem:[%s172 + $0xf0] sm:$0xff] %vm374, %v372
      %406 = vst.msk [vmem:[%s172 + $0xf8] sm:$0xff] %vm374, %v373
      %s407 = smul.u32 32, %s14
      %p408 = scmp.lt.s32.totalorder %s407, 63
      %s409 = scalar_select %p408, %s407, 63
      %s410 = smul.addr %s409, 8
      %s411 = scalar_lea.vmem %s3, %s410
      // Predicated region
      $region33: #{generator_forward.20} parent=31 // pred_check
        %p412 = pneg %p100
      $region34: #{generator_forward.20} parent=31 // pred_check_branch
        %414 = sbr.rel (%p412) target = $region36
      $region35: #{generator_forward.20} parent=31 // pred_region
        %s415 = smul.u32 32, %s14
      $region36: #{generator_forward.20} parent=31 // pred_fallthru
        _
    $region32: #{generator_forward.20} parent=5 // pred_fallthru
      _
    %p416 = scmp.le.s32.totalorder 2, %s9
    // Predicated region
    $region37: #{generator_forward.20} parent=5 // pred_check
      %p417 = pneg %p416
    $region38: #{generator_forward.20} parent=5 // pred_check_branch
      %419 = sbr.rel (%p417) target = $region40
    $region39: #{generator_forward.20} parent=5 // pred_region
      %s420 = ssub.s32 %s9, 2
      // Predicated region
      $region41: #{generator_forward.20} parent=39 // pred_check
        %p421 = pneg %p106
      $region42: #{generator_forward.20} parent=39 // pred_check_branch
        %423 = sbr.rel (%p421) target = $region44
      $region43: #{generator_forward.20} parent=39 // pred_region
        %s424 = smul.u32 32, %s15
        %p425 = scmp.lt.s32.totalorder %s424, 63
        %s426 = scalar_select %p425, %s424, 63
        %s427 = smul.addr %s426, 8
        %s428 = scalar_lea.vmem %s3, %s427
      $region44: #{generator_forward.20} parent=39 // pred_fallthru
        _
    $region40: #{generator_forward.20} parent=5 // pred_fallthru
      _
  $region6: #{generator_forward.20} parent=0 // loop_footer
    %s13 = sadd.s32 1, %s9
  $region7: #{generator_forward.20} parent=0 // loop_footer_branch
    %8 = sbr.rel target = $region3
  $region8: #{generator_forward.20} parent=0 // loop_exit
    _

// kernel: generator_forward.21
$region0: #{generator_forward.21}
  #allocation0 [shape = 'u32[]', space=smem, size = 0x4, offset = 0x4, fixed_abs, tag = 'smem constant byte address 0x4 - core index']
  #allocation1 [shape = 'u32[72,128]{1,0:T(1,128)}', space=vmem, size = 0x9000, scoped, tag = 'internal scratch']
  %s0 = inlined_call_operand.vmem [shape: bf16[128,128], index: 0, kind: input, shape index: {}]
  %s1 = inlined_call_operand.vmem [shape: bf16[128,16], index: 1, kind: input, shape index: {}]
  %s2 = inlined_call_operand.vmem [shape: f32[128,16], index: 2, kind: output, shape index: {0}]
  %s3 = inlined_call_operand.vmem [shape: f32[1,16], index: 3, kind: output, shape index: {1}]
  %s4 = inlined_call_operand.vmem [shape: f32[1,16], index: 4, kind: output, shape index: {2}]
  %5 = xla_tuple %s2, %s3, %s4
  %s6 = sld [smem:[#allocation0]]
  $region38: #{generator_forward.21} parent=0
    _
  %s8 = ssub.s32 1, %s6
  %s9 = scalar_select 0, %s8, %s6
  // Predicated region
  $region2: #{generator_forward.21} parent=0 // pred_check
    _
  $region3: #{generator_forward.21} parent=0 // pred_check_branch
    %11 = sbr.rel (0) target = $region5
  $region4: #{generator_forward.21} parent=0 // pred_region
    _
  $region5: #{generator_forward.21} parent=0 // pred_fallthru
    _
  // Predicated region
  $region6: #{generator_forward.21} parent=0 // pred_check
    _
  $region7: #{generator_forward.21} parent=0 // pred_check_branch
    %13 = sbr.rel (0) target = $region9
  $region8: #{generator_forward.21} parent=0 // pred_region
    _
  $region9: #{generator_forward.21} parent=0 // pred_fallthru
    _
  %p14 = scmp.eq.s32.totalorder 0, 0
  // Predicated region
  $region10: #{generator_forward.21} parent=0 // pred_check
    %p15 = pneg %p14
  $region11: #{generator_forward.21} parent=0 // pred_check_branch
    %17 = sbr.rel (%p15) target = $region13
  $region12: #{generator_forward.21} parent=0 // pred_region
    %vm18 = vcmask 122880
    %19 = vst.msk [vmem:[%s3] sm:$0x1] %vm18, 0.0
    %20 = vst.msk [vmem:[%s4] sm:$0x1] %vm18, 0.0
  $region13: #{generator_forward.21} parent=0 // pred_fallthru
    _
  %v21 = vld [vmem:[%s0] sm:$0xf]
  %v22 = vld [vmem:[%s0 + $0x4] sm:$0xf]
  %v23 = vld [vmem:[%s0 + $0x8] sm:$0xf]
  %v24 = vld [vmem:[%s0 + $0xc] sm:$0xf]
  %v25 = vld [vmem:[%s0 + $0x10] sm:$0xf]
  %v26 = vld [vmem:[%s0 + $0x14] sm:$0xf]
  %v27 = vld [vmem:[%s0 + $0x18] sm:$0xf]
  %v28 = vld [vmem:[%s0 + $0x1c] sm:$0xf]
  %v29 = vld [vmem:[%s0 + $0x20] sm:$0xf]
  %v30 = vld [vmem:[%s0 + $0x24] sm:$0xf]
  %v31 = vld [vmem:[%s0 + $0x28] sm:$0xf]
  %v32 = vld [vmem:[%s0 + $0x2c] sm:$0xf]
  %v33 = vld [vmem:[%s0 + $0x30] sm:$0xf]
  %v34 = vld [vmem:[%s0 + $0x34] sm:$0xf]
  %v35 = vld [vmem:[%s0 + $0x38] sm:$0xf]
  %v36 = vld [vmem:[%s0 + $0x3c] sm:$0xf]
  %v37 = vld [vmem:[%s1] sm:$0xf]
  %v38 = vld [vmem:[%s1 + $0x4] sm:$0xf]
  %v39 = vld [vmem:[%s1 + $0x8] sm:$0xf]
  %v40 = vld [vmem:[%s1 + $0xc] sm:$0xf]
  %v41 = vld [vmem:[%s1 + $0x10] sm:$0xf]
  %v42 = vld [vmem:[%s1 + $0x14] sm:$0xf]
  %v43 = vld [vmem:[%s1 + $0x18] sm:$0xf]
  %v44 = vld [vmem:[%s1 + $0x1c] sm:$0xf]
  %v45 = vld [vmem:[%s1 + $0x20] sm:$0xf]
  %v46 = vld [vmem:[%s1 + $0x24] sm:$0xf]
  %v47 = vld [vmem:[%s1 + $0x28] sm:$0xf]
  %v48 = vld [vmem:[%s1 + $0x2c] sm:$0xf]
  %v49 = vld [vmem:[%s1 + $0x30] sm:$0xf]
  %v50 = vld [vmem:[%s1 + $0x34] sm:$0xf]
  %v51 = vld [vmem:[%s1 + $0x38] sm:$0xf]
  %v52 = vld [vmem:[%s1 + $0x3c] sm:$0xf]
  %v69 = vunpack.c.l.b16 %v21
  %v70 = vunpack.c.l.b16 %v22
  %v71 = vunpack.c.l.b16 %v23
  %v72 = vunpack.c.l.b16 %v24
  %v73 = vunpack.c.l.b16 %v25
  %v74 = vunpack.c.l.b16 %v26
  %v75 = vunpack.c.l.b16 %v27
  %v76 = vunpack.c.l.b16 %v28
  %v77 = vunpack.c.l.b16 %v29
  %v78 = vunpack.c.l.b16 %v30
  %v79 = vunpack.c.l.b16 %v31
  %v80 = vunpack.c.l.b16 %v32
  %v81 = vunpack.c.l.b16 %v33
  %v82 = vunpack.c.l.b16 %v34
  %v83 = vunpack.c.l.b16 %v35
  %v84 = vunpack.c.l.b16 %v36
  %v85 = vpack.c.b16 %v70, %v69
  %v86 = vpack.c.b16 %v72, %v71
  %v87 = vpack.c.b16 %v74, %v73
  %v88 = vpack.c.b16 %v76, %v75
  %v89 = vpack.c.b16 %v78, %v77
  %v90 = vpack.c.b16 %v80, %v79
  %v91 = vpack.c.b16 %v82, %v81
  %v92 = vpack.c.b16 %v84, %v83
  %v117 = vunpack.c.l.b16 %v37
  %v118 = vunpack.c.l.b16 %v38
  %v119 = vunpack.c.l.b16 %v39
  %v120 = vunpack.c.l.b16 %v40
  %v121 = vunpack.c.l.b16 %v41
  %v122 = vunpack.c.l.b16 %v42
  %v123 = vunpack.c.l.b16 %v43
  %v124 = vunpack.c.l.b16 %v44
  %v125 = vunpack.c.l.b16 %v45
  %v126 = vunpack.c.l.b16 %v46
  %v127 = vunpack.c.l.b16 %v47
  %v128 = vunpack.c.l.b16 %v48
  %v129 = vunpack.c.l.b16 %v49
  %v130 = vunpack.c.l.b16 %v50
  %v131 = vunpack.c.l.b16 %v51
  %v132 = vunpack.c.l.b16 %v52
  %v133 = vpack.c.b16 %v118, %v117
  %v134 = vpack.c.b16 %v120, %v119
  %v135 = vpack.c.b16 %v122, %v121
  %v136 = vpack.c.b16 %v124, %v123
  %v137 = vpack.c.b16 %v126, %v125
  %v138 = vpack.c.b16 %v128, %v127
  %v139 = vpack.c.b16 %v130, %v129
  %v140 = vpack.c.b16 %v132, %v131
  %149 = vmatpush.bf16.msra.mxu0 %v140
  %150 = vmatpush.bf16.msra.mxu0 %v139
  %151 = vmatpush.bf16.msra.mxu0 %v138
  %152 = vmatpush.bf16.msra.mxu0 %v137
  %153 = vmatpush.bf16.msra.mxu0 %v136
  %154 = vmatpush.bf16.msra.mxu0 %v135
  %155 = vmatpush.bf16.msra.mxu0 %v134
  %156 = vmatpush.bf16.msra.mxu0 %v133
  %157 = vmatmul.bf16.gmra.mxu0 %v85
  %v158 = vpop.f32.mrf.mxu0
  %v159 = vadd.f32 0.0, %v158
  %v160 = vpop.f32.mrf.mxu0
  %v161 = vadd.f32 0.0, %v160
  %162 = vmatmul.bf16.gmra.mxu0 %v86
  %v163 = vpop.f32.mrf.mxu0
  %v164 = vadd.f32 0.0, %v163
  %v165 = vpop.f32.mrf.mxu0
  %v166 = vadd.f32 0.0, %v165
  %167 = vmatmul.bf16.gmra.mxu0 %v87
  %v168 = vpop.f32.mrf.mxu0
  %v169 = vadd.f32 0.0, %v168
  %v170 = vpop.f32.mrf.mxu0
  %v171 = vadd.f32 0.0, %v170
  %172 = vmatmul.bf16.gmra.mxu0 %v88
  %v173 = vpop.f32.mrf.mxu0
  %v174 = vadd.f32 0.0, %v173
  %v175 = vpop.f32.mrf.mxu0
  %v176 = vadd.f32 0.0, %v175
  %177 = vmatmul.bf16.gmra.mxu0 %v89
  %v178 = vpop.f32.mrf.mxu0
  %v179 = vadd.f32 0.0, %v178
  %v180 = vpop.f32.mrf.mxu0
  %v181 = vadd.f32 0.0, %v180
  %182 = vmatmul.bf16.gmra.mxu0 %v90
  %v183 = vpop.f32.mrf.mxu0
  %v184 = vadd.f32 0.0, %v183
  %v185 = vpop.f32.mrf.mxu0
  %v186 = vadd.f32 0.0, %v185
  %187 = vmatmul.bf16.gmra.mxu0 %v91
  %v188 = vpop.f32.mrf.mxu0
  %v189 = vadd.f32 0.0, %v188
  %v190 = vpop.f32.mrf.mxu0
  %v191 = vadd.f32 0.0, %v190
  %192 = vmatmul.bf16.gmra.mxu0 %v92
  %v193 = vpop.f32.mrf.mxu0
  %v194 = vadd.f32 0.0, %v193
  %v195 = vpop.f32.mrf.mxu0
  %v196 = vadd.f32 0.0, %v195
  %197 = vdwg.mxu0
  %vm198 = vcmask 130048
  %199 = vst.msk [vmem:[%s2] sm:$0xff] %vm198, %v159
  %200 = vst.msk [vmem:[%s2 + $0x8] sm:$0xff] %vm198, %v161
  %201 = vst.msk [vmem:[%s2 + $0x10] sm:$0xff] %vm198, %v164
  %202 = vst.msk [vmem:[%s2 + $0x18] sm:$0xff] %vm198, %v166
  %203 = vst.msk [vmem:[%s2 + $0x20] sm:$0xff] %vm198, %v169
  %204 = vst.msk [vmem:[%s2 + $0x28] sm:$0xff] %vm198, %v171
  %205 = vst.msk [vmem:[%s2 + $0x30] sm:$0xff] %vm198, %v174
  %206 = vst.msk [vmem:[%s2 + $0x38] sm:$0xff] %vm198, %v176
  %207 = vst.msk [vmem:[%s2 + $0x40] sm:$0xff] %vm198, %v179
  %208 = vst.msk [vmem:[%s2 + $0x48] sm:$0xff] %vm198, %v181
  %209 = vst.msk [vmem:[%s2 + $0x50] sm:$0xff] %vm198, %v184
  %210 = vst.msk [vmem:[%s2 + $0x58] sm:$0xff] %vm198, %v186
  %211 = vst.msk [vmem:[%s2 + $0x60] sm:$0xff] %vm198, %v189
  %212 = vst.msk [vmem:[%s2 + $0x68] sm:$0xff] %vm198, %v191
  %213 = vst.msk [vmem:[%s2 + $0x70] sm:$0xff] %vm198, %v194
  %214 = vst.msk [vmem:[%s2 + $0x78] sm:$0xff] %vm198, %v196
  %v215 = vld [vmem:[%s3] sm:$0x1]
  %v216 = vsel %vm198, %v159, 0.0
  %v217 = vsel %vm198, %v161, 0.0
  %v218 = vadd.f32 %v216, %v217
  %v219 = vsel %vm198, %v164, 0.0
  %v220 = vadd.f32 %v218, %v219
  %v221 = vsel %vm198, %v166, 0.0
  %v222 = vadd.f32 %v220, %v221
  %v223 = vsel %vm198, %v169, 0.0
  %v224 = vadd.f32 %v222, %v223
  %v225 = vsel %vm198, %v171, 0.0
  %v226 = vadd.f32 %v224, %v225
  %v227 = vsel %vm198, %v174, 0.0
  %v228 = vadd.f32 %v226, %v227
  %v229 = vsel %vm198, %v176, 0.0
  %v230 = vadd.f32 %v228, %v229
  %v231 = vsel %vm198, %v179, 0.0
  %v232 = vadd.f32 %v230, %v231
  %v233 = vsel %vm198, %v181, 0.0
  %v234 = vadd.f32 %v232, %v233
  %v235 = vsel %vm198, %v184, 0.0
  %v236 = vadd.f32 %v234, %v235
  %v237 = vsel %vm198, %v186, 0.0
  %v238 = vadd.f32 %v236, %v237
  %v239 = vsel %vm198, %v189, 0.0
  %v240 = vadd.f32 %v238, %v239
  %v241 = vsel %vm198, %v191, 0.0
  %v242 = vadd.f32 %v240, %v241
  %v243 = vsel %vm198, %v194, 0.0
  %v244 = vadd.f32 %v242, %v243
  %v245 = vsel %vm198, %v196, 0.0
  %v246 = vadd.f32 %v244, %v245
  %v247 = vrot.slane %v246, 4
  %v248 = vadd.f32 %v246, %v247
  %v249 = vrot.slane %v248, 2
  %v250 = vadd.f32 %v248, %v249
  %v251 = vrot.slane %v250, 1
  %v252 = vadd.f32 %v250, %v251
  %v253 = vadd.f32 %v215, %v252
  %vm254 = vcmask 122880
  %255 = vst.msk [vmem:[%s3] sm:$0x1] %vm254, %v253
  %v256 = vld [vmem:[%s4] sm:$0x1]
  %v257 = vmul.f32 %v159, %v159
  %v258 = vmul.f32 %v161, %v161
  %v259 = vmul.f32 %v164, %v164
  %v260 = vmul.f32 %v166, %v166
  %v261 = vmul.f32 %v169, %v169
  %v262 = vmul.f32 %v171, %v171
  %v263 = vmul.f32 %v174, %v174
  %v264 = vmul.f32 %v176, %v176
  %v265 = vmul.f32 %v179, %v179
  %v266 = vmul.f32 %v181, %v181
  %v267 = vmul.f32 %v184, %v184
  %v268 = vmul.f32 %v186, %v186
  %v269 = vmul.f32 %v189, %v189
  %v270 = vmul.f32 %v191, %v191
  %v271 = vmul.f32 %v194, %v194
  %v272 = vmul.f32 %v196, %v196
  %v273 = vsel %vm198, %v257, 0.0
  %v274 = vsel %vm198, %v258, 0.0
  %v275 = vadd.f32 %v273, %v274
  %v276 = vsel %vm198, %v259, 0.0
  %v277 = vadd.f32 %v275, %v276
  %v278 = vsel %vm198, %v260, 0.0
  %v279 = vadd.f32 %v277, %v278
  %v280 = vsel %vm198, %v261, 0.0
  %v281 = vadd.f32 %v279, %v280
  %v282 = vsel %vm198, %v262, 0.0
  %v283 = vadd.f32 %v281, %v282
  %v284 = vsel %vm198, %v263, 0.0
  %v285 = vadd.f32 %v283, %v284
  %v286 = vsel %vm198, %v264, 0.0
  %v287 = vadd.f32 %v285, %v286
  %v288 = vsel %vm198, %v265, 0.0
  %v289 = vadd.f32 %v287, %v288
  %v290 = vsel %vm198, %v266, 0.0
  %v291 = vadd.f32 %v289, %v290
  %v292 = vsel %vm198, %v267, 0.0
  %v293 = vadd.f32 %v291, %v292
  %v294 = vsel %vm198, %v268, 0.0
  %v295 = vadd.f32 %v293, %v294
  %v296 = vsel %vm198, %v269, 0.0
  %v297 = vadd.f32 %v295, %v296
  %v298 = vsel %vm198, %v270, 0.0
  %v299 = vadd.f32 %v297, %v298
  %v300 = vsel %vm198, %v271, 0.0
  %v301 = vadd.f32 %v299, %v300
  %v302 = vsel %vm198, %v272, 0.0
  %v303 = vadd.f32 %v301, %v302
  %v304 = vrot.slane %v303, 4
  %v305 = vadd.f32 %v303, %v304
  %v306 = vrot.slane %v305, 2
  %v307 = vadd.f32 %v305, %v306
  %v308 = vrot.slane %v307, 1
  %v309 = vadd.f32 %v307, %v308
  %v310 = vadd.f32 %v256, %v309
  %311 = vst.msk [vmem:[%s4] sm:$0x1] %vm254, %v310
  // Predicated region
  $region14: #{generator_forward.21} parent=0 // pred_check
    _
  $region15: #{generator_forward.21} parent=0 // pred_check_branch
    %313 = sbr.rel (0) target = $region17
  $region16: #{generator_forward.21} parent=0 // pred_region
    _
  $region17: #{generator_forward.21} parent=0 // pred_fallthru
    _
  // Predicated region
  $region18: #{generator_forward.21} parent=0 // pred_check
    _
  $region19: #{generator_forward.21} parent=0 // pred_check_branch
    %315 = sbr.rel (0) target = $region21
  $region20: #{generator_forward.21} parent=0 // pred_region
    _
  $region21: #{generator_forward.21} parent=0 // pred_fallthru
    _
  // Predicated region
  $region22: #{generator_forward.21} parent=0 // pred_check
    _
  $region23: #{generator_forward.21} parent=0 // pred_check_branch
    %317 = sbr.rel (0) target = $region25
  $region24: #{generator_forward.21} parent=0 // pred_region
    _
  $region25: #{generator_forward.21} parent=0 // pred_fallthru
    _
  // Predicated region
  $region26: #{generator_forward.21} parent=0 // pred_check
    _
  $region27: #{generator_forward.21} parent=0 // pred_check_branch
    %319 = sbr.rel (0) target = $region29
  $region28: #{generator_forward.21} parent=0 // pred_region
    _
  $region29: #{generator_forward.21} parent=0 // pred_fallthru
    _
  // Predicated region
  $region30: #{generator_forward.21} parent=0 // pred_check
    _
  $region31: #{generator_forward.21} parent=0 // pred_check_branch
    %321 = sbr.rel (0) target = $region33
  $region32: #{generator_forward.21} parent=0 // pred_region
    _
  $region33: #{generator_forward.21} parent=0 // pred_fallthru
    _
  // Predicated region
  $region34: #{generator_forward.21} parent=0 // pred_check
    _
  $region35: #{generator_forward.21} parent=0 // pred_check_branch
    %323 = sbr.rel (0) target = $region37
  $region36: #{generator_forward.21} parent=0 // pred_region
    _
  $region37: #{generator_forward.21} parent=0 // pred_fallthru
    _

// kernel: generator_forward.22
$region0: #{generator_forward.22}
  #allocation0 [shape = 'u32[]', space=smem, size = 0x4, offset = 0x4, fixed_abs, tag = 'smem constant byte address 0x4 - core index']
  #allocation1 [shape = 'u32[72,128]{1,0:T(1,128)}', space=vmem, size = 0x9000, scoped, tag = 'internal scratch']
  %s0 = inlined_call_operand.vmem [shape: f32[128,16], index: 0, kind: input, shape index: {}]
  %s1 = inlined_call_operand.vmem [shape: f32[1,16], index: 1, kind: input, shape index: {}]
  %s2 = inlined_call_operand.vmem [shape: f32[1,16], index: 2, kind: input, shape index: {}]
  %s3 = inlined_call_operand.vmem [shape: f32[128,16], index: 3, kind: output, shape index: {}]
  %s4 = sld [smem:[#allocation0]]
  $region22: #{generator_forward.22} parent=0
    _
  %s6 = ssub.s32 1, %s4
  %s7 = scalar_select 0, %s6, %s4
  // Predicated region
  $region2: #{generator_forward.22} parent=0 // pred_check
    _
  $region3: #{generator_forward.22} parent=0 // pred_check_branch
    %9 = sbr.rel (0) target = $region5
  $region4: #{generator_forward.22} parent=0 // pred_region
    _
  $region5: #{generator_forward.22} parent=0 // pred_fallthru
    _
  // Predicated region
  $region6: #{generator_forward.22} parent=0 // pred_check
    _
  $region7: #{generator_forward.22} parent=0 // pred_check_branch
    %11 = sbr.rel (0) target = $region9
  $region8: #{generator_forward.22} parent=0 // pred_region
    _
  $region9: #{generator_forward.22} parent=0 // pred_fallthru
    _
  // Predicated region
  $region10: #{generator_forward.22} parent=0 // pred_check
    _
  $region11: #{generator_forward.22} parent=0 // pred_check_branch
    %13 = sbr.rel (0) target = $region13
  $region12: #{generator_forward.22} parent=0 // pred_region
    _
  $region13: #{generator_forward.22} parent=0 // pred_fallthru
    _
  %v14 = vld [vmem:[%s0] sm:$0xff]
  %v15 = vld [vmem:[%s0 + $0x8] sm:$0xff]
  %v16 = vld [vmem:[%s0 + $0x10] sm:$0xff]
  %v17 = vld [vmem:[%s0 + $0x18] sm:$0xff]
  %v18 = vld [vmem:[%s0 + $0x20] sm:$0xff]
  %v19 = vld [vmem:[%s0 + $0x28] sm:$0xff]
  %v20 = vld [vmem:[%s0 + $0x30] sm:$0xff]
  %v21 = vld [vmem:[%s0 + $0x38] sm:$0xff]
  %v22 = vld [vmem:[%s0 + $0x40] sm:$0xff]
  %v23 = vld [vmem:[%s0 + $0x48] sm:$0xff]
  %v24 = vld [vmem:[%s0 + $0x50] sm:$0xff]
  %v25 = vld [vmem:[%s0 + $0x58] sm:$0xff]
  %v26 = vld [vmem:[%s0 + $0x60] sm:$0xff]
  %v27 = vld [vmem:[%s0 + $0x68] sm:$0xff]
  %v28 = vld [vmem:[%s0 + $0x70] sm:$0xff]
  %v29 = vld [vmem:[%s0 + $0x78] sm:$0xff]
  %v30 = vld [vmem:[%s1] sm:$0x1]
  %v32 = vperm.slane %v30, 0
  %v34 = vmul.f32 %v14, %v32
  %v35 = vmul.f32 %v15, %v32
  %v36 = vmul.f32 %v16, %v32
  %v37 = vmul.f32 %v17, %v32
  %v38 = vmul.f32 %v18, %v32
  %v39 = vmul.f32 %v19, %v32
  %v40 = vmul.f32 %v20, %v32
  %v41 = vmul.f32 %v21, %v32
  %v42 = vmul.f32 %v22, %v32
  %v43 = vmul.f32 %v23, %v32
  %v44 = vmul.f32 %v24, %v32
  %v45 = vmul.f32 %v25, %v32
  %v46 = vmul.f32 %v26, %v32
  %v47 = vmul.f32 %v27, %v32
  %v48 = vmul.f32 %v28, %v32
  %v49 = vmul.f32 %v29, %v32
  %v50 = vld [vmem:[%s2] sm:$0x1]
  %v52 = vperm.slane %v50, 0
  %v54 = vadd.f32 %v34, %v52
  %v55 = vadd.f32 %v35, %v52
  %v56 = vadd.f32 %v36, %v52
  %v57 = vadd.f32 %v37, %v52
  %v58 = vadd.f32 %v38, %v52
  %v59 = vadd.f32 %v39, %v52
  %v60 = vadd.f32 %v40, %v52
  %v61 = vadd.f32 %v41, %v52
  %v62 = vadd.f32 %v42, %v52
  %v63 = vadd.f32 %v43, %v52
  %v64 = vadd.f32 %v44, %v52
  %v65 = vadd.f32 %v45, %v52
  %v66 = vadd.f32 %v46, %v52
  %v67 = vadd.f32 %v47, %v52
  %v68 = vadd.f32 %v48, %v52
  %v69 = vadd.f32 %v49, %v52
  %vm70 = vcmp.ge.f32.partialorder %v54, 0.0
  %vm71 = vcmp.ge.f32.partialorder %v55, 0.0
  %vm72 = vcmp.ge.f32.partialorder %v56, 0.0
  %vm73 = vcmp.ge.f32.partialorder %v57, 0.0
  %vm74 = vcmp.ge.f32.partialorder %v58, 0.0
  %vm75 = vcmp.ge.f32.partialorder %v59, 0.0
  %vm76 = vcmp.ge.f32.partialorder %v60, 0.0
  %vm77 = vcmp.ge.f32.partialorder %v61, 0.0
  %vm78 = vcmp.ge.f32.partialorder %v62, 0.0
  %vm79 = vcmp.ge.f32.partialorder %v63, 0.0
  %vm80 = vcmp.ge.f32.partialorder %v64, 0.0
  %vm81 = vcmp.ge.f32.partialorder %v65, 0.0
  %vm82 = vcmp.ge.f32.partialorder %v66, 0.0
  %vm83 = vcmp.ge.f32.partialorder %v67, 0.0
  %vm84 = vcmp.ge.f32.partialorder %v68, 0.0
  %vm85 = vcmp.ge.f32.partialorder %v69, 0.0
  %v86 = vmul.f32 %v54, 0.2
  %v87 = vmul.f32 %v55, 0.2
  %v88 = vmul.f32 %v56, 0.2
  %v89 = vmul.f32 %v57, 0.2
  %v90 = vmul.f32 %v58, 0.2
  %v91 = vmul.f32 %v59, 0.2
  %v92 = vmul.f32 %v60, 0.2
  %v93 = vmul.f32 %v61, 0.2
  %v94 = vmul.f32 %v62, 0.2
  %v95 = vmul.f32 %v63, 0.2
  %v96 = vmul.f32 %v64, 0.2
  %v97 = vmul.f32 %v65, 0.2
  %v98 = vmul.f32 %v66, 0.2
  %v99 = vmul.f32 %v67, 0.2
  %v100 = vmul.f32 %v68, 0.2
  %v101 = vmul.f32 %v69, 0.2
  %v102 = vsel %vm70, %v54, %v86
  %v103 = vsel %vm71, %v55, %v87
  %v104 = vsel %vm72, %v56, %v88
  %v105 = vsel %vm73, %v57, %v89
  %v106 = vsel %vm74, %v58, %v90
  %v107 = vsel %vm75, %v59, %v91
  %v108 = vsel %vm76, %v60, %v92
  %v109 = vsel %vm77, %v61, %v93
  %v110 = vsel %vm78, %v62, %v94
  %v111 = vsel %vm79, %v63, %v95
  %v112 = vsel %vm80, %v64, %v96
  %v113 = vsel %vm81, %v65, %v97
  %v114 = vsel %vm82, %v66, %v98
  %v115 = vsel %vm83, %v67, %v99
  %v116 = vsel %vm84, %v68, %v100
  %v117 = vsel %vm85, %v69, %v101
  %vm118 = vcmask 130048
  %119 = vst.msk [vmem:[%s3] sm:$0xff] %vm118, %v102
  %120 = vst.msk [vmem:[%s3 + $0x8] sm:$0xff] %vm118, %v103
  %121 = vst.msk [vmem:[%s3 + $0x10] sm:$0xff] %vm118, %v104
  %122 = vst.msk [vmem:[%s3 + $0x18] sm:$0xff] %vm118, %v105
  %123 = vst.msk [vmem:[%s3 + $0x20] sm:$0xff] %vm118, %v106
  %124 = vst.msk [vmem:[%s3 + $0x28] sm:$0xff] %vm118, %v107
  %125 = vst.msk [vmem:[%s3 + $0x30] sm:$0xff] %vm118, %v108
  %126 = vst.msk [vmem:[%s3 + $0x38] sm:$0xff] %vm118, %v109
  %127 = vst.msk [vmem:[%s3 + $0x40] sm:$0xff] %vm118, %v110
  %128 = vst.msk [vmem:[%s3 + $0x48] sm:$0xff] %vm118, %v111
  %129 = vst.msk [vmem:[%s3 + $0x50] sm:$0xff] %vm118, %v112
  %130 = vst.msk [vmem:[%s3 + $0x58] sm:$0xff] %vm118, %v113
  %131 = vst.msk [vmem:[%s3 + $0x60] sm:$0xff] %vm118, %v114
  %132 = vst.msk [vmem:[%s3 + $0x68] sm:$0xff] %vm118, %v115
  %133 = vst.msk [vmem:[%s3 + $0x70] sm:$0xff] %vm118, %v116
  %134 = vst.msk [vmem:[%s3 + $0x78] sm:$0xff] %vm118, %v117
  // Predicated region
  $region14: #{generator_forward.22} parent=0 // pred_check
    _
  $region15: #{generator_forward.22} parent=0 // pred_check_branch
    %136 = sbr.rel (0) target = $region17
  $region16: #{generator_forward.22} parent=0 // pred_region
    _
  $region17: #{generator_forward.22} parent=0 // pred_fallthru
    _
  // Predicated region
  $region18: #{generator_forward.22} parent=0 // pred_check
    _
  $region19: #{generator_forward.22} parent=0 // pred_check_branch
    %138 = sbr.rel (0) target = $region21
  $region20: #{generator_forward.22} parent=0 // pred_region
    _
  $region21: #{generator_forward.22} parent=0 // pred_fallthru
    _

// kernel: generator_forward.24
$region0: #{generator_forward.24}
  #allocation0 [shape = 'u32[]', space=smem, size = 0x4, offset = 0x4, fixed_abs, tag = 'smem constant byte address 0x4 - core index']
  #allocation1 [shape = 'u32[72,128]{1,0:T(1,128)}', space=vmem, size = 0x9000, scoped, tag = 'internal scratch']
  %s0 = inlined_call_operand.vmem [shape: f32[32,32], index: 0, kind: input, shape index: {}]
  %s1 = inlined_call_operand.vmem [shape: f32[1,32], index: 1, kind: input, shape index: {}]
  %s2 = inlined_call_operand.vmem [shape: f32[1,32], index: 2, kind: input, shape index: {}]
  %s3 = inlined_call_operand.vmem [shape: f32[32,32], index: 3, kind: output, shape index: {}]
  %s4 = sld [smem:[#allocation0]]
  $region22: #{generator_forward.24} parent=0
    _
  %s6 = ssub.s32 1, %s4
  %s7 = scalar_select 0, %s6, %s4
  // Predicated region
  $region2: #{generator_forward.24} parent=0 // pred_check
    _
  $region3: #{generator_forward.24} parent=0 // pred_check_branch
    %9 = sbr.rel (0) target = $region5
  $region4: #{generator_forward.24} parent=0 // pred_region
    _
  $region5: #{generator_forward.24} parent=0 // pred_fallthru
    _
  // Predicated region
  $region6: #{generator_forward.24} parent=0 // pred_check
    _
  $region7: #{generator_forward.24} parent=0 // pred_check_branch
    %11 = sbr.rel (0) target = $region9
  $region8: #{generator_forward.24} parent=0 // pred_region
    _
  $region9: #{generator_forward.24} parent=0 // pred_fallthru
    _
  // Predicated region
  $region10: #{generator_forward.24} parent=0 // pred_check
    _
  $region11: #{generator_forward.24} parent=0 // pred_check_branch
    %13 = sbr.rel (0) target = $region13
  $region12: #{generator_forward.24} parent=0 // pred_region
    _
  $region13: #{generator_forward.24} parent=0 // pred_fallthru
    _
  %v14 = vld [vmem:[%s0] sm:$0xff]
  %v15 = vld [vmem:[%s0 + $0x8] sm:$0xff]
  %v16 = vld [vmem:[%s0 + $0x10] sm:$0xff]
  %v17 = vld [vmem:[%s0 + $0x18] sm:$0xff]
  %v18 = vld [vmem:[%s1] sm:$0x1]
  %v20 = vperm.slane %v18, 0
  %v22 = vmul.f32 %v14, %v20
  %v23 = vmul.f32 %v15, %v20
  %v24 = vmul.f32 %v16, %v20
  %v25 = vmul.f32 %v17, %v20
  %v26 = vld [vmem:[%s2] sm:$0x1]
  %v28 = vperm.slane %v26, 0
  %v30 = vadd.f32 %v22, %v28
  %v31 = vadd.f32 %v23, %v28
  %v32 = vadd.f32 %v24, %v28
  %v33 = vadd.f32 %v25, %v28
  %vm34 = vcmp.ge.f32.partialorder %v30, 0.0
  %vm35 = vcmp.ge.f32.partialorder %v31, 0.0
  %vm36 = vcmp.ge.f32.partialorder %v32, 0.0
  %vm37 = vcmp.ge.f32.partialorder %v33, 0.0
  %v38 = vmul.f32 %v30, 0.2
  %v39 = vmul.f32 %v31, 0.2
  %v40 = vmul.f32 %v32, 0.2
  %v41 = vmul.f32 %v33, 0.2
  %v42 = vsel %vm34, %v30, %v38
  %v43 = vsel %vm35, %v31, %v39
  %v44 = vsel %vm36, %v32, %v40
  %v45 = vsel %vm37, %v33, %v41
  %vm46 = vcmask 261120
  %47 = vst.msk [vmem:[%s3] sm:$0xff] %vm46, %v42
  %48 = vst.msk [vmem:[%s3 + $0x8] sm:$0xff] %vm46, %v43
  %49 = vst.msk [vmem:[%s3 + $0x10] sm:$0xff] %vm46, %v44
  %50 = vst.msk [vmem:[%s3 + $0x18] sm:$0xff] %vm46, %v45
  // Predicated region
  $region14: #{generator_forward.24} parent=0 // pred_check
    _
  $region15: #{generator_forward.24} parent=0 // pred_check_branch
    %52 = sbr.rel (0) target = $region17
  $region16: #{generator_forward.24} parent=0 // pred_region
    _
  $region17: #{generator_forward.24} parent=0 // pred_fallthru
    _
  // Predicated region
  $region18: #{generator_forward.24} parent=0 // pred_check
    _
  $region19: #{generator_forward.24} parent=0 // pred_check_branch
    %54 = sbr.rel (0) target = $region21
  $region20: #{generator_forward.24} parent=0 // pred_region
    _
  $region21: #{generator_forward.24} parent=0 // pred_fallthru
    _

// kernel: generator_forward.23
$region0: #{generator_forward.23}
  #allocation0 [shape = 'u32[]', space=smem, size = 0x4, offset = 0x4, fixed_abs, tag = 'smem constant byte address 0x4 - core index']
  #allocation1 [shape = 'u32[72,128]{1,0:T(1,128)}', space=vmem, size = 0x9000, scoped, tag = 'internal scratch']
  %s0 = inlined_call_operand.vmem [shape: bf16[32,256], index: 0, kind: input, shape index: {}]
  %s1 = inlined_call_operand.vmem [shape: bf16[256,32], index: 1, kind: input, shape index: {}]
  %s2 = inlined_call_operand.vmem [shape: f32[32,32], index: 2, kind: output, shape index: {0}]
  %s3 = inlined_call_operand.vmem [shape: f32[1,32], index: 3, kind: output, shape index: {1}]
  %s4 = inlined_call_operand.vmem [shape: f32[1,32], index: 4, kind: output, shape index: {2}]
  %5 = xla_tuple %s2, %s3, %s4
  %s6 = sld [smem:[#allocation0]]
  $region38: #{generator_forward.23} parent=0
    _
  %s8 = ssub.s32 1, %s6
  %s9 = scalar_select 0, %s8, %s6
  // Predicated region
  $region2: #{generator_forward.23} parent=0 // pred_check
    _
  $region3: #{generator_forward.23} parent=0 // pred_check_branch
    %11 = sbr.rel (0) target = $region5
  $region4: #{generator_forward.23} parent=0 // pred_region
    _
  $region5: #{generator_forward.23} parent=0 // pred_fallthru
    _
  // Predicated region
  $region6: #{generator_forward.23} parent=0 // pred_check
    _
  $region7: #{generator_forward.23} parent=0 // pred_check_branch
    %13 = sbr.rel (0) target = $region9
  $region8: #{generator_forward.23} parent=0 // pred_region
    _
  $region9: #{generator_forward.23} parent=0 // pred_fallthru
    _
  %p14 = scmp.eq.s32.totalorder 0, 0
  // Predicated region
  $region10: #{generator_forward.23} parent=0 // pred_check
    %p15 = pneg %p14
  $region11: #{generator_forward.23} parent=0 // pred_check_branch
    %17 = sbr.rel (%p15) target = $region13
  $region12: #{generator_forward.23} parent=0 // pred_region
    %vm18 = vcmask 253952
    %19 = vst.msk [vmem:[%s3] sm:$0x1] %vm18, 0.0
    %20 = vst.msk [vmem:[%s4] sm:$0x1] %vm18, 0.0
  $region13: #{generator_forward.23} parent=0 // pred_fallthru
    _
  %v21 = vld [vmem:[%s0] sm:$0xff]
  %v22 = vld [vmem:[%s0 + $0x8] sm:$0xff]
  %v23 = vld [vmem:[%s0 + $0x10] sm:$0xff]
  %v24 = vld [vmem:[%s0 + $0x18] sm:$0xff]
  %v25 = vld [vmem:[%s1] sm:$0xf]
  %v26 = vld [vmem:[%s1 + $0x4] sm:$0xf]
  %v27 = vld [vmem:[%s1 + $0x8] sm:$0xf]
  %v28 = vld [vmem:[%s1 + $0xc] sm:$0xf]
  %v29 = vld [vmem:[%s1 + $0x10] sm:$0xf]
  %v30 = vld [vmem:[%s1 + $0x14] sm:$0xf]
  %v31 = vld [vmem:[%s1 + $0x18] sm:$0xf]
  %v32 = vld [vmem:[%s1 + $0x1c] sm:$0xf]
  %v33 = vld [vmem:[%s1 + $0x20] sm:$0xf]
  %v34 = vld [vmem:[%s1 + $0x24] sm:$0xf]
  %v35 = vld [vmem:[%s1 + $0x28] sm:$0xf]
  %v36 = vld [vmem:[%s1 + $0x2c] sm:$0xf]
  %v37 = vld [vmem:[%s1 + $0x30] sm:$0xf]
  %v38 = vld [vmem:[%s1 + $0x34] sm:$0xf]
  %v39 = vld [vmem:[%s1 + $0x38] sm:$0xf]
  %v40 = vld [vmem:[%s1 + $0x3c] sm:$0xf]
  %v41 = vld [vmem:[%s1 + $0x40] sm:$0xf]
  %v42 = vld [vmem:[%s1 + $0x44] sm:$0xf]
  %v43 = vld [vmem:[%s1 + $0x48] sm:$0xf]
  %v44 = vld [vmem:[%s1 + $0x4c] sm:$0xf]
  %v45 = vld [vmem:[%s1 + $0x50] sm:$0xf]
  %v46 = vld [vmem:[%s1 + $0x54] sm:$0xf]
  %v47 = vld [vmem:[%s1 + $0x58] sm:$0xf]
  %v48 = vld [vmem:[%s1 + $0x5c] sm:$0xf]
  %v49 = vld [vmem:[%s1 + $0x60] sm:$0xf]
  %v50 = vld [vmem:[%s1 + $0x64] sm:$0xf]
  %v51 = vld [vmem:[%s1 + $0x68] sm:$0xf]
  %v52 = vld [vmem:[%s1 + $0x6c] sm:$0xf]
  %v53 = vld [vmem:[%s1 + $0x70] sm:$0xf]
  %v54 = vld [vmem:[%s1 + $0x74] sm:$0xf]
  %v55 = vld [vmem:[%s1 + $0x78] sm:$0xf]
  %v56 = vld [vmem:[%s1 + $0x7c] sm:$0xf]
  %v61 = vunpack.c.l.b16 %v21
  %v62 = vunpack.c.h.b16 %v21
  %v63 = vunpack.c.l.b16 %v22
  %v64 = vunpack.c.h.b16 %v22
  %v65 = vunpack.c.l.b16 %v23
  %v66 = vunpack.c.h.b16 %v23
  %v67 = vunpack.c.l.b16 %v24
  %v68 = vunpack.c.h.b16 %v24
  %v69 = vpack.c.b16 %v63, %v61
  %v70 = vpack.c.b16 %v64, %v62
  %v71 = vpack.c.b16 %v67, %v65
  %v72 = vpack.c.b16 %v68, %v66
  %v109 = vunpack.c.l.b16 %v25
  %v110 = vunpack.c.l.b16 %v26
  %v111 = vunpack.c.l.b16 %v27
  %v112 = vunpack.c.l.b16 %v28
  %v113 = vunpack.c.l.b16 %v29
  %v114 = vunpack.c.l.b16 %v30
  %v115 = vunpack.c.l.b16 %v31
  %v116 = vunpack.c.l.b16 %v32
  %v117 = vunpack.c.l.b16 %v33
  %v118 = vunpack.c.l.b16 %v34
  %v119 = vunpack.c.l.b16 %v35
  %v120 = vunpack.c.l.b16 %v36
  %v121 = vunpack.c.l.b16 %v37
  %v122 = vunpack.c.l.b16 %v38
  %v123 = vunpack.c.l.b16 %v39
  %v124 = vunpack.c.l.b16 %v40
  %v125 = vunpack.c.l.b16 %v41
  %v126 = vunpack.c.l.b16 %v42
  %v127 = vunpack.c.l.b16 %v43
  %v128 = vunpack.c.l.b16 %v44
  %v129 = vunpack.c.l.b16 %v45
  %v130 = vunpack.c.l.b16 %v46
  %v131 = vunpack.c.l.b16 %v47
  %v132 = vunpack.c.l.b16 %v48
  %v133 = vunpack.c.l.b16 %v49
  %v134 = vunpack.c.l.b16 %v50
  %v135 = vunpack.c.l.b16 %v51
  %v136 = vunpack.c.l.b16 %v52
  %v137 = vunpack.c.l.b16 %v53
  %v138 = vunpack.c.l.b16 %v54
  %v139 = vunpack.c.l.b16 %v55
  %v140 = vunpack.c.l.b16 %v56
  %v141 = vpack.c.b16 %v110, %v109
  %v142 = vpack.c.b16 %v112, %v111
  %v143 = vpack.c.b16 %v114, %v113
  %v144 = vpack.c.b16 %v116, %v115
  %v145 = vpack.c.b16 %v118, %v117
  %v146 = vpack.c.b16 %v120, %v119
  %v147 = vpack.c.b16 %v122, %v121
  %v148 = vpack.c.b16 %v124, %v123
  %v149 = vpack.c.b16 %v126, %v125
  %v150 = vpack.c.b16 %v128, %v127
  %v151 = vpack.c.b16 %v130, %v129
  %v152 = vpack.c.b16 %v132, %v131
  %v153 = vpack.c.b16 %v134, %v133
  %v154 = vpack.c.b16 %v136, %v135
  %v155 = vpack.c.b16 %v138, %v137
  %v156 = vpack.c.b16 %v140, %v139
  %173 = vmatpush.bf16.msra.mxu0 %v148
  %174 = vmatpush.bf16.msra.mxu0 %v147
  %175 = vmatpush.bf16.msra.mxu0 %v146
  %176 = vmatpush.bf16.msra.mxu0 %v145
  %177 = vmatpush.bf16.msra.mxu0 %v144
  %178 = vmatpush.bf16.msra.mxu0 %v143
  %179 = vmatpush.bf16.msra.mxu0 %v142
  %180 = vmatpush.bf16.msra.mxu0 %v141
  %181 = vmatmul.bf16.gmra.mxu0 %v69
  %v182 = vpop.f32.mrf.mxu0
  %v183 = vadd.f32 0.0, %v182
  %v184 = vpop.f32.mrf.mxu0
  %v185 = vadd.f32 0.0, %v184
  %186 = vmatmul.bf16.gmra.mxu0 %v71
  %v187 = vpop.f32.mrf.mxu0
  %v188 = vadd.f32 0.0, %v187
  %v189 = vpop.f32.mrf.mxu0
  %v190 = vadd.f32 0.0, %v189
  %191 = vdwg.mxu0
  %192 = vmatpush.bf16.msra.mxu0 %v156
  %193 = vmatpush.bf16.msra.mxu0 %v155
  %194 = vmatpush.bf16.msra.mxu0 %v154
  %195 = vmatpush.bf16.msra.mxu0 %v153
  %196 = vmatpush.bf16.msra.mxu0 %v152
  %197 = vmatpush.bf16.msra.mxu0 %v151
  %198 = vmatpush.bf16.msra.mxu0 %v150
  %199 = vmatpush.bf16.msra.mxu0 %v149
  %200 = vmatmul.bf16.gmra.mxu0 %v70
  %v201 = vpop.f32.mrf.mxu0
  %v202 = vadd.f32 %v183, %v201
  %v203 = vpop.f32.mrf.mxu0
  %v204 = vadd.f32 %v185, %v203
  %205 = vmatmul.bf16.gmra.mxu0 %v72
  %v206 = vpop.f32.mrf.mxu0
  %v207 = vadd.f32 %v188, %v206
  %v208 = vpop.f32.mrf.mxu0
  %v209 = vadd.f32 %v190, %v208
  %210 = vdwg.mxu0
  %vm211 = vcmask 261120
  %212 = vst.msk [vmem:[%s2] sm:$0xff] %vm211, %v202
  %213 = vst.msk [vmem:[%s2 + $0x8] sm:$0xff] %vm211, %v204
  %214 = vst.msk [vmem:[%s2 + $0x10] sm:$0xff] %vm211, %v207
  %215 = vst.msk [vmem:[%s2 + $0x18] sm:$0xff] %vm211, %v209
  %v216 = vld [vmem:[%s3] sm:$0x1]
  %v217 = vsel %vm211, %v202, 0.0
  %v218 = vsel %vm211, %v204, 0.0
  %v219 = vadd.f32 %v217, %v218
  %v220 = vsel %vm211, %v207, 0.0
  %v221 = vadd.f32 %v219, %v220
  %v222 = vsel %vm211, %v209, 0.0
  %v223 = vadd.f32 %v221, %v222
  %v224 = vrot.slane %v223, 4
  %v225 = vadd.f32 %v223, %v224
  %v226 = vrot.slane %v225, 2
  %v227 = vadd.f32 %v225, %v226
  %v228 = vrot.slane %v227, 1
  %v229 = vadd.f32 %v227, %v228
  %v230 = vadd.f32 %v216, %v229
  %vm231 = vcmask 253952
  %232 = vst.msk [vmem:[%s3] sm:$0x1] %vm231, %v230
  %v233 = vld [vmem:[%s4] sm:$0x1]
  %v234 = vmul.f32 %v202, %v202
  %v235 = vmul.f32 %v204, %v204
  %v236 = vmul.f32 %v207, %v207
  %v237 = vmul.f32 %v209, %v209
  %v238 = vsel %vm211, %v234, 0.0
  %v239 = vsel %vm211, %v235, 0.0
  %v240 = vadd.f32 %v238, %v239
  %v241 = vsel %vm211, %v236, 0.0
  %v242 = vadd.f32 %v240, %v241
  %v243 = vsel %vm211, %v237, 0.0
  %v244 = vadd.f32 %v242, %v243
  %v245 = vrot.slane %v244, 4
  %v246 = vadd.f32 %v244, %v245
  %v247 = vrot.slane %v246, 2
  %v248 = vadd.f32 %v246, %v247
  %v249 = vrot.slane %v248, 1
  %v250 = vadd.f32 %v248, %v249
  %v251 = vadd.f32 %v233, %v250
  %252 = vst.msk [vmem:[%s4] sm:$0x1] %vm231, %v251
  // Predicated region
  $region14: #{generator_forward.23} parent=0 // pred_check
    _
  $region15: #{generator_forward.23} parent=0 // pred_check_branch
    %254 = sbr.rel (0) target = $region17
  $region16: #{generator_forward.23} parent=0 // pred_region
    _
  $region17: #{generator_forward.23} parent=0 // pred_fallthru
    _
  // Predicated region
  $region18: #{generator_forward.23} parent=0 // pred_check
    _
  $region19: #{generator_forward.23} parent=0 // pred_check_branch
    %256 = sbr.rel (0) target = $region21
  $region20: #{generator_forward.23} parent=0 // pred_region
    _
  $region21: #{generator_forward.23} parent=0 // pred_fallthru
    _
  // Predicated region
  $region22: #{generator_forward.23} parent=0 // pred_check
    _
  $region23: #{generator_forward.23} parent=0 // pred_check_branch
    %258 = sbr.rel (0) target = $region25
  $region24: #{generator_forward.23} parent=0 // pred_region
    _
  $region25: #{generator_forward.23} parent=0 // pred_fallthru
    _
  // Predicated region
  $region26: #{generator_forward.23} parent=0 // pred_check
    _
  $region27: #{generator_forward.23} parent=0 // pred_check_branch
    %260 = sbr.rel (0) target = $region29
  $region28: #{generator_forward.23} parent=0 // pred_region
    _
  $region29: #{generator_forward.23} parent=0 // pred_fallthru
    _
  // Predicated region
  $region30: #{generator_forward.23} parent=0 // pred_check
    _
  $region31: #{generator_forward.23} parent=0 // pred_check_branch
    %262 = sbr.rel (0) target = $region33
  $region32: #{generator_forward.23} parent=0 // pred_region
    _
  $region33: #{generator_forward.23} parent=0 // pred_fallthru
    _
  // Predicated region
  $region34: #{generator_forward.23} parent=0 // pred_check
    _
  $region35: #{generator_forward.23} parent=0 // pred_check_branch
    %264 = sbr.rel (0) target = $region37
  $region36: #{generator_forward.23} parent=0 // pred_region
    _
  $region37: #{generator_forward.23} parent=0 // pred_fallthru
    _

// kernel: squeeze.22
$region0: #{squeeze.22}
  %s0 = inlined_call_operand.vmem [shape: f32[128], index: 0, kind: input, shape index: {}]
  %s1 = inlined_call_operand.vmem [shape: f32[4,32], index: 1, kind: output, shape index: {}]
  $region1: #{squeeze.22} parent=0
    #allocation0 [shape = 'u8[4096]{0}', space=vmem, size = 0x1000, scoped, tag = 'scoped mem for output reshape']
    #allocation1 [shape = 'u8[4096]{0}', space=vmem, size = 0x1000, scoped, tag = 'scoped mem for input reshape']
    %s3 = ssub.s32 2, 1
    %v4 = vld [vmem:[%s0] sm:%s3]
    %5 = vst [vmem:[#allocation1] sm:%s3] %v4
    %v6 = vld [vmem:[#allocation1] sm:$0x1]
    %vm7 = vcmask 261120
    %8 = vst.msk [vmem:[#allocation0] sm:$0x1] %vm7, %v6
    %v9 = vld [vmem:[#allocation1] sm:$0x1]
    %10 = vrot.lane.b32.xlu0 %v9, 96
    %v11 = vpop.permute.xlu0 %10
    %vm12 = vcmask 261120
    %s13 = scalar_lea.vmem [#allocation0], 1
    %14 = vst.msk [vmem:[%s13] sm:$0x1] %vm12, %v11
    %v15 = vld [vmem:[#allocation1] sm:$0x1]
    %16 = vrot.lane.b32.xlu0 %v15, 64
    %v17 = vpop.permute.xlu0 %16
    %vm18 = vcmask 261120
    %s19 = scalar_lea.vmem [#allocation0], 2
    %20 = vst.msk [vmem:[%s19] sm:$0x1] %vm18, %v17
    %v21 = vld [vmem:[#allocation1] sm:$0x1]
    %22 = vrot.lane.b32.xlu0 %v21, 32
    %v23 = vpop.permute.xlu0 %22
    %vm24 = vcmask 261120
    %s25 = scalar_lea.vmem [#allocation0], 3
    %26 = vst.msk [vmem:[%s25] sm:$0x1] %vm24, %v23
    %s28 = ssub.s32 16, 1
    %v29 = vld [vmem:[#allocation0] sm:%s28]
    %s31 = ssub.s32 16, 1
    %32 = vst [vmem:[%s1] sm:%s31] %v29

// kernel: tile.33
$region0: #{tile.33}
  #allocation0 [shape = 's32[1]{0}', space=sflag, size = 0x4, scoped, tag = 'scoped memory for tile.33']
  %s0 = inlined_call_operand.vmem [shape: f32[32], index: 0, kind: input, shape index: {}]
  %s1 = inlined_call_operand.vmem [shape: f32[4,32], index: 1, kind: output, shape index: {}]
  // Predicated region
  $region2: #{tile.33} parent=0 // pred_check
    _
  $region3: #{tile.33} parent=0 // pred_check_branch
    %3 = sbr.rel (0) target = $region5
  $region4: #{tile.33} parent=0 // pred_region
    _
  $region5: #{tile.33} parent=0 // pred_fallthru
    _
  %v4 = vld [vmem:[%s0] ss:$0 sm:$0xff]
  %5 = vst [vmem:[%s1] sm:$0xf] %v4

// kernel: generator_forward.25
$region0: #{generator_forward.25}
  #allocation0 [shape = 'u32[]', space=smem, size = 0x4, offset = 0x4, fixed_abs, tag = 'smem constant byte address 0x4 - core index']
  #allocation1 [shape = 'u32[72,128]{1,0:T(1,128)}', space=vmem, size = 0x9000, scoped, tag = 'internal scratch']
  %s0 = inlined_call_operand.vmem [shape: bf16[32,324], index: 0, kind: input, shape index: {}]
  %s1 = inlined_call_operand.vmem [shape: bf16[324,128], index: 1, kind: input, shape index: {}]
  %s2 = inlined_call_operand.vmem [shape: f32[32,128], index: 2, kind: output, shape index: {0}]
  %s3 = inlined_call_operand.vmem [shape: f32[1,128], index: 3, kind: output, shape index: {1}]
  %s4 = inlined_call_operand.vmem [shape: f32[1,128], index: 4, kind: output, shape index: {2}]
  %5 = xla_tuple %s2, %s3, %s4
  %s6 = sld [smem:[#allocation0]]
  $region38: #{generator_forward.25} parent=0
    _
  %s8 = ssub.s32 1, %s6
  %s9 = scalar_select 0, %s8, %s6
  // Predicated region
  $region2: #{generator_forward.25} parent=0 // pred_check
    _
  $region3: #{generator_forward.25} parent=0 // pred_check_branch
    %11 = sbr.rel (0) target = $region5
  $region4: #{generator_forward.25} parent=0 // pred_region
    _
  $region5: #{generator_forward.25} parent=0 // pred_fallthru
    _
  // Predicated region
  $region6: #{generator_forward.25} parent=0 // pred_check
    _
  $region7: #{generator_forward.25} parent=0 // pred_check_branch
    %13 = sbr.rel (0) target = $region9
  $region8: #{generator_forward.25} parent=0 // pred_region
    _
  $region9: #{generator_forward.25} parent=0 // pred_fallthru
    _
  %p15 = scmp.eq.s32.totalorder 0, 0
  // Predicated region
  $region10: #{generator_forward.25} parent=0 // pred_check
    %p16 = pneg %p15
  $region11: #{generator_forward.25} parent=0 // pred_check_branch
    %18 = sbr.rel (%p16) target = $region13
  $region12: #{generator_forward.25} parent=0 // pred_region
    %19 = vst [vmem:[%s3] sm:$0x1] 0.0
    %20 = vst [vmem:[%s4] sm:$0x1] 0.0
  $region13: #{generator_forward.25} parent=0 // pred_fallthru
    _
  %v21 = vld [vmem:[%s0] sm:$0xff]
  %v22 = vld [vmem:[%s0 + $0x8] sm:$0xf]
  %v23 = vld [vmem:[%s0 + $0xc] sm:$0xff]
  %v24 = vld [vmem:[%s0 + $0x14] sm:$0xf]
  %v25 = vld [vmem:[%s0 + $0x18] sm:$0xff]
  %v26 = vld [vmem:[%s0 + $0x20] sm:$0xf]
  %v27 = vld [vmem:[%s0 + $0x24] sm:$0xff]
  %v28 = vld [vmem:[%s0 + $0x2c] sm:$0xf]
  %v29 = vld [vmem:[%s1] sm:$0xf]
  %v30 = vld [vmem:[%s1 + $0x4] sm:$0xf]
  %v31 = vld [vmem:[%s1 + $0x8] sm:$0xf]
  %v32 = vld [vmem:[%s1 + $0xc] sm:$0xf]
  %v33 = vld [vmem:[%s1 + $0x10] sm:$0xf]
  %v34 = vld [vmem:[%s1 + $0x14] sm:$0xf]
  %v35 = vld [vmem:[%s1 + $0x18] sm:$0xf]
  %v36 = vld [vmem:[%s1 + $0x1c] sm:$0xf]
  %v37 = vld [vmem:[%s1 + $0x20] sm:$0xf]
  %v38 = vld [vmem:[%s1 + $0x24] sm:$0xf]
  %v39 = vld [vmem:[%s1 + $0x28] sm:$0xf]
  %v40 = vld [vmem:[%s1 + $0x2c] sm:$0xf]
  %v41 = vld [vmem:[%s1 + $0x30] sm:$0xf]
  %v42 = vld [vmem:[%s1 + $0x34] sm:$0xf]
  %v43 = vld [vmem:[%s1 + $0x38] sm:$0xf]
  %v44 = vld [vmem:[%s1 + $0x3c] sm:$0xf]
  %v45 = vld [vmem:[%s1 + $0x40] sm:$0xf]
  %v46 = vld [vmem:[%s1 + $0x44] sm:$0xf]
  %v47 = vld [vmem:[%s1 + $0x48] sm:$0xf]
  %v48 = vld [vmem:[%s1 + $0x4c] sm:$0xf]
  %v49 = vld [vmem:[%s1 + $0x50] sm:$0xf]
  %v50 = vld [vmem:[%s1 + $0x54] sm:$0xf]
  %v51 = vld [vmem:[%s1 + $0x58] sm:$0xf]
  %v52 = vld [vmem:[%s1 + $0x5c] sm:$0xf]
  %v53 = vld [vmem:[%s1 + $0x60] sm:$0xf]
  %v54 = vld [vmem:[%s1 + $0x64] sm:$0xf]
  %v55 = vld [vmem:[%s1 + $0x68] sm:$0xf]
  %v56 = vld [vmem:[%s1 + $0x6c] sm:$0xf]
  %v57 = vld [vmem:[%s1 + $0x70] sm:$0xf]
  %v58 = vld [vmem:[%s1 + $0x74] sm:$0xf]
  %v59 = vld [vmem:[%s1 + $0x78] sm:$0xf]
  %v60 = vld [vmem:[%s1 + $0x7c] sm:$0xf]
  %v61 = vld [vmem:[%s1 + $0x80] sm:$0xf]
  %v62 = vld [vmem:[%s1 + $0x84] sm:$0xf]
  %v63 = vld [vmem:[%s1 + $0x88] sm:$0xf]
  %v64 = vld [vmem:[%s1 + $0x8c] sm:$0xf]
  %v65 = vld [vmem:[%s1 + $0x90] sm:$0xf]
  %v66 = vld [vmem:[%s1 + $0x94] sm:$0xf]
  %v67 = vld [vmem:[%s1 + $0x98] sm:$0xf]
  %v68 = vld [vmem:[%s1 + $0x9c] sm:$0xf]
  %v69 = vld [vmem:[%s1 + $0xa0] sm:$0x3]
  %v78 = vunpack.c.l.b16 %v21
  %v79 = vunpack.c.h.b16 %v21
  %v80 = vunpack.c.l.b16 %v22
  %v81 = vunpack.c.l.b16 %v23
  %v82 = vunpack.c.h.b16 %v23
  %v83 = vunpack.c.l.b16 %v24
  %v84 = vunpack.c.l.b16 %v25
  %v85 = vunpack.c.h.b16 %v25
  %v86 = vunpack.c.l.b16 %v26
  %v87 = vunpack.c.l.b16 %v27
  %v88 = vunpack.c.h.b16 %v27
  %v89 = vunpack.c.l.b16 %v28
  %v90 = vpack.c.b16 %v81, %v78
  %v91 = vpack.c.b16 %v82, %v79
  %v92 = vpack.c.b16 %v83, %v80
  %v93 = vpack.c.b16 %v87, %v84
  %v94 = vpack.c.b16 %v88, %v85
  %v95 = vpack.c.b16 %v89, %v86
  %v141 = vunpack.c.l.b16 %v29
  %v142 = vunpack.c.l.b16 %v30
  %v143 = vunpack.c.l.b16 %v31
  %v144 = vunpack.c.l.b16 %v32
  %v145 = vunpack.c.l.b16 %v33
  %v146 = vunpack.c.l.b16 %v34
  %v147 = vunpack.c.l.b16 %v35
  %v148 = vunpack.c.l.b16 %v36
  %v149 = vunpack.c.l.b16 %v37
  %v150 = vunpack.c.l.b16 %v38
  %v151 = vunpack.c.l.b16 %v39
  %v152 = vunpack.c.l.b16 %v40
  %v153 = vunpack.c.l.b16 %v41
  %v154 = vunpack.c.l.b16 %v42
  %v155 = vunpack.c.l.b16 %v43
  %v156 = vunpack.c.l.b16 %v44
  %v157 = vunpack.c.l.b16 %v45
  %v158 = vunpack.c.l.b16 %v46
  %v159 = vunpack.c.l.b16 %v47
  %v160 = vunpack.c.l.b16 %v48
  %v161 = vunpack.c.l.b16 %v49
  %v162 = vunpack.c.l.b16 %v50
  %v163 = vunpack.c.l.b16 %v51
  %v164 = vunpack.c.l.b16 %v52
  %v165 = vunpack.c.l.b16 %v53
  %v166 = vunpack.c.l.b16 %v54
  %v167 = vunpack.c.l.b16 %v55
  %v168 = vunpack.c.l.b16 %v56
  %v169 = vunpack.c.l.b16 %v57
  %v170 = vunpack.c.l.b16 %v58
  %v171 = vunpack.c.l.b16 %v59
  %v172 = vunpack.c.l.b16 %v60
  %v173 = vunpack.c.l.b16 %v61
  %v174 = vunpack.c.l.b16 %v62
  %v175 = vunpack.c.l.b16 %v63
  %v176 = vunpack.c.l.b16 %v64
  %v177 = vunpack.c.l.b16 %v65
  %v178 = vunpack.c.l.b16 %v66
  %v179 = vunpack.c.l.b16 %v67
  %v180 = vunpack.c.l.b16 %v68
  %v181 = vunpack.c.l.b16 %v69
  %v182 = vpack.c.b16 %v142, %v141
  %v183 = vpack.c.b16 %v144, %v143
  %v184 = vpack.c.b16 %v146, %v145
  %v185 = vpack.c.b16 %v148, %v147
  %v186 = vpack.c.b16 %v150, %v149
  %v187 = vpack.c.b16 %v152, %v151
  %v188 = vpack.c.b16 %v154, %v153
  %v189 = vpack.c.b16 %v156, %v155
  %v190 = vpack.c.b16 %v158, %v157
  %v191 = vpack.c.b16 %v160, %v159
  %v192 = vpack.c.b16 %v162, %v161
  %v193 = vpack.c.b16 %v164, %v163
  %v194 = vpack.c.b16 %v166, %v165
  %v195 = vpack.c.b16 %v168, %v167
  %v196 = vpack.c.b16 %v170, %v169
  %v197 = vpack.c.b16 %v172, %v171
  %v198 = vpack.c.b16 %v174, %v173
  %v199 = vpack.c.b16 %v176, %v175
  %v200 = vpack.c.b16 %v178, %v177
  %v201 = vpack.c.b16 %v180, %v179
  %v202 = vpack.c.b16 %v181, %v181
  %vm223 = vcmask 556032
  %v225 = vsel %vm223, %v92, 0
  %v228 = vsel %vm223, %v95, 0
  %vm230 = vcmask 1041408
  %v232 = vsel %vm230, %v202, 0
  %234 = vmatpush.bf16.msra.mxu0 %v189
  %235 = vmatpush.bf16.msra.mxu0 %v188
  %236 = vmatpush.bf16.msra.mxu0 %v187
  %237 = vmatpush.bf16.msra.mxu0 %v186
  %238 = vmatpush.bf16.msra.mxu0 %v185
  %239 = vmatpush.bf16.msra.mxu0 %v184
  %240 = vmatpush.bf16.msra.mxu0 %v183
  %241 = vmatpush.bf16.msra.mxu0 %v182
  %242 = vmatmul.bf16.gmra.mxu0 %v90
  %v243 = vpop.f32.mrf.mxu0
  %v244 = vadd.f32 0.0, %v243
  %v245 = vpop.f32.mrf.mxu0
  %v246 = vadd.f32 0.0, %v245
  %247 = vmatmul.bf16.gmra.mxu0 %v93
  %v248 = vpop.f32.mrf.mxu0
  %v249 = vadd.f32 0.0, %v248
  %v250 = vpop.f32.mrf.mxu0
  %v251 = vadd.f32 0.0, %v250
  %252 = vdwg.mxu0
  %253 = vmatpush.bf16.msra.mxu0 %v197
  %254 = vmatpush.bf16.msra.mxu0 %v196
  %255 = vmatpush.bf16.msra.mxu0 %v195
  %256 = vmatpush.bf16.msra.mxu0 %v194
  %257 = vmatpush.bf16.msra.mxu0 %v193
  %258 = vmatpush.bf16.msra.mxu0 %v192
  %259 = vmatpush.bf16.msra.mxu0 %v191
  %260 = vmatpush.bf16.msra.mxu0 %v190
  %261 = vmatmul.bf16.gmra.mxu0 %v91
  %v262 = vpop.f32.mrf.mxu0
  %v263 = vadd.f32 %v244, %v262
  %v264 = vpop.f32.mrf.mxu0
  %v265 = vadd.f32 %v246, %v264
  %266 = vmatmul.bf16.gmra.mxu0 %v94
  %v267 = vpop.f32.mrf.mxu0
  %v268 = vadd.f32 %v249, %v267
  %v269 = vpop.f32.mrf.mxu0
  %v270 = vadd.f32 %v251, %v269
  %271 = vdwg.mxu0
  %272 = vmatpush.bf16.msra.mxu0 0
  %273 = vmatpush.bf16.msra.mxu0 0
  %274 = vmatpush.bf16.msra.mxu0 0
  %275 = vmatpush.bf16.msra.mxu0 %v232
  %276 = vmatpush.bf16.msra.mxu0 %v201
  %277 = vmatpush.bf16.msra.mxu0 %v200
  %278 = vmatpush.bf16.msra.mxu0 %v199
  %279 = vmatpush.bf16.msra.mxu0 %v198
  %280 = vmatmul.bf16.gmra.mxu0 %v225
  %v281 = vpop.f32.mrf.mxu0
  %v282 = vadd.f32 %v263, %v281
  %v283 = vpop.f32.mrf.mxu0
  %v284 = vadd.f32 %v265, %v283
  %285 = vmatmul.bf16.gmra.mxu0 %v228
  %v286 = vpop.f32.mrf.mxu0
  %v287 = vadd.f32 %v268, %v286
  %v288 = vpop.f32.mrf.mxu0
  %v289 = vadd.f32 %v270, %v288
  %290 = vdwg.mxu0
  %291 = vst [vmem:[%s2] sm:$0xff] %v282
  %292 = vst [vmem:[%s2 + $0x8] sm:$0xff] %v284
  %293 = vst [vmem:[%s2 + $0x10] sm:$0xff] %v287
  %294 = vst [vmem:[%s2 + $0x18] sm:$0xff] %v289
  %v295 = vld [vmem:[%s3] sm:$0x1]
  %v296 = vadd.f32 %v282, %v284
  %v297 = vadd.f32 %v296, %v287
  %v298 = vadd.f32 %v297, %v289
  %v299 = vrot.slane %v298, 4
  %v300 = vadd.f32 %v298, %v299
  %v301 = vrot.slane %v300, 2
  %v302 = vadd.f32 %v300, %v301
  %v303 = vrot.slane %v302, 1
  %v304 = vadd.f32 %v302, %v303
  %v305 = vadd.f32 %v295, %v304
  %306 = vst [vmem:[%s3] sm:$0x1] %v305
  %v307 = vld [vmem:[%s4] sm:$0x1]
  %v308 = vmul.f32 %v282, %v282
  %v309 = vmul.f32 %v284, %v284
  %v310 = vmul.f32 %v287, %v287
  %v311 = vmul.f32 %v289, %v289
  %v312 = vadd.f32 %v308, %v309
  %v313 = vadd.f32 %v312, %v310
  %v314 = vadd.f32 %v313, %v311
  %v315 = vrot.slane %v314, 4
  %v316 = vadd.f32 %v314, %v315
  %v317 = vrot.slane %v316, 2
  %v318 = vadd.f32 %v316, %v317
  %v319 = vrot.slane %v318, 1
  %v320 = vadd.f32 %v318, %v319
  %v321 = vadd.f32 %v307, %v320
  %322 = vst [vmem:[%s4] sm:$0x1] %v321
  // Predicated region
  $region14: #{generator_forward.25} parent=0 // pred_check
    _
  $region15: #{generator_forward.25} parent=0 // pred_check_branch
    %324 = sbr.rel (0) target = $region17
  $region16: #{generator_forward.25} parent=0 // pred_region
    _
  $region17: #{generator_forward.25} parent=0 // pred_fallthru
    _
  // Predicated region
  $region18: #{generator_forward.25} parent=0 // pred_check
    _
  $region19: #{generator_forward.25} parent=0 // pred_check_branch
    %326 = sbr.rel (0) target = $region21
  $region20: #{generator_forward.25} parent=0 // pred_region
    _
  $region21: #{generator_forward.25} parent=0 // pred_fallthru
    _
  // Predicated region
  $region22: #{generator_forward.25} parent=0 // pred_check
    _
  $region23: #{generator_forward.25} parent=0 // pred_check_branch
    %328 = sbr.rel (0) target = $region25
  $region24: #{generator_forward.25} parent=0 // pred_region
    _
  $region25: #{generator_forward.25} parent=0 // pred_fallthru
    _
  // Predicated region
  $region26: #{generator_forward.25} parent=0 // pred_check
    _
  $region27: #{generator_forward.25} parent=0 // pred_check_branch
    %330 = sbr.rel (0) target = $region29
  $region28: #{generator_forward.25} parent=0 // pred_region
    _
  $region29: #{generator_forward.25} parent=0 // pred_fallthru
    _
  // Predicated region
  $region30: #{generator_forward.25} parent=0 // pred_check
    _
  $region31: #{generator_forward.25} parent=0 // pred_check_branch
    %332 = sbr.rel (0) target = $region33
  $region32: #{generator_forward.25} parent=0 // pred_region
    _
  $region33: #{generator_forward.25} parent=0 // pred_fallthru
    _
  // Predicated region
  $region34: #{generator_forward.25} parent=0 // pred_check
    _
  $region35: #{generator_forward.25} parent=0 // pred_check_branch
    %334 = sbr.rel (0) target = $region37
  $region36: #{generator_forward.25} parent=0 // pred_region
    _
  $region37: #{generator_forward.25} parent=0 // pred_fallthru
    _

// kernel: tile.38
$region0: #{tile.38}
  %s0 = inlined_call_operand.vmem [shape: f32[4,32], index: 0, kind: input, shape index: {}]
  %s1 = inlined_call_operand.vmem [shape: f32[1,128], index: 1, kind: output, shape index: {}]
  $region1: #{tile.38} parent=0
    #allocation0 [shape = 'u8[4096]{0}', space=vmem, size = 0x1000, scoped, tag = 'scoped mem for output reshape']
    #allocation1 [shape = 'u8[4096]{0}', space=vmem, size = 0x1000, scoped, tag = 'scoped mem for input reshape']
    %s3 = ssub.s32 16, 1
    %v4 = vld [vmem:[%s0] sm:%s3]
    %5 = vst [vmem:[#allocation1] sm:%s3] %v4
    %v6 = vld [vmem:[#allocation1] sm:$0x1]
    %vm7 = vcmask 261120
    %8 = vst.msk [vmem:[#allocation0] sm:$0x1] %vm7, %v6
    %s9 = scalar_lea.vmem [#allocation1], 3
    %v10 = vld [vmem:[%s9] sm:$0x1]
    %11 = vrot.lane.b32.xlu0 %v10, 96
    %v12 = vpop.permute.xlu0 %11
    %vm13 = vcmask 1048320
    %14 = vst.msk [vmem:[#allocation0] sm:$0x1] %vm13, %v12
    %s15 = scalar_lea.vmem [#allocation1], 2
    %v16 = vld [vmem:[%s15] sm:$0x1]
    %17 = vrot.lane.b32.xlu0 %v16, 64
    %v18 = vpop.permute.xlu0 %17
    %vm19 = vcmask 785920
    %20 = vst.msk [vmem:[#allocation0] sm:$0x1] %vm19, %v18
    %s21 = scalar_lea.vmem [#allocation1], 1
    %v22 = vld [vmem:[%s21] sm:$0x1]
    %23 = vrot.lane.b32.xlu0 %v22, 32
    %v24 = vpop.permute.xlu0 %23
    %vm25 = vcmask 523520
    %26 = vst.msk [vmem:[#allocation0] sm:$0x1] %vm25, %v24
    %s28 = ssub.s32 2, 1
    %v29 = vld [vmem:[#allocation0] sm:%s28]
    %s31 = ssub.s32 2, 1
    %32 = vst [vmem:[%s1] sm:%s31] %v29

// kernel: generator_forward.26
$region0: #{generator_forward.26}
  #allocation0 [shape = 'u32[]', space=smem, size = 0x4, offset = 0x4, fixed_abs, tag = 'smem constant byte address 0x4 - core index']
  #allocation1 [shape = 'u32[72,128]{1,0:T(1,128)}', space=vmem, size = 0x9000, scoped, tag = 'internal scratch']
  %s0 = inlined_call_operand.vmem [shape: f32[32,128], index: 0, kind: input, shape index: {}]
  %s1 = inlined_call_operand.vmem [shape: f32[1,128], index: 1, kind: input, shape index: {}]
  %s2 = inlined_call_operand.vmem [shape: f32[1,128], index: 2, kind: input, shape index: {}]
  %s3 = inlined_call_operand.vmem [shape: f32[32,128], index: 3, kind: output, shape index: {}]
  %s4 = sld [smem:[#allocation0]]
  $region22: #{generator_forward.26} parent=0
    _
  %s6 = ssub.s32 1, %s4
  %s7 = scalar_select 0, %s6, %s4
  // Predicated region
  $region2: #{generator_forward.26} parent=0 // pred_check
    _
  $region3: #{generator_forward.26} parent=0 // pred_check_branch
    %9 = sbr.rel (0) target = $region5
  $region4: #{generator_forward.26} parent=0 // pred_region
    _
  $region5: #{generator_forward.26} parent=0 // pred_fallthru
    _
  // Predicated region
  $region6: #{generator_forward.26} parent=0 // pred_check
    _
  $region7: #{generator_forward.26} parent=0 // pred_check_branch
    %11 = sbr.rel (0) target = $region9
  $region8: #{generator_forward.26} parent=0 // pred_region
    _
  $region9: #{generator_forward.26} parent=0 // pred_fallthru
    _
  // Predicated region
  $region10: #{generator_forward.26} parent=0 // pred_check
    _
  $region11: #{generator_forward.26} parent=0 // pred_check_branch
    %13 = sbr.rel (0) target = $region13
  $region12: #{generator_forward.26} parent=0 // pred_region
    _
  $region13: #{generator_forward.26} parent=0 // pred_fallthru
    _
  %v14 = vld [vmem:[%s0] sm:$0xff]
  %v15 = vld [vmem:[%s0 + $0x8] sm:$0xff]
  %v16 = vld [vmem:[%s0 + $0x10] sm:$0xff]
  %v17 = vld [vmem:[%s0 + $0x18] sm:$0xff]
  %v18 = vld [vmem:[%s1] sm:$0x1]
  %v20 = vperm.slane %v18, 0
  %v22 = vmul.f32 %v14, %v20
  %v23 = vmul.f32 %v15, %v20
  %v24 = vmul.f32 %v16, %v20
  %v25 = vmul.f32 %v17, %v20
  %v26 = vld [vmem:[%s2] sm:$0x1]
  %v28 = vperm.slane %v26, 0
  %v30 = vadd.f32 %v22, %v28
  %v31 = vadd.f32 %v23, %v28
  %v32 = vadd.f32 %v24, %v28
  %v33 = vadd.f32 %v25, %v28
  %v34 = vmax.f32 %v30, 0.0
  %v35 = vmax.f32 %v31, 0.0
  %v36 = vmax.f32 %v32, 0.0
  %v37 = vmax.f32 %v33, 0.0
  %38 = vst [vmem:[%s3] sm:$0xff] %v34
  %39 = vst [vmem:[%s3 + $0x8] sm:$0xff] %v35
  %40 = vst [vmem:[%s3 + $0x10] sm:$0xff] %v36
  %41 = vst [vmem:[%s3 + $0x18] sm:$0xff] %v37
  // Predicated region
  $region14: #{generator_forward.26} parent=0 // pred_check
    _
  $region15: #{generator_forward.26} parent=0 // pred_check_branch
    %43 = sbr.rel (0) target = $region17
  $region16: #{generator_forward.26} parent=0 // pred_region
    _
  $region17: #{generator_forward.26} parent=0 // pred_fallthru
    _
  // Predicated region
  $region18: #{generator_forward.26} parent=0 // pred_check
    _
  $region19: #{generator_forward.26} parent=0 // pred_check_branch
    %45 = sbr.rel (0) target = $region21
  $region20: #{generator_forward.26} parent=0 // pred_region
    _
  $region21: #{generator_forward.26} parent=0 // pred_fallthru
    _

// kernel: generator_forward.27
$region0: #{generator_forward.27}
  #allocation0 [shape = 'u32[]', space=smem, size = 0x4, offset = 0x4, fixed_abs, tag = 'smem constant byte address 0x4 - core index']
  #allocation1 [shape = 'u32[72,128]{1,0:T(1,128)}', space=vmem, size = 0x9000, scoped, tag = 'internal scratch']
  %s0 = inlined_call_operand.vmem [shape: bf16[32,324], index: 0, kind: input, shape index: {}]
  %s1 = inlined_call_operand.vmem [shape: bf16[324,64], index: 1, kind: input, shape index: {}]
  %s2 = inlined_call_operand.vmem [shape: f32[32,64], index: 2, kind: output, shape index: {}]
  %s3 = sld [smem:[#allocation0]]
  $region18: #{generator_forward.27} parent=0
    _
  %s5 = ssub.s32 1, %s3
  %s6 = scalar_select 0, %s5, %s3
  // Predicated region
  $region2: #{generator_forward.27} parent=0 // pred_check
    _
  $region3: #{generator_forward.27} parent=0 // pred_check_branch
    %8 = sbr.rel (0) target = $region5
  $region4: #{generator_forward.27} parent=0 // pred_region
    _
  $region5: #{generator_forward.27} parent=0 // pred_fallthru
    _
  // Predicated region
  $region6: #{generator_forward.27} parent=0 // pred_check
    _
  $region7: #{generator_forward.27} parent=0 // pred_check_branch
    %10 = sbr.rel (0) target = $region9
  $region8: #{generator_forward.27} parent=0 // pred_region
    _
  $region9: #{generator_forward.27} parent=0 // pred_fallthru
    _
  %v12 = vld [vmem:[%s0] sm:$0xff]
  %v13 = vld [vmem:[%s0 + $0x8] sm:$0xf]
  %v14 = vld [vmem:[%s0 + $0xc] sm:$0xff]
  %v15 = vld [vmem:[%s0 + $0x14] sm:$0xf]
  %v16 = vld [vmem:[%s0 + $0x18] sm:$0xff]
  %v17 = vld [vmem:[%s0 + $0x20] sm:$0xf]
  %v18 = vld [vmem:[%s0 + $0x24] sm:$0xff]
  %v19 = vld [vmem:[%s0 + $0x2c] sm:$0xf]
  %v20 = vld [vmem:[%s1] sm:$0xf]
  %v21 = vld [vmem:[%s1 + $0x4] sm:$0xf]
  %v22 = vld [vmem:[%s1 + $0x8] sm:$0xf]
  %v23 = vld [vmem:[%s1 + $0xc] sm:$0xf]
  %v24 = vld [vmem:[%s1 + $0x10] sm:$0xf]
  %v25 = vld [vmem:[%s1 + $0x14] sm:$0xf]
  %v26 = vld [vmem:[%s1 + $0x18] sm:$0xf]
  %v27 = vld [vmem:[%s1 + $0x1c] sm:$0xf]
  %v28 = vld [vmem:[%s1 + $0x20] sm:$0xf]
  %v29 = vld [vmem:[%s1 + $0x24] sm:$0xf]
  %v30 = vld [vmem:[%s1 + $0x28] sm:$0xf]
  %v31 = vld [vmem:[%s1 + $0x2c] sm:$0xf]
  %v32 = vld [vmem:[%s1 + $0x30] sm:$0xf]
  %v33 = vld [vmem:[%s1 + $0x34] sm:$0xf]
  %v34 = vld [vmem:[%s1 + $0x38] sm:$0xf]
  %v35 = vld [vmem:[%s1 + $0x3c] sm:$0xf]
  %v36 = vld [vmem:[%s1 + $0x40] sm:$0xf]
  %v37 = vld [vmem:[%s1 + $0x44] sm:$0xf]
  %v38 = vld [vmem:[%s1 + $0x48] sm:$0xf]
  %v39 = vld [vmem:[%s1 + $0x4c] sm:$0xf]
  %v40 = vld [vmem:[%s1 + $0x50] sm:$0xf]
  %v41 = vld [vmem:[%s1 + $0x54] sm:$0xf]
  %v42 = vld [vmem:[%s1 + $0x58] sm:$0xf]
  %v43 = vld [vmem:[%s1 + $0x5c] sm:$0xf]
  %v44 = vld [vmem:[%s1 + $0x60] sm:$0xf]
  %v45 = vld [vmem:[%s1 + $0x64] sm:$0xf]
  %v46 = vld [vmem:[%s1 + $0x68] sm:$0xf]
  %v47 = vld [vmem:[%s1 + $0x6c] sm:$0xf]
  %v48 = vld [vmem:[%s1 + $0x70] sm:$0xf]
  %v49 = vld [vmem:[%s1 + $0x74] sm:$0xf]
  %v50 = vld [vmem:[%s1 + $0x78] sm:$0xf]
  %v51 = vld [vmem:[%s1 + $0x7c] sm:$0xf]
  %v52 = vld [vmem:[%s1 + $0x80] sm:$0xf]
  %v53 = vld [vmem:[%s1 + $0x84] sm:$0xf]
  %v54 = vld [vmem:[%s1 + $0x88] sm:$0xf]
  %v55 = vld [vmem:[%s1 + $0x8c] sm:$0xf]
  %v56 = vld [vmem:[%s1 + $0x90] sm:$0xf]
  %v57 = vld [vmem:[%s1 + $0x94] sm:$0xf]
  %v58 = vld [vmem:[%s1 + $0x98] sm:$0xf]
  %v59 = vld [vmem:[%s1 + $0x9c] sm:$0xf]
  %v60 = vld [vmem:[%s1 + $0xa0] sm:$0x3]
  %v69 = vunpack.c.l.b16 %v12
  %v70 = vunpack.c.h.b16 %v12
  %v71 = vunpack.c.l.b16 %v13
  %v72 = vunpack.c.l.b16 %v14
  %v73 = vunpack.c.h.b16 %v14
  %v74 = vunpack.c.l.b16 %v15
  %v75 = vunpack.c.l.b16 %v16
  %v76 = vunpack.c.h.b16 %v16
  %v77 = vunpack.c.l.b16 %v17
  %v78 = vunpack.c.l.b16 %v18
  %v79 = vunpack.c.h.b16 %v18
  %v80 = vunpack.c.l.b16 %v19
  %v81 = vpack.c.b16 %v72, %v69
  %v82 = vpack.c.b16 %v73, %v70
  %v83 = vpack.c.b16 %v74, %v71
  %v84 = vpack.c.b16 %v78, %v75
  %v85 = vpack.c.b16 %v79, %v76
  %v86 = vpack.c.b16 %v80, %v77
  %v132 = vunpack.c.l.b16 %v20
  %v133 = vunpack.c.l.b16 %v21
  %v134 = vunpack.c.l.b16 %v22
  %v135 = vunpack.c.l.b16 %v23
  %v136 = vunpack.c.l.b16 %v24
  %v137 = vunpack.c.l.b16 %v25
  %v138 = vunpack.c.l.b16 %v26
  %v139 = vunpack.c.l.b16 %v27
  %v140 = vunpack.c.l.b16 %v28
  %v141 = vunpack.c.l.b16 %v29
  %v142 = vunpack.c.l.b16 %v30
  %v143 = vunpack.c.l.b16 %v31
  %v144 = vunpack.c.l.b16 %v32
  %v145 = vunpack.c.l.b16 %v33
  %v146 = vunpack.c.l.b16 %v34
  %v147 = vunpack.c.l.b16 %v35
  %v148 = vunpack.c.l.b16 %v36
  %v149 = vunpack.c.l.b16 %v37
  %v150 = vunpack.c.l.b16 %v38
  %v151 = vunpack.c.l.b16 %v39
  %v152 = vunpack.c.l.b16 %v40
  %v153 = vunpack.c.l.b16 %v41
  %v154 = vunpack.c.l.b16 %v42
  %v155 = vunpack.c.l.b16 %v43
  %v156 = vunpack.c.l.b16 %v44
  %v157 = vunpack.c.l.b16 %v45
  %v158 = vunpack.c.l.b16 %v46
  %v159 = vunpack.c.l.b16 %v47
  %v160 = vunpack.c.l.b16 %v48
  %v161 = vunpack.c.l.b16 %v49
  %v162 = vunpack.c.l.b16 %v50
  %v163 = vunpack.c.l.b16 %v51
  %v164 = vunpack.c.l.b16 %v52
  %v165 = vunpack.c.l.b16 %v53
  %v166 = vunpack.c.l.b16 %v54
  %v167 = vunpack.c.l.b16 %v55
  %v168 = vunpack.c.l.b16 %v56
  %v169 = vunpack.c.l.b16 %v57
  %v170 = vunpack.c.l.b16 %v58
  %v171 = vunpack.c.l.b16 %v59
  %v172 = vunpack.c.l.b16 %v60
  %v173 = vpack.c.b16 %v133, %v132
  %v174 = vpack.c.b16 %v135, %v134
  %v175 = vpack.c.b16 %v137, %v136
  %v176 = vpack.c.b16 %v139, %v138
  %v177 = vpack.c.b16 %v141, %v140
  %v178 = vpack.c.b16 %v143, %v142
  %v179 = vpack.c.b16 %v145, %v144
  %v180 = vpack.c.b16 %v147, %v146
  %v181 = vpack.c.b16 %v149, %v148
  %v182 = vpack.c.b16 %v151, %v150
  %v183 = vpack.c.b16 %v153, %v152
  %v184 = vpack.c.b16 %v155, %v154
  %v185 = vpack.c.b16 %v157, %v156
  %v186 = vpack.c.b16 %v159, %v158
  %v187 = vpack.c.b16 %v161, %v160
  %v188 = vpack.c.b16 %v163, %v162
  %v189 = vpack.c.b16 %v165, %v164
  %v190 = vpack.c.b16 %v167, %v166
  %v191 = vpack.c.b16 %v169, %v168
  %v192 = vpack.c.b16 %v171, %v170
  %v193 = vpack.c.b16 %v172, %v172
  %vm214 = vcmask 556032
  %v216 = vsel %vm214, %v83, 0
  %v219 = vsel %vm214, %v86, 0
  %vm221 = vcmask 1041408
  %v223 = vsel %vm221, %v193, 0
  %225 = vmatpush.bf16.msra.mxu0 %v180
  %226 = vmatpush.bf16.msra.mxu0 %v179
  %227 = vmatpush.bf16.msra.mxu0 %v178
  %228 = vmatpush.bf16.msra.mxu0 %v177
  %229 = vmatpush.bf16.msra.mxu0 %v176
  %230 = vmatpush.bf16.msra.mxu0 %v175
  %231 = vmatpush.bf16.msra.mxu0 %v174
  %232 = vmatpush.bf16.msra.mxu0 %v173
  %233 = vmatmul.bf16.gmra.mxu0 %v81
  %v234 = vpop.f32.mrf.mxu0
  %v235 = vadd.f32 0.0, %v234
  %v236 = vpop.f32.mrf.mxu0
  %v237 = vadd.f32 0.0, %v236
  %238 = vmatmul.bf16.gmra.mxu0 %v84
  %v239 = vpop.f32.mrf.mxu0
  %v240 = vadd.f32 0.0, %v239
  %v241 = vpop.f32.mrf.mxu0
  %v242 = vadd.f32 0.0, %v241
  %243 = vdwg.mxu0
  %244 = vmatpush.bf16.msra.mxu0 %v188
  %245 = vmatpush.bf16.msra.mxu0 %v187
  %246 = vmatpush.bf16.msra.mxu0 %v186
  %247 = vmatpush.bf16.msra.mxu0 %v185
  %248 = vmatpush.bf16.msra.mxu0 %v184
  %249 = vmatpush.bf16.msra.mxu0 %v183
  %250 = vmatpush.bf16.msra.mxu0 %v182
  %251 = vmatpush.bf16.msra.mxu0 %v181
  %252 = vmatmul.bf16.gmra.mxu0 %v82
  %v253 = vpop.f32.mrf.mxu0
  %v254 = vadd.f32 %v235, %v253
  %v255 = vpop.f32.mrf.mxu0
  %v256 = vadd.f32 %v237, %v255
  %257 = vmatmul.bf16.gmra.mxu0 %v85
  %v258 = vpop.f32.mrf.mxu0
  %v259 = vadd.f32 %v240, %v258
  %v260 = vpop.f32.mrf.mxu0
  %v261 = vadd.f32 %v242, %v260
  %262 = vdwg.mxu0
  %263 = vmatpush.bf16.msra.mxu0 0
  %264 = vmatpush.bf16.msra.mxu0 0
  %265 = vmatpush.bf16.msra.mxu0 0
  %266 = vmatpush.bf16.msra.mxu0 %v223
  %267 = vmatpush.bf16.msra.mxu0 %v192
  %268 = vmatpush.bf16.msra.mxu0 %v191
  %269 = vmatpush.bf16.msra.mxu0 %v190
  %270 = vmatpush.bf16.msra.mxu0 %v189
  %271 = vmatmul.bf16.gmra.mxu0 %v216
  %v272 = vpop.f32.mrf.mxu0
  %v273 = vadd.f32 %v254, %v272
  %v274 = vpop.f32.mrf.mxu0
  %v275 = vadd.f32 %v256, %v274
  %276 = vmatmul.bf16.gmra.mxu0 %v219
  %v277 = vpop.f32.mrf.mxu0
  %v278 = vadd.f32 %v259, %v277
  %v279 = vpop.f32.mrf.mxu0
  %v280 = vadd.f32 %v261, %v279
  %281 = vdwg.mxu0
  %vm282 = vcmask 523264
  %283 = vst.msk [vmem:[%s2] sm:$0xff] %vm282, %v273
  %284 = vst.msk [vmem:[%s2 + $0x8] sm:$0xff] %vm282, %v275
  %285 = vst.msk [vmem:[%s2 + $0x10] sm:$0xff] %vm282, %v278
  %286 = vst.msk [vmem:[%s2 + $0x18] sm:$0xff] %vm282, %v280
  // Predicated region
  $region10: #{generator_forward.27} parent=0 // pred_check
    _
  $region11: #{generator_forward.27} parent=0 // pred_check_branch
    %288 = sbr.rel (0) target = $region13
  $region12: #{generator_forward.27} parent=0 // pred_region
    _
  $region13: #{generator_forward.27} parent=0 // pred_fallthru
    _
  // Predicated region
  $region14: #{generator_forward.27} parent=0 // pred_check
    _
  $region15: #{generator_forward.27} parent=0 // pred_check_branch
    %290 = sbr.rel (0) target = $region17
  $region16: #{generator_forward.27} parent=0 // pred_region
    _
  $region17: #{generator_forward.27} parent=0 // pred_fallthru
    _

// kernel: generator_forward.29
$region0: #{generator_forward.29}
  #allocation0 [shape = 'u32[]', space=smem, size = 0x4, offset = 0x4, fixed_abs, tag = 'smem constant byte address 0x4 - core index']
  #allocation1 [shape = 'u32[72,128]{1,0:T(1,128)}', space=vmem, size = 0x9000, scoped, tag = 'internal scratch']
  %s0 = inlined_call_operand.vmem [shape: f32[128,32], index: 0, kind: input, shape index: {}]
  %s1 = inlined_call_operand.vmem [shape: f32[1,32], index: 1, kind: input, shape index: {}]
  %s2 = inlined_call_operand.vmem [shape: f32[1,32], index: 2, kind: input, shape index: {}]
  %s3 = inlined_call_operand.vmem [shape: f32[128,32], index: 3, kind: input, shape index: {}]
  %s4 = inlined_call_operand.vmem [shape: f32[128,32], index: 4, kind: output, shape index: {}]
  %s5 = sld [smem:[#allocation0]]
  $region26: #{generator_forward.29} parent=0
    _
  %s7 = ssub.s32 1, %s5
  %s8 = scalar_select 0, %s7, %s5
  // Predicated region
  $region2: #{generator_forward.29} parent=0 // pred_check
    _
  $region3: #{generator_forward.29} parent=0 // pred_check_branch
    %10 = sbr.rel (0) target = $region5
  $region4: #{generator_forward.29} parent=0 // pred_region
    _
  $region5: #{generator_forward.29} parent=0 // pred_fallthru
    _
  // Predicated region
  $region6: #{generator_forward.29} parent=0 // pred_check
    _
  $region7: #{generator_forward.29} parent=0 // pred_check_branch
    %12 = sbr.rel (0) target = $region9
  $region8: #{generator_forward.29} parent=0 // pred_region
    _
  $region9: #{generator_forward.29} parent=0 // pred_fallthru
    _
  // Predicated region
  $region10: #{generator_forward.29} parent=0 // pred_check
    _
  $region11: #{generator_forward.29} parent=0 // pred_check_branch
    %14 = sbr.rel (0) target = $region13
  $region12: #{generator_forward.29} parent=0 // pred_region
    _
  $region13: #{generator_forward.29} parent=0 // pred_fallthru
    _
  // Predicated region
  $region14: #{generator_forward.29} parent=0 // pred_check
    _
  $region15: #{generator_forward.29} parent=0 // pred_check_branch
    %16 = sbr.rel (0) target = $region17
  $region16: #{generator_forward.29} parent=0 // pred_region
    _
  $region17: #{generator_forward.29} parent=0 // pred_fallthru
    _
  %v17 = vld [vmem:[%s0] sm:$0xff]
  %v18 = vld [vmem:[%s0 + $0x8] sm:$0xff]
  %v19 = vld [vmem:[%s0 + $0x10] sm:$0xff]
  %v20 = vld [vmem:[%s0 + $0x18] sm:$0xff]
  %v21 = vld [vmem:[%s0 + $0x20] sm:$0xff]
  %v22 = vld [vmem:[%s0 + $0x28] sm:$0xff]
  %v23 = vld [vmem:[%s0 + $0x30] sm:$0xff]
  %v24 = vld [vmem:[%s0 + $0x38] sm:$0xff]
  %v25 = vld [vmem:[%s0 + $0x40] sm:$0xff]
  %v26 = vld [vmem:[%s0 + $0x48] sm:$0xff]
  %v27 = vld [vmem:[%s0 + $0x50] sm:$0xff]
  %v28 = vld [vmem:[%s0 + $0x58] sm:$0xff]
  %v29 = vld [vmem:[%s0 + $0x60] sm:$0xff]
  %v30 = vld [vmem:[%s0 + $0x68] sm:$0xff]
  %v31 = vld [vmem:[%s0 + $0x70] sm:$0xff]
  %v32 = vld [vmem:[%s0 + $0x78] sm:$0xff]
  %v33 = vld [vmem:[%s1] sm:$0x1]
  %v35 = vperm.slane %v33, 0
  %v37 = vmul.f32 %v17, %v35
  %v38 = vmul.f32 %v18, %v35
  %v39 = vmul.f32 %v19, %v35
  %v40 = vmul.f32 %v20, %v35
  %v41 = vmul.f32 %v21, %v35
  %v42 = vmul.f32 %v22, %v35
  %v43 = vmul.f32 %v23, %v35
  %v44 = vmul.f32 %v24, %v35
  %v45 = vmul.f32 %v25, %v35
  %v46 = vmul.f32 %v26, %v35
  %v47 = vmul.f32 %v27, %v35
  %v48 = vmul.f32 %v28, %v35
  %v49 = vmul.f32 %v29, %v35
  %v50 = vmul.f32 %v30, %v35
  %v51 = vmul.f32 %v31, %v35
  %v52 = vmul.f32 %v32, %v35
  %v53 = vld [vmem:[%s2] sm:$0x1]
  %v55 = vperm.slane %v53, 0
  %v57 = vadd.f32 %v37, %v55
  %v58 = vadd.f32 %v38, %v55
  %v59 = vadd.f32 %v39, %v55
  %v60 = vadd.f32 %v40, %v55
  %v61 = vadd.f32 %v41, %v55
  %v62 = vadd.f32 %v42, %v55
  %v63 = vadd.f32 %v43, %v55
  %v64 = vadd.f32 %v44, %v55
  %v65 = vadd.f32 %v45, %v55
  %v66 = vadd.f32 %v46, %v55
  %v67 = vadd.f32 %v47, %v55
  %v68 = vadd.f32 %v48, %v55
  %v69 = vadd.f32 %v49, %v55
  %v70 = vadd.f32 %v50, %v55
  %v71 = vadd.f32 %v51, %v55
  %v72 = vadd.f32 %v52, %v55
  %v73 = vsub.f32 0.0, %v57
  %v74 = vsub.f32 0.0, %v58
  %v75 = vsub.f32 0.0, %v59
  %v76 = vsub.f32 0.0, %v60
  %v77 = vsub.f32 0.0, %v61
  %v78 = vsub.f32 0.0, %v62
  %v79 = vsub.f32 0.0, %v63
  %v80 = vsub.f32 0.0, %v64
  %v81 = vsub.f32 0.0, %v65
  %v82 = vsub.f32 0.0, %v66
  %v83 = vsub.f32 0.0, %v67
  %v84 = vsub.f32 0.0, %v68
  %v85 = vsub.f32 0.0, %v69
  %v86 = vsub.f32 0.0, %v70
  %v87 = vsub.f32 0.0, %v71
  %v88 = vsub.f32 0.0, %v72
  %v89 = vmul.f32 %v73, 1.442695
  %v90 = vpow.pop %v89
  %v91 = vmul.f32 %v74, 1.442695
  %v92 = vpow.pop %v91
  %v93 = vmul.f32 %v75, 1.442695
  %v94 = vpow.pop %v93
  %v95 = vmul.f32 %v76, 1.442695
  %v96 = vpow.pop %v95
  %v97 = vmul.f32 %v77, 1.442695
  %v98 = vpow.pop %v97
  %v99 = vmul.f32 %v78, 1.442695
  %v100 = vpow.pop %v99
  %v101 = vmul.f32 %v79, 1.442695
  %v102 = vpow.pop %v101
  %v103 = vmul.f32 %v80, 1.442695
  %v104 = vpow.pop %v103
  %v105 = vmul.f32 %v81, 1.442695
  %v106 = vpow.pop %v105
  %v107 = vmul.f32 %v82, 1.442695
  %v108 = vpow.pop %v107
  %v109 = vmul.f32 %v83, 1.442695
  %v110 = vpow.pop %v109
  %v111 = vmul.f32 %v84, 1.442695
  %v112 = vpow.pop %v111
  %v113 = vmul.f32 %v85, 1.442695
  %v114 = vpow.pop %v113
  %v115 = vmul.f32 %v86, 1.442695
  %v116 = vpow.pop %v115
  %v117 = vmul.f32 %v87, 1.442695
  %v118 = vpow.pop %v117
  %v119 = vmul.f32 %v88, 1.442695
  %v120 = vpow.pop %v119
  %v121 = vadd.f32 %v90, 1.0
  %v122 = vadd.f32 %v92, 1.0
  %v123 = vadd.f32 %v94, 1.0
  %v124 = vadd.f32 %v96, 1.0
  %v125 = vadd.f32 %v98, 1.0
  %v126 = vadd.f32 %v100, 1.0
  %v127 = vadd.f32 %v102, 1.0
  %v128 = vadd.f32 %v104, 1.0
  %v129 = vadd.f32 %v106, 1.0
  %v130 = vadd.f32 %v108, 1.0
  %v131 = vadd.f32 %v110, 1.0
  %v132 = vadd.f32 %v112, 1.0
  %v133 = vadd.f32 %v114, 1.0
  %v134 = vadd.f32 %v116, 1.0
  %v135 = vadd.f32 %v118, 1.0
  %v136 = vadd.f32 %v120, 1.0
  %v137 = vrcp.pop %v121
  %v138 = vmul.f32 %v121, %v137
  %v139 = vsub.f32 1.0, %v138
  %v140 = vmul.f32 %v137, %v139
  %v141 = vadd.f32 %v137, %v140
  %vm142 = vweird.f32 %v121
  %vm143 = vweird.f32 %v137
  %vm144 = vmor %vm142, %vm143
  %v145 = vsel %vm144, %v137, %v141
  %v146 = vand.u32 2147483647, %v121
  %vm147 = vcmp.eq.f32.partialorder %v146, 8.507059e+37
  %v148 = vand.u32 %v121, 2147483648
  %v149 = vor.u32 1.1754944e-38, %v148
  %v150 = vsel %vm147, %v149, %v145
  %v151 = vmul.f32 1.0, %v150
  %v152 = vrcp.pop %v122
  %v153 = vmul.f32 %v122, %v152
  %v154 = vsub.f32 1.0, %v153
  %v155 = vmul.f32 %v152, %v154
  %v156 = vadd.f32 %v152, %v155
  %vm157 = vweird.f32 %v122
  %vm158 = vweird.f32 %v152
  %vm159 = vmor %vm157, %vm158
  %v160 = vsel %vm159, %v152, %v156
  %v161 = vand.u32 2147483647, %v122
  %vm162 = vcmp.eq.f32.partialorder %v161, 8.507059e+37
  %v163 = vand.u32 %v122, 2147483648
  %v164 = vor.u32 1.1754944e-38, %v163
  %v165 = vsel %vm162, %v164, %v160
  %v166 = vmul.f32 1.0, %v165
  %v167 = vrcp.pop %v123
  %v168 = vmul.f32 %v123, %v167
  %v169 = vsub.f32 1.0, %v168
  %v170 = vmul.f32 %v167, %v169
  %v171 = vadd.f32 %v167, %v170
  %vm172 = vweird.f32 %v123
  %vm173 = vweird.f32 %v167
  %vm174 = vmor %vm172, %vm173
  %v175 = vsel %vm174, %v167, %v171
  %v176 = vand.u32 2147483647, %v123
  %vm177 = vcmp.eq.f32.partialorder %v176, 8.507059e+37
  %v178 = vand.u32 %v123, 2147483648
  %v179 = vor.u32 1.1754944e-38, %v178
  %v180 = vsel %vm177, %v179, %v175
  %v181 = vmul.f32 1.0, %v180
  %v182 = vrcp.pop %v124
  %v183 = vmul.f32 %v124, %v182
  %v184 = vsub.f32 1.0, %v183
  %v185 = vmul.f32 %v182, %v184
  %v186 = vadd.f32 %v182, %v185
  %vm187 = vweird.f32 %v124
  %vm188 = vweird.f32 %v182
  %vm189 = vmor %vm187, %vm188
  %v190 = vsel %vm189, %v182, %v186
  %v191 = vand.u32 2147483647, %v124
  %vm192 = vcmp.eq.f32.partialorder %v191, 8.507059e+37
  %v193 = vand.u32 %v124, 2147483648
  %v194 = vor.u32 1.1754944e-38, %v193
  %v195 = vsel %vm192, %v194, %v190
  %v196 = vmul.f32 1.0, %v195
  %v197 = vrcp.pop %v125
  %v198 = vmul.f32 %v125, %v197
  %v199 = vsub.f32 1.0, %v198
  %v200 = vmul.f32 %v197, %v199
  %v201 = vadd.f32 %v197, %v200
  %vm202 = vweird.f32 %v125
  %vm203 = vweird.f32 %v197
  %vm204 = vmor %vm202, %vm203
  %v205 = vsel %vm204, %v197, %v201
  %v206 = vand.u32 2147483647, %v125
  %vm207 = vcmp.eq.f32.partialorder %v206, 8.507059e+37
  %v208 = vand.u32 %v125, 2147483648
  %v209 = vor.u32 1.1754944e-38, %v208
  %v210 = vsel %vm207, %v209, %v205
  %v211 = vmul.f32 1.0, %v210
  %v212 = vrcp.pop %v126
  %v213 = vmul.f32 %v126, %v212
  %v214 = vsub.f32 1.0, %v213
  %v215 = vmul.f32 %v212, %v214
  %v216 = vadd.f32 %v212, %v215
  %vm217 = vweird.f32 %v126
  %vm218 = vweird.f32 %v212
  %vm219 = vmor %vm217, %vm218
  %v220 = vsel %vm219, %v212, %v216
  %v221 = vand.u32 2147483647, %v126
  %vm222 = vcmp.eq.f32.partialorder %v221, 8.507059e+37
  %v223 = vand.u32 %v126, 2147483648
  %v224 = vor.u32 1.1754944e-38, %v223
  %v225 = vsel %vm222, %v224, %v220
  %v226 = vmul.f32 1.0, %v225
  %v227 = vrcp.pop %v127
  %v228 = vmul.f32 %v127, %v227
  %v229 = vsub.f32 1.0, %v228
  %v230 = vmul.f32 %v227, %v229
  %v231 = vadd.f32 %v227, %v230
  %vm232 = vweird.f32 %v127
  %vm233 = vweird.f32 %v227
  %vm234 = vmor %vm232, %vm233
  %v235 = vsel %vm234, %v227, %v231
  %v236 = vand.u32 2147483647, %v127
  %vm237 = vcmp.eq.f32.partialorder %v236, 8.507059e+37
  %v238 = vand.u32 %v127, 2147483648
  %v239 = vor.u32 1.1754944e-38, %v238
  %v240 = vsel %vm237, %v239, %v235
  %v241 = vmul.f32 1.0, %v240
  %v242 = vrcp.pop %v128
  %v243 = vmul.f32 %v128, %v242
  %v244 = vsub.f32 1.0, %v243
  %v245 = vmul.f32 %v242, %v244
  %v246 = vadd.f32 %v242, %v245
  %vm247 = vweird.f32 %v128
  %vm248 = vweird.f32 %v242
  %vm249 = vmor %vm247, %vm248
  %v250 = vsel %vm249, %v242, %v246
  %v251 = vand.u32 2147483647, %v128
  %vm252 = vcmp.eq.f32.partialorder %v251, 8.507059e+37
  %v253 = vand.u32 %v128, 2147483648
  %v254 = vor.u32 1.1754944e-38, %v253
  %v255 = vsel %vm252, %v254, %v250
  %v256 = vmul.f32 1.0, %v255
  %v257 = vrcp.pop %v129
  %v258 = vmul.f32 %v129, %v257
  %v259 = vsub.f32 1.0, %v258
  %v260 = vmul.f32 %v257, %v259
  %v261 = vadd.f32 %v257, %v260
  %vm262 = vweird.f32 %v129
  %vm263 = vweird.f32 %v257
  %vm264 = vmor %vm262, %vm263
  %v265 = vsel %vm264, %v257, %v261
  %v266 = vand.u32 2147483647, %v129
  %vm267 = vcmp.eq.f32.partialorder %v266, 8.507059e+37
  %v268 = vand.u32 %v129, 2147483648
  %v269 = vor.u32 1.1754944e-38, %v268
  %v270 = vsel %vm267, %v269, %v265
  %v271 = vmul.f32 1.0, %v270
  %v272 = vrcp.pop %v130
  %v273 = vmul.f32 %v130, %v272
  %v274 = vsub.f32 1.0, %v273
  %v275 = vmul.f32 %v272, %v274
  %v276 = vadd.f32 %v272, %v275
  %vm277 = vweird.f32 %v130
  %vm278 = vweird.f32 %v272
  %vm279 = vmor %vm277, %vm278
  %v280 = vsel %vm279, %v272, %v276
  %v281 = vand.u32 2147483647, %v130
  %vm282 = vcmp.eq.f32.partialorder %v281, 8.507059e+37
  %v283 = vand.u32 %v130, 2147483648
  %v284 = vor.u32 1.1754944e-38, %v283
  %v285 = vsel %vm282, %v284, %v280
  %v286 = vmul.f32 1.0, %v285
  %v287 = vrcp.pop %v131
  %v288 = vmul.f32 %v131, %v287
  %v289 = vsub.f32 1.0, %v288
  %v290 = vmul.f32 %v287, %v289
  %v291 = vadd.f32 %v287, %v290
  %vm292 = vweird.f32 %v131
  %vm293 = vweird.f32 %v287
  %vm294 = vmor %vm292, %vm293
  %v295 = vsel %vm294, %v287, %v291
  %v296 = vand.u32 2147483647, %v131
  %vm297 = vcmp.eq.f32.partialorder %v296, 8.507059e+37
  %v298 = vand.u32 %v131, 2147483648
  %v299 = vor.u32 1.1754944e-38, %v298
  %v300 = vsel %vm297, %v299, %v295
  %v301 = vmul.f32 1.0, %v300
  %v302 = vrcp.pop %v132
  %v303 = vmul.f32 %v132, %v302
  %v304 = vsub.f32 1.0, %v303
  %v305 = vmul.f32 %v302, %v304
  %v306 = vadd.f32 %v302, %v305
  %vm307 = vweird.f32 %v132
  %vm308 = vweird.f32 %v302
  %vm309 = vmor %vm307, %vm308
  %v310 = vsel %vm309, %v302, %v306
  %v311 = vand.u32 2147483647, %v132
  %vm312 = vcmp.eq.f32.partialorder %v311, 8.507059e+37
  %v313 = vand.u32 %v132, 2147483648
  %v314 = vor.u32 1.1754944e-38, %v313
  %v315 = vsel %vm312, %v314, %v310
  %v316 = vmul.f32 1.0, %v315
  %v317 = vrcp.pop %v133
  %v318 = vmul.f32 %v133, %v317
  %v319 = vsub.f32 1.0, %v318
  %v320 = vmul.f32 %v317, %v319
  %v321 = vadd.f32 %v317, %v320
  %vm322 = vweird.f32 %v133
  %vm323 = vweird.f32 %v317
  %vm324 = vmor %vm322, %vm323
  %v325 = vsel %vm324, %v317, %v321
  %v326 = vand.u32 2147483647, %v133
  %vm327 = vcmp.eq.f32.partialorder %v326, 8.507059e+37
  %v328 = vand.u32 %v133, 2147483648
  %v329 = vor.u32 1.1754944e-38, %v328
  %v330 = vsel %vm327, %v329, %v325
  %v331 = vmul.f32 1.0, %v330
  %v332 = vrcp.pop %v134
  %v333 = vmul.f32 %v134, %v332
  %v334 = vsub.f32 1.0, %v333
  %v335 = vmul.f32 %v332, %v334
  %v336 = vadd.f32 %v332, %v335
  %vm337 = vweird.f32 %v134
  %vm338 = vweird.f32 %v332
  %vm339 = vmor %vm337, %vm338
  %v340 = vsel %vm339, %v332, %v336
  %v341 = vand.u32 2147483647, %v134
  %vm342 = vcmp.eq.f32.partialorder %v341, 8.507059e+37
  %v343 = vand.u32 %v134, 2147483648
  %v344 = vor.u32 1.1754944e-38, %v343
  %v345 = vsel %vm342, %v344, %v340
  %v346 = vmul.f32 1.0, %v345
  %v347 = vrcp.pop %v135
  %v348 = vmul.f32 %v135, %v347
  %v349 = vsub.f32 1.0, %v348
  %v350 = vmul.f32 %v347, %v349
  %v351 = vadd.f32 %v347, %v350
  %vm352 = vweird.f32 %v135
  %vm353 = vweird.f32 %v347
  %vm354 = vmor %vm352, %vm353
  %v355 = vsel %vm354, %v347, %v351
  %v356 = vand.u32 2147483647, %v135
  %vm357 = vcmp.eq.f32.partialorder %v356, 8.507059e+37
  %v358 = vand.u32 %v135, 2147483648
  %v359 = vor.u32 1.1754944e-38, %v358
  %v360 = vsel %vm357, %v359, %v355
  %v361 = vmul.f32 1.0, %v360
  %v362 = vrcp.pop %v136
  %v363 = vmul.f32 %v136, %v362
  %v364 = vsub.f32 1.0, %v363
  %v365 = vmul.f32 %v362, %v364
  %v366 = vadd.f32 %v362, %v365
  %vm367 = vweird.f32 %v136
  %vm368 = vweird.f32 %v362
  %vm369 = vmor %vm367, %vm368
  %v370 = vsel %vm369, %v362, %v366
  %v371 = vand.u32 2147483647, %v136
  %vm372 = vcmp.eq.f32.partialorder %v371, 8.507059e+37
  %v373 = vand.u32 %v136, 2147483648
  %v374 = vor.u32 1.1754944e-38, %v373
  %v375 = vsel %vm372, %v374, %v370
  %v376 = vmul.f32 1.0, %v375
  %v377 = vld [vmem:[%s3] sm:$0xff]
  %v378 = vld [vmem:[%s3 + $0x8] sm:$0xff]
  %v379 = vld [vmem:[%s3 + $0x10] sm:$0xff]
  %v380 = vld [vmem:[%s3 + $0x18] sm:$0xff]
  %v381 = vld [vmem:[%s3 + $0x20] sm:$0xff]
  %v382 = vld [vmem:[%s3 + $0x28] sm:$0xff]
  %v383 = vld [vmem:[%s3 + $0x30] sm:$0xff]
  %v384 = vld [vmem:[%s3 + $0x38] sm:$0xff]
  %v385 = vld [vmem:[%s3 + $0x40] sm:$0xff]
  %v386 = vld [vmem:[%s3 + $0x48] sm:$0xff]
  %v387 = vld [vmem:[%s3 + $0x50] sm:$0xff]
  %v388 = vld [vmem:[%s3 + $0x58] sm:$0xff]
  %v389 = vld [vmem:[%s3 + $0x60] sm:$0xff]
  %v390 = vld [vmem:[%s3 + $0x68] sm:$0xff]
  %v391 = vld [vmem:[%s3 + $0x70] sm:$0xff]
  %v392 = vld [vmem:[%s3 + $0x78] sm:$0xff]
  %v393 = vmul.f32 %v151, %v377
  %v394 = vmul.f32 %v166, %v378
  %v395 = vmul.f32 %v181, %v379
  %v396 = vmul.f32 %v196, %v380
  %v397 = vmul.f32 %v211, %v381
  %v398 = vmul.f32 %v226, %v382
  %v399 = vmul.f32 %v241, %v383
  %v400 = vmul.f32 %v256, %v384
  %v401 = vmul.f32 %v271, %v385
  %v402 = vmul.f32 %v286, %v386
  %v403 = vmul.f32 %v301, %v387
  %v404 = vmul.f32 %v316, %v388
  %v405 = vmul.f32 %v331, %v389
  %v406 = vmul.f32 %v346, %v390
  %v407 = vmul.f32 %v361, %v391
  %v408 = vmul.f32 %v376, %v392
  %vm409 = vcmask 261120
  %410 = vst.msk [vmem:[%s4] sm:$0xff] %vm409, %v393
  %411 = vst.msk [vmem:[%s4 + $0x8] sm:$0xff] %vm409, %v394
  %412 = vst.msk [vmem:[%s4 + $0x10] sm:$0xff] %vm409, %v395
  %413 = vst.msk [vmem:[%s4 + $0x18] sm:$0xff] %vm409, %v396
  %414 = vst.msk [vmem:[%s4 + $0x20] sm:$0xff] %vm409, %v397
  %415 = vst.msk [vmem:[%s4 + $0x28] sm:$0xff] %vm409, %v398
  %416 = vst.msk [vmem:[%s4 + $0x30] sm:$0xff] %vm409, %v399
  %417 = vst.msk [vmem:[%s4 + $0x38] sm:$0xff] %vm409, %v400
  %418 = vst.msk [vmem:[%s4 + $0x40] sm:$0xff] %vm409, %v401
  %419 = vst.msk [vmem:[%s4 + $0x48] sm:$0xff] %vm409, %v402
  %420 = vst.msk [vmem:[%s4 + $0x50] sm:$0xff] %vm409, %v403
  %421 = vst.msk [vmem:[%s4 + $0x58] sm:$0xff] %vm409, %v404
  %422 = vst.msk [vmem:[%s4 + $0x60] sm:$0xff] %vm409, %v405
  %423 = vst.msk [vmem:[%s4 + $0x68] sm:$0xff] %vm409, %v406
  %424 = vst.msk [vmem:[%s4 + $0x70] sm:$0xff] %vm409, %v407
  %425 = vst.msk [vmem:[%s4 + $0x78] sm:$0xff] %vm409, %v408
  // Predicated region
  $region18: #{generator_forward.29} parent=0 // pred_check
    _
  $region19: #{generator_forward.29} parent=0 // pred_check_branch
    %427 = sbr.rel (0) target = $region21
  $region20: #{generator_forward.29} parent=0 // pred_region
    _
  $region21: #{generator_forward.29} parent=0 // pred_fallthru
    _
  // Predicated region
  $region22: #{generator_forward.29} parent=0 // pred_check
    _
  $region23: #{generator_forward.29} parent=0 // pred_check_branch
    %429 = sbr.rel (0) target = $region25
  $region24: #{generator_forward.29} parent=0 // pred_region
    _
  $region25: #{generator_forward.29} parent=0 // pred_fallthru
    _

// kernel: generator_forward.28
$region0: #{generator_forward.28}
  #allocation0 [shape = 'u32[]', space=smem, size = 0x4, offset = 0x4, fixed_abs, tag = 'smem constant byte address 0x4 - core index']
  #allocation1 [shape = 'u32[72,128]{1,0:T(1,128)}', space=vmem, size = 0x9000, scoped, tag = 'internal scratch']
  %s0 = inlined_call_operand.vmem [shape: bf16[128,288], index: 0, kind: input, shape index: {}]
  %s1 = inlined_call_operand.vmem [shape: bf16[288,32], index: 1, kind: input, shape index: {}]
  %s2 = inlined_call_operand.vmem [shape: f32[128,32], index: 2, kind: output, shape index: {0}]
  %s3 = inlined_call_operand.vmem [shape: f32[1,32], index: 3, kind: output, shape index: {1}]
  %s4 = inlined_call_operand.vmem [shape: f32[1,32], index: 4, kind: output, shape index: {2}]
  %5 = xla_tuple %s2, %s3, %s4
  %s6 = sld [smem:[#allocation0]]
  $region38: #{generator_forward.28} parent=0
    _
  %s8 = ssub.s32 1, %s6
  %s9 = scalar_select 0, %s8, %s6
  // Predicated region
  $region2: #{generator_forward.28} parent=0 // pred_check
    _
  $region3: #{generator_forward.28} parent=0 // pred_check_branch
    %11 = sbr.rel (0) target = $region5
  $region4: #{generator_forward.28} parent=0 // pred_region
    _
  $region5: #{generator_forward.28} parent=0 // pred_fallthru
    _
  // Predicated region
  $region6: #{generator_forward.28} parent=0 // pred_check
    _
  $region7: #{generator_forward.28} parent=0 // pred_check_branch
    %13 = sbr.rel (0) target = $region9
  $region8: #{generator_forward.28} parent=0 // pred_region
    _
  $region9: #{generator_forward.28} parent=0 // pred_fallthru
    _
  %p15 = scmp.eq.s32.totalorder 0, 0
  // Predicated region
  $region10: #{generator_forward.28} parent=0 // pred_check
    %p16 = pneg %p15
  $region11: #{generator_forward.28} parent=0 // pred_check_branch
    %18 = sbr.rel (%p16) target = $region13
  $region12: #{generator_forward.28} parent=0 // pred_region
    %vm19 = vcmask 253952
    %20 = vst.msk [vmem:[%s3] sm:$0x1] %vm19, 0.0
    %21 = vst.msk [vmem:[%s4] sm:$0x1] %vm19, 0.0
  $region13: #{generator_forward.28} parent=0 // pred_fallthru
    _
  %v22 = vld [vmem:[%s0] sm:$0xff]
  %v23 = vld [vmem:[%s0 + $0x8] sm:$0xf]
  %v24 = vld [vmem:[%s0 + $0xc] sm:$0xff]
  %v25 = vld [vmem:[%s0 + $0x14] sm:$0xf]
  %v26 = vld [vmem:[%s0 + $0x18] sm:$0xff]
  %v27 = vld [vmem:[%s0 + $0x20] sm:$0xf]
  %v28 = vld [vmem:[%s0 + $0x24] sm:$0xff]
  %v29 = vld [vmem:[%s0 + $0x2c] sm:$0xf]
  %v30 = vld [vmem:[%s0 + $0x30] sm:$0xff]
  %v31 = vld [vmem:[%s0 + $0x38] sm:$0xf]
  %v32 = vld [vmem:[%s0 + $0x3c] sm:$0xff]
  %v33 = vld [vmem:[%s0 + $0x44] sm:$0xf]
  %v34 = vld [vmem:[%s0 + $0x48] sm:$0xff]
  %v35 = vld [vmem:[%s0 + $0x50] sm:$0xf]
  %v36 = vld [vmem:[%s0 + $0x54] sm:$0xff]
  %v37 = vld [vmem:[%s0 + $0x5c] sm:$0xf]
  %v38 = vld [vmem:[%s0 + $0x60] sm:$0xff]
  %v39 = vld [vmem:[%s0 + $0x68] sm:$0xf]
  %v40 = vld [vmem:[%s0 + $0x6c] sm:$0xff]
  %v41 = vld [vmem:[%s0 + $0x74] sm:$0xf]
  %v42 = vld [vmem:[%s0 + $0x78] sm:$0xff]
  %v43 = vld [vmem:[%s0 + $0x80] sm:$0xf]
  %v44 = vld [vmem:[%s0 + $0x84] sm:$0xff]
  %v45 = vld [vmem:[%s0 + $0x8c] sm:$0xf]
  %v46 = vld [vmem:[%s0 + $0x90] sm:$0xff]
  %v47 = vld [vmem:[%s0 + $0x98] sm:$0xf]
  %v48 = vld [vmem:[%s0 + $0x9c] sm:$0xff]
  %v49 = vld [vmem:[%s0 + $0xa4] sm:$0xf]
  %v50 = vld [vmem:[%s0 + $0xa8] sm:$0xff]
  %v51 = vld [vmem:[%s0 + $0xb0] sm:$0xf]
  %v52 = vld [vmem:[%s0 + $0xb4] sm:$0xff]
  %v53 = vld [vmem:[%s0 + $0xbc] sm:$0xf]
  %v54 = vld [vmem:[%s1] sm:$0xf]
  %v55 = vld [vmem:[%s1 + $0x4] sm:$0xf]
  %v56 = vld [vmem:[%s1 + $0x8] sm:$0xf]
  %v57 = vld [vmem:[%s1 + $0xc] sm:$0xf]
  %v58 = vld [vmem:[%s1 + $0x10] sm:$0xf]
  %v59 = vld [vmem:[%s1 + $0x14] sm:$0xf]
  %v60 = vld [vmem:[%s1 + $0x18] sm:$0xf]
  %v61 = vld [vmem:[%s1 + $0x1c] sm:$0xf]
  %v62 = vld [vmem:[%s1 + $0x20] sm:$0xf]
  %v63 = vld [vmem:[%s1 + $0x24] sm:$0xf]
  %v64 = vld [vmem:[%s1 + $0x28] sm:$0xf]
  %v65 = vld [vmem:[%s1 + $0x2c] sm:$0xf]
  %v66 = vld [vmem:[%s1 + $0x30] sm:$0xf]
  %v67 = vld [vmem:[%s1 + $0x34] sm:$0xf]
  %v68 = vld [vmem:[%s1 + $0x38] sm:$0xf]
  %v69 = vld [vmem:[%s1 + $0x3c] sm:$0xf]
  %v70 = vld [vmem:[%s1 + $0x40] sm:$0xf]
  %v71 = vld [vmem:[%s1 + $0x44] sm:$0xf]
  %v72 = vld [vmem:[%s1 + $0x48] sm:$0xf]
  %v73 = vld [vmem:[%s1 + $0x4c] sm:$0xf]
  %v74 = vld [vmem:[%s1 + $0x50] sm:$0xf]
  %v75 = vld [vmem:[%s1 + $0x54] sm:$0xf]
  %v76 = vld [vmem:[%s1 + $0x58] sm:$0xf]
  %v77 = vld [vmem:[%s1 + $0x5c] sm:$0xf]
  %v78 = vld [vmem:[%s1 + $0x60] sm:$0xf]
  %v79 = vld [vmem:[%s1 + $0x64] sm:$0xf]
  %v80 = vld [vmem:[%s1 + $0x68] sm:$0xf]
  %v81 = vld [vmem:[%s1 + $0x6c] sm:$0xf]
  %v82 = vld [vmem:[%s1 + $0x70] sm:$0xf]
  %v83 = vld [vmem:[%s1 + $0x74] sm:$0xf]
  %v84 = vld [vmem:[%s1 + $0x78] sm:$0xf]
  %v85 = vld [vmem:[%s1 + $0x7c] sm:$0xf]
  %v86 = vld [vmem:[%s1 + $0x80] sm:$0xf]
  %v87 = vld [vmem:[%s1 + $0x84] sm:$0xf]
  %v88 = vld [vmem:[%s1 + $0x88] sm:$0xf]
  %v89 = vld [vmem:[%s1 + $0x8c] sm:$0xf]
  %v122 = vunpack.c.l.b16 %v22
  %v123 = vunpack.c.h.b16 %v22
  %v124 = vunpack.c.l.b16 %v23
  %v125 = vunpack.c.l.b16 %v24
  %v126 = vunpack.c.h.b16 %v24
  %v127 = vunpack.c.l.b16 %v25
  %v128 = vunpack.c.l.b16 %v26
  %v129 = vunpack.c.h.b16 %v26
  %v130 = vunpack.c.l.b16 %v27
  %v131 = vunpack.c.l.b16 %v28
  %v132 = vunpack.c.h.b16 %v28
  %v133 = vunpack.c.l.b16 %v29
  %v134 = vunpack.c.l.b16 %v30
  %v135 = vunpack.c.h.b16 %v30
  %v136 = vunpack.c.l.b16 %v31
  %v137 = vunpack.c.l.b16 %v32
  %v138 = vunpack.c.h.b16 %v32
  %v139 = vunpack.c.l.b16 %v33
  %v140 = vunpack.c.l.b16 %v34
  %v141 = vunpack.c.h.b16 %v34
  %v142 = vunpack.c.l.b16 %v35
  %v143 = vunpack.c.l.b16 %v36
  %v144 = vunpack.c.h.b16 %v36
  %v145 = vunpack.c.l.b16 %v37
  %v146 = vunpack.c.l.b16 %v38
  %v147 = vunpack.c.h.b16 %v38
  %v148 = vunpack.c.l.b16 %v39
  %v149 = vunpack.c.l.b16 %v40
  %v150 = vunpack.c.h.b16 %v40
  %v151 = vunpack.c.l.b16 %v41
  %v152 = vunpack.c.l.b16 %v42
  %v153 = vunpack.c.h.b16 %v42
  %v154 = vunpack.c.l.b16 %v43
  %v155 = vunpack.c.l.b16 %v44
  %v156 = vunpack.c.h.b16 %v44
  %v157 = vunpack.c.l.b16 %v45
  %v158 = vunpack.c.l.b16 %v46
  %v159 = vunpack.c.h.b16 %v46
  %v160 = vunpack.c.l.b16 %v47
  %v161 = vunpack.c.l.b16 %v48
  %v162 = vunpack.c.h.b16 %v48
  %v163 = vunpack.c.l.b16 %v49
  %v164 = vunpack.c.l.b16 %v50
  %v165 = vunpack.c.h.b16 %v50
  %v166 = vunpack.c.l.b16 %v51
  %v167 = vunpack.c.l.b16 %v52
  %v168 = vunpack.c.h.b16 %v52
  %v169 = vunpack.c.l.b16 %v53
  %v170 = vpack.c.b16 %v125, %v122
  %v171 = vpack.c.b16 %v126, %v123
  %v172 = vpack.c.b16 %v127, %v124
  %v173 = vpack.c.b16 %v131, %v128
  %v174 = vpack.c.b16 %v132, %v129
  %v175 = vpack.c.b16 %v133, %v130
  %v176 = vpack.c.b16 %v137, %v134
  %v177 = vpack.c.b16 %v138, %v135
  %v178 = vpack.c.b16 %v139, %v136
  %v179 = vpack.c.b16 %v143, %v140
  %v180 = vpack.c.b16 %v144, %v141
  %v181 = vpack.c.b16 %v145, %v142
  %v182 = vpack.c.b16 %v149, %v146
  %v183 = vpack.c.b16 %v150, %v147
  %v184 = vpack.c.b16 %v151, %v148
  %v185 = vpack.c.b16 %v155, %v152
  %v186 = vpack.c.b16 %v156, %v153
  %v187 = vpack.c.b16 %v157, %v154
  %v188 = vpack.c.b16 %v161, %v158
  %v189 = vpack.c.b16 %v162, %v159
  %v190 = vpack.c.b16 %v163, %v160
  %v191 = vpack.c.b16 %v167, %v164
  %v192 = vpack.c.b16 %v168, %v165
  %v193 = vpack.c.b16 %v169, %v166
  %v246 = vunpack.c.l.b16 %v54
  %v247 = vunpack.c.l.b16 %v55
  %v248 = vunpack.c.l.b16 %v56
  %v249 = vunpack.c.l.b16 %v57
  %v250 = vunpack.c.l.b16 %v58
  %v251 = vunpack.c.l.b16 %v59
  %v252 = vunpack.c.l.b16 %v60
  %v253 = vunpack.c.l.b16 %v61
  %v254 = vunpack.c.l.b16 %v62
  %v255 = vunpack.c.l.b16 %v63
  %v256 = vunpack.c.l.b16 %v64
  %v257 = vunpack.c.l.b16 %v65
  %v258 = vunpack.c.l.b16 %v66
  %v259 = vunpack.c.l.b16 %v67
  %v260 = vunpack.c.l.b16 %v68
  %v261 = vunpack.c.l.b16 %v69
  %v262 = vunpack.c.l.b16 %v70
  %v263 = vunpack.c.l.b16 %v71
  %v264 = vunpack.c.l.b16 %v72
  %v265 = vunpack.c.l.b16 %v73
  %v266 = vunpack.c.l.b16 %v74
  %v267 = vunpack.c.l.b16 %v75
  %v268 = vunpack.c.l.b16 %v76
  %v269 = vunpack.c.l.b16 %v77
  %v270 = vunpack.c.l.b16 %v78
  %v271 = vunpack.c.l.b16 %v79
  %v272 = vunpack.c.l.b16 %v80
  %v273 = vunpack.c.l.b16 %v81
  %v274 = vunpack.c.l.b16 %v82
  %v275 = vunpack.c.l.b16 %v83
  %v276 = vunpack.c.l.b16 %v84
  %v277 = vunpack.c.l.b16 %v85
  %v278 = vunpack.c.l.b16 %v86
  %v279 = vunpack.c.l.b16 %v87
  %v280 = vunpack.c.l.b16 %v88
  %v281 = vunpack.c.l.b16 %v89
  %v282 = vpack.c.b16 %v247, %v246
  %v283 = vpack.c.b16 %v249, %v248
  %v284 = vpack.c.b16 %v251, %v250
  %v285 = vpack.c.b16 %v253, %v252
  %v286 = vpack.c.b16 %v255, %v254
  %v287 = vpack.c.b16 %v257, %v256
  %v288 = vpack.c.b16 %v259, %v258
  %v289 = vpack.c.b16 %v261, %v260
  %v290 = vpack.c.b16 %v263, %v262
  %v291 = vpack.c.b16 %v265, %v264
  %v292 = vpack.c.b16 %v267, %v266
  %v293 = vpack.c.b16 %v269, %v268
  %v294 = vpack.c.b16 %v271, %v270
  %v295 = vpack.c.b16 %v273, %v272
  %v296 = vpack.c.b16 %v275, %v274
  %v297 = vpack.c.b16 %v277, %v276
  %v298 = vpack.c.b16 %v279, %v278
  %v299 = vpack.c.b16 %v281, %v280
  %vm318 = vcmask 261120
  %v320 = vsel %vm318, %v172, 0
  %v323 = vsel %vm318, %v175, 0
  %v326 = vsel %vm318, %v178, 0
  %v329 = vsel %vm318, %v181, 0
  %v332 = vsel %vm318, %v184, 0
  %v335 = vsel %vm318, %v187, 0
  %v338 = vsel %vm318, %v190, 0
  %v341 = vsel %vm318, %v193, 0
  %343 = vmatpush.bf16.msra.mxu0 %v289
  %344 = vmatpush.bf16.msra.mxu0 %v288
  %345 = vmatpush.bf16.msra.mxu0 %v287
  %346 = vmatpush.bf16.msra.mxu0 %v286
  %347 = vmatpush.bf16.msra.mxu0 %v285
  %348 = vmatpush.bf16.msra.mxu0 %v284
  %349 = vmatpush.bf16.msra.mxu0 %v283
  %350 = vmatpush.bf16.msra.mxu0 %v282
  %351 = vmatmul.bf16.gmra.mxu0 %v170
  %v352 = vpop.f32.mrf.mxu0
  %v353 = vadd.f32 0.0, %v352
  %v354 = vpop.f32.mrf.mxu0
  %v355 = vadd.f32 0.0, %v354
  %356 = vmatmul.bf16.gmra.mxu0 %v173
  %v357 = vpop.f32.mrf.mxu0
  %v358 = vadd.f32 0.0, %v357
  %v359 = vpop.f32.mrf.mxu0
  %v360 = vadd.f32 0.0, %v359
  %361 = vmatmul.bf16.gmra.mxu0 %v176
  %v362 = vpop.f32.mrf.mxu0
  %v363 = vadd.f32 0.0, %v362
  %v364 = vpop.f32.mrf.mxu0
  %v365 = vadd.f32 0.0, %v364
  %366 = vmatmul.bf16.gmra.mxu0 %v179
  %v367 = vpop.f32.mrf.mxu0
  %v368 = vadd.f32 0.0, %v367
  %v369 = vpop.f32.mrf.mxu0
  %v370 = vadd.f32 0.0, %v369
  %371 = vmatmul.bf16.gmra.mxu0 %v182
  %v372 = vpop.f32.mrf.mxu0
  %v373 = vadd.f32 0.0, %v372
  %v374 = vpop.f32.mrf.mxu0
  %v375 = vadd.f32 0.0, %v374
  %376 = vmatmul.bf16.gmra.mxu0 %v185
  %v377 = vpop.f32.mrf.mxu0
  %v378 = vadd.f32 0.0, %v377
  %v379 = vpop.f32.mrf.mxu0
  %v380 = vadd.f32 0.0, %v379
  %381 = vmatmul.bf16.gmra.mxu0 %v188
  %v382 = vpop.f32.mrf.mxu0
  %v383 = vadd.f32 0.0, %v382
  %v384 = vpop.f32.mrf.mxu0
  %v385 = vadd.f32 0.0, %v384
  %386 = vmatmul.bf16.gmra.mxu0 %v191
  %v387 = vpop.f32.mrf.mxu0
  %v388 = vadd.f32 0.0, %v387
  %v389 = vpop.f32.mrf.mxu0
  %v390 = vadd.f32 0.0, %v389
  %391 = vdwg.mxu0
  %392 = vmatpush.bf16.msra.mxu0 %v297
  %393 = vmatpush.bf16.msra.mxu0 %v296
  %394 = vmatpush.bf16.msra.mxu0 %v295
  %395 = vmatpush.bf16.msra.mxu0 %v294
  %396 = vmatpush.bf16.msra.mxu0 %v293
  %397 = vmatpush.bf16.msra.mxu0 %v292
  %398 = vmatpush.bf16.msra.mxu0 %v291
  %399 = vmatpush.bf16.msra.mxu0 %v290
  %400 = vmatmul.bf16.gmra.mxu0 %v171
  %v401 = vpop.f32.mrf.mxu0
  %v402 = vadd.f32 %v353, %v401
  %v403 = vpop.f32.mrf.mxu0
  %v404 = vadd.f32 %v355, %v403
  %405 = vmatmul.bf16.gmra.mxu0 %v174
  %v406 = vpop.f32.mrf.mxu0
  %v407 = vadd.f32 %v358, %v406
  %v408 = vpop.f32.mrf.mxu0
  %v409 = vadd.f32 %v360, %v408
  %410 = vmatmul.bf16.gmra.mxu0 %v177
  %v411 = vpop.f32.mrf.mxu0
  %v412 = vadd.f32 %v363, %v411
  %v413 = vpop.f32.mrf.mxu0
  %v414 = vadd.f32 %v365, %v413
  %415 = vmatmul.bf16.gmra.mxu0 %v180
  %v416 = vpop.f32.mrf.mxu0
  %v417 = vadd.f32 %v368, %v416
  %v418 = vpop.f32.mrf.mxu0
  %v419 = vadd.f32 %v370, %v418
  %420 = vmatmul.bf16.gmra.mxu0 %v183
  %v421 = vpop.f32.mrf.mxu0
  %v422 = vadd.f32 %v373, %v421
  %v423 = vpop.f32.mrf.mxu0
  %v424 = vadd.f32 %v375, %v423
  %425 = vmatmul.bf16.gmra.mxu0 %v186
  %v426 = vpop.f32.mrf.mxu0
  %v427 = vadd.f32 %v378, %v426
  %v428 = vpop.f32.mrf.mxu0
  %v429 = vadd.f32 %v380, %v428
  %430 = vmatmul.bf16.gmra.mxu0 %v189
  %v431 = vpop.f32.mrf.mxu0
  %v432 = vadd.f32 %v383, %v431
  %v433 = vpop.f32.mrf.mxu0
  %v434 = vadd.f32 %v385, %v433
  %435 = vmatmul.bf16.gmra.mxu0 %v192
  %v436 = vpop.f32.mrf.mxu0
  %v437 = vadd.f32 %v388, %v436
  %v438 = vpop.f32.mrf.mxu0
  %v439 = vadd.f32 %v390, %v438
  %440 = vdwg.mxu0
  %441 = vmatpush.bf16.msra.mxu0 0
  %442 = vmatpush.bf16.msra.mxu0 0
  %443 = vmatpush.bf16.msra.mxu0 0
  %444 = vmatpush.bf16.msra.mxu0 0
  %445 = vmatpush.bf16.msra.mxu0 0
  %446 = vmatpush.bf16.msra.mxu0 0
  %447 = vmatpush.bf16.msra.mxu0 %v299
  %448 = vmatpush.bf16.msra.mxu0 %v298
  %449 = vmatmul.bf16.gmra.mxu0 %v320
  %v450 = vpop.f32.mrf.mxu0
  %v451 = vadd.f32 %v402, %v450
  %v452 = vpop.f32.mrf.mxu0
  %v453 = vadd.f32 %v404, %v452
  %454 = vmatmul.bf16.gmra.mxu0 %v323
  %v455 = vpop.f32.mrf.mxu0
  %v456 = vadd.f32 %v407, %v455
  %v457 = vpop.f32.mrf.mxu0
  %v458 = vadd.f32 %v409, %v457
  %459 = vmatmul.bf16.gmra.mxu0 %v326
  %v460 = vpop.f32.mrf.mxu0
  %v461 = vadd.f32 %v412, %v460
  %v462 = vpop.f32.mrf.mxu0
  %v463 = vadd.f32 %v414, %v462
  %464 = vmatmul.bf16.gmra.mxu0 %v329
  %v465 = vpop.f32.mrf.mxu0
  %v466 = vadd.f32 %v417, %v465
  %v467 = vpop.f32.mrf.mxu0
  %v468 = vadd.f32 %v419, %v467
  %469 = vmatmul.bf16.gmra.mxu0 %v332
  %v470 = vpop.f32.mrf.mxu0
  %v471 = vadd.f32 %v422, %v470
  %v472 = vpop.f32.mrf.mxu0
  %v473 = vadd.f32 %v424, %v472
  %474 = vmatmul.bf16.gmra.mxu0 %v335
  %v475 = vpop.f32.mrf.mxu0
  %v476 = vadd.f32 %v427, %v475
  %v477 = vpop.f32.mrf.mxu0
  %v478 = vadd.f32 %v429, %v477
  %479 = vmatmul.bf16.gmra.mxu0 %v338
  %v480 = vpop.f32.mrf.mxu0
  %v481 = vadd.f32 %v432, %v480
  %v482 = vpop.f32.mrf.mxu0
  %v483 = vadd.f32 %v434, %v482
  %484 = vmatmul.bf16.gmra.mxu0 %v341
  %v485 = vpop.f32.mrf.mxu0
  %v486 = vadd.f32 %v437, %v485
  %v487 = vpop.f32.mrf.mxu0
  %v488 = vadd.f32 %v439, %v487
  %489 = vdwg.mxu0
  %490 = vst.msk [vmem:[%s2] sm:$0xff] %vm318, %v451
  %491 = vst.msk [vmem:[%s2 + $0x8] sm:$0xff] %vm318, %v453
  %492 = vst.msk [vmem:[%s2 + $0x10] sm:$0xff] %vm318, %v456
  %493 = vst.msk [vmem:[%s2 + $0x18] sm:$0xff] %vm318, %v458
  %494 = vst.msk [vmem:[%s2 + $0x20] sm:$0xff] %vm318, %v461
  %495 = vst.msk [vmem:[%s2 + $0x28] sm:$0xff] %vm318, %v463
  %496 = vst.msk [vmem:[%s2 + $0x30] sm:$0xff] %vm318, %v466
  %497 = vst.msk [vmem:[%s2 + $0x38] sm:$0xff] %vm318, %v468
  %498 = vst.msk [vmem:[%s2 + $0x40] sm:$0xff] %vm318, %v471
  %499 = vst.msk [vmem:[%s2 + $0x48] sm:$0xff] %vm318, %v473
  %500 = vst.msk [vmem:[%s2 + $0x50] sm:$0xff] %vm318, %v476
  %501 = vst.msk [vmem:[%s2 + $0x58] sm:$0xff] %vm318, %v478
  %502 = vst.msk [vmem:[%s2 + $0x60] sm:$0xff] %vm318, %v481
  %503 = vst.msk [vmem:[%s2 + $0x68] sm:$0xff] %vm318, %v483
  %504 = vst.msk [vmem:[%s2 + $0x70] sm:$0xff] %vm318, %v486
  %505 = vst.msk [vmem:[%s2 + $0x78] sm:$0xff] %vm318, %v488
  %v506 = vld [vmem:[%s3] sm:$0x1]
  %v507 = vsel %vm318, %v451, 0.0
  %v508 = vsel %vm318, %v453, 0.0
  %v509 = vadd.f32 %v507, %v508
  %v510 = vsel %vm318, %v456, 0.0
  %v511 = vadd.f32 %v509, %v510
  %v512 = vsel %vm318, %v458, 0.0
  %v513 = vadd.f32 %v511, %v512
  %v514 = vsel %vm318, %v461, 0.0
  %v515 = vadd.f32 %v513, %v514
  %v516 = vsel %vm318, %v463, 0.0
  %v517 = vadd.f32 %v515, %v516
  %v518 = vsel %vm318, %v466, 0.0
  %v519 = vadd.f32 %v517, %v518
  %v520 = vsel %vm318, %v468, 0.0
  %v521 = vadd.f32 %v519, %v520
  %v522 = vsel %vm318, %v471, 0.0
  %v523 = vadd.f32 %v521, %v522
  %v524 = vsel %vm318, %v473, 0.0
  %v525 = vadd.f32 %v523, %v524
  %v526 = vsel %vm318, %v476, 0.0
  %v527 = vadd.f32 %v525, %v526
  %v528 = vsel %vm318, %v478, 0.0
  %v529 = vadd.f32 %v527, %v528
  %v530 = vsel %vm318, %v481, 0.0
  %v531 = vadd.f32 %v529, %v530
  %v532 = vsel %vm318, %v483, 0.0
  %v533 = vadd.f32 %v531, %v532
  %v534 = vsel %vm318, %v486, 0.0
  %v535 = vadd.f32 %v533, %v534
  %v536 = vsel %vm318, %v488, 0.0
  %v537 = vadd.f32 %v535, %v536
  %v538 = vrot.slane %v537, 4
  %v539 = vadd.f32 %v537, %v538
  %v540 = vrot.slane %v539, 2
  %v541 = vadd.f32 %v539, %v540
  %v542 = vrot.slane %v541, 1
  %v543 = vadd.f32 %v541, %v542
  %v544 = vadd.f32 %v506, %v543
  %vm545 = vcmask 253952
  %546 = vst.msk [vmem:[%s3] sm:$0x1] %vm545, %v544
  %v547 = vld [vmem:[%s4] sm:$0x1]
  %v548 = vmul.f32 %v451, %v451
  %v549 = vmul.f32 %v453, %v453
  %v550 = vmul.f32 %v456, %v456
  %v551 = vmul.f32 %v458, %v458
  %v552 = vmul.f32 %v461, %v461
  %v553 = vmul.f32 %v463, %v463
  %v554 = vmul.f32 %v466, %v466
  %v555 = vmul.f32 %v468, %v468
  %v556 = vmul.f32 %v471, %v471
  %v557 = vmul.f32 %v473, %v473
  %v558 = vmul.f32 %v476, %v476
  %v559 = vmul.f32 %v478, %v478
  %v560 = vmul.f32 %v481, %v481
  %v561 = vmul.f32 %v483, %v483
  %v562 = vmul.f32 %v486, %v486
  %v563 = vmul.f32 %v488, %v488
  %v564 = vsel %vm318, %v548, 0.0
  %v565 = vsel %vm318, %v549, 0.0
  %v566 = vadd.f32 %v564, %v565
  %v567 = vsel %vm318, %v550, 0.0
  %v568 = vadd.f32 %v566, %v567
  %v569 = vsel %vm318, %v551, 0.0
  %v570 = vadd.f32 %v568, %v569
  %v571 = vsel %vm318, %v552, 0.0
  %v572 = vadd.f32 %v570, %v571
  %v573 = vsel %vm318, %v553, 0.0
  %v574 = vadd.f32 %v572, %v573
  %v575 = vsel %vm318, %v554, 0.0
  %v576 = vadd.f32 %v574, %v575
  %v577 = vsel %vm318, %v555, 0.0
  %v578 = vadd.f32 %v576, %v577
  %v579 = vsel %vm318, %v556, 0.0
  %v580 = vadd.f32 %v578, %v579
  %v581 = vsel %vm318, %v557, 0.0
  %v582 = vadd.f32 %v580, %v581
  %v583 = vsel %vm318, %v558, 0.0
  %v584 = vadd.f32 %v582, %v583
  %v585 = vsel %vm318, %v559, 0.0
  %v586 = vadd.f32 %v584, %v585
  %v587 = vsel %vm318, %v560, 0.0
  %v588 = vadd.f32 %v586, %v587
  %v589 = vsel %vm318, %v561, 0.0
  %v590 = vadd.f32 %v588, %v589
  %v591 = vsel %vm318, %v562, 0.0
  %v592 = vadd.f32 %v590, %v591
  %v593 = vsel %vm318, %v563, 0.0
  %v594 = vadd.f32 %v592, %v593
  %v595 = vrot.slane %v594, 4
  %v596 = vadd.f32 %v594, %v595
  %v597 = vrot.slane %v596, 2
  %v598 = vadd.f32 %v596, %v597
  %v599 = vrot.slane %v598, 1
  %v600 = vadd.f32 %v598, %v599
  %v601 = vadd.f32 %v547, %v600
  %602 = vst.msk [vmem:[%s4] sm:$0x1] %vm545, %v601
  // Predicated region
  $region14: #{generator_forward.28} parent=0 // pred_check
    _
  $region15: #{generator_forward.28} parent=0 // pred_check_branch
    %604 = sbr.rel (0) target = $region17
  $region16: #{generator_forward.28} parent=0 // pred_region
    _
  $region17: #{generator_forward.28} parent=0 // pred_fallthru
    _
  // Predicated region
  $region18: #{generator_forward.28} parent=0 // pred_check
    _
  $region19: #{generator_forward.28} parent=0 // pred_check_branch
    %606 = sbr.rel (0) target = $region21
  $region20: #{generator_forward.28} parent=0 // pred_region
    _
  $region21: #{generator_forward.28} parent=0 // pred_fallthru
    _
  // Predicated region
  $region22: #{generator_forward.28} parent=0 // pred_check
    _
  $region23: #{generator_forward.28} parent=0 // pred_check_branch
    %608 = sbr.rel (0) target = $region25
  $region24: #{generator_forward.28} parent=0 // pred_region
    _
  $region25: #{generator_forward.28} parent=0 // pred_fallthru
    _
  // Predicated region
  $region26: #{generator_forward.28} parent=0 // pred_check
    _
  $region27: #{generator_forward.28} parent=0 // pred_check_branch
    %610 = sbr.rel (0) target = $region29
  $region28: #{generator_forward.28} parent=0 // pred_region
    _
  $region29: #{generator_forward.28} parent=0 // pred_fallthru
    _
  // Predicated region
  $region30: #{generator_forward.28} parent=0 // pred_check
    _
  $region31: #{generator_forward.28} parent=0 // pred_check_branch
    %612 = sbr.rel (0) target = $region33
  $region32: #{generator_forward.28} parent=0 // pred_region
    _
  $region33: #{generator_forward.28} parent=0 // pred_fallthru
    _
  // Predicated region
  $region34: #{generator_forward.28} parent=0 // pred_check
    _
  $region35: #{generator_forward.28} parent=0 // pred_check_branch
    %614 = sbr.rel (0) target = $region37
  $region36: #{generator_forward.28} parent=0 // pred_region
    _
  $region37: #{generator_forward.28} parent=0 // pred_fallthru
    _

// kernel: generator_forward.31
$region0: #{generator_forward.31}
  #allocation0 [shape = 'u32[]', space=smem, size = 0x4, offset = 0x4, fixed_abs, tag = 'smem constant byte address 0x4 - core index']
  #allocation1 [shape = 'u32[72,128]{1,0:T(1,128)}', space=vmem, size = 0x9000, scoped, tag = 'internal scratch']
  %s0 = inlined_call_operand.vmem [shape: f32[128,16], index: 0, kind: input, shape index: {}]
  %s1 = inlined_call_operand.vmem [shape: f32[1,16], index: 1, kind: input, shape index: {}]
  %s2 = inlined_call_operand.vmem [shape: f32[1,16], index: 2, kind: input, shape index: {}]
  %s3 = inlined_call_operand.vmem [shape: f32[128,16], index: 3, kind: input, shape index: {}]
  %s4 = inlined_call_operand.vmem [shape: f32[128,16], index: 4, kind: input, shape index: {}]
  %s5 = inlined_call_operand.vmem [shape: f32[128,16], index: 5, kind: output, shape index: {}]
  %s6 = sld [smem:[#allocation0]]
  $region30: #{generator_forward.31} parent=0
    _
  %s8 = ssub.s32 1, %s6
  %s9 = scalar_select 0, %s8, %s6
  // Predicated region
  $region2: #{generator_forward.31} parent=0 // pred_check
    _
  $region3: #{generator_forward.31} parent=0 // pred_check_branch
    %11 = sbr.rel (0) target = $region5
  $region4: #{generator_forward.31} parent=0 // pred_region
    _
  $region5: #{generator_forward.31} parent=0 // pred_fallthru
    _
  // Predicated region
  $region6: #{generator_forward.31} parent=0 // pred_check
    _
  $region7: #{generator_forward.31} parent=0 // pred_check_branch
    %13 = sbr.rel (0) target = $region9
  $region8: #{generator_forward.31} parent=0 // pred_region
    _
  $region9: #{generator_forward.31} parent=0 // pred_fallthru
    _
  // Predicated region
  $region10: #{generator_forward.31} parent=0 // pred_check
    _
  $region11: #{generator_forward.31} parent=0 // pred_check_branch
    %15 = sbr.rel (0) target = $region13
  $region12: #{generator_forward.31} parent=0 // pred_region
    _
  $region13: #{generator_forward.31} parent=0 // pred_fallthru
    _
  // Predicated region
  $region14: #{generator_forward.31} parent=0 // pred_check
    _
  $region15: #{generator_forward.31} parent=0 // pred_check_branch
    %17 = sbr.rel (0) target = $region17
  $region16: #{generator_forward.31} parent=0 // pred_region
    _
  $region17: #{generator_forward.31} parent=0 // pred_fallthru
    _
  // Predicated region
  $region18: #{generator_forward.31} parent=0 // pred_check
    _
  $region19: #{generator_forward.31} parent=0 // pred_check_branch
    %19 = sbr.rel (0) target = $region21
  $region20: #{generator_forward.31} parent=0 // pred_region
    _
  $region21: #{generator_forward.31} parent=0 // pred_fallthru
    _
  %v20 = vld [vmem:[%s0] sm:$0xff]
  %v21 = vld [vmem:[%s0 + $0x8] sm:$0xff]
  %v22 = vld [vmem:[%s0 + $0x10] sm:$0xff]
  %v23 = vld [vmem:[%s0 + $0x18] sm:$0xff]
  %v24 = vld [vmem:[%s0 + $0x20] sm:$0xff]
  %v25 = vld [vmem:[%s0 + $0x28] sm:$0xff]
  %v26 = vld [vmem:[%s0 + $0x30] sm:$0xff]
  %v27 = vld [vmem:[%s0 + $0x38] sm:$0xff]
  %v28 = vld [vmem:[%s0 + $0x40] sm:$0xff]
  %v29 = vld [vmem:[%s0 + $0x48] sm:$0xff]
  %v30 = vld [vmem:[%s0 + $0x50] sm:$0xff]
  %v31 = vld [vmem:[%s0 + $0x58] sm:$0xff]
  %v32 = vld [vmem:[%s0 + $0x60] sm:$0xff]
  %v33 = vld [vmem:[%s0 + $0x68] sm:$0xff]
  %v34 = vld [vmem:[%s0 + $0x70] sm:$0xff]
  %v35 = vld [vmem:[%s0 + $0x78] sm:$0xff]
  %v36 = vld [vmem:[%s1] sm:$0x1]
  %v38 = vperm.slane %v36, 0
  %v40 = vmul.f32 %v20, %v38
  %v41 = vmul.f32 %v21, %v38
  %v42 = vmul.f32 %v22, %v38
  %v43 = vmul.f32 %v23, %v38
  %v44 = vmul.f32 %v24, %v38
  %v45 = vmul.f32 %v25, %v38
  %v46 = vmul.f32 %v26, %v38
  %v47 = vmul.f32 %v27, %v38
  %v48 = vmul.f32 %v28, %v38
  %v49 = vmul.f32 %v29, %v38
  %v50 = vmul.f32 %v30, %v38
  %v51 = vmul.f32 %v31, %v38
  %v52 = vmul.f32 %v32, %v38
  %v53 = vmul.f32 %v33, %v38
  %v54 = vmul.f32 %v34, %v38
  %v55 = vmul.f32 %v35, %v38
  %v56 = vld [vmem:[%s2] sm:$0x1]
  %v58 = vperm.slane %v56, 0
  %v60 = vadd.f32 %v40, %v58
  %v61 = vadd.f32 %v41, %v58
  %v62 = vadd.f32 %v42, %v58
  %v63 = vadd.f32 %v43, %v58
  %v64 = vadd.f32 %v44, %v58
  %v65 = vadd.f32 %v45, %v58
  %v66 = vadd.f32 %v46, %v58
  %v67 = vadd.f32 %v47, %v58
  %v68 = vadd.f32 %v48, %v58
  %v69 = vadd.f32 %v49, %v58
  %v70 = vadd.f32 %v50, %v58
  %v71 = vadd.f32 %v51, %v58
  %v72 = vadd.f32 %v52, %v58
  %v73 = vadd.f32 %v53, %v58
  %v74 = vadd.f32 %v54, %v58
  %v75 = vadd.f32 %v55, %v58
  %v76 = vtanh.pop %v60
  %v77 = vtanh.pop %v61
  %v78 = vtanh.pop %v62
  %v79 = vtanh.pop %v63
  %v80 = vtanh.pop %v64
  %v81 = vtanh.pop %v65
  %v82 = vtanh.pop %v66
  %v83 = vtanh.pop %v67
  %v84 = vtanh.pop %v68
  %v85 = vtanh.pop %v69
  %v86 = vtanh.pop %v70
  %v87 = vtanh.pop %v71
  %v88 = vtanh.pop %v72
  %v89 = vtanh.pop %v73
  %v90 = vtanh.pop %v74
  %v91 = vtanh.pop %v75
  %v92 = vld [vmem:[%s3] sm:$0xff]
  %v93 = vld [vmem:[%s3 + $0x8] sm:$0xff]
  %v94 = vld [vmem:[%s3 + $0x10] sm:$0xff]
  %v95 = vld [vmem:[%s3 + $0x18] sm:$0xff]
  %v96 = vld [vmem:[%s3 + $0x20] sm:$0xff]
  %v97 = vld [vmem:[%s3 + $0x28] sm:$0xff]
  %v98 = vld [vmem:[%s3 + $0x30] sm:$0xff]
  %v99 = vld [vmem:[%s3 + $0x38] sm:$0xff]
  %v100 = vld [vmem:[%s3 + $0x40] sm:$0xff]
  %v101 = vld [vmem:[%s3 + $0x48] sm:$0xff]
  %v102 = vld [vmem:[%s3 + $0x50] sm:$0xff]
  %v103 = vld [vmem:[%s3 + $0x58] sm:$0xff]
  %v104 = vld [vmem:[%s3 + $0x60] sm:$0xff]
  %v105 = vld [vmem:[%s3 + $0x68] sm:$0xff]
  %v106 = vld [vmem:[%s3 + $0x70] sm:$0xff]
  %v107 = vld [vmem:[%s3 + $0x78] sm:$0xff]
  %v108 = vsub.f32 1.0, %v92
  %v109 = vsub.f32 1.0, %v93
  %v110 = vsub.f32 1.0, %v94
  %v111 = vsub.f32 1.0, %v95
  %v112 = vsub.f32 1.0, %v96
  %v113 = vsub.f32 1.0, %v97
  %v114 = vsub.f32 1.0, %v98
  %v115 = vsub.f32 1.0, %v99
  %v116 = vsub.f32 1.0, %v100
  %v117 = vsub.f32 1.0, %v101
  %v118 = vsub.f32 1.0, %v102
  %v119 = vsub.f32 1.0, %v103
  %v120 = vsub.f32 1.0, %v104
  %v121 = vsub.f32 1.0, %v105
  %v122 = vsub.f32 1.0, %v106
  %v123 = vsub.f32 1.0, %v107
  %v124 = vld [vmem:[%s4] sm:$0xff]
  %v125 = vld [vmem:[%s4 + $0x8] sm:$0xff]
  %v126 = vld [vmem:[%s4 + $0x10] sm:$0xff]
  %v127 = vld [vmem:[%s4 + $0x18] sm:$0xff]
  %v128 = vld [vmem:[%s4 + $0x20] sm:$0xff]
  %v129 = vld [vmem:[%s4 + $0x28] sm:$0xff]
  %v130 = vld [vmem:[%s4 + $0x30] sm:$0xff]
  %v131 = vld [vmem:[%s4 + $0x38] sm:$0xff]
  %v132 = vld [vmem:[%s4 + $0x40] sm:$0xff]
  %v133 = vld [vmem:[%s4 + $0x48] sm:$0xff]
  %v134 = vld [vmem:[%s4 + $0x50] sm:$0xff]
  %v135 = vld [vmem:[%s4 + $0x58] sm:$0xff]
  %v136 = vld [vmem:[%s4 + $0x60] sm:$0xff]
  %v137 = vld [vmem:[%s4 + $0x68] sm:$0xff]
  %v138 = vld [vmem:[%s4 + $0x70] sm:$0xff]
  %v139 = vld [vmem:[%s4 + $0x78] sm:$0xff]
  %v140 = vmul.f32 %v108, %v124
  %v141 = vmul.f32 %v109, %v125
  %v142 = vmul.f32 %v110, %v126
  %v143 = vmul.f32 %v111, %v127
  %v144 = vmul.f32 %v112, %v128
  %v145 = vmul.f32 %v113, %v129
  %v146 = vmul.f32 %v114, %v130
  %v147 = vmul.f32 %v115, %v131
  %v148 = vmul.f32 %v116, %v132
  %v149 = vmul.f32 %v117, %v133
  %v150 = vmul.f32 %v118, %v134
  %v151 = vmul.f32 %v119, %v135
  %v152 = vmul.f32 %v120, %v136
  %v153 = vmul.f32 %v121, %v137
  %v154 = vmul.f32 %v122, %v138
  %v155 = vmul.f32 %v123, %v139
  %v156 = vmul.f32 %v92, %v76
  %v157 = vmul.f32 %v93, %v77
  %v158 = vmul.f32 %v94, %v78
  %v159 = vmul.f32 %v95, %v79
  %v160 = vmul.f32 %v96, %v80
  %v161 = vmul.f32 %v97, %v81
  %v162 = vmul.f32 %v98, %v82
  %v163 = vmul.f32 %v99, %v83
  %v164 = vmul.f32 %v100, %v84
  %v165 = vmul.f32 %v101, %v85
  %v166 = vmul.f32 %v102, %v86
  %v167 = vmul.f32 %v103, %v87
  %v168 = vmul.f32 %v104, %v88
  %v169 = vmul.f32 %v105, %v89
  %v170 = vmul.f32 %v106, %v90
  %v171 = vmul.f32 %v107, %v91
  %v172 = vadd.f32 %v140, %v156
  %v173 = vadd.f32 %v141, %v157
  %v174 = vadd.f32 %v142, %v158
  %v175 = vadd.f32 %v143, %v159
  %v176 = vadd.f32 %v144, %v160
  %v177 = vadd.f32 %v145, %v161
  %v178 = vadd.f32 %v146, %v162
  %v179 = vadd.f32 %v147, %v163
  %v180 = vadd.f32 %v148, %v164
  %v181 = vadd.f32 %v149, %v165
  %v182 = vadd.f32 %v150, %v166
  %v183 = vadd.f32 %v151, %v167
  %v184 = vadd.f32 %v152, %v168
  %v185 = vadd.f32 %v153, %v169
  %v186 = vadd.f32 %v154, %v170
  %v187 = vadd.f32 %v155, %v171
  %vm188 = vcmask 130048
  %189 = vst.msk [vmem:[%s5] sm:$0xff] %vm188, %v172
  %190 = vst.msk [vmem:[%s5 + $0x8] sm:$0xff] %vm188, %v173
  %191 = vst.msk [vmem:[%s5 + $0x10] sm:$0xff] %vm188, %v174
  %192 = vst.msk [vmem:[%s5 + $0x18] sm:$0xff] %vm188, %v175
  %193 = vst.msk [vmem:[%s5 + $0x20] sm:$0xff] %vm188, %v176
  %194 = vst.msk [vmem:[%s5 + $0x28] sm:$0xff] %vm188, %v177
  %195 = vst.msk [vmem:[%s5 + $0x30] sm:$0xff] %vm188, %v178
  %196 = vst.msk [vmem:[%s5 + $0x38] sm:$0xff] %vm188, %v179
  %197 = vst.msk [vmem:[%s5 + $0x40] sm:$0xff] %vm188, %v180
  %198 = vst.msk [vmem:[%s5 + $0x48] sm:$0xff] %vm188, %v181
  %199 = vst.msk [vmem:[%s5 + $0x50] sm:$0xff] %vm188, %v182
  %200 = vst.msk [vmem:[%s5 + $0x58] sm:$0xff] %vm188, %v183
  %201 = vst.msk [vmem:[%s5 + $0x60] sm:$0xff] %vm188, %v184
  %202 = vst.msk [vmem:[%s5 + $0x68] sm:$0xff] %vm188, %v185
  %203 = vst.msk [vmem:[%s5 + $0x70] sm:$0xff] %vm188, %v186
  %204 = vst.msk [vmem:[%s5 + $0x78] sm:$0xff] %vm188, %v187
  // Predicated region
  $region22: #{generator_forward.31} parent=0 // pred_check
    _
  $region23: #{generator_forward.31} parent=0 // pred_check_branch
    %206 = sbr.rel (0) target = $region25
  $region24: #{generator_forward.31} parent=0 // pred_region
    _
  $region25: #{generator_forward.31} parent=0 // pred_fallthru
    _
  // Predicated region
  $region26: #{generator_forward.31} parent=0 // pred_check
    _
  $region27: #{generator_forward.31} parent=0 // pred_check_branch
    %208 = sbr.rel (0) target = $region29
  $region28: #{generator_forward.31} parent=0 // pred_region
    _
  $region29: #{generator_forward.31} parent=0 // pred_fallthru
    _

// kernel: generator_forward.30
$region0: #{generator_forward.30}
  #allocation0 [shape = 'u32[]', space=smem, size = 0x4, offset = 0x4, fixed_abs, tag = 'smem constant byte address 0x4 - core index']
  #allocation1 [shape = 'u32[72,128]{1,0:T(1,128)}', space=vmem, size = 0x9000, scoped, tag = 'internal scratch']
  %s0 = inlined_call_operand.vmem [shape: bf16[128,288], index: 0, kind: input, shape index: {}]
  %s1 = inlined_call_operand.vmem [shape: bf16[288,16], index: 1, kind: input, shape index: {}]
  %s2 = inlined_call_operand.vmem [shape: f32[128,16], index: 2, kind: output, shape index: {0}]
  %s3 = inlined_call_operand.vmem [shape: f32[1,16], index: 3, kind: output, shape index: {1}]
  %s4 = inlined_call_operand.vmem [shape: f32[1,16], index: 4, kind: output, shape index: {2}]
  %5 = xla_tuple %s2, %s3, %s4
  %s6 = sld [smem:[#allocation0]]
  $region38: #{generator_forward.30} parent=0
    _
  %s8 = ssub.s32 1, %s6
  %s9 = scalar_select 0, %s8, %s6
  // Predicated region
  $region2: #{generator_forward.30} parent=0 // pred_check
    _
  $region3: #{generator_forward.30} parent=0 // pred_check_branch
    %11 = sbr.rel (0) target = $region5
  $region4: #{generator_forward.30} parent=0 // pred_region
    _
  $region5: #{generator_forward.30} parent=0 // pred_fallthru
    _
  // Predicated region
  $region6: #{generator_forward.30} parent=0 // pred_check
    _
  $region7: #{generator_forward.30} parent=0 // pred_check_branch
    %13 = sbr.rel (0) target = $region9
  $region8: #{generator_forward.30} parent=0 // pred_region
    _
  $region9: #{generator_forward.30} parent=0 // pred_fallthru
    _
  %p15 = scmp.eq.s32.totalorder 0, 0
  // Predicated region
  $region10: #{generator_forward.30} parent=0 // pred_check
    %p16 = pneg %p15
  $region11: #{generator_forward.30} parent=0 // pred_check_branch
    %18 = sbr.rel (%p16) target = $region13
  $region12: #{generator_forward.30} parent=0 // pred_region
    %vm19 = vcmask 122880
    %20 = vst.msk [vmem:[%s3] sm:$0x1] %vm19, 0.0
    %21 = vst.msk [vmem:[%s4] sm:$0x1] %vm19, 0.0
  $region13: #{generator_forward.30} parent=0 // pred_fallthru
    _
  %v22 = vld [vmem:[%s0] sm:$0xff]
  %v23 = vld [vmem:[%s0 + $0x8] sm:$0xf]
  %v24 = vld [vmem:[%s0 + $0xc] sm:$0xff]
  %v25 = vld [vmem:[%s0 + $0x14] sm:$0xf]
  %v26 = vld [vmem:[%s0 + $0x18] sm:$0xff]
  %v27 = vld [vmem:[%s0 + $0x20] sm:$0xf]
  %v28 = vld [vmem:[%s0 + $0x24] sm:$0xff]
  %v29 = vld [vmem:[%s0 + $0x2c] sm:$0xf]
  %v30 = vld [vmem:[%s0 + $0x30] sm:$0xff]
  %v31 = vld [vmem:[%s0 + $0x38] sm:$0xf]
  %v32 = vld [vmem:[%s0 + $0x3c] sm:$0xff]
  %v33 = vld [vmem:[%s0 + $0x44] sm:$0xf]
  %v34 = vld [vmem:[%s0 + $0x48] sm:$0xff]
  %v35 = vld [vmem:[%s0 + $0x50] sm:$0xf]
  %v36 = vld [vmem:[%s0 + $0x54] sm:$0xff]
  %v37 = vld [vmem:[%s0 + $0x5c] sm:$0xf]
  %v38 = vld [vmem:[%s0 + $0x60] sm:$0xff]
  %v39 = vld [vmem:[%s0 + $0x68] sm:$0xf]
  %v40 = vld [vmem:[%s0 + $0x6c] sm:$0xff]
  %v41 = vld [vmem:[%s0 + $0x74] sm:$0xf]
  %v42 = vld [vmem:[%s0 + $0x78] sm:$0xff]
  %v43 = vld [vmem:[%s0 + $0x80] sm:$0xf]
  %v44 = vld [vmem:[%s0 + $0x84] sm:$0xff]
  %v45 = vld [vmem:[%s0 + $0x8c] sm:$0xf]
  %v46 = vld [vmem:[%s0 + $0x90] sm:$0xff]
  %v47 = vld [vmem:[%s0 + $0x98] sm:$0xf]
  %v48 = vld [vmem:[%s0 + $0x9c] sm:$0xff]
  %v49 = vld [vmem:[%s0 + $0xa4] sm:$0xf]
  %v50 = vld [vmem:[%s0 + $0xa8] sm:$0xff]
  %v51 = vld [vmem:[%s0 + $0xb0] sm:$0xf]
  %v52 = vld [vmem:[%s0 + $0xb4] sm:$0xff]
  %v53 = vld [vmem:[%s0 + $0xbc] sm:$0xf]
  %v54 = vld [vmem:[%s1] sm:$0xf]
  %v55 = vld [vmem:[%s1 + $0x4] sm:$0xf]
  %v56 = vld [vmem:[%s1 + $0x8] sm:$0xf]
  %v57 = vld [vmem:[%s1 + $0xc] sm:$0xf]
  %v58 = vld [vmem:[%s1 + $0x10] sm:$0xf]
  %v59 = vld [vmem:[%s1 + $0x14] sm:$0xf]
  %v60 = vld [vmem:[%s1 + $0x18] sm:$0xf]
  %v61 = vld [vmem:[%s1 + $0x1c] sm:$0xf]
  %v62 = vld [vmem:[%s1 + $0x20] sm:$0xf]
  %v63 = vld [vmem:[%s1 + $0x24] sm:$0xf]
  %v64 = vld [vmem:[%s1 + $0x28] sm:$0xf]
  %v65 = vld [vmem:[%s1 + $0x2c] sm:$0xf]
  %v66 = vld [vmem:[%s1 + $0x30] sm:$0xf]
  %v67 = vld [vmem:[%s1 + $0x34] sm:$0xf]
  %v68 = vld [vmem:[%s1 + $0x38] sm:$0xf]
  %v69 = vld [vmem:[%s1 + $0x3c] sm:$0xf]
  %v70 = vld [vmem:[%s1 + $0x40] sm:$0xf]
  %v71 = vld [vmem:[%s1 + $0x44] sm:$0xf]
  %v72 = vld [vmem:[%s1 + $0x48] sm:$0xf]
  %v73 = vld [vmem:[%s1 + $0x4c] sm:$0xf]
  %v74 = vld [vmem:[%s1 + $0x50] sm:$0xf]
  %v75 = vld [vmem:[%s1 + $0x54] sm:$0xf]
  %v76 = vld [vmem:[%s1 + $0x58] sm:$0xf]
  %v77 = vld [vmem:[%s1 + $0x5c] sm:$0xf]
  %v78 = vld [vmem:[%s1 + $0x60] sm:$0xf]
  %v79 = vld [vmem:[%s1 + $0x64] sm:$0xf]
  %v80 = vld [vmem:[%s1 + $0x68] sm:$0xf]
  %v81 = vld [vmem:[%s1 + $0x6c] sm:$0xf]
  %v82 = vld [vmem:[%s1 + $0x70] sm:$0xf]
  %v83 = vld [vmem:[%s1 + $0x74] sm:$0xf]
  %v84 = vld [vmem:[%s1 + $0x78] sm:$0xf]
  %v85 = vld [vmem:[%s1 + $0x7c] sm:$0xf]
  %v86 = vld [vmem:[%s1 + $0x80] sm:$0xf]
  %v87 = vld [vmem:[%s1 + $0x84] sm:$0xf]
  %v88 = vld [vmem:[%s1 + $0x88] sm:$0xf]
  %v89 = vld [vmem:[%s1 + $0x8c] sm:$0xf]
  %v122 = vunpack.c.l.b16 %v22
  %v123 = vunpack.c.h.b16 %v22
  %v124 = vunpack.c.l.b16 %v23
  %v125 = vunpack.c.l.b16 %v24
  %v126 = vunpack.c.h.b16 %v24
  %v127 = vunpack.c.l.b16 %v25
  %v128 = vunpack.c.l.b16 %v26
  %v129 = vunpack.c.h.b16 %v26
  %v130 = vunpack.c.l.b16 %v27
  %v131 = vunpack.c.l.b16 %v28
  %v132 = vunpack.c.h.b16 %v28
  %v133 = vunpack.c.l.b16 %v29
  %v134 = vunpack.c.l.b16 %v30
  %v135 = vunpack.c.h.b16 %v30
  %v136 = vunpack.c.l.b16 %v31
  %v137 = vunpack.c.l.b16 %v32
  %v138 = vunpack.c.h.b16 %v32
  %v139 = vunpack.c.l.b16 %v33
  %v140 = vunpack.c.l.b16 %v34
  %v141 = vunpack.c.h.b16 %v34
  %v142 = vunpack.c.l.b16 %v35
  %v143 = vunpack.c.l.b16 %v36
  %v144 = vunpack.c.h.b16 %v36
  %v145 = vunpack.c.l.b16 %v37
  %v146 = vunpack.c.l.b16 %v38
  %v147 = vunpack.c.h.b16 %v38
  %v148 = vunpack.c.l.b16 %v39
  %v149 = vunpack.c.l.b16 %v40
  %v150 = vunpack.c.h.b16 %v40
  %v151 = vunpack.c.l.b16 %v41
  %v152 = vunpack.c.l.b16 %v42
  %v153 = vunpack.c.h.b16 %v42
  %v154 = vunpack.c.l.b16 %v43
  %v155 = vunpack.c.l.b16 %v44
  %v156 = vunpack.c.h.b16 %v44
  %v157 = vunpack.c.l.b16 %v45
  %v158 = vunpack.c.l.b16 %v46
  %v159 = vunpack.c.h.b16 %v46
  %v160 = vunpack.c.l.b16 %v47
  %v161 = vunpack.c.l.b16 %v48
  %v162 = vunpack.c.h.b16 %v48
  %v163 = vunpack.c.l.b16 %v49
  %v164 = vunpack.c.l.b16 %v50
  %v165 = vunpack.c.h.b16 %v50
  %v166 = vunpack.c.l.b16 %v51
  %v167 = vunpack.c.l.b16 %v52
  %v168 = vunpack.c.h.b16 %v52
  %v169 = vunpack.c.l.b16 %v53
  %v170 = vpack.c.b16 %v125, %v122
  %v171 = vpack.c.b16 %v126, %v123
  %v172 = vpack.c.b16 %v127, %v124
  %v173 = vpack.c.b16 %v131, %v128
  %v174 = vpack.c.b16 %v132, %v129
  %v175 = vpack.c.b16 %v133, %v130
  %v176 = vpack.c.b16 %v137, %v134
  %v177 = vpack.c.b16 %v138, %v135
  %v178 = vpack.c.b16 %v139, %v136
  %v179 = vpack.c.b16 %v143, %v140
  %v180 = vpack.c.b16 %v144, %v141
  %v181 = vpack.c.b16 %v145, %v142
  %v182 = vpack.c.b16 %v149, %v146
  %v183 = vpack.c.b16 %v150, %v147
  %v184 = vpack.c.b16 %v151, %v148
  %v185 = vpack.c.b16 %v155, %v152
  %v186 = vpack.c.b16 %v156, %v153
  %v187 = vpack.c.b16 %v157, %v154
  %v188 = vpack.c.b16 %v161, %v158
  %v189 = vpack.c.b16 %v162, %v159
  %v190 = vpack.c.b16 %v163, %v160
  %v191 = vpack.c.b16 %v167, %v164
  %v192 = vpack.c.b16 %v168, %v165
  %v193 = vpack.c.b16 %v169, %v166
  %v246 = vunpack.c.l.b16 %v54
  %v247 = vunpack.c.l.b16 %v55
  %v248 = vunpack.c.l.b16 %v56
  %v249 = vunpack.c.l.b16 %v57
  %v250 = vunpack.c.l.b16 %v58
  %v251 = vunpack.c.l.b16 %v59
  %v252 = vunpack.c.l.b16 %v60
  %v253 = vunpack.c.l.b16 %v61
  %v254 = vunpack.c.l.b16 %v62
  %v255 = vunpack.c.l.b16 %v63
  %v256 = vunpack.c.l.b16 %v64
  %v257 = vunpack.c.l.b16 %v65
  %v258 = vunpack.c.l.b16 %v66
  %v259 = vunpack.c.l.b16 %v67
  %v260 = vunpack.c.l.b16 %v68
  %v261 = vunpack.c.l.b16 %v69
  %v262 = vunpack.c.l.b16 %v70
  %v263 = vunpack.c.l.b16 %v71
  %v264 = vunpack.c.l.b16 %v72
  %v265 = vunpack.c.l.b16 %v73
  %v266 = vunpack.c.l.b16 %v74
  %v267 = vunpack.c.l.b16 %v75
  %v268 = vunpack.c.l.b16 %v76
  %v269 = vunpack.c.l.b16 %v77
  %v270 = vunpack.c.l.b16 %v78
  %v271 = vunpack.c.l.b16 %v79
  %v272 = vunpack.c.l.b16 %v80
  %v273 = vunpack.c.l.b16 %v81
  %v274 = vunpack.c.l.b16 %v82
  %v275 = vunpack.c.l.b16 %v83
  %v276 = vunpack.c.l.b16 %v84
  %v277 = vunpack.c.l.b16 %v85
  %v278 = vunpack.c.l.b16 %v86
  %v279 = vunpack.c.l.b16 %v87
  %v280 = vunpack.c.l.b16 %v88
  %v281 = vunpack.c.l.b16 %v89
  %v282 = vpack.c.b16 %v247, %v246
  %v283 = vpack.c.b16 %v249, %v248
  %v284 = vpack.c.b16 %v251, %v250
  %v285 = vpack.c.b16 %v253, %v252
  %v286 = vpack.c.b16 %v255, %v254
  %v287 = vpack.c.b16 %v257, %v256
  %v288 = vpack.c.b16 %v259, %v258
  %v289 = vpack.c.b16 %v261, %v260
  %v290 = vpack.c.b16 %v263, %v262
  %v291 = vpack.c.b16 %v265, %v264
  %v292 = vpack.c.b16 %v267, %v266
  %v293 = vpack.c.b16 %v269, %v268
  %v294 = vpack.c.b16 %v271, %v270
  %v295 = vpack.c.b16 %v273, %v272
  %v296 = vpack.c.b16 %v275, %v274
  %v297 = vpack.c.b16 %v277, %v276
  %v298 = vpack.c.b16 %v279, %v278
  %v299 = vpack.c.b16 %v281, %v280
  %vm318 = vcmask 261120
  %v320 = vsel %vm318, %v172, 0
  %v323 = vsel %vm318, %v175, 0
  %v326 = vsel %vm318, %v178, 0
  %v329 = vsel %vm318, %v181, 0
  %v332 = vsel %vm318, %v184, 0
  %v335 = vsel %vm318, %v187, 0
  %v338 = vsel %vm318, %v190, 0
  %v341 = vsel %vm318, %v193, 0
  %343 = vmatpush.bf16.msra.mxu0 %v289
  %344 = vmatpush.bf16.msra.mxu0 %v288
  %345 = vmatpush.bf16.msra.mxu0 %v287
  %346 = vmatpush.bf16.msra.mxu0 %v286
  %347 = vmatpush.bf16.msra.mxu0 %v285
  %348 = vmatpush.bf16.msra.mxu0 %v284
  %349 = vmatpush.bf16.msra.mxu0 %v283
  %350 = vmatpush.bf16.msra.mxu0 %v282
  %351 = vmatmul.bf16.gmra.mxu0 %v170
  %v352 = vpop.f32.mrf.mxu0
  %v353 = vadd.f32 0.0, %v352
  %v354 = vpop.f32.mrf.mxu0
  %v355 = vadd.f32 0.0, %v354
  %356 = vmatmul.bf16.gmra.mxu0 %v173
  %v357 = vpop.f32.mrf.mxu0
  %v358 = vadd.f32 0.0, %v357
  %v359 = vpop.f32.mrf.mxu0
  %v360 = vadd.f32 0.0, %v359
  %361 = vmatmul.bf16.gmra.mxu0 %v176
  %v362 = vpop.f32.mrf.mxu0
  %v363 = vadd.f32 0.0, %v362
  %v364 = vpop.f32.mrf.mxu0
  %v365 = vadd.f32 0.0, %v364
  %366 = vmatmul.bf16.gmra.mxu0 %v179
  %v367 = vpop.f32.mrf.mxu0
  %v368 = vadd.f32 0.0, %v367
  %v369 = vpop.f32.mrf.mxu0
  %v370 = vadd.f32 0.0, %v369
  %371 = vmatmul.bf16.gmra.mxu0 %v182
  %v372 = vpop.f32.mrf.mxu0
  %v373 = vadd.f32 0.0, %v372
  %v374 = vpop.f32.mrf.mxu0
  %v375 = vadd.f32 0.0, %v374
  %376 = vmatmul.bf16.gmra.mxu0 %v185
  %v377 = vpop.f32.mrf.mxu0
  %v378 = vadd.f32 0.0, %v377
  %v379 = vpop.f32.mrf.mxu0
  %v380 = vadd.f32 0.0, %v379
  %381 = vmatmul.bf16.gmra.mxu0 %v188
  %v382 = vpop.f32.mrf.mxu0
  %v383 = vadd.f32 0.0, %v382
  %v384 = vpop.f32.mrf.mxu0
  %v385 = vadd.f32 0.0, %v384
  %386 = vmatmul.bf16.gmra.mxu0 %v191
  %v387 = vpop.f32.mrf.mxu0
  %v388 = vadd.f32 0.0, %v387
  %v389 = vpop.f32.mrf.mxu0
  %v390 = vadd.f32 0.0, %v389
  %391 = vdwg.mxu0
  %392 = vmatpush.bf16.msra.mxu0 %v297
  %393 = vmatpush.bf16.msra.mxu0 %v296
  %394 = vmatpush.bf16.msra.mxu0 %v295
  %395 = vmatpush.bf16.msra.mxu0 %v294
  %396 = vmatpush.bf16.msra.mxu0 %v293
  %397 = vmatpush.bf16.msra.mxu0 %v292
  %398 = vmatpush.bf16.msra.mxu0 %v291
  %399 = vmatpush.bf16.msra.mxu0 %v290
  %400 = vmatmul.bf16.gmra.mxu0 %v171
  %v401 = vpop.f32.mrf.mxu0
  %v402 = vadd.f32 %v353, %v401
  %v403 = vpop.f32.mrf.mxu0
  %v404 = vadd.f32 %v355, %v403
  %405 = vmatmul.bf16.gmra.mxu0 %v174
  %v406 = vpop.f32.mrf.mxu0
  %v407 = vadd.f32 %v358, %v406
  %v408 = vpop.f32.mrf.mxu0
  %v409 = vadd.f32 %v360, %v408
  %410 = vmatmul.bf16.gmra.mxu0 %v177
  %v411 = vpop.f32.mrf.mxu0
  %v412 = vadd.f32 %v363, %v411
  %v413 = vpop.f32.mrf.mxu0
  %v414 = vadd.f32 %v365, %v413
  %415 = vmatmul.bf16.gmra.mxu0 %v180
  %v416 = vpop.f32.mrf.mxu0
  %v417 = vadd.f32 %v368, %v416
  %v418 = vpop.f32.mrf.mxu0
  %v419 = vadd.f32 %v370, %v418
  %420 = vmatmul.bf16.gmra.mxu0 %v183
  %v421 = vpop.f32.mrf.mxu0
  %v422 = vadd.f32 %v373, %v421
  %v423 = vpop.f32.mrf.mxu0
  %v424 = vadd.f32 %v375, %v423
  %425 = vmatmul.bf16.gmra.mxu0 %v186
  %v426 = vpop.f32.mrf.mxu0
  %v427 = vadd.f32 %v378, %v426
  %v428 = vpop.f32.mrf.mxu0
  %v429 = vadd.f32 %v380, %v428
  %430 = vmatmul.bf16.gmra.mxu0 %v189
  %v431 = vpop.f32.mrf.mxu0
  %v432 = vadd.f32 %v383, %v431
  %v433 = vpop.f32.mrf.mxu0
  %v434 = vadd.f32 %v385, %v433
  %435 = vmatmul.bf16.gmra.mxu0 %v192
  %v436 = vpop.f32.mrf.mxu0
  %v437 = vadd.f32 %v388, %v436
  %v438 = vpop.f32.mrf.mxu0
  %v439 = vadd.f32 %v390, %v438
  %440 = vdwg.mxu0
  %441 = vmatpush.bf16.msra.mxu0 0
  %442 = vmatpush.bf16.msra.mxu0 0
  %443 = vmatpush.bf16.msra.mxu0 0
  %444 = vmatpush.bf16.msra.mxu0 0
  %445 = vmatpush.bf16.msra.mxu0 0
  %446 = vmatpush.bf16.msra.mxu0 0
  %447 = vmatpush.bf16.msra.mxu0 %v299
  %448 = vmatpush.bf16.msra.mxu0 %v298
  %449 = vmatmul.bf16.gmra.mxu0 %v320
  %v450 = vpop.f32.mrf.mxu0
  %v451 = vadd.f32 %v402, %v450
  %v452 = vpop.f32.mrf.mxu0
  %v453 = vadd.f32 %v404, %v452
  %454 = vmatmul.bf16.gmra.mxu0 %v323
  %v455 = vpop.f32.mrf.mxu0
  %v456 = vadd.f32 %v407, %v455
  %v457 = vpop.f32.mrf.mxu0
  %v458 = vadd.f32 %v409, %v457
  %459 = vmatmul.bf16.gmra.mxu0 %v326
  %v460 = vpop.f32.mrf.mxu0
  %v461 = vadd.f32 %v412, %v460
  %v462 = vpop.f32.mrf.mxu0
  %v463 = vadd.f32 %v414, %v462
  %464 = vmatmul.bf16.gmra.mxu0 %v329
  %v465 = vpop.f32.mrf.mxu0
  %v466 = vadd.f32 %v417, %v465
  %v467 = vpop.f32.mrf.mxu0
  %v468 = vadd.f32 %v419, %v467
  %469 = vmatmul.bf16.gmra.mxu0 %v332
  %v470 = vpop.f32.mrf.mxu0
  %v471 = vadd.f32 %v422, %v470
  %v472 = vpop.f32.mrf.mxu0
  %v473 = vadd.f32 %v424, %v472
  %474 = vmatmul.bf16.gmra.mxu0 %v335
  %v475 = vpop.f32.mrf.mxu0
  %v476 = vadd.f32 %v427, %v475
  %v477 = vpop.f32.mrf.mxu0
  %v478 = vadd.f32 %v429, %v477
  %479 = vmatmul.bf16.gmra.mxu0 %v338
  %v480 = vpop.f32.mrf.mxu0
  %v481 = vadd.f32 %v432, %v480
  %v482 = vpop.f32.mrf.mxu0
  %v483 = vadd.f32 %v434, %v482
  %484 = vmatmul.bf16.gmra.mxu0 %v341
  %v485 = vpop.f32.mrf.mxu0
  %v486 = vadd.f32 %v437, %v485
  %v487 = vpop.f32.mrf.mxu0
  %v488 = vadd.f32 %v439, %v487
  %489 = vdwg.mxu0
  %vm490 = vcmask 130048
  %491 = vst.msk [vmem:[%s2] sm:$0xff] %vm490, %v451
  %492 = vst.msk [vmem:[%s2 + $0x8] sm:$0xff] %vm490, %v453
  %493 = vst.msk [vmem:[%s2 + $0x10] sm:$0xff] %vm490, %v456
  %494 = vst.msk [vmem:[%s2 + $0x18] sm:$0xff] %vm490, %v458
  %495 = vst.msk [vmem:[%s2 + $0x20] sm:$0xff] %vm490, %v461
  %496 = vst.msk [vmem:[%s2 + $0x28] sm:$0xff] %vm490, %v463
  %497 = vst.msk [vmem:[%s2 + $0x30] sm:$0xff] %vm490, %v466
  %498 = vst.msk [vmem:[%s2 + $0x38] sm:$0xff] %vm490, %v468
  %499 = vst.msk [vmem:[%s2 + $0x40] sm:$0xff] %vm490, %v471
  %500 = vst.msk [vmem:[%s2 + $0x48] sm:$0xff] %vm490, %v473
  %501 = vst.msk [vmem:[%s2 + $0x50] sm:$0xff] %vm490, %v476
  %502 = vst.msk [vmem:[%s2 + $0x58] sm:$0xff] %vm490, %v478
  %503 = vst.msk [vmem:[%s2 + $0x60] sm:$0xff] %vm490, %v481
  %504 = vst.msk [vmem:[%s2 + $0x68] sm:$0xff] %vm490, %v483
  %505 = vst.msk [vmem:[%s2 + $0x70] sm:$0xff] %vm490, %v486
  %506 = vst.msk [vmem:[%s2 + $0x78] sm:$0xff] %vm490, %v488
  %v507 = vld [vmem:[%s3] sm:$0x1]
  %v508 = vsel %vm490, %v451, 0.0
  %v509 = vsel %vm490, %v453, 0.0
  %v510 = vadd.f32 %v508, %v509
  %v511 = vsel %vm490, %v456, 0.0
  %v512 = vadd.f32 %v510, %v511
  %v513 = vsel %vm490, %v458, 0.0
  %v514 = vadd.f32 %v512, %v513
  %v515 = vsel %vm490, %v461, 0.0
  %v516 = vadd.f32 %v514, %v515
  %v517 = vsel %vm490, %v463, 0.0
  %v518 = vadd.f32 %v516, %v517
  %v519 = vsel %vm490, %v466, 0.0
  %v520 = vadd.f32 %v518, %v519
  %v521 = vsel %vm490, %v468, 0.0
  %v522 = vadd.f32 %v520, %v521
  %v523 = vsel %vm490, %v471, 0.0
  %v524 = vadd.f32 %v522, %v523
  %v525 = vsel %vm490, %v473, 0.0
  %v526 = vadd.f32 %v524, %v525
  %v527 = vsel %vm490, %v476, 0.0
  %v528 = vadd.f32 %v526, %v527
  %v529 = vsel %vm490, %v478, 0.0
  %v530 = vadd.f32 %v528, %v529
  %v531 = vsel %vm490, %v481, 0.0
  %v532 = vadd.f32 %v530, %v531
  %v533 = vsel %vm490, %v483, 0.0
  %v534 = vadd.f32 %v532, %v533
  %v535 = vsel %vm490, %v486, 0.0
  %v536 = vadd.f32 %v534, %v535
  %v537 = vsel %vm490, %v488, 0.0
  %v538 = vadd.f32 %v536, %v537
  %v539 = vrot.slane %v538, 4
  %v540 = vadd.f32 %v538, %v539
  %v541 = vrot.slane %v540, 2
  %v542 = vadd.f32 %v540, %v541
  %v543 = vrot.slane %v542, 1
  %v544 = vadd.f32 %v542, %v543
  %v545 = vadd.f32 %v507, %v544
  %vm546 = vcmask 122880
  %547 = vst.msk [vmem:[%s3] sm:$0x1] %vm546, %v545
  %v548 = vld [vmem:[%s4] sm:$0x1]
  %v549 = vmul.f32 %v451, %v451
  %v550 = vmul.f32 %v453, %v453
  %v551 = vmul.f32 %v456, %v456
  %v552 = vmul.f32 %v458, %v458
  %v553 = vmul.f32 %v461, %v461
  %v554 = vmul.f32 %v463, %v463
  %v555 = vmul.f32 %v466, %v466
  %v556 = vmul.f32 %v468, %v468
  %v557 = vmul.f32 %v471, %v471
  %v558 = vmul.f32 %v473, %v473
  %v559 = vmul.f32 %v476, %v476
  %v560 = vmul.f32 %v478, %v478
  %v561 = vmul.f32 %v481, %v481
  %v562 = vmul.f32 %v483, %v483
  %v563 = vmul.f32 %v486, %v486
  %v564 = vmul.f32 %v488, %v488
  %v565 = vsel %vm490, %v549, 0.0
  %v566 = vsel %vm490, %v550, 0.0
  %v567 = vadd.f32 %v565, %v566
  %v568 = vsel %vm490, %v551, 0.0
  %v569 = vadd.f32 %v567, %v568
  %v570 = vsel %vm490, %v552, 0.0
  %v571 = vadd.f32 %v569, %v570
  %v572 = vsel %vm490, %v553, 0.0
  %v573 = vadd.f32 %v571, %v572
  %v574 = vsel %vm490, %v554, 0.0
  %v575 = vadd.f32 %v573, %v574
  %v576 = vsel %vm490, %v555, 0.0
  %v577 = vadd.f32 %v575, %v576
  %v578 = vsel %vm490, %v556, 0.0
  %v579 = vadd.f32 %v577, %v578
  %v580 = vsel %vm490, %v557, 0.0
  %v581 = vadd.f32 %v579, %v580
  %v582 = vsel %vm490, %v558, 0.0
  %v583 = vadd.f32 %v581, %v582
  %v584 = vsel %vm490, %v559, 0.0
  %v585 = vadd.f32 %v583, %v584
  %v586 = vsel %vm490, %v560, 0.0
  %v587 = vadd.f32 %v585, %v586
  %v588 = vsel %vm490, %v561, 0.0
  %v589 = vadd.f32 %v587, %v588
  %v590 = vsel %vm490, %v562, 0.0
  %v591 = vadd.f32 %v589, %v590
  %v592 = vsel %vm490, %v563, 0.0
  %v593 = vadd.f32 %v591, %v592
  %v594 = vsel %vm490, %v564, 0.0
  %v595 = vadd.f32 %v593, %v594
  %v596 = vrot.slane %v595, 4
  %v597 = vadd.f32 %v595, %v596
  %v598 = vrot.slane %v597, 2
  %v599 = vadd.f32 %v597, %v598
  %v600 = vrot.slane %v599, 1
  %v601 = vadd.f32 %v599, %v600
  %v602 = vadd.f32 %v548, %v601
  %603 = vst.msk [vmem:[%s4] sm:$0x1] %vm546, %v602
  // Predicated region
  $region14: #{generator_forward.30} parent=0 // pred_check
    _
  $region15: #{generator_forward.30} parent=0 // pred_check_branch
    %605 = sbr.rel (0) target = $region17
  $region16: #{generator_forward.30} parent=0 // pred_region
    _
  $region17: #{generator_forward.30} parent=0 // pred_fallthru
    _
  // Predicated region
  $region18: #{generator_forward.30} parent=0 // pred_check
    _
  $region19: #{generator_forward.30} parent=0 // pred_check_branch
    %607 = sbr.rel (0) target = $region21
  $region20: #{generator_forward.30} parent=0 // pred_region
    _
  $region21: #{generator_forward.30} parent=0 // pred_fallthru
    _
  // Predicated region
  $region22: #{generator_forward.30} parent=0 // pred_check
    _
  $region23: #{generator_forward.30} parent=0 // pred_check_branch
    %609 = sbr.rel (0) target = $region25
  $region24: #{generator_forward.30} parent=0 // pred_region
    _
  $region25: #{generator_forward.30} parent=0 // pred_fallthru
    _
  // Predicated region
  $region26: #{generator_forward.30} parent=0 // pred_check
    _
  $region27: #{generator_forward.30} parent=0 // pred_check_branch
    %611 = sbr.rel (0) target = $region29
  $region28: #{generator_forward.30} parent=0 // pred_region
    _
  $region29: #{generator_forward.30} parent=0 // pred_fallthru
    _
  // Predicated region
  $region30: #{generator_forward.30} parent=0 // pred_check
    _
  $region31: #{generator_forward.30} parent=0 // pred_check_branch
    %613 = sbr.rel (0) target = $region33
  $region32: #{generator_forward.30} parent=0 // pred_region
    _
  $region33: #{generator_forward.30} parent=0 // pred_fallthru
    _
  // Predicated region
  $region34: #{generator_forward.30} parent=0 // pred_check
    _
  $region35: #{generator_forward.30} parent=0 // pred_check_branch
    %615 = sbr.rel (0) target = $region37
  $region36: #{generator_forward.30} parent=0 // pred_region
    _
  $region37: #{generator_forward.30} parent=0 // pred_fallthru
    _

// kernel: squeeze.29
$region0: #{squeeze.29}
  %s0 = inlined_call_operand.vmem [shape: f32[64], index: 0, kind: input, shape index: {}]
  %s1 = inlined_call_operand.vmem [shape: f32[4,16], index: 1, kind: output, shape index: {}]
  $region1: #{squeeze.29} parent=0
    #allocation0 [shape = 'u8[4096]{0}', space=vmem, size = 0x1000, scoped, tag = 'scoped mem for output reshape']
    #allocation1 [shape = 'u8[4096]{0}', space=vmem, size = 0x1000, scoped, tag = 'scoped mem for input reshape']
    %s3 = ssub.s32 2, 1
    %v4 = vld [vmem:[%s0] sm:%s3]
    %5 = vst [vmem:[#allocation1] sm:%s3] %v4
    %v6 = vld [vmem:[#allocation1] sm:$0x1]
    %vm7 = vcmask 130048
    %8 = vst.msk [vmem:[#allocation0] sm:$0x1] %vm7, %v6
    %v9 = vld [vmem:[#allocation1] sm:$0x1]
    %10 = vrot.lane.b32.xlu0 %v9, 112
    %v11 = vpop.permute.xlu0 %10
    %vm12 = vcmask 130048
    %s13 = scalar_lea.vmem [#allocation0], 1
    %14 = vst.msk [vmem:[%s13] sm:$0x1] %vm12, %v11
    %v15 = vld [vmem:[#allocation1] sm:$0x1]
    %16 = vrot.lane.b32.xlu0 %v15, 96
    %v17 = vpop.permute.xlu0 %16
    %vm18 = vcmask 130048
    %s19 = scalar_lea.vmem [#allocation0], 2
    %20 = vst.msk [vmem:[%s19] sm:$0x1] %vm18, %v17
    %v21 = vld [vmem:[#allocation1] sm:$0x1]
    %22 = vrot.lane.b32.xlu0 %v21, 80
    %v23 = vpop.permute.xlu0 %22
    %vm24 = vcmask 130048
    %s25 = scalar_lea.vmem [#allocation0], 3
    %26 = vst.msk [vmem:[%s25] sm:$0x1] %vm24, %v23
    %s28 = ssub.s32 16, 1
    %v29 = vld [vmem:[#allocation0] sm:%s28]
    %s31 = ssub.s32 16, 1
    %32 = vst [vmem:[%s1] sm:%s31] %v29

// kernel: tile.43
$region0: #{tile.43}
  #allocation0 [shape = 's32[1]{0}', space=sflag, size = 0x4, scoped, tag = 'scoped memory for tile.43']
  %s0 = inlined_call_operand.vmem [shape: f32[16], index: 0, kind: input, shape index: {}]
  %s1 = inlined_call_operand.vmem [shape: f32[4,16], index: 1, kind: output, shape index: {}]
  // Predicated region
  $region2: #{tile.43} parent=0 // pred_check
    _
  $region3: #{tile.43} parent=0 // pred_check_branch
    %3 = sbr.rel (0) target = $region5
  $region4: #{tile.43} parent=0 // pred_region
    _
  $region5: #{tile.43} parent=0 // pred_fallthru
    _
  %v4 = vld [vmem:[%s0] ss:$0 sm:$0xff]
  %5 = vst [vmem:[%s1] sm:$0xf] %v4

// kernel: tile.48
$region0: #{tile.48}
  %s0 = inlined_call_operand.vmem [shape: f32[4,16], index: 0, kind: input, shape index: {}]
  %s1 = inlined_call_operand.vmem [shape: f32[1,64], index: 1, kind: output, shape index: {}]
  $region1: #{tile.48} parent=0
    #allocation0 [shape = 'u8[4096]{0}', space=vmem, size = 0x1000, scoped, tag = 'scoped mem for output reshape']
    #allocation1 [shape = 'u8[4096]{0}', space=vmem, size = 0x1000, scoped, tag = 'scoped mem for input reshape']
    %s3 = ssub.s32 16, 1
    %v4 = vld [vmem:[%s0] sm:%s3]
    %5 = vst [vmem:[#allocation1] sm:%s3] %v4
    %v6 = vld [vmem:[#allocation1] sm:$0x1]
    %vm7 = vcmask 130048
    %8 = vst.msk [vmem:[#allocation0] sm:$0x1] %vm7, %v6
    %s9 = scalar_lea.vmem [#allocation1], 3
    %v10 = vld [vmem:[%s9] sm:$0x1]
    %11 = vrot.lane.b32.xlu0 %v10, 48
    %v12 = vpop.permute.xlu0 %11
    %vm13 = vcmask 523648
    %14 = vst.msk [vmem:[#allocation0] sm:$0x1] %vm13, %v12
    %s15 = scalar_lea.vmem [#allocation1], 2
    %v16 = vld [vmem:[%s15] sm:$0x1]
    %17 = vrot.lane.b32.xlu0 %v16, 32
    %v18 = vpop.permute.xlu0 %17
    %vm19 = vcmask 392448
    %20 = vst.msk [vmem:[#allocation0] sm:$0x1] %vm19, %v18
    %s21 = scalar_lea.vmem [#allocation1], 1
    %v22 = vld [vmem:[%s21] sm:$0x1]
    %23 = vrot.lane.b32.xlu0 %v22, 16
    %v24 = vpop.permute.xlu0 %23
    %vm25 = vcmask 261248
    %26 = vst.msk [vmem:[#allocation0] sm:$0x1] %vm25, %v24
    %s28 = ssub.s32 2, 1
    %v29 = vld [vmem:[#allocation0] sm:%s28]
    %s31 = ssub.s32 2, 1
    %32 = vst [vmem:[%s1] sm:%s31] %v29

// kernel: generator_forward.32
$region0: #{generator_forward.32}
  #allocation0 [shape = 'u32[]', space=smem, size = 0x4, offset = 0x4, fixed_abs, tag = 'smem constant byte address 0x4 - core index']
  #allocation1 [shape = 'u32[72,128]{1,0:T(1,128)}', space=vmem, size = 0x9000, scoped, tag = 'internal scratch']
  %s0 = inlined_call_operand.vmem [shape: bf16[128,432], index: 0, kind: input, shape index: {}]
  %s1 = inlined_call_operand.vmem [shape: bf16[432,64], index: 1, kind: input, shape index: {}]
  %s2 = inlined_call_operand.vmem [shape: f32[128,64], index: 2, kind: output, shape index: {0}]
  %s3 = inlined_call_operand.vmem [shape: f32[1,64], index: 3, kind: output, shape index: {1}]
  %s4 = inlined_call_operand.vmem [shape: f32[1,64], index: 4, kind: output, shape index: {2}]
  %5 = xla_tuple %s2, %s3, %s4
  %s6 = sld [smem:[#allocation0]]
  $region38: #{generator_forward.32} parent=0
    _
  %s8 = ssub.s32 1, %s6
  %s9 = scalar_select 0, %s8, %s6
  // Predicated region
  $region2: #{generator_forward.32} parent=0 // pred_check
    _
  $region3: #{generator_forward.32} parent=0 // pred_check_branch
    %11 = sbr.rel (0) target = $region5
  $region4: #{generator_forward.32} parent=0 // pred_region
    _
  $region5: #{generator_forward.32} parent=0 // pred_fallthru
    _
  // Predicated region
  $region6: #{generator_forward.32} parent=0 // pred_check
    _
  $region7: #{generator_forward.32} parent=0 // pred_check_branch
    %13 = sbr.rel (0) target = $region9
  $region8: #{generator_forward.32} parent=0 // pred_region
    _
  $region9: #{generator_forward.32} parent=0 // pred_fallthru
    _
  %p15 = scmp.eq.s32.totalorder 0, 0
  // Predicated region
  $region10: #{generator_forward.32} parent=0 // pred_check
    %p16 = pneg %p15
  $region11: #{generator_forward.32} parent=0 // pred_check_branch
    %18 = sbr.rel (%p16) target = $region13
  $region12: #{generator_forward.32} parent=0 // pred_region
    %vm19 = vcmask 516096
    %20 = vst.msk [vmem:[%s3] sm:$0x1] %vm19, 0.0
    %21 = vst.msk [vmem:[%s4] sm:$0x1] %vm19, 0.0
  $region13: #{generator_forward.32} parent=0 // pred_fallthru
    _
  %v22 = vld [vmem:[%s0] sm:$0xff]
  %v23 = vld [vmem:[%s0 + $0x8] sm:$0xff]
  %v24 = vld [vmem:[%s0 + $0x10] sm:$0xff]
  %v25 = vld [vmem:[%s0 + $0x18] sm:$0xff]
  %v26 = vld [vmem:[%s0 + $0x20] sm:$0xff]
  %v27 = vld [vmem:[%s0 + $0x28] sm:$0xff]
  %v28 = vld [vmem:[%s0 + $0x30] sm:$0xff]
  %v29 = vld [vmem:[%s0 + $0x38] sm:$0xff]
  %v30 = vld [vmem:[%s0 + $0x40] sm:$0xff]
  %v31 = vld [vmem:[%s0 + $0x48] sm:$0xff]
  %v32 = vld [vmem:[%s0 + $0x50] sm:$0xff]
  %v33 = vld [vmem:[%s0 + $0x58] sm:$0xff]
  %v34 = vld [vmem:[%s0 + $0x60] sm:$0xff]
  %v35 = vld [vmem:[%s0 + $0x68] sm:$0xff]
  %v36 = vld [vmem:[%s0 + $0x70] sm:$0xff]
  %v37 = vld [vmem:[%s0 + $0x78] sm:$0xff]
  %v38 = vld [vmem:[%s0 + $0x80] sm:$0xff]
  %v39 = vld [vmem:[%s0 + $0x88] sm:$0xff]
  %v40 = vld [vmem:[%s0 + $0x90] sm:$0xff]
  %v41 = vld [vmem:[%s0 + $0x98] sm:$0xff]
  %v42 = vld [vmem:[%s0 + $0xa0] sm:$0xff]
  %v43 = vld [vmem:[%s0 + $0xa8] sm:$0xff]
  %v44 = vld [vmem:[%s0 + $0xb0] sm:$0xff]
  %v45 = vld [vmem:[%s0 + $0xb8] sm:$0xff]
  %v46 = vld [vmem:[%s0 + $0xc0] sm:$0xff]
  %v47 = vld [vmem:[%s0 + $0xc8] sm:$0xff]
  %v48 = vld [vmem:[%s0 + $0xd0] sm:$0xff]
  %v49 = vld [vmem:[%s0 + $0xd8] sm:$0xff]
  %v50 = vld [vmem:[%s0 + $0xe0] sm:$0xff]
  %v51 = vld [vmem:[%s0 + $0xe8] sm:$0xff]
  %v52 = vld [vmem:[%s0 + $0xf0] sm:$0xff]
  %v53 = vld [vmem:[%s0 + $0xf8] sm:$0xff]
  %v54 = vld [vmem:[%s1] sm:$0xf]
  %v55 = vld [vmem:[%s1 + $0x4] sm:$0xf]
  %v56 = vld [vmem:[%s1 + $0x8] sm:$0xf]
  %v57 = vld [vmem:[%s1 + $0xc] sm:$0xf]
  %v58 = vld [vmem:[%s1 + $0x10] sm:$0xf]
  %v59 = vld [vmem:[%s1 + $0x14] sm:$0xf]
  %v60 = vld [vmem:[%s1 + $0x18] sm:$0xf]
  %v61 = vld [vmem:[%s1 + $0x1c] sm:$0xf]
  %v62 = vld [vmem:[%s1 + $0x20] sm:$0xf]
  %v63 = vld [vmem:[%s1 + $0x24] sm:$0xf]
  %v64 = vld [vmem:[%s1 + $0x28] sm:$0xf]
  %v65 = vld [vmem:[%s1 + $0x2c] sm:$0xf]
  %v66 = vld [vmem:[%s1 + $0x30] sm:$0xf]
  %v67 = vld [vmem:[%s1 + $0x34] sm:$0xf]
  %v68 = vld [vmem:[%s1 + $0x38] sm:$0xf]
  %v69 = vld [vmem:[%s1 + $0x3c] sm:$0xf]
  %v70 = vld [vmem:[%s1 + $0x40] sm:$0xf]
  %v71 = vld [vmem:[%s1 + $0x44] sm:$0xf]
  %v72 = vld [vmem:[%s1 + $0x48] sm:$0xf]
  %v73 = vld [vmem:[%s1 + $0x4c] sm:$0xf]
  %v74 = vld [vmem:[%s1 + $0x50] sm:$0xf]
  %v75 = vld [vmem:[%s1 + $0x54] sm:$0xf]
  %v76 = vld [vmem:[%s1 + $0x58] sm:$0xf]
  %v77 = vld [vmem:[%s1 + $0x5c] sm:$0xf]
  %v78 = vld [vmem:[%s1 + $0x60] sm:$0xf]
  %v79 = vld [vmem:[%s1 + $0x64] sm:$0xf]
  %v80 = vld [vmem:[%s1 + $0x68] sm:$0xf]
  %v81 = vld [vmem:[%s1 + $0x6c] sm:$0xf]
  %v82 = vld [vmem:[%s1 + $0x70] sm:$0xf]
  %v83 = vld [vmem:[%s1 + $0x74] sm:$0xf]
  %v84 = vld [vmem:[%s1 + $0x78] sm:$0xf]
  %v85 = vld [vmem:[%s1 + $0x7c] sm:$0xf]
  %v86 = vld [vmem:[%s1 + $0x80] sm:$0xf]
  %v87 = vld [vmem:[%s1 + $0x84] sm:$0xf]
  %v88 = vld [vmem:[%s1 + $0x88] sm:$0xf]
  %v89 = vld [vmem:[%s1 + $0x8c] sm:$0xf]
  %v90 = vld [vmem:[%s1 + $0x90] sm:$0xf]
  %v91 = vld [vmem:[%s1 + $0x94] sm:$0xf]
  %v92 = vld [vmem:[%s1 + $0x98] sm:$0xf]
  %v93 = vld [vmem:[%s1 + $0x9c] sm:$0xf]
  %v94 = vld [vmem:[%s1 + $0xa0] sm:$0xf]
  %v95 = vld [vmem:[%s1 + $0xa4] sm:$0xf]
  %v96 = vld [vmem:[%s1 + $0xa8] sm:$0xf]
  %v97 = vld [vmem:[%s1 + $0xac] sm:$0xf]
  %v98 = vld [vmem:[%s1 + $0xb0] sm:$0xf]
  %v99 = vld [vmem:[%s1 + $0xb4] sm:$0xf]
  %v100 = vld [vmem:[%s1 + $0xb8] sm:$0xf]
  %v101 = vld [vmem:[%s1 + $0xbc] sm:$0xf]
  %v102 = vld [vmem:[%s1 + $0xc0] sm:$0xf]
  %v103 = vld [vmem:[%s1 + $0xc4] sm:$0xf]
  %v104 = vld [vmem:[%s1 + $0xc8] sm:$0xf]
  %v105 = vld [vmem:[%s1 + $0xcc] sm:$0xf]
  %v106 = vld [vmem:[%s1 + $0xd0] sm:$0xf]
  %v107 = vld [vmem:[%s1 + $0xd4] sm:$0xf]
  %v140 = vunpack.c.l.b16 %v22
  %v141 = vunpack.c.h.b16 %v22
  %v142 = vunpack.c.l.b16 %v23
  %v143 = vunpack.c.h.b16 %v23
  %v144 = vunpack.c.l.b16 %v24
  %v145 = vunpack.c.h.b16 %v24
  %v146 = vunpack.c.l.b16 %v25
  %v147 = vunpack.c.h.b16 %v25
  %v148 = vunpack.c.l.b16 %v26
  %v149 = vunpack.c.h.b16 %v26
  %v150 = vunpack.c.l.b16 %v27
  %v151 = vunpack.c.h.b16 %v27
  %v152 = vunpack.c.l.b16 %v28
  %v153 = vunpack.c.h.b16 %v28
  %v154 = vunpack.c.l.b16 %v29
  %v155 = vunpack.c.h.b16 %v29
  %v156 = vunpack.c.l.b16 %v30
  %v157 = vunpack.c.h.b16 %v30
  %v158 = vunpack.c.l.b16 %v31
  %v159 = vunpack.c.h.b16 %v31
  %v160 = vunpack.c.l.b16 %v32
  %v161 = vunpack.c.h.b16 %v32
  %v162 = vunpack.c.l.b16 %v33
  %v163 = vunpack.c.h.b16 %v33
  %v164 = vunpack.c.l.b16 %v34
  %v165 = vunpack.c.h.b16 %v34
  %v166 = vunpack.c.l.b16 %v35
  %v167 = vunpack.c.h.b16 %v35
  %v168 = vunpack.c.l.b16 %v36
  %v169 = vunpack.c.h.b16 %v36
  %v170 = vunpack.c.l.b16 %v37
  %v171 = vunpack.c.h.b16 %v37
  %v172 = vunpack.c.l.b16 %v38
  %v173 = vunpack.c.h.b16 %v38
  %v174 = vunpack.c.l.b16 %v39
  %v175 = vunpack.c.h.b16 %v39
  %v176 = vunpack.c.l.b16 %v40
  %v177 = vunpack.c.h.b16 %v40
  %v178 = vunpack.c.l.b16 %v41
  %v179 = vunpack.c.h.b16 %v41
  %v180 = vunpack.c.l.b16 %v42
  %v181 = vunpack.c.h.b16 %v42
  %v182 = vunpack.c.l.b16 %v43
  %v183 = vunpack.c.h.b16 %v43
  %v184 = vunpack.c.l.b16 %v44
  %v185 = vunpack.c.h.b16 %v44
  %v186 = vunpack.c.l.b16 %v45
  %v187 = vunpack.c.h.b16 %v45
  %v188 = vunpack.c.l.b16 %v46
  %v189 = vunpack.c.h.b16 %v46
  %v190 = vunpack.c.l.b16 %v47
  %v191 = vunpack.c.h.b16 %v47
  %v192 = vunpack.c.l.b16 %v48
  %v193 = vunpack.c.h.b16 %v48
  %v194 = vunpack.c.l.b16 %v49
  %v195 = vunpack.c.h.b16 %v49
  %v196 = vunpack.c.l.b16 %v50
  %v197 = vunpack.c.h.b16 %v50
  %v198 = vunpack.c.l.b16 %v51
  %v199 = vunpack.c.h.b16 %v51
  %v200 = vunpack.c.l.b16 %v52
  %v201 = vunpack.c.h.b16 %v52
  %v202 = vunpack.c.l.b16 %v53
  %v203 = vunpack.c.h.b16 %v53
  %v204 = vpack.c.b16 %v144, %v140
  %v205 = vpack.c.b16 %v145, %v141
  %v206 = vpack.c.b16 %v146, %v142
  %v207 = vpack.c.b16 %v147, %v143
  %v208 = vpack.c.b16 %v152, %v148
  %v209 = vpack.c.b16 %v153, %v149
  %v210 = vpack.c.b16 %v154, %v150
  %v211 = vpack.c.b16 %v155, %v151
  %v212 = vpack.c.b16 %v160, %v156
  %v213 = vpack.c.b16 %v161, %v157
  %v214 = vpack.c.b16 %v162, %v158
  %v215 = vpack.c.b16 %v163, %v159
  %v216 = vpack.c.b16 %v168, %v164
  %v217 = vpack.c.b16 %v169, %v165
  %v218 = vpack.c.b16 %v170, %v166
  %v219 = vpack.c.b16 %v171, %v167
  %v220 = vpack.c.b16 %v176, %v172
  %v221 = vpack.c.b16 %v177, %v173
  %v222 = vpack.c.b16 %v178, %v174
  %v223 = vpack.c.b16 %v179, %v175
  %v224 = vpack.c.b16 %v184, %v180
  %v225 = vpack.c.b16 %v185, %v181
  %v226 = vpack.c.b16 %v186, %v182
  %v227 = vpack.c.b16 %v187, %v183
  %v228 = vpack.c.b16 %v192, %v188
  %v229 = vpack.c.b16 %v193, %v189
  %v230 = vpack.c.b16 %v194, %v190
  %v231 = vpack.c.b16 %v195, %v191
  %v232 = vpack.c.b16 %v200, %v196
  %v233 = vpack.c.b16 %v201, %v197
  %v234 = vpack.c.b16 %v202, %v198
  %v235 = vpack.c.b16 %v203, %v199
  %v314 = vunpack.c.l.b16 %v54
  %v315 = vunpack.c.l.b16 %v55
  %v316 = vunpack.c.l.b16 %v56
  %v317 = vunpack.c.l.b16 %v57
  %v318 = vunpack.c.l.b16 %v58
  %v319 = vunpack.c.l.b16 %v59
  %v320 = vunpack.c.l.b16 %v60
  %v321 = vunpack.c.l.b16 %v61
  %v322 = vunpack.c.l.b16 %v62
  %v323 = vunpack.c.l.b16 %v63
  %v324 = vunpack.c.l.b16 %v64
  %v325 = vunpack.c.l.b16 %v65
  %v326 = vunpack.c.l.b16 %v66
  %v327 = vunpack.c.l.b16 %v67
  %v328 = vunpack.c.l.b16 %v68
  %v329 = vunpack.c.l.b16 %v69
  %v330 = vunpack.c.l.b16 %v70
  %v331 = vunpack.c.l.b16 %v71
  %v332 = vunpack.c.l.b16 %v72
  %v333 = vunpack.c.l.b16 %v73
  %v334 = vunpack.c.l.b16 %v74
  %v335 = vunpack.c.l.b16 %v75
  %v336 = vunpack.c.l.b16 %v76
  %v337 = vunpack.c.l.b16 %v77
  %v338 = vunpack.c.l.b16 %v78
  %v339 = vunpack.c.l.b16 %v79
  %v340 = vunpack.c.l.b16 %v80
  %v341 = vunpack.c.l.b16 %v81
  %v342 = vunpack.c.l.b16 %v82
  %v343 = vunpack.c.l.b16 %v83
  %v344 = vunpack.c.l.b16 %v84
  %v345 = vunpack.c.l.b16 %v85
  %v346 = vunpack.c.l.b16 %v86
  %v347 = vunpack.c.l.b16 %v87
  %v348 = vunpack.c.l.b16 %v88
  %v349 = vunpack.c.l.b16 %v89
  %v350 = vunpack.c.l.b16 %v90
  %v351 = vunpack.c.l.b16 %v91
  %v352 = vunpack.c.l.b16 %v92
  %v353 = vunpack.c.l.b16 %v93
  %v354 = vunpack.c.l.b16 %v94
  %v355 = vunpack.c.l.b16 %v95
  %v356 = vunpack.c.l.b16 %v96
  %v357 = vunpack.c.l.b16 %v97
  %v358 = vunpack.c.l.b16 %v98
  %v359 = vunpack.c.l.b16 %v99
  %v360 = vunpack.c.l.b16 %v100
  %v361 = vunpack.c.l.b16 %v101
  %v362 = vunpack.c.l.b16 %v102
  %v363 = vunpack.c.l.b16 %v103
  %v364 = vunpack.c.l.b16 %v104
  %v365 = vunpack.c.l.b16 %v105
  %v366 = vunpack.c.l.b16 %v106
  %v367 = vunpack.c.l.b16 %v107
  %v368 = vpack.c.b16 %v315, %v314
  %v369 = vpack.c.b16 %v317, %v316
  %v370 = vpack.c.b16 %v319, %v318
  %v371 = vpack.c.b16 %v321, %v320
  %v372 = vpack.c.b16 %v323, %v322
  %v373 = vpack.c.b16 %v325, %v324
  %v374 = vpack.c.b16 %v327, %v326
  %v375 = vpack.c.b16 %v329, %v328
  %v376 = vpack.c.b16 %v331, %v330
  %v377 = vpack.c.b16 %v333, %v332
  %v378 = vpack.c.b16 %v335, %v334
  %v379 = vpack.c.b16 %v337, %v336
  %v380 = vpack.c.b16 %v339, %v338
  %v381 = vpack.c.b16 %v341, %v340
  %v382 = vpack.c.b16 %v343, %v342
  %v383 = vpack.c.b16 %v345, %v344
  %v384 = vpack.c.b16 %v347, %v346
  %v385 = vpack.c.b16 %v349, %v348
  %v386 = vpack.c.b16 %v351, %v350
  %v387 = vpack.c.b16 %v353, %v352
  %v388 = vpack.c.b16 %v355, %v354
  %v389 = vpack.c.b16 %v357, %v356
  %v390 = vpack.c.b16 %v359, %v358
  %v391 = vpack.c.b16 %v361, %v360
  %v392 = vpack.c.b16 %v363, %v362
  %v393 = vpack.c.b16 %v365, %v364
  %v394 = vpack.c.b16 %v367, %v366
  %vm422 = vcmask 392192
  %v424 = vsel %vm422, %v207, 0
  %v427 = vsel %vm422, %v211, 0
  %v430 = vsel %vm422, %v215, 0
  %v433 = vsel %vm422, %v219, 0
  %v436 = vsel %vm422, %v223, 0
  %v439 = vsel %vm422, %v227, 0
  %v442 = vsel %vm422, %v231, 0
  %v445 = vsel %vm422, %v235, 0
  %447 = vmatpush.bf16.msra.mxu0 %v375
  %448 = vmatpush.bf16.msra.mxu0 %v374
  %449 = vmatpush.bf16.msra.mxu0 %v373
  %450 = vmatpush.bf16.msra.mxu0 %v372
  %451 = vmatpush.bf16.msra.mxu0 %v371
  %452 = vmatpush.bf16.msra.mxu0 %v370
  %453 = vmatpush.bf16.msra.mxu0 %v369
  %454 = vmatpush.bf16.msra.mxu0 %v368
  %455 = vmatmul.bf16.gmra.mxu0 %v204
  %v456 = vpop.f32.mrf.mxu0
  %v457 = vadd.f32 0.0, %v456
  %v458 = vpop.f32.mrf.mxu0
  %v459 = vadd.f32 0.0, %v458
  %460 = vmatmul.bf16.gmra.mxu0 %v208
  %v461 = vpop.f32.mrf.mxu0
  %v462 = vadd.f32 0.0, %v461
  %v463 = vpop.f32.mrf.mxu0
  %v464 = vadd.f32 0.0, %v463
  %465 = vmatmul.bf16.gmra.mxu0 %v212
  %v466 = vpop.f32.mrf.mxu0
  %v467 = vadd.f32 0.0, %v466
  %v468 = vpop.f32.mrf.mxu0
  %v469 = vadd.f32 0.0, %v468
  %470 = vmatmul.bf16.gmra.mxu0 %v216
  %v471 = vpop.f32.mrf.mxu0
  %v472 = vadd.f32 0.0, %v471
  %v473 = vpop.f32.mrf.mxu0
  %v474 = vadd.f32 0.0, %v473
  %475 = vmatmul.bf16.gmra.mxu0 %v220
  %v476 = vpop.f32.mrf.mxu0
  %v477 = vadd.f32 0.0, %v476
  %v478 = vpop.f32.mrf.mxu0
  %v479 = vadd.f32 0.0, %v478
  %480 = vmatmul.bf16.gmra.mxu0 %v224
  %v481 = vpop.f32.mrf.mxu0
  %v482 = vadd.f32 0.0, %v481
  %v483 = vpop.f32.mrf.mxu0
  %v484 = vadd.f32 0.0, %v483
  %485 = vmatmul.bf16.gmra.mxu0 %v228
  %v486 = vpop.f32.mrf.mxu0
  %v487 = vadd.f32 0.0, %v486
  %v488 = vpop.f32.mrf.mxu0
  %v489 = vadd.f32 0.0, %v488
  %490 = vmatmul.bf16.gmra.mxu0 %v232
  %v491 = vpop.f32.mrf.mxu0
  %v492 = vadd.f32 0.0, %v491
  %v493 = vpop.f32.mrf.mxu0
  %v494 = vadd.f32 0.0, %v493
  %495 = vdwg.mxu0
  %496 = vmatpush.bf16.msra.mxu0 %v383
  %497 = vmatpush.bf16.msra.mxu0 %v382
  %498 = vmatpush.bf16.msra.mxu0 %v381
  %499 = vmatpush.bf16.msra.mxu0 %v380
  %500 = vmatpush.bf16.msra.mxu0 %v379
  %501 = vmatpush.bf16.msra.mxu0 %v378
  %502 = vmatpush.bf16.msra.mxu0 %v377
  %503 = vmatpush.bf16.msra.mxu0 %v376
  %504 = vmatmul.bf16.gmra.mxu0 %v205
  %v505 = vpop.f32.mrf.mxu0
  %v506 = vadd.f32 %v457, %v505
  %v507 = vpop.f32.mrf.mxu0
  %v508 = vadd.f32 %v459, %v507
  %509 = vmatmul.bf16.gmra.mxu0 %v209
  %v510 = vpop.f32.mrf.mxu0
  %v511 = vadd.f32 %v462, %v510
  %v512 = vpop.f32.mrf.mxu0
  %v513 = vadd.f32 %v464, %v512
  %514 = vmatmul.bf16.gmra.mxu0 %v213
  %v515 = vpop.f32.mrf.mxu0
  %v516 = vadd.f32 %v467, %v515
  %v517 = vpop.f32.mrf.mxu0
  %v518 = vadd.f32 %v469, %v517
  %519 = vmatmul.bf16.gmra.mxu0 %v217
  %v520 = vpop.f32.mrf.mxu0
  %v521 = vadd.f32 %v472, %v520
  %v522 = vpop.f32.mrf.mxu0
  %v523 = vadd.f32 %v474, %v522
  %524 = vmatmul.bf16.gmra.mxu0 %v221
  %v525 = vpop.f32.mrf.mxu0
  %v526 = vadd.f32 %v477, %v525
  %v527 = vpop.f32.mrf.mxu0
  %v528 = vadd.f32 %v479, %v527
  %529 = vmatmul.bf16.gmra.mxu0 %v225
  %v530 = vpop.f32.mrf.mxu0
  %v531 = vadd.f32 %v482, %v530
  %v532 = vpop.f32.mrf.mxu0
  %v533 = vadd.f32 %v484, %v532
  %534 = vmatmul.bf16.gmra.mxu0 %v229
  %v535 = vpop.f32.mrf.mxu0
  %v536 = vadd.f32 %v487, %v535
  %v537 = vpop.f32.mrf.mxu0
  %v538 = vadd.f32 %v489, %v537
  %539 = vmatmul.bf16.gmra.mxu0 %v233
  %v540 = vpop.f32.mrf.mxu0
  %v541 = vadd.f32 %v492, %v540
  %v542 = vpop.f32.mrf.mxu0
  %v543 = vadd.f32 %v494, %v542
  %544 = vdwg.mxu0
  %545 = vmatpush.bf16.msra.mxu0 %v391
  %546 = vmatpush.bf16.msra.mxu0 %v390
  %547 = vmatpush.bf16.msra.mxu0 %v389
  %548 = vmatpush.bf16.msra.mxu0 %v388
  %549 = vmatpush.bf16.msra.mxu0 %v387
  %550 = vmatpush.bf16.msra.mxu0 %v386
  %551 = vmatpush.bf16.msra.mxu0 %v385
  %552 = vmatpush.bf16.msra.mxu0 %v384
  %553 = vmatmul.bf16.gmra.mxu0 %v206
  %v554 = vpop.f32.mrf.mxu0
  %v555 = vadd.f32 %v506, %v554
  %v556 = vpop.f32.mrf.mxu0
  %v557 = vadd.f32 %v508, %v556
  %558 = vmatmul.bf16.gmra.mxu0 %v210
  %v559 = vpop.f32.mrf.mxu0
  %v560 = vadd.f32 %v511, %v559
  %v561 = vpop.f32.mrf.mxu0
  %v562 = vadd.f32 %v513, %v561
  %563 = vmatmul.bf16.gmra.mxu0 %v214
  %v564 = vpop.f32.mrf.mxu0
  %v565 = vadd.f32 %v516, %v564
  %v566 = vpop.f32.mrf.mxu0
  %v567 = vadd.f32 %v518, %v566
  %568 = vmatmul.bf16.gmra.mxu0 %v218
  %v569 = vpop.f32.mrf.mxu0
  %v570 = vadd.f32 %v521, %v569
  %v571 = vpop.f32.mrf.mxu0
  %v572 = vadd.f32 %v523, %v571
  %573 = vmatmul.bf16.gmra.mxu0 %v222
  %v574 = vpop.f32.mrf.mxu0
  %v575 = vadd.f32 %v526, %v574
  %v576 = vpop.f32.mrf.mxu0
  %v577 = vadd.f32 %v528, %v576
  %578 = vmatmul.bf16.gmra.mxu0 %v226
  %v579 = vpop.f32.mrf.mxu0
  %v580 = vadd.f32 %v531, %v579
  %v581 = vpop.f32.mrf.mxu0
  %v582 = vadd.f32 %v533, %v581
  %583 = vmatmul.bf16.gmra.mxu0 %v230
  %v584 = vpop.f32.mrf.mxu0
  %v585 = vadd.f32 %v536, %v584
  %v586 = vpop.f32.mrf.mxu0
  %v587 = vadd.f32 %v538, %v586
  %588 = vmatmul.bf16.gmra.mxu0 %v234
  %v589 = vpop.f32.mrf.mxu0
  %v590 = vadd.f32 %v541, %v589
  %v591 = vpop.f32.mrf.mxu0
  %v592 = vadd.f32 %v543, %v591
  %593 = vdwg.mxu0
  %594 = vmatpush.bf16.msra.mxu0 0
  %595 = vmatpush.bf16.msra.mxu0 0
  %596 = vmatpush.bf16.msra.mxu0 0
  %597 = vmatpush.bf16.msra.mxu0 0
  %598 = vmatpush.bf16.msra.mxu0 0
  %599 = vmatpush.bf16.msra.mxu0 %v394
  %600 = vmatpush.bf16.msra.mxu0 %v393
  %601 = vmatpush.bf16.msra.mxu0 %v392
  %602 = vmatmul.bf16.gmra.mxu0 %v424
  %v603 = vpop.f32.mrf.mxu0
  %v604 = vadd.f32 %v555, %v603
  %v605 = vpop.f32.mrf.mxu0
  %v606 = vadd.f32 %v557, %v605
  %607 = vmatmul.bf16.gmra.mxu0 %v427
  %v608 = vpop.f32.mrf.mxu0
  %v609 = vadd.f32 %v560, %v608
  %v610 = vpop.f32.mrf.mxu0
  %v611 = vadd.f32 %v562, %v610
  %612 = vmatmul.bf16.gmra.mxu0 %v430
  %v613 = vpop.f32.mrf.mxu0
  %v614 = vadd.f32 %v565, %v613
  %v615 = vpop.f32.mrf.mxu0
  %v616 = vadd.f32 %v567, %v615
  %617 = vmatmul.bf16.gmra.mxu0 %v433
  %v618 = vpop.f32.mrf.mxu0
  %v619 = vadd.f32 %v570, %v618
  %v620 = vpop.f32.mrf.mxu0
  %v621 = vadd.f32 %v572, %v620
  %622 = vmatmul.bf16.gmra.mxu0 %v436
  %v623 = vpop.f32.mrf.mxu0
  %v624 = vadd.f32 %v575, %v623
  %v625 = vpop.f32.mrf.mxu0
  %v626 = vadd.f32 %v577, %v625
  %627 = vmatmul.bf16.gmra.mxu0 %v439
  %v628 = vpop.f32.mrf.mxu0
  %v629 = vadd.f32 %v580, %v628
  %v630 = vpop.f32.mrf.mxu0
  %v631 = vadd.f32 %v582, %v630
  %632 = vmatmul.bf16.gmra.mxu0 %v442
  %v633 = vpop.f32.mrf.mxu0
  %v634 = vadd.f32 %v585, %v633
  %v635 = vpop.f32.mrf.mxu0
  %v636 = vadd.f32 %v587, %v635
  %637 = vmatmul.bf16.gmra.mxu0 %v445
  %v638 = vpop.f32.mrf.mxu0
  %v639 = vadd.f32 %v590, %v638
  %v640 = vpop.f32.mrf.mxu0
  %v641 = vadd.f32 %v592, %v640
  %642 = vdwg.mxu0
  %vm643 = vcmask 523264
  %644 = vst.msk [vmem:[%s2] sm:$0xff] %vm643, %v604
  %645 = vst.msk [vmem:[%s2 + $0x8] sm:$0xff] %vm643, %v606
  %646 = vst.msk [vmem:[%s2 + $0x10] sm:$0xff] %vm643, %v609
  %647 = vst.msk [vmem:[%s2 + $0x18] sm:$0xff] %vm643, %v611
  %648 = vst.msk [vmem:[%s2 + $0x20] sm:$0xff] %vm643, %v614
  %649 = vst.msk [vmem:[%s2 + $0x28] sm:$0xff] %vm643, %v616
  %650 = vst.msk [vmem:[%s2 + $0x30] sm:$0xff] %vm643, %v619
  %651 = vst.msk [vmem:[%s2 + $0x38] sm:$0xff] %vm643, %v621
  %652 = vst.msk [vmem:[%s2 + $0x40] sm:$0xff] %vm643, %v624
  %653 = vst.msk [vmem:[%s2 + $0x48] sm:$0xff] %vm643, %v626
  %654 = vst.msk [vmem:[%s2 + $0x50] sm:$0xff] %vm643, %v629
  %655 = vst.msk [vmem:[%s2 + $0x58] sm:$0xff] %vm643, %v631
  %656 = vst.msk [vmem:[%s2 + $0x60] sm:$0xff] %vm643, %v634
  %657 = vst.msk [vmem:[%s2 + $0x68] sm:$0xff] %vm643, %v636
  %658 = vst.msk [vmem:[%s2 + $0x70] sm:$0xff] %vm643, %v639
  %659 = vst.msk [vmem:[%s2 + $0x78] sm:$0xff] %vm643, %v641
  %v660 = vld [vmem:[%s3] sm:$0x1]
  %v661 = vsel %vm643, %v604, 0.0
  %v662 = vsel %vm643, %v606, 0.0
  %v663 = vadd.f32 %v661, %v662
  %v664 = vsel %vm643, %v609, 0.0
  %v665 = vadd.f32 %v663, %v664
  %v666 = vsel %vm643, %v611, 0.0
  %v667 = vadd.f32 %v665, %v666
  %v668 = vsel %vm643, %v614, 0.0
  %v669 = vadd.f32 %v667, %v668
  %v670 = vsel %vm643, %v616, 0.0
  %v671 = vadd.f32 %v669, %v670
  %v672 = vsel %vm643, %v619, 0.0
  %v673 = vadd.f32 %v671, %v672
  %v674 = vsel %vm643, %v621, 0.0
  %v675 = vadd.f32 %v673, %v674
  %v676 = vsel %vm643, %v624, 0.0
  %v677 = vadd.f32 %v675, %v676
  %v678 = vsel %vm643, %v626, 0.0
  %v679 = vadd.f32 %v677, %v678
  %v680 = vsel %vm643, %v629, 0.0
  %v681 = vadd.f32 %v679, %v680
  %v682 = vsel %vm643, %v631, 0.0
  %v683 = vadd.f32 %v681, %v682
  %v684 = vsel %vm643, %v634, 0.0
  %v685 = vadd.f32 %v683, %v684
  %v686 = vsel %vm643, %v636, 0.0
  %v687 = vadd.f32 %v685, %v686
  %v688 = vsel %vm643, %v639, 0.0
  %v689 = vadd.f32 %v687, %v688
  %v690 = vsel %vm643, %v641, 0.0
  %v691 = vadd.f32 %v689, %v690
  %v692 = vrot.slane %v691, 4
  %v693 = vadd.f32 %v691, %v692
  %v694 = vrot.slane %v693, 2
  %v695 = vadd.f32 %v693, %v694
  %v696 = vrot.slane %v695, 1
  %v697 = vadd.f32 %v695, %v696
  %v698 = vadd.f32 %v660, %v697
  %vm699 = vcmask 516096
  %700 = vst.msk [vmem:[%s3] sm:$0x1] %vm699, %v698
  %v701 = vld [vmem:[%s4] sm:$0x1]
  %v702 = vmul.f32 %v604, %v604
  %v703 = vmul.f32 %v606, %v606
  %v704 = vmul.f32 %v609, %v609
  %v705 = vmul.f32 %v611, %v611
  %v706 = vmul.f32 %v614, %v614
  %v707 = vmul.f32 %v616, %v616
  %v708 = vmul.f32 %v619, %v619
  %v709 = vmul.f32 %v621, %v621
  %v710 = vmul.f32 %v624, %v624
  %v711 = vmul.f32 %v626, %v626
  %v712 = vmul.f32 %v629, %v629
  %v713 = vmul.f32 %v631, %v631
  %v714 = vmul.f32 %v634, %v634
  %v715 = vmul.f32 %v636, %v636
  %v716 = vmul.f32 %v639, %v639
  %v717 = vmul.f32 %v641, %v641
  %v718 = vsel %vm643, %v702, 0.0
  %v719 = vsel %vm643, %v703, 0.0
  %v720 = vadd.f32 %v718, %v719
  %v721 = vsel %vm643, %v704, 0.0
  %v722 = vadd.f32 %v720, %v721
  %v723 = vsel %vm643, %v705, 0.0
  %v724 = vadd.f32 %v722, %v723
  %v725 = vsel %vm643, %v706, 0.0
  %v726 = vadd.f32 %v724, %v725
  %v727 = vsel %vm643, %v707, 0.0
  %v728 = vadd.f32 %v726, %v727
  %v729 = vsel %vm643, %v708, 0.0
  %v730 = vadd.f32 %v728, %v729
  %v731 = vsel %vm643, %v709, 0.0
  %v732 = vadd.f32 %v730, %v731
  %v733 = vsel %vm643, %v710, 0.0
  %v734 = vadd.f32 %v732, %v733
  %v735 = vsel %vm643, %v711, 0.0
  %v736 = vadd.f32 %v734, %v735
  %v737 = vsel %vm643, %v712, 0.0
  %v738 = vadd.f32 %v736, %v737
  %v739 = vsel %vm643, %v713, 0.0
  %v740 = vadd.f32 %v738, %v739
  %v741 = vsel %vm643, %v714, 0.0
  %v742 = vadd.f32 %v740, %v741
  %v743 = vsel %vm643, %v715, 0.0
  %v744 = vadd.f32 %v742, %v743
  %v745 = vsel %vm643, %v716, 0.0
  %v746 = vadd.f32 %v744, %v745
  %v747 = vsel %vm643, %v717, 0.0
  %v748 = vadd.f32 %v746, %v747
  %v749 = vrot.slane %v748, 4
  %v750 = vadd.f32 %v748, %v749
  %v751 = vrot.slane %v750, 2
  %v752 = vadd.f32 %v750, %v751
  %v753 = vrot.slane %v752, 1
  %v754 = vadd.f32 %v752, %v753
  %v755 = vadd.f32 %v701, %v754
  %756 = vst.msk [vmem:[%s4] sm:$0x1] %vm699, %v755
  // Predicated region
  $region14: #{generator_forward.32} parent=0 // pred_check
    _
  $region15: #{generator_forward.32} parent=0 // pred_check_branch
    %758 = sbr.rel (0) target = $region17
  $region16: #{generator_forward.32} parent=0 // pred_region
    _
  $region17: #{generator_forward.32} parent=0 // pred_fallthru
    _
  // Predicated region
  $region18: #{generator_forward.32} parent=0 // pred_check
    _
  $region19: #{generator_forward.32} parent=0 // pred_check_branch
    %760 = sbr.rel (0) target = $region21
  $region20: #{generator_forward.32} parent=0 // pred_region
    _
  $region21: #{generator_forward.32} parent=0 // pred_fallthru
    _
  // Predicated region
  $region22: #{generator_forward.32} parent=0 // pred_check
    _
  $region23: #{generator_forward.32} parent=0 // pred_check_branch
    %762 = sbr.rel (0) target = $region25
  $region24: #{generator_forward.32} parent=0 // pred_region
    _
  $region25: #{generator_forward.32} parent=0 // pred_fallthru
    _
  // Predicated region
  $region26: #{generator_forward.32} parent=0 // pred_check
    _
  $region27: #{generator_forward.32} parent=0 // pred_check_branch
    %764 = sbr.rel (0) target = $region29
  $region28: #{generator_forward.32} parent=0 // pred_region
    _
  $region29: #{generator_forward.32} parent=0 // pred_fallthru
    _
  // Predicated region
  $region30: #{generator_forward.32} parent=0 // pred_check
    _
  $region31: #{generator_forward.32} parent=0 // pred_check_branch
    %766 = sbr.rel (0) target = $region33
  $region32: #{generator_forward.32} parent=0 // pred_region
    _
  $region33: #{generator_forward.32} parent=0 // pred_fallthru
    _
  // Predicated region
  $region34: #{generator_forward.32} parent=0 // pred_check
    _
  $region35: #{generator_forward.32} parent=0 // pred_check_branch
    %768 = sbr.rel (0) target = $region37
  $region36: #{generator_forward.32} parent=0 // pred_region
    _
  $region37: #{generator_forward.32} parent=0 // pred_fallthru
    _

// kernel: generator_forward.33
$region0: #{generator_forward.33}
  #allocation0 [shape = 'u32[]', space=smem, size = 0x4, offset = 0x4, fixed_abs, tag = 'smem constant byte address 0x4 - core index']
  #allocation1 [shape = 'u32[72,128]{1,0:T(1,128)}', space=vmem, size = 0x9000, scoped, tag = 'internal scratch']
  %s0 = inlined_call_operand.vmem [shape: f32[128,64], index: 0, kind: input, shape index: {}]
  %s1 = inlined_call_operand.vmem [shape: f32[1,64], index: 1, kind: input, shape index: {}]
  %s2 = inlined_call_operand.vmem [shape: f32[1,64], index: 2, kind: input, shape index: {}]
  %s3 = inlined_call_operand.vmem [shape: f32[128,64], index: 3, kind: output, shape index: {}]
  %s4 = sld [smem:[#allocation0]]
  $region22: #{generator_forward.33} parent=0
    _
  %s6 = ssub.s32 1, %s4
  %s7 = scalar_select 0, %s6, %s4
  // Predicated region
  $region2: #{generator_forward.33} parent=0 // pred_check
    _
  $region3: #{generator_forward.33} parent=0 // pred_check_branch
    %9 = sbr.rel (0) target = $region5
  $region4: #{generator_forward.33} parent=0 // pred_region
    _
  $region5: #{generator_forward.33} parent=0 // pred_fallthru
    _
  // Predicated region
  $region6: #{generator_forward.33} parent=0 // pred_check
    _
  $region7: #{generator_forward.33} parent=0 // pred_check_branch
    %11 = sbr.rel (0) target = $region9
  $region8: #{generator_forward.33} parent=0 // pred_region
    _
  $region9: #{generator_forward.33} parent=0 // pred_fallthru
    _
  // Predicated region
  $region10: #{generator_forward.33} parent=0 // pred_check
    _
  $region11: #{generator_forward.33} parent=0 // pred_check_branch
    %13 = sbr.rel (0) target = $region13
  $region12: #{generator_forward.33} parent=0 // pred_region
    _
  $region13: #{generator_forward.33} parent=0 // pred_fallthru
    _
  %v14 = vld [vmem:[%s0] sm:$0xff]
  %v15 = vld [vmem:[%s0 + $0x8] sm:$0xff]
  %v16 = vld [vmem:[%s0 + $0x10] sm:$0xff]
  %v17 = vld [vmem:[%s0 + $0x18] sm:$0xff]
  %v18 = vld [vmem:[%s0 + $0x20] sm:$0xff]
  %v19 = vld [vmem:[%s0 + $0x28] sm:$0xff]
  %v20 = vld [vmem:[%s0 + $0x30] sm:$0xff]
  %v21 = vld [vmem:[%s0 + $0x38] sm:$0xff]
  %v22 = vld [vmem:[%s0 + $0x40] sm:$0xff]
  %v23 = vld [vmem:[%s0 + $0x48] sm:$0xff]
  %v24 = vld [vmem:[%s0 + $0x50] sm:$0xff]
  %v25 = vld [vmem:[%s0 + $0x58] sm:$0xff]
  %v26 = vld [vmem:[%s0 + $0x60] sm:$0xff]
  %v27 = vld [vmem:[%s0 + $0x68] sm:$0xff]
  %v28 = vld [vmem:[%s0 + $0x70] sm:$0xff]
  %v29 = vld [vmem:[%s0 + $0x78] sm:$0xff]
  %v30 = vld [vmem:[%s1] sm:$0x1]
  %v32 = vperm.slane %v30, 0
  %v34 = vmul.f32 %v14, %v32
  %v35 = vmul.f32 %v15, %v32
  %v36 = vmul.f32 %v16, %v32
  %v37 = vmul.f32 %v17, %v32
  %v38 = vmul.f32 %v18, %v32
  %v39 = vmul.f32 %v19, %v32
  %v40 = vmul.f32 %v20, %v32
  %v41 = vmul.f32 %v21, %v32
  %v42 = vmul.f32 %v22, %v32
  %v43 = vmul.f32 %v23, %v32
  %v44 = vmul.f32 %v24, %v32
  %v45 = vmul.f32 %v25, %v32
  %v46 = vmul.f32 %v26, %v32
  %v47 = vmul.f32 %v27, %v32
  %v48 = vmul.f32 %v28, %v32
  %v49 = vmul.f32 %v29, %v32
  %v50 = vld [vmem:[%s2] sm:$0x1]
  %v52 = vperm.slane %v50, 0
  %v54 = vadd.f32 %v34, %v52
  %v55 = vadd.f32 %v35, %v52
  %v56 = vadd.f32 %v36, %v52
  %v57 = vadd.f32 %v37, %v52
  %v58 = vadd.f32 %v38, %v52
  %v59 = vadd.f32 %v39, %v52
  %v60 = vadd.f32 %v40, %v52
  %v61 = vadd.f32 %v41, %v52
  %v62 = vadd.f32 %v42, %v52
  %v63 = vadd.f32 %v43, %v52
  %v64 = vadd.f32 %v44, %v52
  %v65 = vadd.f32 %v45, %v52
  %v66 = vadd.f32 %v46, %v52
  %v67 = vadd.f32 %v47, %v52
  %v68 = vadd.f32 %v48, %v52
  %v69 = vadd.f32 %v49, %v52
  %v70 = vmax.f32 %v54, 0.0
  %v71 = vmax.f32 %v55, 0.0
  %v72 = vmax.f32 %v56, 0.0
  %v73 = vmax.f32 %v57, 0.0
  %v74 = vmax.f32 %v58, 0.0
  %v75 = vmax.f32 %v59, 0.0
  %v76 = vmax.f32 %v60, 0.0
  %v77 = vmax.f32 %v61, 0.0
  %v78 = vmax.f32 %v62, 0.0
  %v79 = vmax.f32 %v63, 0.0
  %v80 = vmax.f32 %v64, 0.0
  %v81 = vmax.f32 %v65, 0.0
  %v82 = vmax.f32 %v66, 0.0
  %v83 = vmax.f32 %v67, 0.0
  %v84 = vmax.f32 %v68, 0.0
  %v85 = vmax.f32 %v69, 0.0
  %vm86 = vcmask 523264
  %87 = vst.msk [vmem:[%s3] sm:$0xff] %vm86, %v70
  %88 = vst.msk [vmem:[%s3 + $0x8] sm:$0xff] %vm86, %v71
  %89 = vst.msk [vmem:[%s3 + $0x10] sm:$0xff] %vm86, %v72
  %90 = vst.msk [vmem:[%s3 + $0x18] sm:$0xff] %vm86, %v73
  %91 = vst.msk [vmem:[%s3 + $0x20] sm:$0xff] %vm86, %v74
  %92 = vst.msk [vmem:[%s3 + $0x28] sm:$0xff] %vm86, %v75
  %93 = vst.msk [vmem:[%s3 + $0x30] sm:$0xff] %vm86, %v76
  %94 = vst.msk [vmem:[%s3 + $0x38] sm:$0xff] %vm86, %v77
  %95 = vst.msk [vmem:[%s3 + $0x40] sm:$0xff] %vm86, %v78
  %96 = vst.msk [vmem:[%s3 + $0x48] sm:$0xff] %vm86, %v79
  %97 = vst.msk [vmem:[%s3 + $0x50] sm:$0xff] %vm86, %v80
  %98 = vst.msk [vmem:[%s3 + $0x58] sm:$0xff] %vm86, %v81
  %99 = vst.msk [vmem:[%s3 + $0x60] sm:$0xff] %vm86, %v82
  %100 = vst.msk [vmem:[%s3 + $0x68] sm:$0xff] %vm86, %v83
  %101 = vst.msk [vmem:[%s3 + $0x70] sm:$0xff] %vm86, %v84
  %102 = vst.msk [vmem:[%s3 + $0x78] sm:$0xff] %vm86, %v85
  // Predicated region
  $region14: #{generator_forward.33} parent=0 // pred_check
    _
  $region15: #{generator_forward.33} parent=0 // pred_check_branch
    %104 = sbr.rel (0) target = $region17
  $region16: #{generator_forward.33} parent=0 // pred_region
    _
  $region17: #{generator_forward.33} parent=0 // pred_fallthru
    _
  // Predicated region
  $region18: #{generator_forward.33} parent=0 // pred_check
    _
  $region19: #{generator_forward.33} parent=0 // pred_check_branch
    %106 = sbr.rel (0) target = $region21
  $region20: #{generator_forward.33} parent=0 // pred_region
    _
  $region21: #{generator_forward.33} parent=0 // pred_fallthru
    _

// kernel: squeeze.31
$region0: #{squeeze.31}
  %s0 = inlined_call_operand.vmem [shape: f32[16], index: 0, kind: input, shape index: {}]
  %s1 = inlined_call_operand.vmem [shape: f32[4,4], index: 1, kind: output, shape index: {}]
  $region1: #{squeeze.31} parent=0
    #allocation0 [shape = 'u8[4096]{0}', space=vmem, size = 0x1000, scoped, tag = 'scoped mem for output reshape']
    #allocation1 [shape = 'u8[4096]{0}', space=vmem, size = 0x1000, scoped, tag = 'scoped mem for input reshape']
    %s3 = ssub.s32 2, 1
    %v4 = vld [vmem:[%s0] sm:%s3]
    %5 = vst [vmem:[#allocation1] sm:%s3] %v4
    %v6 = vld [vmem:[#allocation1] sm:$0x1]
    %vm7 = vcmask 31744
    %8 = vst.msk [vmem:[#allocation0] sm:$0x1] %vm7, %v6
    %v9 = vld [vmem:[#allocation1] sm:$0x1]
    %10 = vrot.lane.b32.xlu0 %v9, 124
    %v11 = vpop.permute.xlu0 %10
    %vm12 = vcmask 31744
    %s13 = scalar_lea.vmem [#allocation0], 1
    %14 = vst.msk [vmem:[%s13] sm:$0x1] %vm12, %v11
    %v15 = vld [vmem:[#allocation1] sm:$0x1]
    %16 = vrot.lane.b32.xlu0 %v15, 120
    %v17 = vpop.permute.xlu0 %16
    %vm18 = vcmask 31744
    %s19 = scalar_lea.vmem [#allocation0], 2
    %20 = vst.msk [vmem:[%s19] sm:$0x1] %vm18, %v17
    %v21 = vld [vmem:[#allocation1] sm:$0x1]
    %22 = vrot.lane.b32.xlu0 %v21, 116
    %v23 = vpop.permute.xlu0 %22
    %vm24 = vcmask 31744
    %s25 = scalar_lea.vmem [#allocation0], 3
    %26 = vst.msk [vmem:[%s25] sm:$0x1] %vm24, %v23
    %s28 = ssub.s32 16, 1
    %v29 = vld [vmem:[#allocation0] sm:%s28]
    %s31 = ssub.s32 16, 1
    %32 = vst [vmem:[%s1] sm:%s31] %v29

// kernel: tile.53
$region0: #{tile.53}
  #allocation0 [shape = 's32[1]{0}', space=sflag, size = 0x4, scoped, tag = 'scoped memory for tile.53']
  %s0 = inlined_call_operand.vmem [shape: f32[4], index: 0, kind: input, shape index: {}]
  %s1 = inlined_call_operand.vmem [shape: f32[4,4], index: 1, kind: output, shape index: {}]
  // Predicated region
  $region2: #{tile.53} parent=0 // pred_check
    _
  $region3: #{tile.53} parent=0 // pred_check_branch
    %3 = sbr.rel (0) target = $region5
  $region4: #{tile.53} parent=0 // pred_region
    _
  $region5: #{tile.53} parent=0 // pred_fallthru
    _
  %v4 = vld [vmem:[%s0] ss:$0 sm:$0xff]
  %5 = vst [vmem:[%s1] sm:$0xf] %v4

// kernel: tile.58
$region0: #{tile.58}
  %s0 = inlined_call_operand.vmem [shape: f32[4,4], index: 0, kind: input, shape index: {}]
  %s1 = inlined_call_operand.vmem [shape: f32[1,16], index: 1, kind: output, shape index: {}]
  $region1: #{tile.58} parent=0
    #allocation0 [shape = 'u8[4096]{0}', space=vmem, size = 0x1000, scoped, tag = 'scoped mem for output reshape']
    #allocation1 [shape = 'u8[4096]{0}', space=vmem, size = 0x1000, scoped, tag = 'scoped mem for input reshape']
    %s3 = ssub.s32 16, 1
    %v4 = vld [vmem:[%s0] sm:%s3]
    %5 = vst [vmem:[#allocation1] sm:%s3] %v4
    %v6 = vld [vmem:[#allocation1] sm:$0x1]
    %vm7 = vcmask 31744
    %8 = vst.msk [vmem:[#allocation0] sm:$0x1] %vm7, %v6
    %s9 = scalar_lea.vmem [#allocation1], 3
    %v10 = vld [vmem:[%s9] sm:$0x1]
    %11 = vrot.lane.b32.xlu0 %v10, 12
    %v12 = vpop.permute.xlu0 %11
    %vm13 = vcmask 130144
    %14 = vst.msk [vmem:[#allocation0] sm:$0x1] %vm13, %v12
    %s15 = scalar_lea.vmem [#allocation1], 2
    %v16 = vld [vmem:[%s15] sm:$0x1]
    %17 = vrot.lane.b32.xlu0 %v16, 8
    %v18 = vpop.permute.xlu0 %17
    %vm19 = vcmask 97344
    %20 = vst.msk [vmem:[#allocation0] sm:$0x1] %vm19, %v18
    %s21 = scalar_lea.vmem [#allocation1], 1
    %v22 = vld [vmem:[%s21] sm:$0x1]
    %23 = vrot.lane.b32.xlu0 %v22, 4
    %v24 = vpop.permute.xlu0 %23
    %vm25 = vcmask 64544
    %26 = vst.msk [vmem:[#allocation0] sm:$0x1] %vm25, %v24
    %s28 = ssub.s32 2, 1
    %v29 = vld [vmem:[#allocation0] sm:%s28]
    %s31 = ssub.s32 2, 1
    %32 = vst [vmem:[%s1] sm:%s31] %v29

// kernel: generator_forward.34
$region0: #{generator_forward.34}
  #allocation0 [shape = 'u32[]', space=smem, size = 0x4, offset = 0x4, fixed_abs, tag = 'smem constant byte address 0x4 - core index']
  #allocation1 [shape = 'u32[72,128]{1,0:T(1,128)}', space=vmem, size = 0x9000, scoped, tag = 'internal scratch']
  %s0 = inlined_call_operand.vmem [shape: bf16[512,144], index: 0, kind: input, shape index: {}]
  %s1 = inlined_call_operand.vmem [shape: bf16[144,16], index: 1, kind: input, shape index: {}]
  %s2 = inlined_call_operand.vmem [shape: f32[512,16], index: 2, kind: output, shape index: {0}]
  %s3 = inlined_call_operand.vmem [shape: f32[1,16], index: 3, kind: output, shape index: {1}]
  %s4 = inlined_call_operand.vmem [shape: f32[1,16], index: 4, kind: output, shape index: {2}]
  %5 = xla_tuple %s2, %s3, %s4
  %s6 = sld [smem:[#allocation0]]
  $region61: #{generator_forward.34} parent=0
    _
  %s8 = ssub.s32 1, %s6
  %s9 = scalar_select 0, %s8, %s6
  loop: start=0, step=1, limit=4
  $region2: #{generator_forward.34} parent=0 // loop_pre_header
    _
  $region3: #{generator_forward.34} parent=0 // loop_header
    %s11 = sphi 0, %s15
    %p12 = scmp.ge.s32.totalorder %s11, 4
    %s21 = sphi 0, %s23
    %s24 = sphi 0, %s21
    %s25 = sphi 0, %s24
    %s41 = sphi 0, %s25
    %s45 = sphi 0, %s45
    %s47 = sphi 0, %s45
    %s48 = sphi 0, %s47
    %s62 = sphi 0, %s48
    %s68 = sphi 0, %s70
    %s71 = sphi 0, %s68
    %s72 = sphi 0, %s71
    %s88 = sphi 0, %s72
    %s92 = sphi 0, %s92
    %s94 = sphi 0, %s92
    %s95 = sphi 0, %s94
    %s109 = sphi 0, %s95
    %s113 = sphi 0, %s113
    %s115 = sphi 0, %s113
    %s116 = sphi 0, %s115
    %s130 = sphi 0, %s116
  $region4: #{generator_forward.34} parent=0 // loop_header_branch
    %14 = sbr.rel (%p12) target = $region8
  $region5: #{generator_forward.34} parent=0 // loop_body
    %s16 = ssub.s32 %s11, 1
    %s17 = ssub.s32 %s11, 2
    %s18 = sadd.s32 %s11, 1
    %s19 = ssub.s32 %s11, %s18
    %p20 = scmp.eq.s32.totalorder %s19, 0
    %s22 = sadd.s32 %s21, 1
    %s23 = scalar_select %p20, %s21, %s22
    %p26 = pneg %p20
    %p27 = scmp.eq.s32.totalorder %s11, 1
    %p28 = por %p26, %p27
    %p29 = scmp.ne.s32.totalorder %s21, %s24
    %p30 = scmp.eq.s32.totalorder %s11, 0
    %p31 = por %p29, %p30
    %p32 = scmp.ne.s32.totalorder %s21, %s24
    %p33 = scmp.eq.s32.totalorder %s16, 1
    %p34 = por %p32, %p33
    %p35 = scmp.ne.s32.totalorder %s24, %s25
    %p36 = scmp.eq.s32.totalorder %s16, 0
    %p37 = por %p35, %p36
    %p38 = scmp.ne.s32.totalorder %s24, %s25
    %p39 = scmp.eq.s32.totalorder %s17, 1
    %p40 = por %p38, %p39
    %p42 = scmp.ne.s32.totalorder %s25, %s41
    %p43 = scmp.eq.s32.totalorder %s17, 0
    %p44 = por %p42, %p43
    %s46 = sadd.s32 %s45, 1
    %p49 = scmp.eq.s32.totalorder %s11, 1
    %p50 = scmp.ne.s32.totalorder %s45, %s47
    %p51 = scmp.eq.s32.totalorder %s11, 0
    %p52 = por %p50, %p51
    %p53 = scmp.ne.s32.totalorder %s45, %s47
    %p54 = scmp.eq.s32.totalorder %s16, 1
    %p55 = por %p53, %p54
    %p56 = scmp.ne.s32.totalorder %s47, %s48
    %p57 = scmp.eq.s32.totalorder %s16, 0
    %p58 = por %p56, %p57
    %p59 = scmp.ne.s32.totalorder %s47, %s48
    %p60 = scmp.eq.s32.totalorder %s17, 1
    %p61 = por %p59, %p60
    %p63 = scmp.ne.s32.totalorder %s48, %s62
    %p64 = scmp.eq.s32.totalorder %s17, 0
    %p65 = por %p63, %p64
    %s66 = ssub.s32 %s11, %s18
    %p67 = scmp.eq.s32.totalorder %s66, 0
    %s69 = sadd.s32 %s68, 1
    %s70 = scalar_select %p67, %s68, %s69
    %p73 = pneg %p67
    %p74 = scmp.eq.s32.totalorder %s11, 1
    %p75 = por %p73, %p74
    %p76 = scmp.ne.s32.totalorder %s68, %s71
    %p77 = scmp.eq.s32.totalorder %s11, 0
    %p78 = por %p76, %p77
    %p79 = scmp.ne.s32.totalorder %s68, %s71
    %p80 = scmp.eq.s32.totalorder %s16, 1
    %p81 = por %p79, %p80
    %p82 = scmp.ne.s32.totalorder %s71, %s72
    %p83 = scmp.eq.s32.totalorder %s16, 0
    %p84 = por %p82, %p83
    %p85 = scmp.ne.s32.totalorder %s71, %s72
    %p86 = scmp.eq.s32.totalorder %s17, 1
    %p87 = por %p85, %p86
    %p89 = scmp.ne.s32.totalorder %s72, %s88
    %p90 = scmp.eq.s32.totalorder %s17, 0
    %p91 = por %p89, %p90
    %s93 = sadd.s32 %s92, 1
    %p96 = scmp.eq.s32.totalorder %s11, 1
    %p97 = scmp.ne.s32.totalorder %s92, %s94
    %p98 = scmp.eq.s32.totalorder %s11, 0
    %p99 = por %p97, %p98
    %p100 = scmp.ne.s32.totalorder %s92, %s94
    %p101 = scmp.eq.s32.totalorder %s16, 1
    %p102 = por %p100, %p101
    %p103 = scmp.ne.s32.totalorder %s94, %s95
    %p104 = scmp.eq.s32.totalorder %s16, 0
    %p105 = por %p103, %p104
    %p106 = scmp.ne.s32.totalorder %s94, %s95
    %p107 = scmp.eq.s32.totalorder %s17, 1
    %p108 = por %p106, %p107
    %p110 = scmp.ne.s32.totalorder %s95, %s109
    %p111 = scmp.eq.s32.totalorder %s17, 0
    %p112 = por %p110, %p111
    %s114 = sadd.s32 %s113, 1
    %p117 = scmp.eq.s32.totalorder %s11, 1
    %p118 = scmp.ne.s32.totalorder %s113, %s115
    %p119 = scmp.eq.s32.totalorder %s11, 0
    %p120 = por %p118, %p119
    %p121 = scmp.ne.s32.totalorder %s113, %s115
    %p122 = scmp.eq.s32.totalorder %s16, 1
    %p123 = por %p121, %p122
    %p124 = scmp.ne.s32.totalorder %s115, %s116
    %p125 = scmp.eq.s32.totalorder %s16, 0
    %p126 = por %p124, %p125
    %p127 = scmp.ne.s32.totalorder %s115, %s116
    %p128 = scmp.eq.s32.totalorder %s17, 1
    %p129 = por %p127, %p128
    %p131 = scmp.ne.s32.totalorder %s116, %s130
    %p132 = scmp.eq.s32.totalorder %s17, 0
    %p133 = por %p131, %p132
    %p134 = scmp.le.s32.totalorder 1, %s11
    %p135 = scmp.lt.s32.totalorder %s11, 3
    %p136 = pnand %p134, %p135
    %p137 = pneg %p136
    // Predicated region
    $region9: #{generator_forward.34} parent=5 // pred_check
      _
    $region10: #{generator_forward.34} parent=5 // pred_check_branch
      %139 = sbr.rel (%p136) target = $region12
    $region11: #{generator_forward.34} parent=5 // pred_region
      %s140 = ssub.s32 %s11, 1
      // Predicated region
      $region13: #{generator_forward.34} parent=11 // pred_check
        %p141 = pneg %p58
      $region14: #{generator_forward.34} parent=11 // pred_check_branch
        %143 = sbr.rel (%p141) target = $region16
      $region15: #{generator_forward.34} parent=11 // pred_region
        _
      $region16: #{generator_forward.34} parent=11 // pred_fallthru
        _
    $region12: #{generator_forward.34} parent=5 // pred_fallthru
      _
    %p144 = scmp.lt.s32.totalorder %s11, 2
    // Predicated region
    $region17: #{generator_forward.34} parent=5 // pred_check
      %p145 = pneg %p144
    $region18: #{generator_forward.34} parent=5 // pred_check_branch
      %147 = sbr.rel (%p145) target = $region20
    $region19: #{generator_forward.34} parent=5 // pred_region
      // Predicated region
      $region21: #{generator_forward.34} parent=19 // pred_check
        %p148 = pneg %p31
      $region22: #{generator_forward.34} parent=19 // pred_check_branch
        %150 = sbr.rel (%p148) target = $region24
      $region23: #{generator_forward.34} parent=19 // pred_region
        %s151 = smul.u32 32, %s11
        %p152 = scmp.lt.s32.totalorder %s151, 63
        %s153 = scalar_select %p152, %s151, 63
        %s154 = smul.addr %s153, 2
        %s155 = smul.addr %s154, 4
        %s156 = scalar_lea.vmem %s0, %s155
        %s157 = smul.u32 32, %s11
      $region24: #{generator_forward.34} parent=19 // pred_fallthru
        _
    $region20: #{generator_forward.34} parent=5 // pred_fallthru
      _
    %p158 = scmp.le.s32.totalorder 1, %s11
    %p159 = scmp.lt.s32.totalorder %s11, 3
    %p160 = pnand %p158, %p159
    %p161 = pneg %p160
    // Predicated region
    $region25: #{generator_forward.34} parent=5 // pred_check
      _
    $region26: #{generator_forward.34} parent=5 // pred_check_branch
      %163 = sbr.rel (%p160) target = $region28
    $region27: #{generator_forward.34} parent=5 // pred_region
      %s164 = ssub.s32 %s11, 1
      %s165 = smul.u32 32, %s16
      %p166 = scmp.lt.s32.totalorder %s165, 63
      %s167 = scalar_select %p166, %s165, 63
      %s168 = smul.addr %s167, 2
      %s169 = smul.addr %s168, 4
      %s170 = scalar_lea.vmem %s0, %s169
      %p171 = pneg %p37
      %p172 = pneg %p34
      %p173 = pneg %p58
      %p174 = pneg %p55
      %p175 = pneg %p84
      %p176 = pneg %p81
      %s177 = smul.u32 32, %s16
      %p178 = scmp.lt.s32.totalorder %s177, 63
      %s179 = scalar_select %p178, %s177, 63
      %s180 = smul.addr %s179, 8
      %s181 = scalar_lea.vmem %s2, %s180
      %p182 = pneg %p105
      %p183 = pneg %p102
      %p184 = pneg %p126
      %p185 = pneg %p123
      %s186 = smul.u32 32, %s16
      %p187 = scmp.lt.s32.totalorder %s186, 63
      %s188 = scalar_select %p187, %s186, 63
      %s189 = smul.addr %s188, 2
      %s190 = smul.addr %s189, 4
      %s191 = scalar_lea.vmem %s0, %s190
      %s192 = smul.u32 32, %s16
      %s193 = smul.u32 32, %s16
      %p194 = scmp.lt.s32.totalorder %s193, 63
      %s195 = scalar_select %p194, %s193, 63
      %s196 = smul.addr %s195, 8
      %s197 = scalar_lea.vmem %s2, %s196
      %s198 = smul.u32 32, %s16
      %p200 = scmp.eq.s32.totalorder %s16, 0
      // Predicated region
      $region29: #{generator_forward.34} parent=27 // pred_check
        %p201 = pneg %p200
      $region30: #{generator_forward.34} parent=27 // pred_check_branch
        %203 = sbr.rel (%p201) target = $region32
      $region31: #{generator_forward.34} parent=27 // pred_region
        %vm204 = vcmask 122880
        %205 = vst.msk [vmem:[%s3] sm:$0x1] %vm204, 0.0
        %206 = vst.msk [vmem:[%s4] sm:$0x1] %vm204, 0.0
      $region32: #{generator_forward.34} parent=27 // pred_fallthru
        _
      %v207 = vld [vmem:[%s191] sm:$0xff]
      %v208 = vld [vmem:[%s191 + $0x8] sm:$0xff]
      %v209 = vld [vmem:[%s191 + $0x10] sm:$0xff]
      %v210 = vld [vmem:[%s191 + $0x18] sm:$0xff]
      %v211 = vld [vmem:[%s191 + $0x20] sm:$0xff]
      %v212 = vld [vmem:[%s191 + $0x28] sm:$0xff]
      %v213 = vld [vmem:[%s191 + $0x30] sm:$0xff]
      %v214 = vld [vmem:[%s191 + $0x38] sm:$0xff]
      %v215 = vld [vmem:[%s191 + $0x40] sm:$0xff]
      %v216 = vld [vmem:[%s191 + $0x48] sm:$0xff]
      %v217 = vld [vmem:[%s191 + $0x50] sm:$0xff]
      %v218 = vld [vmem:[%s191 + $0x58] sm:$0xff]
      %v219 = vld [vmem:[%s191 + $0x60] sm:$0xff]
      %v220 = vld [vmem:[%s191 + $0x68] sm:$0xff]
      %v221 = vld [vmem:[%s191 + $0x70] sm:$0xff]
      %v222 = vld [vmem:[%s191 + $0x78] sm:$0xff]
      %v223 = vld [vmem:[%s191 + $0x80] sm:$0xff]
      %v224 = vld [vmem:[%s191 + $0x88] sm:$0xff]
      %v225 = vld [vmem:[%s191 + $0x90] sm:$0xff]
      %v226 = vld [vmem:[%s191 + $0x98] sm:$0xff]
      %v227 = vld [vmem:[%s191 + $0xa0] sm:$0xff]
      %v228 = vld [vmem:[%s191 + $0xa8] sm:$0xff]
      %v229 = vld [vmem:[%s191 + $0xb0] sm:$0xff]
      %v230 = vld [vmem:[%s191 + $0xb8] sm:$0xff]
      %v231 = vld [vmem:[%s191 + $0xc0] sm:$0xff]
      %v232 = vld [vmem:[%s191 + $0xc8] sm:$0xff]
      %v233 = vld [vmem:[%s191 + $0xd0] sm:$0xff]
      %v234 = vld [vmem:[%s191 + $0xd8] sm:$0xff]
      %v235 = vld [vmem:[%s191 + $0xe0] sm:$0xff]
      %v236 = vld [vmem:[%s191 + $0xe8] sm:$0xff]
      %v237 = vld [vmem:[%s191 + $0xf0] sm:$0xff]
      %v238 = vld [vmem:[%s191 + $0xf8] sm:$0xff]
      %v239 = vld [vmem:[%s1] sm:$0xf]
      %v240 = vld [vmem:[%s1 + $0x4] sm:$0xf]
      %v241 = vld [vmem:[%s1 + $0x8] sm:$0xf]
      %v242 = vld [vmem:[%s1 + $0xc] sm:$0xf]
      %v243 = vld [vmem:[%s1 + $0x10] sm:$0xf]
      %v244 = vld [vmem:[%s1 + $0x14] sm:$0xf]
      %v245 = vld [vmem:[%s1 + $0x18] sm:$0xf]
      %v246 = vld [vmem:[%s1 + $0x1c] sm:$0xf]
      %v247 = vld [vmem:[%s1 + $0x20] sm:$0xf]
      %v248 = vld [vmem:[%s1 + $0x24] sm:$0xf]
      %v249 = vld [vmem:[%s1 + $0x28] sm:$0xf]
      %v250 = vld [vmem:[%s1 + $0x2c] sm:$0xf]
      %v251 = vld [vmem:[%s1 + $0x30] sm:$0xf]
      %v252 = vld [vmem:[%s1 + $0x34] sm:$0xf]
      %v253 = vld [vmem:[%s1 + $0x38] sm:$0xf]
      %v254 = vld [vmem:[%s1 + $0x3c] sm:$0xf]
      %v255 = vld [vmem:[%s1 + $0x40] sm:$0xf]
      %v256 = vld [vmem:[%s1 + $0x44] sm:$0xf]
      %v289 = vunpack.c.l.b16 %v207
      %v290 = vunpack.c.h.b16 %v207
      %v291 = vunpack.c.l.b16 %v208
      %v292 = vunpack.c.h.b16 %v208
      %v293 = vunpack.c.l.b16 %v209
      %v294 = vunpack.c.h.b16 %v209
      %v295 = vunpack.c.l.b16 %v210
      %v296 = vunpack.c.h.b16 %v210
      %v297 = vunpack.c.l.b16 %v211
      %v298 = vunpack.c.h.b16 %v211
      %v299 = vunpack.c.l.b16 %v212
      %v300 = vunpack.c.h.b16 %v212
      %v301 = vunpack.c.l.b16 %v213
      %v302 = vunpack.c.h.b16 %v213
      %v303 = vunpack.c.l.b16 %v214
      %v304 = vunpack.c.h.b16 %v214
      %v305 = vunpack.c.l.b16 %v215
      %v306 = vunpack.c.h.b16 %v215
      %v307 = vunpack.c.l.b16 %v216
      %v308 = vunpack.c.h.b16 %v216
      %v309 = vunpack.c.l.b16 %v217
      %v310 = vunpack.c.h.b16 %v217
      %v311 = vunpack.c.l.b16 %v218
      %v312 = vunpack.c.h.b16 %v218
      %v313 = vunpack.c.l.b16 %v219
      %v314 = vunpack.c.h.b16 %v219
      %v315 = vunpack.c.l.b16 %v220
      %v316 = vunpack.c.h.b16 %v220
      %v317 = vunpack.c.l.b16 %v221
      %v318 = vunpack.c.h.b16 %v221
      %v319 = vunpack.c.l.b16 %v222
      %v320 = vunpack.c.h.b16 %v222
      %v321 = vunpack.c.l.b16 %v223
      %v322 = vunpack.c.h.b16 %v223
      %v323 = vunpack.c.l.b16 %v224
      %v324 = vunpack.c.h.b16 %v224
      %v325 = vunpack.c.l.b16 %v225
      %v326 = vunpack.c.h.b16 %v225
      %v327 = vunpack.c.l.b16 %v226
      %v328 = vunpack.c.h.b16 %v226
      %v329 = vunpack.c.l.b16 %v227
      %v330 = vunpack.c.h.b16 %v227
      %v331 = vunpack.c.l.b16 %v228
      %v332 = vunpack.c.h.b16 %v228
      %v333 = vunpack.c.l.b16 %v229
      %v334 = vunpack.c.h.b16 %v229
      %v335 = vunpack.c.l.b16 %v230
      %v336 = vunpack.c.h.b16 %v230
      %v337 = vunpack.c.l.b16 %v231
      %v338 = vunpack.c.h.b16 %v231
      %v339 = vunpack.c.l.b16 %v232
      %v340 = vunpack.c.h.b16 %v232
      %v341 = vunpack.c.l.b16 %v233
      %v342 = vunpack.c.h.b16 %v233
      %v343 = vunpack.c.l.b16 %v234
      %v344 = vunpack.c.h.b16 %v234
      %v345 = vunpack.c.l.b16 %v235
      %v346 = vunpack.c.h.b16 %v235
      %v347 = vunpack.c.l.b16 %v236
      %v348 = vunpack.c.h.b16 %v236
      %v349 = vunpack.c.l.b16 %v237
      %v350 = vunpack.c.h.b16 %v237
      %v351 = vunpack.c.l.b16 %v238
      %v352 = vunpack.c.h.b16 %v238
      %v353 = vpack.c.b16 %v291, %v289
      %v354 = vpack.c.b16 %v292, %v290
      %v355 = vpack.c.b16 %v295, %v293
      %v356 = vpack.c.b16 %v296, %v294
      %v357 = vpack.c.b16 %v299, %v297
      %v358 = vpack.c.b16 %v300, %v298
      %v359 = vpack.c.b16 %v303, %v301
      %v360 = vpack.c.b16 %v304, %v302
      %v361 = vpack.c.b16 %v307, %v305
      %v362 = vpack.c.b16 %v308, %v306
      %v363 = vpack.c.b16 %v311, %v309
      %v364 = vpack.c.b16 %v312, %v310
      %v365 = vpack.c.b16 %v315, %v313
      %v366 = vpack.c.b16 %v316, %v314
      %v367 = vpack.c.b16 %v319, %v317
      %v368 = vpack.c.b16 %v320, %v318
      %v369 = vpack.c.b16 %v323, %v321
      %v370 = vpack.c.b16 %v324, %v322
      %v371 = vpack.c.b16 %v327, %v325
      %v372 = vpack.c.b16 %v328, %v326
      %v373 = vpack.c.b16 %v331, %v329
      %v374 = vpack.c.b16 %v332, %v330
      %v375 = vpack.c.b16 %v335, %v333
      %v376 = vpack.c.b16 %v336, %v334
      %v377 = vpack.c.b16 %v339, %v337
      %v378 = vpack.c.b16 %v340, %v338
      %v379 = vpack.c.b16 %v343, %v341
      %v380 = vpack.c.b16 %v344, %v342
      %v381 = vpack.c.b16 %v347, %v345
      %v382 = vpack.c.b16 %v348, %v346
      %v383 = vpack.c.b16 %v351, %v349
      %v384 = vpack.c.b16 %v352, %v350
      %v419 = vunpack.c.l.b16 %v239
      %v420 = vunpack.c.l.b16 %v240
      %v421 = vunpack.c.l.b16 %v241
      %v422 = vunpack.c.l.b16 %v242
      %v423 = vunpack.c.l.b16 %v243
      %v424 = vunpack.c.l.b16 %v244
      %v425 = vunpack.c.l.b16 %v245
      %v426 = vunpack.c.l.b16 %v246
      %v427 = vunpack.c.l.b16 %v247
      %v428 = vunpack.c.l.b16 %v248
      %v429 = vunpack.c.l.b16 %v249
      %v430 = vunpack.c.l.b16 %v250
      %v431 = vunpack.c.l.b16 %v251
      %v432 = vunpack.c.l.b16 %v252
      %v433 = vunpack.c.l.b16 %v253
      %v434 = vunpack.c.l.b16 %v254
      %v435 = vunpack.c.l.b16 %v255
      %v436 = vunpack.c.l.b16 %v256
      %v437 = vpack.c.b16 %v420, %v419
      %v438 = vpack.c.b16 %v422, %v421
      %v439 = vpack.c.b16 %v424, %v423
      %v440 = vpack.c.b16 %v426, %v425
      %v441 = vpack.c.b16 %v428, %v427
      %v442 = vpack.c.b16 %v430, %v429
      %v443 = vpack.c.b16 %v432, %v431
      %v444 = vpack.c.b16 %v434, %v433
      %v445 = vpack.c.b16 %v436, %v435
      %vm455 = vcmask 130048
      %v457 = vsel %vm455, %v354, 0
      %v460 = vsel %vm455, %v356, 0
      %v463 = vsel %vm455, %v358, 0
      %v466 = vsel %vm455, %v360, 0
      %v469 = vsel %vm455, %v362, 0
      %v472 = vsel %vm455, %v364, 0
      %v475 = vsel %vm455, %v366, 0
      %v478 = vsel %vm455, %v368, 0
      %v481 = vsel %vm455, %v370, 0
      %v484 = vsel %vm455, %v372, 0
      %v487 = vsel %vm455, %v374, 0
      %v490 = vsel %vm455, %v376, 0
      %v493 = vsel %vm455, %v378, 0
      %v496 = vsel %vm455, %v380, 0
      %v499 = vsel %vm455, %v382, 0
      %v502 = vsel %vm455, %v384, 0
      %504 = vmatpush.bf16.msra.mxu0 %v444
      %505 = vmatpush.bf16.msra.mxu0 %v443
      %506 = vmatpush.bf16.msra.mxu0 %v442
      %507 = vmatpush.bf16.msra.mxu0 %v441
      %508 = vmatpush.bf16.msra.mxu0 %v440
      %509 = vmatpush.bf16.msra.mxu0 %v439
      %510 = vmatpush.bf16.msra.mxu0 %v438
      %511 = vmatpush.bf16.msra.mxu0 %v437
      %512 = vmatmul.bf16.gmra.mxu0 %v353
      %v513 = vpop.f32.mrf.mxu0
      %v514 = vadd.f32 0.0, %v513
      %v515 = vpop.f32.mrf.mxu0
      %v516 = vadd.f32 0.0, %v515
      %517 = vmatmul.bf16.gmra.mxu0 %v355
      %v518 = vpop.f32.mrf.mxu0
      %v519 = vadd.f32 0.0, %v518
      %v520 = vpop.f32.mrf.mxu0
      %v521 = vadd.f32 0.0, %v520
      %522 = vmatmul.bf16.gmra.mxu0 %v357
      %v523 = vpop.f32.mrf.mxu0
      %v524 = vadd.f32 0.0, %v523
      %v525 = vpop.f32.mrf.mxu0
      %v526 = vadd.f32 0.0, %v525
      %527 = vmatmul.bf16.gmra.mxu0 %v359
      %v528 = vpop.f32.mrf.mxu0
      %v529 = vadd.f32 0.0, %v528
      %v530 = vpop.f32.mrf.mxu0
      %v531 = vadd.f32 0.0, %v530
      %532 = vmatmul.bf16.gmra.mxu0 %v361
      %v533 = vpop.f32.mrf.mxu0
      %v534 = vadd.f32 0.0, %v533
      %v535 = vpop.f32.mrf.mxu0
      %v536 = vadd.f32 0.0, %v535
      %537 = vmatmul.bf16.gmra.mxu0 %v363
      %v538 = vpop.f32.mrf.mxu0
      %v539 = vadd.f32 0.0, %v538
      %v540 = vpop.f32.mrf.mxu0
      %v541 = vadd.f32 0.0, %v540
      %542 = vmatmul.bf16.gmra.mxu0 %v365
      %v543 = vpop.f32.mrf.mxu0
      %v544 = vadd.f32 0.0, %v543
      %v545 = vpop.f32.mrf.mxu0
      %v546 = vadd.f32 0.0, %v545
      %547 = vmatmul.bf16.gmra.mxu0 %v367
      %v548 = vpop.f32.mrf.mxu0
      %v549 = vadd.f32 0.0, %v548
      %v550 = vpop.f32.mrf.mxu0
      %v551 = vadd.f32 0.0, %v550
      %552 = vmatmul.bf16.gmra.mxu0 %v369
      %v553 = vpop.f32.mrf.mxu0
      %v554 = vadd.f32 0.0, %v553
      %v555 = vpop.f32.mrf.mxu0
      %v556 = vadd.f32 0.0, %v555
      %557 = vmatmul.bf16.gmra.mxu0 %v371
      %v558 = vpop.f32.mrf.mxu0
      %v559 = vadd.f32 0.0, %v558
      %v560 = vpop.f32.mrf.mxu0
      %v561 = vadd.f32 0.0, %v560
      %562 = vmatmul.bf16.gmra.mxu0 %v373
      %v563 = vpop.f32.mrf.mxu0
      %v564 = vadd.f32 0.0, %v563
      %v565 = vpop.f32.mrf.mxu0
      %v566 = vadd.f32 0.0, %v565
      %567 = vmatmul.bf16.gmra.mxu0 %v375
      %v568 = vpop.f32.mrf.mxu0
      %v569 = vadd.f32 0.0, %v568
      %v570 = vpop.f32.mrf.mxu0
      %v571 = vadd.f32 0.0, %v570
      %572 = vmatmul.bf16.gmra.mxu0 %v377
      %v573 = vpop.f32.mrf.mxu0
      %v574 = vadd.f32 0.0, %v573
      %v575 = vpop.f32.mrf.mxu0
      %v576 = vadd.f32 0.0, %v575
      %577 = vmatmul.bf16.gmra.mxu0 %v379
      %v578 = vpop.f32.mrf.mxu0
      %v579 = vadd.f32 0.0, %v578
      %v580 = vpop.f32.mrf.mxu0
      %v581 = vadd.f32 0.0, %v580
      %582 = vmatmul.bf16.gmra.mxu0 %v381
      %v583 = vpop.f32.mrf.mxu0
      %v584 = vadd.f32 0.0, %v583
      %v585 = vpop.f32.mrf.mxu0
      %v586 = vadd.f32 0.0, %v585
      %587 = vmatmul.bf16.gmra.mxu0 %v383
      %v588 = vpop.f32.mrf.mxu0
      %v589 = vadd.f32 0.0, %v588
      %v590 = vpop.f32.mrf.mxu0
      %v591 = vadd.f32 0.0, %v590
      %592 = vdwg.mxu0
      %593 = vmatpush.bf16.msra.mxu0 0
      %594 = vmatpush.bf16.msra.mxu0 0
      %595 = vmatpush.bf16.msra.mxu0 0
      %596 = vmatpush.bf16.msra.mxu0 0
      %597 = vmatpush.bf16.msra.mxu0 0
      %598 = vmatpush.bf16.msra.mxu0 0
      %599 = vmatpush.bf16.msra.mxu0 0
      %600 = vmatpush.bf16.msra.mxu0 %v445
      %601 = vmatmul.bf16.gmra.mxu0 %v457
      %v602 = vpop.f32.mrf.mxu0
      %v603 = vadd.f32 %v514, %v602
      %v604 = vpop.f32.mrf.mxu0
      %v605 = vadd.f32 %v516, %v604
      %606 = vmatmul.bf16.gmra.mxu0 %v460
      %v607 = vpop.f32.mrf.mxu0
      %v608 = vadd.f32 %v519, %v607
      %v609 = vpop.f32.mrf.mxu0
      %v610 = vadd.f32 %v521, %v609
      %611 = vmatmul.bf16.gmra.mxu0 %v463
      %v612 = vpop.f32.mrf.mxu0
      %v613 = vadd.f32 %v524, %v612
      %v614 = vpop.f32.mrf.mxu0
      %v615 = vadd.f32 %v526, %v614
      %616 = vmatmul.bf16.gmra.mxu0 %v466
      %v617 = vpop.f32.mrf.mxu0
      %v618 = vadd.f32 %v529, %v617
      %v619 = vpop.f32.mrf.mxu0
      %v620 = vadd.f32 %v531, %v619
      %621 = vmatmul.bf16.gmra.mxu0 %v469
      %v622 = vpop.f32.mrf.mxu0
      %v623 = vadd.f32 %v534, %v622
      %v624 = vpop.f32.mrf.mxu0
      %v625 = vadd.f32 %v536, %v624
      %626 = vmatmul.bf16.gmra.mxu0 %v472
      %v627 = vpop.f32.mrf.mxu0
      %v628 = vadd.f32 %v539, %v627
      %v629 = vpop.f32.mrf.mxu0
      %v630 = vadd.f32 %v541, %v629
      %631 = vmatmul.bf16.gmra.mxu0 %v475
      %v632 = vpop.f32.mrf.mxu0
      %v633 = vadd.f32 %v544, %v632
      %v634 = vpop.f32.mrf.mxu0
      %v635 = vadd.f32 %v546, %v634
      %636 = vmatmul.bf16.gmra.mxu0 %v478
      %v637 = vpop.f32.mrf.mxu0
      %v638 = vadd.f32 %v549, %v637
      %v639 = vpop.f32.mrf.mxu0
      %v640 = vadd.f32 %v551, %v639
      %641 = vmatmul.bf16.gmra.mxu0 %v481
      %v642 = vpop.f32.mrf.mxu0
      %v643 = vadd.f32 %v554, %v642
      %v644 = vpop.f32.mrf.mxu0
      %v645 = vadd.f32 %v556, %v644
      %646 = vmatmul.bf16.gmra.mxu0 %v484
      %v647 = vpop.f32.mrf.mxu0
      %v648 = vadd.f32 %v559, %v647
      %v649 = vpop.f32.mrf.mxu0
      %v650 = vadd.f32 %v561, %v649
      %651 = vmatmul.bf16.gmra.mxu0 %v487
      %v652 = vpop.f32.mrf.mxu0
      %v653 = vadd.f32 %v564, %v652
      %v654 = vpop.f32.mrf.mxu0
      %v655 = vadd.f32 %v566, %v654
      %656 = vmatmul.bf16.gmra.mxu0 %v490
      %v657 = vpop.f32.mrf.mxu0
      %v658 = vadd.f32 %v569, %v657
      %v659 = vpop.f32.mrf.mxu0
      %v660 = vadd.f32 %v571, %v659
      %661 = vmatmul.bf16.gmra.mxu0 %v493
      %v662 = vpop.f32.mrf.mxu0
      %v663 = vadd.f32 %v574, %v662
      %v664 = vpop.f32.mrf.mxu0
      %v665 = vadd.f32 %v576, %v664
      %666 = vmatmul.bf16.gmra.mxu0 %v496
      %v667 = vpop.f32.mrf.mxu0
      %v668 = vadd.f32 %v579, %v667
      %v669 = vpop.f32.mrf.mxu0
      %v670 = vadd.f32 %v581, %v669
      %671 = vmatmul.bf16.gmra.mxu0 %v499
      %v672 = vpop.f32.mrf.mxu0
      %v673 = vadd.f32 %v584, %v672
      %v674 = vpop.f32.mrf.mxu0
      %v675 = vadd.f32 %v586, %v674
      %676 = vmatmul.bf16.gmra.mxu0 %v502
      %v677 = vpop.f32.mrf.mxu0
      %v678 = vadd.f32 %v589, %v677
      %v679 = vpop.f32.mrf.mxu0
      %v680 = vadd.f32 %v591, %v679
      %681 = vdwg.mxu0
      %682 = vst.msk [vmem:[%s197] sm:$0xff] %vm455, %v603
      %683 = vst.msk [vmem:[%s197 + $0x8] sm:$0xff] %vm455, %v605
      %684 = vst.msk [vmem:[%s197 + $0x10] sm:$0xff] %vm455, %v608
      %685 = vst.msk [vmem:[%s197 + $0x18] sm:$0xff] %vm455, %v610
      %686 = vst.msk [vmem:[%s197 + $0x20] sm:$0xff] %vm455, %v613
      %687 = vst.msk [vmem:[%s197 + $0x28] sm:$0xff] %vm455, %v615
      %688 = vst.msk [vmem:[%s197 + $0x30] sm:$0xff] %vm455, %v618
      %689 = vst.msk [vmem:[%s197 + $0x38] sm:$0xff] %vm455, %v620
      %690 = vst.msk [vmem:[%s197 + $0x40] sm:$0xff] %vm455, %v623
      %691 = vst.msk [vmem:[%s197 + $0x48] sm:$0xff] %vm455, %v625
      %692 = vst.msk [vmem:[%s197 + $0x50] sm:$0xff] %vm455, %v628
      %693 = vst.msk [vmem:[%s197 + $0x58] sm:$0xff] %vm455, %v630
      %694 = vst.msk [vmem:[%s197 + $0x60] sm:$0xff] %vm455, %v633
      %695 = vst.msk [vmem:[%s197 + $0x68] sm:$0xff] %vm455, %v635
      %696 = vst.msk [vmem:[%s197 + $0x70] sm:$0xff] %vm455, %v638
      %697 = vst.msk [vmem:[%s197 + $0x78] sm:$0xff] %vm455, %v640
      %698 = vst.msk [vmem:[%s197 + $0x80] sm:$0xff] %vm455, %v643
      %699 = vst.msk [vmem:[%s197 + $0x88] sm:$0xff] %vm455, %v645
      %700 = vst.msk [vmem:[%s197 + $0x90] sm:$0xff] %vm455, %v648
      %701 = vst.msk [vmem:[%s197 + $0x98] sm:$0xff] %vm455, %v650
      %702 = vst.msk [vmem:[%s197 + $0xa0] sm:$0xff] %vm455, %v653
      %703 = vst.msk [vmem:[%s197 + $0xa8] sm:$0xff] %vm455, %v655
      %704 = vst.msk [vmem:[%s197 + $0xb0] sm:$0xff] %vm455, %v658
      %705 = vst.msk [vmem:[%s197 + $0xb8] sm:$0xff] %vm455, %v660
      %706 = vst.msk [vmem:[%s197 + $0xc0] sm:$0xff] %vm455, %v663
      %707 = vst.msk [vmem:[%s197 + $0xc8] sm:$0xff] %vm455, %v665
      %708 = vst.msk [vmem:[%s197 + $0xd0] sm:$0xff] %vm455, %v668
      %709 = vst.msk [vmem:[%s197 + $0xd8] sm:$0xff] %vm455, %v670
      %710 = vst.msk [vmem:[%s197 + $0xe0] sm:$0xff] %vm455, %v673
      %711 = vst.msk [vmem:[%s197 + $0xe8] sm:$0xff] %vm455, %v675
      %712 = vst.msk [vmem:[%s197 + $0xf0] sm:$0xff] %vm455, %v678
      %713 = vst.msk [vmem:[%s197 + $0xf8] sm:$0xff] %vm455, %v680
      %v714 = vld [vmem:[%s3] sm:$0x1]
      %v715 = vsel %vm455, %v603, 0.0
      %v716 = vsel %vm455, %v605, 0.0
      %v717 = vadd.f32 %v715, %v716
      %v718 = vsel %vm455, %v608, 0.0
      %v719 = vadd.f32 %v717, %v718
      %v720 = vsel %vm455, %v610, 0.0
      %v721 = vadd.f32 %v719, %v720
      %v722 = vsel %vm455, %v613, 0.0
      %v723 = vadd.f32 %v721, %v722
      %v724 = vsel %vm455, %v615, 0.0
      %v725 = vadd.f32 %v723, %v724
      %v726 = vsel %vm455, %v618, 0.0
      %v727 = vadd.f32 %v725, %v726
      %v728 = vsel %vm455, %v620, 0.0
      %v729 = vadd.f32 %v727, %v728
      %v730 = vsel %vm455, %v623, 0.0
      %v731 = vadd.f32 %v729, %v730
      %v732 = vsel %vm455, %v625, 0.0
      %v733 = vadd.f32 %v731, %v732
      %v734 = vsel %vm455, %v628, 0.0
      %v735 = vadd.f32 %v733, %v734
      %v736 = vsel %vm455, %v630, 0.0
      %v737 = vadd.f32 %v735, %v736
      %v738 = vsel %vm455, %v633, 0.0
      %v739 = vadd.f32 %v737, %v738
      %v740 = vsel %vm455, %v635, 0.0
      %v741 = vadd.f32 %v739, %v740
      %v742 = vsel %vm455, %v638, 0.0
      %v743 = vadd.f32 %v741, %v742
      %v744 = vsel %vm455, %v640, 0.0
      %v745 = vadd.f32 %v743, %v744
      %v746 = vsel %vm455, %v643, 0.0
      %v747 = vadd.f32 %v745, %v746
      %v748 = vsel %vm455, %v645, 0.0
      %v749 = vadd.f32 %v747, %v748
      %v750 = vsel %vm455, %v648, 0.0
      %v751 = vadd.f32 %v749, %v750
      %v752 = vsel %vm455, %v650, 0.0
      %v753 = vadd.f32 %v751, %v752
      %v754 = vsel %vm455, %v653, 0.0
      %v755 = vadd.f32 %v753, %v754
      %v756 = vsel %vm455, %v655, 0.0
      %v757 = vadd.f32 %v755, %v756
      %v758 = vsel %vm455, %v658, 0.0
      %v759 = vadd.f32 %v757, %v758
      %v760 = vsel %vm455, %v660, 0.0
      %v761 = vadd.f32 %v759, %v760
      %v762 = vsel %vm455, %v663, 0.0
      %v763 = vadd.f32 %v761, %v762
      %v764 = vsel %vm455, %v665, 0.0
      %v765 = vadd.f32 %v763, %v764
      %v766 = vsel %vm455, %v668, 0.0
      %v767 = vadd.f32 %v765, %v766
      %v768 = vsel %vm455, %v670, 0.0
      %v769 = vadd.f32 %v767, %v768
      %v770 = vsel %vm455, %v673, 0.0
      %v771 = vadd.f32 %v769, %v770
      %v772 = vsel %vm455, %v675, 0.0
      %v773 = vadd.f32 %v771, %v772
      %v774 = vsel %vm455, %v678, 0.0
      %v775 = vadd.f32 %v773, %v774
      %v776 = vsel %vm455, %v680, 0.0
      %v777 = vadd.f32 %v775, %v776
      %v778 = vrot.slane %v777, 4
      %v779 = vadd.f32 %v777, %v778
      %v780 = vrot.slane %v779, 2
      %v781 = vadd.f32 %v779, %v780
      %v782 = vrot.slane %v781, 1
      %v783 = vadd.f32 %v781, %v782
      %v784 = vadd.f32 %v714, %v783
      %vm785 = vcmask 122880
      %786 = vst.msk [vmem:[%s3] sm:$0x1] %vm785, %v784
      %v787 = vld [vmem:[%s4] sm:$0x1]
      %v788 = vmul.f32 %v603, %v603
      %v789 = vmul.f32 %v605, %v605
      %v790 = vmul.f32 %v608, %v608
      %v791 = vmul.f32 %v610, %v610
      %v792 = vmul.f32 %v613, %v613
      %v793 = vmul.f32 %v615, %v615
      %v794 = vmul.f32 %v618, %v618
      %v795 = vmul.f32 %v620, %v620
      %v796 = vmul.f32 %v623, %v623
      %v797 = vmul.f32 %v625, %v625
      %v798 = vmul.f32 %v628, %v628
      %v799 = vmul.f32 %v630, %v630
      %v800 = vmul.f32 %v633, %v633
      %v801 = vmul.f32 %v635, %v635
      %v802 = vmul.f32 %v638, %v638
      %v803 = vmul.f32 %v640, %v640
      %v804 = vmul.f32 %v643, %v643
      %v805 = vmul.f32 %v645, %v645
      %v806 = vmul.f32 %v648, %v648
      %v807 = vmul.f32 %v650, %v650
      %v808 = vmul.f32 %v653, %v653
      %v809 = vmul.f32 %v655, %v655
      %v810 = vmul.f32 %v658, %v658
      %v811 = vmul.f32 %v660, %v660
      %v812 = vmul.f32 %v663, %v663
      %v813 = vmul.f32 %v665, %v665
      %v814 = vmul.f32 %v668, %v668
      %v815 = vmul.f32 %v670, %v670
      %v816 = vmul.f32 %v673, %v673
      %v817 = vmul.f32 %v675, %v675
      %v818 = vmul.f32 %v678, %v678
      %v819 = vmul.f32 %v680, %v680
      %v820 = vsel %vm455, %v788, 0.0
      %v821 = vsel %vm455, %v789, 0.0
      %v822 = vadd.f32 %v820, %v821
      %v823 = vsel %vm455, %v790, 0.0
      %v824 = vadd.f32 %v822, %v823
      %v825 = vsel %vm455, %v791, 0.0
      %v826 = vadd.f32 %v824, %v825
      %v827 = vsel %vm455, %v792, 0.0
      %v828 = vadd.f32 %v826, %v827
      %v829 = vsel %vm455, %v793, 0.0
      %v830 = vadd.f32 %v828, %v829
      %v831 = vsel %vm455, %v794, 0.0
      %v832 = vadd.f32 %v830, %v831
      %v833 = vsel %vm455, %v795, 0.0
      %v834 = vadd.f32 %v832, %v833
      %v835 = vsel %vm455, %v796, 0.0
      %v836 = vadd.f32 %v834, %v835
      %v837 = vsel %vm455, %v797, 0.0
      %v838 = vadd.f32 %v836, %v837
      %v839 = vsel %vm455, %v798, 0.0
      %v840 = vadd.f32 %v838, %v839
      %v841 = vsel %vm455, %v799, 0.0
      %v842 = vadd.f32 %v840, %v841
      %v843 = vsel %vm455, %v800, 0.0
      %v844 = vadd.f32 %v842, %v843
      %v845 = vsel %vm455, %v801, 0.0
      %v846 = vadd.f32 %v844, %v845
      %v847 = vsel %vm455, %v802, 0.0
      %v848 = vadd.f32 %v846, %v847
      %v849 = vsel %vm455, %v803, 0.0
      %v850 = vadd.f32 %v848, %v849
      %v851 = vsel %vm455, %v804, 0.0
      %v852 = vadd.f32 %v850, %v851
      %v853 = vsel %vm455, %v805, 0.0
      %v854 = vadd.f32 %v852, %v853
      %v855 = vsel %vm455, %v806, 0.0
      %v856 = vadd.f32 %v854, %v855
      %v857 = vsel %vm455, %v807, 0.0
      %v858 = vadd.f32 %v856, %v857
      %v859 = vsel %vm455, %v808, 0.0
      %v860 = vadd.f32 %v858, %v859
      %v861 = vsel %vm455, %v809, 0.0
      %v862 = vadd.f32 %v860, %v861
      %v863 = vsel %vm455, %v810, 0.0
      %v864 = vadd.f32 %v862, %v863
      %v865 = vsel %vm455, %v811, 0.0
      %v866 = vadd.f32 %v864, %v865
      %v867 = vsel %vm455, %v812, 0.0
      %v868 = vadd.f32 %v866, %v867
      %v869 = vsel %vm455, %v813, 0.0
      %v870 = vadd.f32 %v868, %v869
      %v871 = vsel %vm455, %v814, 0.0
      %v872 = vadd.f32 %v870, %v871
      %v873 = vsel %vm455, %v815, 0.0
      %v874 = vadd.f32 %v872, %v873
      %v875 = vsel %vm455, %v816, 0.0
      %v876 = vadd.f32 %v874, %v875
      %v877 = vsel %vm455, %v817, 0.0
      %v878 = vadd.f32 %v876, %v877
      %v879 = vsel %vm455, %v818, 0.0
      %v880 = vadd.f32 %v878, %v879
      %v881 = vsel %vm455, %v819, 0.0
      %v882 = vadd.f32 %v880, %v881
      %v883 = vrot.slane %v882, 4
      %v884 = vadd.f32 %v882, %v883
      %v885 = vrot.slane %v884, 2
      %v886 = vadd.f32 %v884, %v885
      %v887 = vrot.slane %v886, 1
      %v888 = vadd.f32 %v886, %v887
      %v889 = vadd.f32 %v787, %v888
      %890 = vst.msk [vmem:[%s4] sm:$0x1] %vm785, %v889
      %s891 = smul.u32 32, %s16
      %p892 = scmp.lt.s32.totalorder %s891, 63
      %s893 = scalar_select %p892, %s891, 63
      %s894 = smul.addr %s893, 8
      %s895 = scalar_lea.vmem %s2, %s894
      // Predicated region
      $region33: #{generator_forward.34} parent=27 // pred_check
        %p896 = pneg %p81
      $region34: #{generator_forward.34} parent=27 // pred_check_branch
        %898 = sbr.rel (%p896) target = $region36
      $region35: #{generator_forward.34} parent=27 // pred_region
        %s899 = smul.u32 32, %s16
      $region36: #{generator_forward.34} parent=27 // pred_fallthru
        _
      // Predicated region
      $region37: #{generator_forward.34} parent=27 // pred_check
        %p900 = pneg %p102
      $region38: #{generator_forward.34} parent=27 // pred_check_branch
        %902 = sbr.rel (%p900) target = $region40
      $region39: #{generator_forward.34} parent=27 // pred_region
        _
      $region40: #{generator_forward.34} parent=27 // pred_fallthru
        _
      // Predicated region
      $region41: #{generator_forward.34} parent=27 // pred_check
        %p903 = pneg %p123
      $region42: #{generator_forward.34} parent=27 // pred_check_branch
        %905 = sbr.rel (%p903) target = $region44
      $region43: #{generator_forward.34} parent=27 // pred_region
        _
      $region44: #{generator_forward.34} parent=27 // pred_fallthru
        _
      // Predicated region
      $region45: #{generator_forward.34} parent=27 // pred_check
        %p906 = pneg %p102
      $region46: #{generator_forward.34} parent=27 // pred_check_branch
        %908 = sbr.rel (%p906) target = $region48
      $region47: #{generator_forward.34} parent=27 // pred_region
        _
      $region48: #{generator_forward.34} parent=27 // pred_fallthru
        _
      // Predicated region
      $region49: #{generator_forward.34} parent=27 // pred_check
        %p909 = pneg %p123
      $region50: #{generator_forward.34} parent=27 // pred_check_branch
        %911 = sbr.rel (%p909) target = $region52
      $region51: #{generator_forward.34} parent=27 // pred_region
        _
      $region52: #{generator_forward.34} parent=27 // pred_fallthru
        _
    $region28: #{generator_forward.34} parent=5 // pred_fallthru
      _
    %p912 = scmp.le.s32.totalorder 2, %s11
    // Predicated region
    $region53: #{generator_forward.34} parent=5 // pred_check
      %p913 = pneg %p912
    $region54: #{generator_forward.34} parent=5 // pred_check_branch
      %915 = sbr.rel (%p913) target = $region56
    $region55: #{generator_forward.34} parent=5 // pred_region
      %s916 = ssub.s32 %s11, 2
      // Predicated region
      $region57: #{generator_forward.34} parent=55 // pred_check
        %p917 = pneg %p87
      $region58: #{generator_forward.34} parent=55 // pred_check_branch
        %919 = sbr.rel (%p917) target = $region60
      $region59: #{generator_forward.34} parent=55 // pred_region
        %s920 = smul.u32 32, %s17
        %p921 = scmp.lt.s32.totalorder %s920, 63
        %s922 = scalar_select %p921, %s920, 63
        %s923 = smul.addr %s922, 8
        %s924 = scalar_lea.vmem %s2, %s923
      $region60: #{generator_forward.34} parent=55 // pred_fallthru
        _
    $region56: #{generator_forward.34} parent=5 // pred_fallthru
      _
  $region6: #{generator_forward.34} parent=0 // loop_footer
    %s15 = sadd.s32 1, %s11
  $region7: #{generator_forward.34} parent=0 // loop_footer_branch
    %10 = sbr.rel target = $region3
  $region8: #{generator_forward.34} parent=0 // loop_exit
    _

// kernel: generator_forward.35
$region0: #{generator_forward.35}
  #allocation0 [shape = 'u32[]', space=smem, size = 0x4, offset = 0x4, fixed_abs, tag = 'smem constant byte address 0x4 - core index']
  #allocation1 [shape = 'u32[72,128]{1,0:T(1,128)}', space=vmem, size = 0x9000, scoped, tag = 'internal scratch']
  %s0 = inlined_call_operand.vmem [shape: f32[512,16], index: 0, kind: input, shape index: {}]
  %s1 = inlined_call_operand.vmem [shape: f32[1,16], index: 1, kind: input, shape index: {}]
  %s2 = inlined_call_operand.vmem [shape: f32[1,16], index: 2, kind: input, shape index: {}]
  %s3 = inlined_call_operand.vmem [shape: f32[512,16], index: 3, kind: output, shape index: {}]
  %s4 = sld [smem:[#allocation0]]
  $region45: #{generator_forward.35} parent=0
    _
  %s6 = ssub.s32 1, %s4
  %s7 = scalar_select 0, %s6, %s4
  loop: start=0, step=1, limit=4
  $region2: #{generator_forward.35} parent=0 // loop_pre_header
    _
  $region3: #{generator_forward.35} parent=0 // loop_header
    %s9 = sphi 0, %s13
    %p10 = scmp.ge.s32.totalorder %s9, 4
    %s19 = sphi 0, %s21
    %s22 = sphi 0, %s19
    %s23 = sphi 0, %s22
    %s39 = sphi 0, %s23
    %s43 = sphi 0, %s43
    %s45 = sphi 0, %s43
    %s46 = sphi 0, %s45
    %s60 = sphi 0, %s46
    %s64 = sphi 0, %s64
    %s66 = sphi 0, %s64
    %s67 = sphi 0, %s66
    %s81 = sphi 0, %s67
    %s87 = sphi 0, %s89
    %s90 = sphi 0, %s87
    %s91 = sphi 0, %s90
    %s107 = sphi 0, %s91
  $region4: #{generator_forward.35} parent=0 // loop_header_branch
    %12 = sbr.rel (%p10) target = $region8
  $region5: #{generator_forward.35} parent=0 // loop_body
    %s14 = ssub.s32 %s9, 1
    %s15 = ssub.s32 %s9, 2
    %s16 = sadd.s32 %s9, 1
    %s17 = ssub.s32 %s9, %s16
    %p18 = scmp.eq.s32.totalorder %s17, 0
    %s20 = sadd.s32 %s19, 1
    %s21 = scalar_select %p18, %s19, %s20
    %p24 = pneg %p18
    %p25 = scmp.eq.s32.totalorder %s9, 1
    %p26 = por %p24, %p25
    %p27 = scmp.ne.s32.totalorder %s19, %s22
    %p28 = scmp.eq.s32.totalorder %s9, 0
    %p29 = por %p27, %p28
    %p30 = scmp.ne.s32.totalorder %s19, %s22
    %p31 = scmp.eq.s32.totalorder %s14, 1
    %p32 = por %p30, %p31
    %p33 = scmp.ne.s32.totalorder %s22, %s23
    %p34 = scmp.eq.s32.totalorder %s14, 0
    %p35 = por %p33, %p34
    %p36 = scmp.ne.s32.totalorder %s22, %s23
    %p37 = scmp.eq.s32.totalorder %s15, 1
    %p38 = por %p36, %p37
    %p40 = scmp.ne.s32.totalorder %s23, %s39
    %p41 = scmp.eq.s32.totalorder %s15, 0
    %p42 = por %p40, %p41
    %s44 = sadd.s32 %s43, 1
    %p47 = scmp.eq.s32.totalorder %s9, 1
    %p48 = scmp.ne.s32.totalorder %s43, %s45
    %p49 = scmp.eq.s32.totalorder %s9, 0
    %p50 = por %p48, %p49
    %p51 = scmp.ne.s32.totalorder %s43, %s45
    %p52 = scmp.eq.s32.totalorder %s14, 1
    %p53 = por %p51, %p52
    %p54 = scmp.ne.s32.totalorder %s45, %s46
    %p55 = scmp.eq.s32.totalorder %s14, 0
    %p56 = por %p54, %p55
    %p57 = scmp.ne.s32.totalorder %s45, %s46
    %p58 = scmp.eq.s32.totalorder %s15, 1
    %p59 = por %p57, %p58
    %p61 = scmp.ne.s32.totalorder %s46, %s60
    %p62 = scmp.eq.s32.totalorder %s15, 0
    %p63 = por %p61, %p62
    %s65 = sadd.s32 %s64, 1
    %p68 = scmp.eq.s32.totalorder %s9, 1
    %p69 = scmp.ne.s32.totalorder %s64, %s66
    %p70 = scmp.eq.s32.totalorder %s9, 0
    %p71 = por %p69, %p70
    %p72 = scmp.ne.s32.totalorder %s64, %s66
    %p73 = scmp.eq.s32.totalorder %s14, 1
    %p74 = por %p72, %p73
    %p75 = scmp.ne.s32.totalorder %s66, %s67
    %p76 = scmp.eq.s32.totalorder %s14, 0
    %p77 = por %p75, %p76
    %p78 = scmp.ne.s32.totalorder %s66, %s67
    %p79 = scmp.eq.s32.totalorder %s15, 1
    %p80 = por %p78, %p79
    %p82 = scmp.ne.s32.totalorder %s67, %s81
    %p83 = scmp.eq.s32.totalorder %s15, 0
    %p84 = por %p82, %p83
    %s85 = ssub.s32 %s9, %s16
    %p86 = scmp.eq.s32.totalorder %s85, 0
    %s88 = sadd.s32 %s87, 1
    %s89 = scalar_select %p86, %s87, %s88
    %p92 = pneg %p86
    %p93 = scmp.eq.s32.totalorder %s9, 1
    %p94 = por %p92, %p93
    %p95 = scmp.ne.s32.totalorder %s87, %s90
    %p96 = scmp.eq.s32.totalorder %s9, 0
    %p97 = por %p95, %p96
    %p98 = scmp.ne.s32.totalorder %s87, %s90
    %p99 = scmp.eq.s32.totalorder %s14, 1
    %p100 = por %p98, %p99
    %p101 = scmp.ne.s32.totalorder %s90, %s91
    %p102 = scmp.eq.s32.totalorder %s14, 0
    %p103 = por %p101, %p102
    %p104 = scmp.ne.s32.totalorder %s90, %s91
    %p105 = scmp.eq.s32.totalorder %s15, 1
    %p106 = por %p104, %p105
    %p108 = scmp.ne.s32.totalorder %s91, %s107
    %p109 = scmp.eq.s32.totalorder %s15, 0
    %p110 = por %p108, %p109
    %p111 = scmp.le.s32.totalorder 1, %s9
    %p112 = scmp.lt.s32.totalorder %s9, 3
    %p113 = pnand %p111, %p112
    %p114 = pneg %p113
    // Predicated region
    $region9: #{generator_forward.35} parent=5 // pred_check
      _
    $region10: #{generator_forward.35} parent=5 // pred_check_branch
      %116 = sbr.rel (%p113) target = $region12
    $region11: #{generator_forward.35} parent=5 // pred_region
      %s117 = ssub.s32 %s9, 1
      // Predicated region
      $region13: #{generator_forward.35} parent=11 // pred_check
        %p118 = pneg %p56
      $region14: #{generator_forward.35} parent=11 // pred_check_branch
        %120 = sbr.rel (%p118) target = $region16
      $region15: #{generator_forward.35} parent=11 // pred_region
        _
      $region16: #{generator_forward.35} parent=11 // pred_fallthru
        _
      // Predicated region
      $region17: #{generator_forward.35} parent=11 // pred_check
        %p121 = pneg %p77
      $region18: #{generator_forward.35} parent=11 // pred_check_branch
        %123 = sbr.rel (%p121) target = $region20
      $region19: #{generator_forward.35} parent=11 // pred_region
        _
      $region20: #{generator_forward.35} parent=11 // pred_fallthru
        _
    $region12: #{generator_forward.35} parent=5 // pred_fallthru
      _
    %p124 = scmp.lt.s32.totalorder %s9, 2
    // Predicated region
    $region21: #{generator_forward.35} parent=5 // pred_check
      %p125 = pneg %p124
    $region22: #{generator_forward.35} parent=5 // pred_check_branch
      %127 = sbr.rel (%p125) target = $region24
    $region23: #{generator_forward.35} parent=5 // pred_region
      // Predicated region
      $region25: #{generator_forward.35} parent=23 // pred_check
        %p128 = pneg %p29
      $region26: #{generator_forward.35} parent=23 // pred_check_branch
        %130 = sbr.rel (%p128) target = $region28
      $region27: #{generator_forward.35} parent=23 // pred_region
        %s131 = smul.u32 32, %s9
        %p132 = scmp.lt.s32.totalorder %s131, 63
        %s133 = scalar_select %p132, %s131, 63
        %s134 = smul.addr %s133, 8
        %s135 = scalar_lea.vmem %s0, %s134
        %s136 = smul.u32 32, %s9
      $region28: #{generator_forward.35} parent=23 // pred_fallthru
        _
    $region24: #{generator_forward.35} parent=5 // pred_fallthru
      _
    %p137 = scmp.le.s32.totalorder 1, %s9
    %p138 = scmp.lt.s32.totalorder %s9, 3
    %p139 = pnand %p137, %p138
    %p140 = pneg %p139
    // Predicated region
    $region29: #{generator_forward.35} parent=5 // pred_check
      _
    $region30: #{generator_forward.35} parent=5 // pred_check_branch
      %142 = sbr.rel (%p139) target = $region32
    $region31: #{generator_forward.35} parent=5 // pred_region
      %s143 = ssub.s32 %s9, 1
      %s144 = smul.u32 32, %s14
      %p145 = scmp.lt.s32.totalorder %s144, 63
      %s146 = scalar_select %p145, %s144, 63
      %s147 = smul.addr %s146, 8
      %s148 = scalar_lea.vmem %s0, %s147
      %p149 = pneg %p35
      %p150 = pneg %p32
      %p151 = pneg %p56
      %p152 = pneg %p53
      %p153 = pneg %p77
      %p154 = pneg %p74
      %p155 = pneg %p103
      %p156 = pneg %p100
      %s157 = smul.u32 32, %s14
      %p158 = scmp.lt.s32.totalorder %s157, 63
      %s159 = scalar_select %p158, %s157, 63
      %s160 = smul.addr %s159, 8
      %s161 = scalar_lea.vmem %s3, %s160
      %s162 = smul.u32 32, %s14
      %p163 = scmp.lt.s32.totalorder %s162, 63
      %s164 = scalar_select %p163, %s162, 63
      %s165 = smul.addr %s164, 8
      %s166 = scalar_lea.vmem %s0, %s165
      %s167 = smul.u32 32, %s14
      %s168 = smul.u32 32, %s14
      %p169 = scmp.lt.s32.totalorder %s168, 63
      %s170 = scalar_select %p169, %s168, 63
      %s171 = smul.addr %s170, 8
      %s172 = scalar_lea.vmem %s3, %s171
      %s173 = smul.u32 32, %s14
      %v174 = vld [vmem:[%s166] sm:$0xff]
      %v175 = vld [vmem:[%s166 + $0x8] sm:$0xff]
      %v176 = vld [vmem:[%s166 + $0x10] sm:$0xff]
      %v177 = vld [vmem:[%s166 + $0x18] sm:$0xff]
      %v178 = vld [vmem:[%s166 + $0x20] sm:$0xff]
      %v179 = vld [vmem:[%s166 + $0x28] sm:$0xff]
      %v180 = vld [vmem:[%s166 + $0x30] sm:$0xff]
      %v181 = vld [vmem:[%s166 + $0x38] sm:$0xff]
      %v182 = vld [vmem:[%s166 + $0x40] sm:$0xff]
      %v183 = vld [vmem:[%s166 + $0x48] sm:$0xff]
      %v184 = vld [vmem:[%s166 + $0x50] sm:$0xff]
      %v185 = vld [vmem:[%s166 + $0x58] sm:$0xff]
      %v186 = vld [vmem:[%s166 + $0x60] sm:$0xff]
      %v187 = vld [vmem:[%s166 + $0x68] sm:$0xff]
      %v188 = vld [vmem:[%s166 + $0x70] sm:$0xff]
      %v189 = vld [vmem:[%s166 + $0x78] sm:$0xff]
      %v190 = vld [vmem:[%s166 + $0x80] sm:$0xff]
      %v191 = vld [vmem:[%s166 + $0x88] sm:$0xff]
      %v192 = vld [vmem:[%s166 + $0x90] sm:$0xff]
      %v193 = vld [vmem:[%s166 + $0x98] sm:$0xff]
      %v194 = vld [vmem:[%s166 + $0xa0] sm:$0xff]
      %v195 = vld [vmem:[%s166 + $0xa8] sm:$0xff]
      %v196 = vld [vmem:[%s166 + $0xb0] sm:$0xff]
      %v197 = vld [vmem:[%s166 + $0xb8] sm:$0xff]
      %v198 = vld [vmem:[%s166 + $0xc0] sm:$0xff]
      %v199 = vld [vmem:[%s166 + $0xc8] sm:$0xff]
      %v200 = vld [vmem:[%s166 + $0xd0] sm:$0xff]
      %v201 = vld [vmem:[%s166 + $0xd8] sm:$0xff]
      %v202 = vld [vmem:[%s166 + $0xe0] sm:$0xff]
      %v203 = vld [vmem:[%s166 + $0xe8] sm:$0xff]
      %v204 = vld [vmem:[%s166 + $0xf0] sm:$0xff]
      %v205 = vld [vmem:[%s166 + $0xf8] sm:$0xff]
      %v206 = vld [vmem:[%s1] sm:$0x1]
      %v208 = vperm.slane %v206, 0
      %v210 = vmul.f32 %v174, %v208
      %v211 = vmul.f32 %v175, %v208
      %v212 = vmul.f32 %v176, %v208
      %v213 = vmul.f32 %v177, %v208
      %v214 = vmul.f32 %v178, %v208
      %v215 = vmul.f32 %v179, %v208
      %v216 = vmul.f32 %v180, %v208
      %v217 = vmul.f32 %v181, %v208
      %v218 = vmul.f32 %v182, %v208
      %v219 = vmul.f32 %v183, %v208
      %v220 = vmul.f32 %v184, %v208
      %v221 = vmul.f32 %v185, %v208
      %v222 = vmul.f32 %v186, %v208
      %v223 = vmul.f32 %v187, %v208
      %v224 = vmul.f32 %v188, %v208
      %v225 = vmul.f32 %v189, %v208
      %v226 = vmul.f32 %v190, %v208
      %v227 = vmul.f32 %v191, %v208
      %v228 = vmul.f32 %v192, %v208
      %v229 = vmul.f32 %v193, %v208
      %v230 = vmul.f32 %v194, %v208
      %v231 = vmul.f32 %v195, %v208
      %v232 = vmul.f32 %v196, %v208
      %v233 = vmul.f32 %v197, %v208
      %v234 = vmul.f32 %v198, %v208
      %v235 = vmul.f32 %v199, %v208
      %v236 = vmul.f32 %v200, %v208
      %v237 = vmul.f32 %v201, %v208
      %v238 = vmul.f32 %v202, %v208
      %v239 = vmul.f32 %v203, %v208
      %v240 = vmul.f32 %v204, %v208
      %v241 = vmul.f32 %v205, %v208
      %v242 = vld [vmem:[%s2] sm:$0x1]
      %v244 = vperm.slane %v242, 0
      %v246 = vadd.f32 %v210, %v244
      %v247 = vadd.f32 %v211, %v244
      %v248 = vadd.f32 %v212, %v244
      %v249 = vadd.f32 %v213, %v244
      %v250 = vadd.f32 %v214, %v244
      %v251 = vadd.f32 %v215, %v244
      %v252 = vadd.f32 %v216, %v244
      %v253 = vadd.f32 %v217, %v244
      %v254 = vadd.f32 %v218, %v244
      %v255 = vadd.f32 %v219, %v244
      %v256 = vadd.f32 %v220, %v244
      %v257 = vadd.f32 %v221, %v244
      %v258 = vadd.f32 %v222, %v244
      %v259 = vadd.f32 %v223, %v244
      %v260 = vadd.f32 %v224, %v244
      %v261 = vadd.f32 %v225, %v244
      %v262 = vadd.f32 %v226, %v244
      %v263 = vadd.f32 %v227, %v244
      %v264 = vadd.f32 %v228, %v244
      %v265 = vadd.f32 %v229, %v244
      %v266 = vadd.f32 %v230, %v244
      %v267 = vadd.f32 %v231, %v244
      %v268 = vadd.f32 %v232, %v244
      %v269 = vadd.f32 %v233, %v244
      %v270 = vadd.f32 %v234, %v244
      %v271 = vadd.f32 %v235, %v244
      %v272 = vadd.f32 %v236, %v244
      %v273 = vadd.f32 %v237, %v244
      %v274 = vadd.f32 %v238, %v244
      %v275 = vadd.f32 %v239, %v244
      %v276 = vadd.f32 %v240, %v244
      %v277 = vadd.f32 %v241, %v244
      %v278 = vmax.f32 %v246, 0.0
      %v279 = vmax.f32 %v247, 0.0
      %v280 = vmax.f32 %v248, 0.0
      %v281 = vmax.f32 %v249, 0.0
      %v282 = vmax.f32 %v250, 0.0
      %v283 = vmax.f32 %v251, 0.0
      %v284 = vmax.f32 %v252, 0.0
      %v285 = vmax.f32 %v253, 0.0
      %v286 = vmax.f32 %v254, 0.0
      %v287 = vmax.f32 %v255, 0.0
      %v288 = vmax.f32 %v256, 0.0
      %v289 = vmax.f32 %v257, 0.0
      %v290 = vmax.f32 %v258, 0.0
      %v291 = vmax.f32 %v259, 0.0
      %v292 = vmax.f32 %v260, 0.0
      %v293 = vmax.f32 %v261, 0.0
      %v294 = vmax.f32 %v262, 0.0
      %v295 = vmax.f32 %v263, 0.0
      %v296 = vmax.f32 %v264, 0.0
      %v297 = vmax.f32 %v265, 0.0
      %v298 = vmax.f32 %v266, 0.0
      %v299 = vmax.f32 %v267, 0.0
      %v300 = vmax.f32 %v268, 0.0
      %v301 = vmax.f32 %v269, 0.0
      %v302 = vmax.f32 %v270, 0.0
      %v303 = vmax.f32 %v271, 0.0
      %v304 = vmax.f32 %v272, 0.0
      %v305 = vmax.f32 %v273, 0.0
      %v306 = vmax.f32 %v274, 0.0
      %v307 = vmax.f32 %v275, 0.0
      %v308 = vmax.f32 %v276, 0.0
      %v309 = vmax.f32 %v277, 0.0
      %vm310 = vcmask 130048
      %311 = vst.msk [vmem:[%s172] sm:$0xff] %vm310, %v278
      %312 = vst.msk [vmem:[%s172 + $0x8] sm:$0xff] %vm310, %v279
      %313 = vst.msk [vmem:[%s172 + $0x10] sm:$0xff] %vm310, %v280
      %314 = vst.msk [vmem:[%s172 + $0x18] sm:$0xff] %vm310, %v281
      %315 = vst.msk [vmem:[%s172 + $0x20] sm:$0xff] %vm310, %v282
      %316 = vst.msk [vmem:[%s172 + $0x28] sm:$0xff] %vm310, %v283
      %317 = vst.msk [vmem:[%s172 + $0x30] sm:$0xff] %vm310, %v284
      %318 = vst.msk [vmem:[%s172 + $0x38] sm:$0xff] %vm310, %v285
      %319 = vst.msk [vmem:[%s172 + $0x40] sm:$0xff] %vm310, %v286
      %320 = vst.msk [vmem:[%s172 + $0x48] sm:$0xff] %vm310, %v287
      %321 = vst.msk [vmem:[%s172 + $0x50] sm:$0xff] %vm310, %v288
      %322 = vst.msk [vmem:[%s172 + $0x58] sm:$0xff] %vm310, %v289
      %323 = vst.msk [vmem:[%s172 + $0x60] sm:$0xff] %vm310, %v290
      %324 = vst.msk [vmem:[%s172 + $0x68] sm:$0xff] %vm310, %v291
      %325 = vst.msk [vmem:[%s172 + $0x70] sm:$0xff] %vm310, %v292
      %326 = vst.msk [vmem:[%s172 + $0x78] sm:$0xff] %vm310, %v293
      %327 = vst.msk [vmem:[%s172 + $0x80] sm:$0xff] %vm310, %v294
      %328 = vst.msk [vmem:[%s172 + $0x88] sm:$0xff] %vm310, %v295
      %329 = vst.msk [vmem:[%s172 + $0x90] sm:$0xff] %vm310, %v296
      %330 = vst.msk [vmem:[%s172 + $0x98] sm:$0xff] %vm310, %v297
      %331 = vst.msk [vmem:[%s172 + $0xa0] sm:$0xff] %vm310, %v298
      %332 = vst.msk [vmem:[%s172 + $0xa8] sm:$0xff] %vm310, %v299
      %333 = vst.msk [vmem:[%s172 + $0xb0] sm:$0xff] %vm310, %v300
      %334 = vst.msk [vmem:[%s172 + $0xb8] sm:$0xff] %vm310, %v301
      %335 = vst.msk [vmem:[%s172 + $0xc0] sm:$0xff] %vm310, %v302
      %336 = vst.msk [vmem:[%s172 + $0xc8] sm:$0xff] %vm310, %v303
      %337 = vst.msk [vmem:[%s172 + $0xd0] sm:$0xff] %vm310, %v304
      %338 = vst.msk [vmem:[%s172 + $0xd8] sm:$0xff] %vm310, %v305
      %339 = vst.msk [vmem:[%s172 + $0xe0] sm:$0xff] %vm310, %v306
      %340 = vst.msk [vmem:[%s172 + $0xe8] sm:$0xff] %vm310, %v307
      %341 = vst.msk [vmem:[%s172 + $0xf0] sm:$0xff] %vm310, %v308
      %342 = vst.msk [vmem:[%s172 + $0xf8] sm:$0xff] %vm310, %v309
      %s343 = smul.u32 32, %s14
      %p344 = scmp.lt.s32.totalorder %s343, 63
      %s345 = scalar_select %p344, %s343, 63
      %s346 = smul.addr %s345, 8
      %s347 = scalar_lea.vmem %s3, %s346
      // Predicated region
      $region33: #{generator_forward.35} parent=31 // pred_check
        %p348 = pneg %p100
      $region34: #{generator_forward.35} parent=31 // pred_check_branch
        %350 = sbr.rel (%p348) target = $region36
      $region35: #{generator_forward.35} parent=31 // pred_region
        %s351 = smul.u32 32, %s14
      $region36: #{generator_forward.35} parent=31 // pred_fallthru
        _
    $region32: #{generator_forward.35} parent=5 // pred_fallthru
      _
    %p352 = scmp.le.s32.totalorder 2, %s9
    // Predicated region
    $region37: #{generator_forward.35} parent=5 // pred_check
      %p353 = pneg %p352
    $region38: #{generator_forward.35} parent=5 // pred_check_branch
      %355 = sbr.rel (%p353) target = $region40
    $region39: #{generator_forward.35} parent=5 // pred_region
      %s356 = ssub.s32 %s9, 2
      // Predicated region
      $region41: #{generator_forward.35} parent=39 // pred_check
        %p357 = pneg %p106
      $region42: #{generator_forward.35} parent=39 // pred_check_branch
        %359 = sbr.rel (%p357) target = $region44
      $region43: #{generator_forward.35} parent=39 // pred_region
        %s360 = smul.u32 32, %s15
        %p361 = scmp.lt.s32.totalorder %s360, 63
        %s362 = scalar_select %p361, %s360, 63
        %s363 = smul.addr %s362, 8
        %s364 = scalar_lea.vmem %s3, %s363
      $region44: #{generator_forward.35} parent=39 // pred_fallthru
        _
    $region40: #{generator_forward.35} parent=5 // pred_fallthru
      _
  $region6: #{generator_forward.35} parent=0 // loop_footer
    %s13 = sadd.s32 1, %s9
  $region7: #{generator_forward.35} parent=0 // loop_footer_branch
    %8 = sbr.rel target = $region3
  $region8: #{generator_forward.35} parent=0 // loop_exit
    _

// kernel: generator_forward.36
$region0: #{generator_forward.36}
  #allocation0 [shape = 'u32[]', space=smem, size = 0x4, offset = 0x4, fixed_abs, tag = 'smem constant byte address 0x4 - core index']
  #allocation1 [shape = 'u32[72,128]{1,0:T(1,128)}', space=vmem, size = 0x9000, scoped, tag = 'internal scratch']
  %s0 = inlined_call_operand.vmem [shape: bf16[2048,36], index: 0, kind: input, shape index: {}]
  %s1 = inlined_call_operand.vmem [shape: bf16[36,3], index: 1, kind: input, shape index: {}]
  %s2 = inlined_call_operand.vmem [shape: f32[2048,3], index: 2, kind: output, shape index: {}]
  %s3 = sld [smem:[#allocation0]]
  $region41: #{generator_forward.36} parent=0
    _
  %s5 = ssub.s32 1, %s3
  %s6 = scalar_select 0, %s5, %s3
  loop: start=0, step=1, limit=6
  $region2: #{generator_forward.36} parent=0 // loop_pre_header
    _
  $region3: #{generator_forward.36} parent=0 // loop_header
    %s8 = sphi 0, %s12
    %p9 = scmp.ge.s32.totalorder %s8, 6
    %s18 = sphi 0, %s20
    %s21 = sphi 0, %s18
    %s22 = sphi 0, %s21
    %s38 = sphi 0, %s22
    %s42 = sphi 0, %s42
    %s44 = sphi 0, %s42
    %s45 = sphi 0, %s44
    %s59 = sphi 0, %s45
    %s65 = sphi 0, %s67
    %s68 = sphi 0, %s65
    %s69 = sphi 0, %s68
    %s85 = sphi 0, %s69
  $region4: #{generator_forward.36} parent=0 // loop_header_branch
    %11 = sbr.rel (%p9) target = $region8
  $region5: #{generator_forward.36} parent=0 // loop_body
    %s13 = ssub.s32 %s8, 1
    %s14 = ssub.s32 %s8, 2
    %s15 = sadd.s32 %s8, 1
    %s16 = ssub.s32 %s8, %s15
    %p17 = scmp.eq.s32.totalorder %s16, 0
    %s19 = sadd.s32 %s18, 1
    %s20 = scalar_select %p17, %s18, %s19
    %p23 = pneg %p17
    %p24 = scmp.eq.s32.totalorder %s8, 3
    %p25 = por %p23, %p24
    %p26 = scmp.ne.s32.totalorder %s18, %s21
    %p27 = scmp.eq.s32.totalorder %s8, 0
    %p28 = por %p26, %p27
    %p29 = scmp.ne.s32.totalorder %s18, %s21
    %p30 = scmp.eq.s32.totalorder %s13, 3
    %p31 = por %p29, %p30
    %p32 = scmp.ne.s32.totalorder %s21, %s22
    %p33 = scmp.eq.s32.totalorder %s13, 0
    %p34 = por %p32, %p33
    %p35 = scmp.ne.s32.totalorder %s21, %s22
    %p36 = scmp.eq.s32.totalorder %s14, 3
    %p37 = por %p35, %p36
    %p39 = scmp.ne.s32.totalorder %s22, %s38
    %p40 = scmp.eq.s32.totalorder %s14, 0
    %p41 = por %p39, %p40
    %s43 = sadd.s32 %s42, 1
    %p46 = scmp.eq.s32.totalorder %s8, 3
    %p47 = scmp.ne.s32.totalorder %s42, %s44
    %p48 = scmp.eq.s32.totalorder %s8, 0
    %p49 = por %p47, %p48
    %p50 = scmp.ne.s32.totalorder %s42, %s44
    %p51 = scmp.eq.s32.totalorder %s13, 3
    %p52 = por %p50, %p51
    %p53 = scmp.ne.s32.totalorder %s44, %s45
    %p54 = scmp.eq.s32.totalorder %s13, 0
    %p55 = por %p53, %p54
    %p56 = scmp.ne.s32.totalorder %s44, %s45
    %p57 = scmp.eq.s32.totalorder %s14, 3
    %p58 = por %p56, %p57
    %p60 = scmp.ne.s32.totalorder %s45, %s59
    %p61 = scmp.eq.s32.totalorder %s14, 0
    %p62 = por %p60, %p61
    %s63 = ssub.s32 %s8, %s15
    %p64 = scmp.eq.s32.totalorder %s63, 0
    %s66 = sadd.s32 %s65, 1
    %s67 = scalar_select %p64, %s65, %s66
    %p70 = pneg %p64
    %p71 = scmp.eq.s32.totalorder %s8, 3
    %p72 = por %p70, %p71
    %p73 = scmp.ne.s32.totalorder %s65, %s68
    %p74 = scmp.eq.s32.totalorder %s8, 0
    %p75 = por %p73, %p74
    %p76 = scmp.ne.s32.totalorder %s65, %s68
    %p77 = scmp.eq.s32.totalorder %s13, 3
    %p78 = por %p76, %p77
    %p79 = scmp.ne.s32.totalorder %s68, %s69
    %p80 = scmp.eq.s32.totalorder %s13, 0
    %p81 = por %p79, %p80
    %p82 = scmp.ne.s32.totalorder %s68, %s69
    %p83 = scmp.eq.s32.totalorder %s14, 3
    %p84 = por %p82, %p83
    %p86 = scmp.ne.s32.totalorder %s69, %s85
    %p87 = scmp.eq.s32.totalorder %s14, 0
    %p88 = por %p86, %p87
    %p89 = scmp.le.s32.totalorder 1, %s8
    %p90 = scmp.lt.s32.totalorder %s8, 5
    %p91 = pnand %p89, %p90
    %p92 = pneg %p91
    // Predicated region
    $region9: #{generator_forward.36} parent=5 // pred_check
      _
    $region10: #{generator_forward.36} parent=5 // pred_check_branch
      %94 = sbr.rel (%p91) target = $region12
    $region11: #{generator_forward.36} parent=5 // pred_region
      %s95 = ssub.s32 %s8, 1
      // Predicated region
      $region13: #{generator_forward.36} parent=11 // pred_check
        %p96 = pneg %p55
      $region14: #{generator_forward.36} parent=11 // pred_check_branch
        %98 = sbr.rel (%p96) target = $region16
      $region15: #{generator_forward.36} parent=11 // pred_region
        _
      $region16: #{generator_forward.36} parent=11 // pred_fallthru
        _
    $region12: #{generator_forward.36} parent=5 // pred_fallthru
      _
    %p99 = scmp.lt.s32.totalorder %s8, 4
    // Predicated region
    $region17: #{generator_forward.36} parent=5 // pred_check
      %p100 = pneg %p99
    $region18: #{generator_forward.36} parent=5 // pred_check_branch
      %102 = sbr.rel (%p100) target = $region20
    $region19: #{generator_forward.36} parent=5 // pred_region
      // Predicated region
      $region21: #{generator_forward.36} parent=19 // pred_check
        %p103 = pneg %p28
      $region22: #{generator_forward.36} parent=19 // pred_check_branch
        %105 = sbr.rel (%p103) target = $region24
      $region23: #{generator_forward.36} parent=19 // pred_region
        %s106 = smul.u32 64, %s8
        %p107 = scmp.lt.s32.totalorder %s106, 255
        %s108 = scalar_select %p107, %s106, 255
        %s109 = smul.addr %s108, 4
        %s110 = scalar_lea.vmem %s0, %s109
        %s111 = smul.u32 64, %s8
      $region24: #{generator_forward.36} parent=19 // pred_fallthru
        _
    $region20: #{generator_forward.36} parent=5 // pred_fallthru
      _
    %p112 = scmp.le.s32.totalorder 1, %s8
    %p113 = scmp.lt.s32.totalorder %s8, 5
    %p114 = pnand %p112, %p113
    %p115 = pneg %p114
    // Predicated region
    $region25: #{generator_forward.36} parent=5 // pred_check
      _
    $region26: #{generator_forward.36} parent=5 // pred_check_branch
      %117 = sbr.rel (%p114) target = $region28
    $region27: #{generator_forward.36} parent=5 // pred_region
      %s118 = ssub.s32 %s8, 1
      %s119 = smul.u32 64, %s13
      %p120 = scmp.lt.s32.totalorder %s119, 255
      %s121 = scalar_select %p120, %s119, 255
      %s122 = smul.addr %s121, 4
      %s123 = scalar_lea.vmem %s0, %s122
      %p124 = pneg %p34
      %p125 = pneg %p31
      %p126 = pneg %p55
      %p127 = pneg %p52
      %p128 = pneg %p81
      %p129 = pneg %p78
      %s130 = smul.u32 64, %s13
      %p131 = scmp.lt.s32.totalorder %s130, 255
      %s132 = scalar_select %p131, %s130, 255
      %s133 = smul.addr %s132, 8
      %s134 = scalar_lea.vmem %s2, %s133
      %s135 = smul.u32 64, %s13
      %p136 = scmp.lt.s32.totalorder %s135, 255
      %s137 = scalar_select %p136, %s135, 255
      %s138 = smul.addr %s137, 4
      %s139 = scalar_lea.vmem %s0, %s138
      %s140 = smul.u32 64, %s13
      %s141 = smul.u32 64, %s13
      %p142 = scmp.lt.s32.totalorder %s141, 255
      %s143 = scalar_select %p142, %s141, 255
      %s144 = smul.addr %s143, 8
      %s145 = scalar_lea.vmem %s2, %s144
      %s146 = smul.u32 64, %s13
      %v148 = vld [vmem:[%s139] sm:$0xf]
      %v149 = vld [vmem:[%s139 + $0x4] sm:$0xf]
      %v150 = vld [vmem:[%s139 + $0x8] sm:$0xf]
      %v151 = vld [vmem:[%s139 + $0xc] sm:$0xf]
      %v152 = vld [vmem:[%s139 + $0x10] sm:$0xf]
      %v153 = vld [vmem:[%s139 + $0x14] sm:$0xf]
      %v154 = vld [vmem:[%s139 + $0x18] sm:$0xf]
      %v155 = vld [vmem:[%s139 + $0x1c] sm:$0xf]
      %v156 = vld [vmem:[%s139 + $0x20] sm:$0xf]
      %v157 = vld [vmem:[%s139 + $0x24] sm:$0xf]
      %v158 = vld [vmem:[%s139 + $0x28] sm:$0xf]
      %v159 = vld [vmem:[%s139 + $0x2c] sm:$0xf]
      %v160 = vld [vmem:[%s139 + $0x30] sm:$0xf]
      %v161 = vld [vmem:[%s139 + $0x34] sm:$0xf]
      %v162 = vld [vmem:[%s139 + $0x38] sm:$0xf]
      %v163 = vld [vmem:[%s139 + $0x3c] sm:$0xf]
      %v164 = vld [vmem:[%s139 + $0x40] sm:$0xf]
      %v165 = vld [vmem:[%s139 + $0x44] sm:$0xf]
      %v166 = vld [vmem:[%s139 + $0x48] sm:$0xf]
      %v167 = vld [vmem:[%s139 + $0x4c] sm:$0xf]
      %v168 = vld [vmem:[%s139 + $0x50] sm:$0xf]
      %v169 = vld [vmem:[%s139 + $0x54] sm:$0xf]
      %v170 = vld [vmem:[%s139 + $0x58] sm:$0xf]
      %v171 = vld [vmem:[%s139 + $0x5c] sm:$0xf]
      %v172 = vld [vmem:[%s139 + $0x60] sm:$0xf]
      %v173 = vld [vmem:[%s139 + $0x64] sm:$0xf]
      %v174 = vld [vmem:[%s139 + $0x68] sm:$0xf]
      %v175 = vld [vmem:[%s139 + $0x6c] sm:$0xf]
      %v176 = vld [vmem:[%s139 + $0x70] sm:$0xf]
      %v177 = vld [vmem:[%s139 + $0x74] sm:$0xf]
      %v178 = vld [vmem:[%s139 + $0x78] sm:$0xf]
      %v179 = vld [vmem:[%s139 + $0x7c] sm:$0xf]
      %v180 = vld [vmem:[%s139 + $0x80] sm:$0xf]
      %v181 = vld [vmem:[%s139 + $0x84] sm:$0xf]
      %v182 = vld [vmem:[%s139 + $0x88] sm:$0xf]
      %v183 = vld [vmem:[%s139 + $0x8c] sm:$0xf]
      %v184 = vld [vmem:[%s139 + $0x90] sm:$0xf]
      %v185 = vld [vmem:[%s139 + $0x94] sm:$0xf]
      %v186 = vld [vmem:[%s139 + $0x98] sm:$0xf]
      %v187 = vld [vmem:[%s139 + $0x9c] sm:$0xf]
      %v188 = vld [vmem:[%s139 + $0xa0] sm:$0xf]
      %v189 = vld [vmem:[%s139 + $0xa4] sm:$0xf]
      %v190 = vld [vmem:[%s139 + $0xa8] sm:$0xf]
      %v191 = vld [vmem:[%s139 + $0xac] sm:$0xf]
      %v192 = vld [vmem:[%s139 + $0xb0] sm:$0xf]
      %v193 = vld [vmem:[%s139 + $0xb4] sm:$0xf]
      %v194 = vld [vmem:[%s139 + $0xb8] sm:$0xf]
      %v195 = vld [vmem:[%s139 + $0xbc] sm:$0xf]
      %v196 = vld [vmem:[%s139 + $0xc0] sm:$0xf]
      %v197 = vld [vmem:[%s139 + $0xc4] sm:$0xf]
      %v198 = vld [vmem:[%s139 + $0xc8] sm:$0xf]
      %v199 = vld [vmem:[%s139 + $0xcc] sm:$0xf]
      %v200 = vld [vmem:[%s139 + $0xd0] sm:$0xf]
      %v201 = vld [vmem:[%s139 + $0xd4] sm:$0xf]
      %v202 = vld [vmem:[%s139 + $0xd8] sm:$0xf]
      %v203 = vld [vmem:[%s139 + $0xdc] sm:$0xf]
      %v204 = vld [vmem:[%s139 + $0xe0] sm:$0xf]
      %v205 = vld [vmem:[%s139 + $0xe4] sm:$0xf]
      %v206 = vld [vmem:[%s139 + $0xe8] sm:$0xf]
      %v207 = vld [vmem:[%s139 + $0xec] sm:$0xf]
      %v208 = vld [vmem:[%s139 + $0xf0] sm:$0xf]
      %v209 = vld [vmem:[%s139 + $0xf4] sm:$0xf]
      %v210 = vld [vmem:[%s139 + $0xf8] sm:$0xf]
      %v211 = vld [vmem:[%s139 + $0xfc] sm:$0xf]
      %v212 = vld [vmem:[%s1] sm:$0xf]
      %v213 = vld [vmem:[%s1 + $0x4] sm:$0xf]
      %v214 = vld [vmem:[%s1 + $0x8] sm:$0xf]
      %v215 = vld [vmem:[%s1 + $0xc] sm:$0xf]
      %v216 = vld [vmem:[%s1 + $0x10] sm:$0x3]
      %v281 = vunpack.c.l.b16 %v148
      %v282 = vunpack.c.l.b16 %v149
      %v283 = vunpack.c.l.b16 %v150
      %v284 = vunpack.c.l.b16 %v151
      %v285 = vunpack.c.l.b16 %v152
      %v286 = vunpack.c.l.b16 %v153
      %v287 = vunpack.c.l.b16 %v154
      %v288 = vunpack.c.l.b16 %v155
      %v289 = vunpack.c.l.b16 %v156
      %v290 = vunpack.c.l.b16 %v157
      %v291 = vunpack.c.l.b16 %v158
      %v292 = vunpack.c.l.b16 %v159
      %v293 = vunpack.c.l.b16 %v160
      %v294 = vunpack.c.l.b16 %v161
      %v295 = vunpack.c.l.b16 %v162
      %v296 = vunpack.c.l.b16 %v163
      %v297 = vunpack.c.l.b16 %v164
      %v298 = vunpack.c.l.b16 %v165
      %v299 = vunpack.c.l.b16 %v166
      %v300 = vunpack.c.l.b16 %v167
      %v301 = vunpack.c.l.b16 %v168
      %v302 = vunpack.c.l.b16 %v169
      %v303 = vunpack.c.l.b16 %v170
      %v304 = vunpack.c.l.b16 %v171
      %v305 = vunpack.c.l.b16 %v172
      %v306 = vunpack.c.l.b16 %v173
      %v307 = vunpack.c.l.b16 %v174
      %v308 = vunpack.c.l.b16 %v175
      %v309 = vunpack.c.l.b16 %v176
      %v310 = vunpack.c.l.b16 %v177
      %v311 = vunpack.c.l.b16 %v178
      %v312 = vunpack.c.l.b16 %v179
      %v313 = vunpack.c.l.b16 %v180
      %v314 = vunpack.c.l.b16 %v181
      %v315 = vunpack.c.l.b16 %v182
      %v316 = vunpack.c.l.b16 %v183
      %v317 = vunpack.c.l.b16 %v184
      %v318 = vunpack.c.l.b16 %v185
      %v319 = vunpack.c.l.b16 %v186
      %v320 = vunpack.c.l.b16 %v187
      %v321 = vunpack.c.l.b16 %v188
      %v322 = vunpack.c.l.b16 %v189
      %v323 = vunpack.c.l.b16 %v190
      %v324 = vunpack.c.l.b16 %v191
      %v325 = vunpack.c.l.b16 %v192
      %v326 = vunpack.c.l.b16 %v193
      %v327 = vunpack.c.l.b16 %v194
      %v328 = vunpack.c.l.b16 %v195
      %v329 = vunpack.c.l.b16 %v196
      %v330 = vunpack.c.l.b16 %v197
      %v331 = vunpack.c.l.b16 %v198
      %v332 = vunpack.c.l.b16 %v199
      %v333 = vunpack.c.l.b16 %v200
      %v334 = vunpack.c.l.b16 %v201
      %v335 = vunpack.c.l.b16 %v202
      %v336 = vunpack.c.l.b16 %v203
      %v337 = vunpack.c.l.b16 %v204
      %v338 = vunpack.c.l.b16 %v205
      %v339 = vunpack.c.l.b16 %v206
      %v340 = vunpack.c.l.b16 %v207
      %v341 = vunpack.c.l.b16 %v208
      %v342 = vunpack.c.l.b16 %v209
      %v343 = vunpack.c.l.b16 %v210
      %v344 = vunpack.c.l.b16 %v211
      %v345 = vpack.c.b16 %v282, %v281
      %v346 = vpack.c.b16 %v284, %v283
      %v347 = vpack.c.b16 %v286, %v285
      %v348 = vpack.c.b16 %v288, %v287
      %v349 = vpack.c.b16 %v290, %v289
      %v350 = vpack.c.b16 %v292, %v291
      %v351 = vpack.c.b16 %v294, %v293
      %v352 = vpack.c.b16 %v296, %v295
      %v353 = vpack.c.b16 %v298, %v297
      %v354 = vpack.c.b16 %v300, %v299
      %v355 = vpack.c.b16 %v302, %v301
      %v356 = vpack.c.b16 %v304, %v303
      %v357 = vpack.c.b16 %v306, %v305
      %v358 = vpack.c.b16 %v308, %v307
      %v359 = vpack.c.b16 %v310, %v309
      %v360 = vpack.c.b16 %v312, %v311
      %v361 = vpack.c.b16 %v314, %v313
      %v362 = vpack.c.b16 %v316, %v315
      %v363 = vpack.c.b16 %v318, %v317
      %v364 = vpack.c.b16 %v320, %v319
      %v365 = vpack.c.b16 %v322, %v321
      %v366 = vpack.c.b16 %v324, %v323
      %v367 = vpack.c.b16 %v326, %v325
      %v368 = vpack.c.b16 %v328, %v327
      %v369 = vpack.c.b16 %v330, %v329
      %v370 = vpack.c.b16 %v332, %v331
      %v371 = vpack.c.b16 %v334, %v333
      %v372 = vpack.c.b16 %v336, %v335
      %v373 = vpack.c.b16 %v338, %v337
      %v374 = vpack.c.b16 %v340, %v339
      %v375 = vpack.c.b16 %v342, %v341
      %v376 = vpack.c.b16 %v344, %v343
      %v382 = vunpack.c.l.b16 %v212
      %v383 = vunpack.c.l.b16 %v213
      %v384 = vunpack.c.l.b16 %v214
      %v385 = vunpack.c.l.b16 %v215
      %v386 = vunpack.c.l.b16 %v216
      %v387 = vpack.c.b16 %v383, %v382
      %v388 = vpack.c.b16 %v385, %v384
      %v389 = vpack.c.b16 %v386, %v386
      %vm392 = vcmask 293888
      %v394 = vsel %vm392, %v345, 0
      %v397 = vsel %vm392, %v346, 0
      %v400 = vsel %vm392, %v347, 0
      %v403 = vsel %vm392, %v348, 0
      %v406 = vsel %vm392, %v349, 0
      %v409 = vsel %vm392, %v350, 0
      %v412 = vsel %vm392, %v351, 0
      %v415 = vsel %vm392, %v352, 0
      %v418 = vsel %vm392, %v353, 0
      %v421 = vsel %vm392, %v354, 0
      %v424 = vsel %vm392, %v355, 0
      %v427 = vsel %vm392, %v356, 0
      %v430 = vsel %vm392, %v357, 0
      %v433 = vsel %vm392, %v358, 0
      %v436 = vsel %vm392, %v359, 0
      %v439 = vsel %vm392, %v360, 0
      %v442 = vsel %vm392, %v361, 0
      %v445 = vsel %vm392, %v362, 0
      %v448 = vsel %vm392, %v363, 0
      %v451 = vsel %vm392, %v364, 0
      %v454 = vsel %vm392, %v365, 0
      %v457 = vsel %vm392, %v366, 0
      %v460 = vsel %vm392, %v367, 0
      %v463 = vsel %vm392, %v368, 0
      %v466 = vsel %vm392, %v369, 0
      %v469 = vsel %vm392, %v370, 0
      %v472 = vsel %vm392, %v371, 0
      %v475 = vsel %vm392, %v372, 0
      %v478 = vsel %vm392, %v373, 0
      %v481 = vsel %vm392, %v374, 0
      %v484 = vsel %vm392, %v375, 0
      %v487 = vsel %vm392, %v376, 0
      %vm489 = vcmask 1041408
      %v491 = vsel %vm489, %v389, 0
      %493 = vmatpush.bf16.msra.mxu0 0
      %494 = vmatpush.bf16.msra.mxu0 0
      %495 = vmatpush.bf16.msra.mxu0 0
      %496 = vmatpush.bf16.msra.mxu0 0
      %497 = vmatpush.bf16.msra.mxu0 0
      %498 = vmatpush.bf16.msra.mxu0 %v491
      %499 = vmatpush.bf16.msra.mxu0 %v388
      %500 = vmatpush.bf16.msra.mxu0 %v387
      %501 = vmatmul.bf16.gmra.mxu0 %v394
      %v502 = vpop.f32.mrf.mxu0
      %v503 = vadd.f32 0.0, %v502
      %v504 = vpop.f32.mrf.mxu0
      %v505 = vadd.f32 0.0, %v504
      %506 = vmatmul.bf16.gmra.mxu0 %v397
      %v507 = vpop.f32.mrf.mxu0
      %v508 = vadd.f32 0.0, %v507
      %v509 = vpop.f32.mrf.mxu0
      %v510 = vadd.f32 0.0, %v509
      %511 = vmatmul.bf16.gmra.mxu0 %v400
      %v512 = vpop.f32.mrf.mxu0
      %v513 = vadd.f32 0.0, %v512
      %v514 = vpop.f32.mrf.mxu0
      %v515 = vadd.f32 0.0, %v514
      %516 = vmatmul.bf16.gmra.mxu0 %v403
      %v517 = vpop.f32.mrf.mxu0
      %v518 = vadd.f32 0.0, %v517
      %v519 = vpop.f32.mrf.mxu0
      %v520 = vadd.f32 0.0, %v519
      %521 = vmatmul.bf16.gmra.mxu0 %v406
      %v522 = vpop.f32.mrf.mxu0
      %v523 = vadd.f32 0.0, %v522
      %v524 = vpop.f32.mrf.mxu0
      %v525 = vadd.f32 0.0, %v524
      %526 = vmatmul.bf16.gmra.mxu0 %v409
      %v527 = vpop.f32.mrf.mxu0
      %v528 = vadd.f32 0.0, %v527
      %v529 = vpop.f32.mrf.mxu0
      %v530 = vadd.f32 0.0, %v529
      %531 = vmatmul.bf16.gmra.mxu0 %v412
      %v532 = vpop.f32.mrf.mxu0
      %v533 = vadd.f32 0.0, %v532
      %v534 = vpop.f32.mrf.mxu0
      %v535 = vadd.f32 0.0, %v534
      %536 = vmatmul.bf16.gmra.mxu0 %v415
      %v537 = vpop.f32.mrf.mxu0
      %v538 = vadd.f32 0.0, %v537
      %v539 = vpop.f32.mrf.mxu0
      %v540 = vadd.f32 0.0, %v539
      %541 = vmatmul.bf16.gmra.mxu0 %v418
      %v542 = vpop.f32.mrf.mxu0
      %v543 = vadd.f32 0.0, %v542
      %v544 = vpop.f32.mrf.mxu0
      %v545 = vadd.f32 0.0, %v544
      %546 = vmatmul.bf16.gmra.mxu0 %v421
      %v547 = vpop.f32.mrf.mxu0
      %v548 = vadd.f32 0.0, %v547
      %v549 = vpop.f32.mrf.mxu0
      %v550 = vadd.f32 0.0, %v549
      %551 = vmatmul.bf16.gmra.mxu0 %v424
      %v552 = vpop.f32.mrf.mxu0
      %v553 = vadd.f32 0.0, %v552
      %v554 = vpop.f32.mrf.mxu0
      %v555 = vadd.f32 0.0, %v554
      %556 = vmatmul.bf16.gmra.mxu0 %v427
      %v557 = vpop.f32.mrf.mxu0
      %v558 = vadd.f32 0.0, %v557
      %v559 = vpop.f32.mrf.mxu0
      %v560 = vadd.f32 0.0, %v559
      %561 = vmatmul.bf16.gmra.mxu0 %v430
      %v562 = vpop.f32.mrf.mxu0
      %v563 = vadd.f32 0.0, %v562
      %v564 = vpop.f32.mrf.mxu0
      %v565 = vadd.f32 0.0, %v564
      %566 = vmatmul.bf16.gmra.mxu0 %v433
      %v567 = vpop.f32.mrf.mxu0
      %v568 = vadd.f32 0.0, %v567
      %v569 = vpop.f32.mrf.mxu0
      %v570 = vadd.f32 0.0, %v569
      %571 = vmatmul.bf16.gmra.mxu0 %v436
      %v572 = vpop.f32.mrf.mxu0
      %v573 = vadd.f32 0.0, %v572
      %v574 = vpop.f32.mrf.mxu0
      %v575 = vadd.f32 0.0, %v574
      %576 = vmatmul.bf16.gmra.mxu0 %v439
      %v577 = vpop.f32.mrf.mxu0
      %v578 = vadd.f32 0.0, %v577
      %v579 = vpop.f32.mrf.mxu0
      %v580 = vadd.f32 0.0, %v579
      %581 = vmatmul.bf16.gmra.mxu0 %v442
      %v582 = vpop.f32.mrf.mxu0
      %v583 = vadd.f32 0.0, %v582
      %v584 = vpop.f32.mrf.mxu0
      %v585 = vadd.f32 0.0, %v584
      %586 = vmatmul.bf16.gmra.mxu0 %v445
      %v587 = vpop.f32.mrf.mxu0
      %v588 = vadd.f32 0.0, %v587
      %v589 = vpop.f32.mrf.mxu0
      %v590 = vadd.f32 0.0, %v589
      %591 = vmatmul.bf16.gmra.mxu0 %v448
      %v592 = vpop.f32.mrf.mxu0
      %v593 = vadd.f32 0.0, %v592
      %v594 = vpop.f32.mrf.mxu0
      %v595 = vadd.f32 0.0, %v594
      %596 = vmatmul.bf16.gmra.mxu0 %v451
      %v597 = vpop.f32.mrf.mxu0
      %v598 = vadd.f32 0.0, %v597
      %v599 = vpop.f32.mrf.mxu0
      %v600 = vadd.f32 0.0, %v599
      %601 = vmatmul.bf16.gmra.mxu0 %v454
      %v602 = vpop.f32.mrf.mxu0
      %v603 = vadd.f32 0.0, %v602
      %v604 = vpop.f32.mrf.mxu0
      %v605 = vadd.f32 0.0, %v604
      %606 = vmatmul.bf16.gmra.mxu0 %v457
      %v607 = vpop.f32.mrf.mxu0
      %v608 = vadd.f32 0.0, %v607
      %v609 = vpop.f32.mrf.mxu0
      %v610 = vadd.f32 0.0, %v609
      %611 = vmatmul.bf16.gmra.mxu0 %v460
      %v612 = vpop.f32.mrf.mxu0
      %v613 = vadd.f32 0.0, %v612
      %v614 = vpop.f32.mrf.mxu0
      %v615 = vadd.f32 0.0, %v614
      %616 = vmatmul.bf16.gmra.mxu0 %v463
      %v617 = vpop.f32.mrf.mxu0
      %v618 = vadd.f32 0.0, %v617
      %v619 = vpop.f32.mrf.mxu0
      %v620 = vadd.f32 0.0, %v619
      %621 = vmatmul.bf16.gmra.mxu0 %v466
      %v622 = vpop.f32.mrf.mxu0
      %v623 = vadd.f32 0.0, %v622
      %v624 = vpop.f32.mrf.mxu0
      %v625 = vadd.f32 0.0, %v624
      %626 = vmatmul.bf16.gmra.mxu0 %v469
      %v627 = vpop.f32.mrf.mxu0
      %v628 = vadd.f32 0.0, %v627
      %v629 = vpop.f32.mrf.mxu0
      %v630 = vadd.f32 0.0, %v629
      %631 = vmatmul.bf16.gmra.mxu0 %v472
      %v632 = vpop.f32.mrf.mxu0
      %v633 = vadd.f32 0.0, %v632
      %v634 = vpop.f32.mrf.mxu0
      %v635 = vadd.f32 0.0, %v634
      %636 = vmatmul.bf16.gmra.mxu0 %v475
      %v637 = vpop.f32.mrf.mxu0
      %v638 = vadd.f32 0.0, %v637
      %v639 = vpop.f32.mrf.mxu0
      %v640 = vadd.f32 0.0, %v639
      %641 = vmatmul.bf16.gmra.mxu0 %v478
      %v642 = vpop.f32.mrf.mxu0
      %v643 = vadd.f32 0.0, %v642
      %v644 = vpop.f32.mrf.mxu0
      %v645 = vadd.f32 0.0, %v644
      %646 = vmatmul.bf16.gmra.mxu0 %v481
      %v647 = vpop.f32.mrf.mxu0
      %v648 = vadd.f32 0.0, %v647
      %v649 = vpop.f32.mrf.mxu0
      %v650 = vadd.f32 0.0, %v649
      %651 = vmatmul.bf16.gmra.mxu0 %v484
      %v652 = vpop.f32.mrf.mxu0
      %v653 = vadd.f32 0.0, %v652
      %v654 = vpop.f32.mrf.mxu0
      %v655 = vadd.f32 0.0, %v654
      %656 = vmatmul.bf16.gmra.mxu0 %v487
      %v657 = vpop.f32.mrf.mxu0
      %v658 = vadd.f32 0.0, %v657
      %v659 = vpop.f32.mrf.mxu0
      %v660 = vadd.f32 0.0, %v659
      %661 = vdwg.mxu0
      %vm662 = vcmask 23552
      %663 = vst.msk [vmem:[%s145] sm:$0xff] %vm662, %v503
      %664 = vst.msk [vmem:[%s145 + $0x8] sm:$0xff] %vm662, %v505
      %665 = vst.msk [vmem:[%s145 + $0x10] sm:$0xff] %vm662, %v508
      %666 = vst.msk [vmem:[%s145 + $0x18] sm:$0xff] %vm662, %v510
      %667 = vst.msk [vmem:[%s145 + $0x20] sm:$0xff] %vm662, %v513
      %668 = vst.msk [vmem:[%s145 + $0x28] sm:$0xff] %vm662, %v515
      %669 = vst.msk [vmem:[%s145 + $0x30] sm:$0xff] %vm662, %v518
      %670 = vst.msk [vmem:[%s145 + $0x38] sm:$0xff] %vm662, %v520
      %671 = vst.msk [vmem:[%s145 + $0x40] sm:$0xff] %vm662, %v523
      %672 = vst.msk [vmem:[%s145 + $0x48] sm:$0xff] %vm662, %v525
      %673 = vst.msk [vmem:[%s145 + $0x50] sm:$0xff] %vm662, %v528
      %674 = vst.msk [vmem:[%s145 + $0x58] sm:$0xff] %vm662, %v530
      %675 = vst.msk [vmem:[%s145 + $0x60] sm:$0xff] %vm662, %v533
      %676 = vst.msk [vmem:[%s145 + $0x68] sm:$0xff] %vm662, %v535
      %677 = vst.msk [vmem:[%s145 + $0x70] sm:$0xff] %vm662, %v538
      %678 = vst.msk [vmem:[%s145 + $0x78] sm:$0xff] %vm662, %v540
      %679 = vst.msk [vmem:[%s145 + $0x80] sm:$0xff] %vm662, %v543
      %680 = vst.msk [vmem:[%s145 + $0x88] sm:$0xff] %vm662, %v545
      %681 = vst.msk [vmem:[%s145 + $0x90] sm:$0xff] %vm662, %v548
      %682 = vst.msk [vmem:[%s145 + $0x98] sm:$0xff] %vm662, %v550
      %683 = vst.msk [vmem:[%s145 + $0xa0] sm:$0xff] %vm662, %v553
      %684 = vst.msk [vmem:[%s145 + $0xa8] sm:$0xff] %vm662, %v555
      %685 = vst.msk [vmem:[%s145 + $0xb0] sm:$0xff] %vm662, %v558
      %686 = vst.msk [vmem:[%s145 + $0xb8] sm:$0xff] %vm662, %v560
      %687 = vst.msk [vmem:[%s145 + $0xc0] sm:$0xff] %vm662, %v563
      %688 = vst.msk [vmem:[%s145 + $0xc8] sm:$0xff] %vm662, %v565
      %689 = vst.msk [vmem:[%s145 + $0xd0] sm:$0xff] %vm662, %v568
      %690 = vst.msk [vmem:[%s145 + $0xd8] sm:$0xff] %vm662, %v570
      %691 = vst.msk [vmem:[%s145 + $0xe0] sm:$0xff] %vm662, %v573
      %692 = vst.msk [vmem:[%s145 + $0xe8] sm:$0xff] %vm662, %v575
      %693 = vst.msk [vmem:[%s145 + $0xf0] sm:$0xff] %vm662, %v578
      %694 = vst.msk [vmem:[%s145 + $0xf8] sm:$0xff] %vm662, %v580
      %695 = vst.msk [vmem:[%s145 + $0x100] sm:$0xff] %vm662, %v583
      %696 = vst.msk [vmem:[%s145 + $0x108] sm:$0xff] %vm662, %v585
      %697 = vst.msk [vmem:[%s145 + $0x110] sm:$0xff] %vm662, %v588
      %698 = vst.msk [vmem:[%s145 + $0x118] sm:$0xff] %vm662, %v590
      %699 = vst.msk [vmem:[%s145 + $0x120] sm:$0xff] %vm662, %v593
      %700 = vst.msk [vmem:[%s145 + $0x128] sm:$0xff] %vm662, %v595
      %701 = vst.msk [vmem:[%s145 + $0x130] sm:$0xff] %vm662, %v598
      %702 = vst.msk [vmem:[%s145 + $0x138] sm:$0xff] %vm662, %v600
      %703 = vst.msk [vmem:[%s145 + $0x140] sm:$0xff] %vm662, %v603
      %704 = vst.msk [vmem:[%s145 + $0x148] sm:$0xff] %vm662, %v605
      %705 = vst.msk [vmem:[%s145 + $0x150] sm:$0xff] %vm662, %v608
      %706 = vst.msk [vmem:[%s145 + $0x158] sm:$0xff] %vm662, %v610
      %707 = vst.msk [vmem:[%s145 + $0x160] sm:$0xff] %vm662, %v613
      %708 = vst.msk [vmem:[%s145 + $0x168] sm:$0xff] %vm662, %v615
      %709 = vst.msk [vmem:[%s145 + $0x170] sm:$0xff] %vm662, %v618
      %710 = vst.msk [vmem:[%s145 + $0x178] sm:$0xff] %vm662, %v620
      %711 = vst.msk [vmem:[%s145 + $0x180] sm:$0xff] %vm662, %v623
      %712 = vst.msk [vmem:[%s145 + $0x188] sm:$0xff] %vm662, %v625
      %713 = vst.msk [vmem:[%s145 + $0x190] sm:$0xff] %vm662, %v628
      %714 = vst.msk [vmem:[%s145 + $0x198] sm:$0xff] %vm662, %v630
      %715 = vst.msk [vmem:[%s145 + $0x1a0] sm:$0xff] %vm662, %v633
      %716 = vst.msk [vmem:[%s145 + $0x1a8] sm:$0xff] %vm662, %v635
      %717 = vst.msk [vmem:[%s145 + $0x1b0] sm:$0xff] %vm662, %v638
      %718 = vst.msk [vmem:[%s145 + $0x1b8] sm:$0xff] %vm662, %v640
      %719 = vst.msk [vmem:[%s145 + $0x1c0] sm:$0xff] %vm662, %v643
      %720 = vst.msk [vmem:[%s145 + $0x1c8] sm:$0xff] %vm662, %v645
      %721 = vst.msk [vmem:[%s145 + $0x1d0] sm:$0xff] %vm662, %v648
      %722 = vst.msk [vmem:[%s145 + $0x1d8] sm:$0xff] %vm662, %v650
      %723 = vst.msk [vmem:[%s145 + $0x1e0] sm:$0xff] %vm662, %v653
      %724 = vst.msk [vmem:[%s145 + $0x1e8] sm:$0xff] %vm662, %v655
      %725 = vst.msk [vmem:[%s145 + $0x1f0] sm:$0xff] %vm662, %v658
      %726 = vst.msk [vmem:[%s145 + $0x1f8] sm:$0xff] %vm662, %v660
      %s727 = smul.u32 64, %s13
      %p728 = scmp.lt.s32.totalorder %s727, 255
      %s729 = scalar_select %p728, %s727, 255
      %s730 = smul.addr %s729, 8
      %s731 = scalar_lea.vmem %s2, %s730
      // Predicated region
      $region29: #{generator_forward.36} parent=27 // pred_check
        %p732 = pneg %p78
      $region30: #{generator_forward.36} parent=27 // pred_check_branch
        %734 = sbr.rel (%p732) target = $region32
      $region31: #{generator_forward.36} parent=27 // pred_region
        %s735 = smul.u32 64, %s13
      $region32: #{generator_forward.36} parent=27 // pred_fallthru
        _
    $region28: #{generator_forward.36} parent=5 // pred_fallthru
      _
    %p736 = scmp.le.s32.totalorder 2, %s8
    // Predicated region
    $region33: #{generator_forward.36} parent=5 // pred_check
      %p737 = pneg %p736
    $region34: #{generator_forward.36} parent=5 // pred_check_branch
      %739 = sbr.rel (%p737) target = $region36
    $region35: #{generator_forward.36} parent=5 // pred_region
      %s740 = ssub.s32 %s8, 2
      // Predicated region
      $region37: #{generator_forward.36} parent=35 // pred_check
        %p741 = pneg %p84
      $region38: #{generator_forward.36} parent=35 // pred_check_branch
        %743 = sbr.rel (%p741) target = $region40
      $region39: #{generator_forward.36} parent=35 // pred_region
        %s744 = smul.u32 64, %s14
        %p745 = scmp.lt.s32.totalorder %s744, 255
        %s746 = scalar_select %p745, %s744, 255
        %s747 = smul.addr %s746, 8
        %s748 = scalar_lea.vmem %s2, %s747
      $region40: #{generator_forward.36} parent=35 // pred_fallthru
        _
    $region36: #{generator_forward.36} parent=5 // pred_fallthru
      _
  $region6: #{generator_forward.36} parent=0 // loop_footer
    %s12 = sadd.s32 1, %s8
  $region7: #{generator_forward.36} parent=0 // loop_footer_branch
    %7 = sbr.rel target = $region3
  $region8: #{generator_forward.36} parent=0 // loop_exit
    _

// kernel: generator_forward.37
$region0: #{generator_forward.37}
  #allocation0 [shape = 'u32[]', space=smem, size = 0x4, offset = 0x4, fixed_abs, tag = 'smem constant byte address 0x4 - core index']
  #allocation1 [shape = 'u32[72,128]{1,0:T(1,128)}', space=vmem, size = 0x9000, scoped, tag = 'internal scratch']
  %s0 = inlined_call_operand.vmem [shape: f32[2048,3], index: 0, kind: input, shape index: {}]
  %s1 = inlined_call_operand.vmem [shape: f32[1,3], index: 1, kind: input, shape index: {}]
  %s2 = inlined_call_operand.vmem [shape: f32[1,3], index: 2, kind: input, shape index: {}]
  %s3 = inlined_call_operand.vmem [shape: f32[2048,3], index: 3, kind: output, shape index: {}]
  %s4 = sld [smem:[#allocation0]]
  $region45: #{generator_forward.37} parent=0
    _
  %s6 = ssub.s32 1, %s4
  %s7 = scalar_select 0, %s6, %s4
  loop: start=0, step=1, limit=6
  $region2: #{generator_forward.37} parent=0 // loop_pre_header
    _
  $region3: #{generator_forward.37} parent=0 // loop_header
    %s9 = sphi 0, %s13
    %p10 = scmp.ge.s32.totalorder %s9, 6
    %s19 = sphi 0, %s21
    %s22 = sphi 0, %s19
    %s23 = sphi 0, %s22
    %s39 = sphi 0, %s23
    %s43 = sphi 0, %s43
    %s45 = sphi 0, %s43
    %s46 = sphi 0, %s45
    %s60 = sphi 0, %s46
    %s64 = sphi 0, %s64
    %s66 = sphi 0, %s64
    %s67 = sphi 0, %s66
    %s81 = sphi 0, %s67
    %s87 = sphi 0, %s89
    %s90 = sphi 0, %s87
    %s91 = sphi 0, %s90
    %s107 = sphi 0, %s91
  $region4: #{generator_forward.37} parent=0 // loop_header_branch
    %12 = sbr.rel (%p10) target = $region8
  $region5: #{generator_forward.37} parent=0 // loop_body
    %s14 = ssub.s32 %s9, 1
    %s15 = ssub.s32 %s9, 2
    %s16 = sadd.s32 %s9, 1
    %s17 = ssub.s32 %s9, %s16
    %p18 = scmp.eq.s32.totalorder %s17, 0
    %s20 = sadd.s32 %s19, 1
    %s21 = scalar_select %p18, %s19, %s20
    %p24 = pneg %p18
    %p25 = scmp.eq.s32.totalorder %s9, 3
    %p26 = por %p24, %p25
    %p27 = scmp.ne.s32.totalorder %s19, %s22
    %p28 = scmp.eq.s32.totalorder %s9, 0
    %p29 = por %p27, %p28
    %p30 = scmp.ne.s32.totalorder %s19, %s22
    %p31 = scmp.eq.s32.totalorder %s14, 3
    %p32 = por %p30, %p31
    %p33 = scmp.ne.s32.totalorder %s22, %s23
    %p34 = scmp.eq.s32.totalorder %s14, 0
    %p35 = por %p33, %p34
    %p36 = scmp.ne.s32.totalorder %s22, %s23
    %p37 = scmp.eq.s32.totalorder %s15, 3
    %p38 = por %p36, %p37
    %p40 = scmp.ne.s32.totalorder %s23, %s39
    %p41 = scmp.eq.s32.totalorder %s15, 0
    %p42 = por %p40, %p41
    %s44 = sadd.s32 %s43, 1
    %p47 = scmp.eq.s32.totalorder %s9, 3
    %p48 = scmp.ne.s32.totalorder %s43, %s45
    %p49 = scmp.eq.s32.totalorder %s9, 0
    %p50 = por %p48, %p49
    %p51 = scmp.ne.s32.totalorder %s43, %s45
    %p52 = scmp.eq.s32.totalorder %s14, 3
    %p53 = por %p51, %p52
    %p54 = scmp.ne.s32.totalorder %s45, %s46
    %p55 = scmp.eq.s32.totalorder %s14, 0
    %p56 = por %p54, %p55
    %p57 = scmp.ne.s32.totalorder %s45, %s46
    %p58 = scmp.eq.s32.totalorder %s15, 3
    %p59 = por %p57, %p58
    %p61 = scmp.ne.s32.totalorder %s46, %s60
    %p62 = scmp.eq.s32.totalorder %s15, 0
    %p63 = por %p61, %p62
    %s65 = sadd.s32 %s64, 1
    %p68 = scmp.eq.s32.totalorder %s9, 3
    %p69 = scmp.ne.s32.totalorder %s64, %s66
    %p70 = scmp.eq.s32.totalorder %s9, 0
    %p71 = por %p69, %p70
    %p72 = scmp.ne.s32.totalorder %s64, %s66
    %p73 = scmp.eq.s32.totalorder %s14, 3
    %p74 = por %p72, %p73
    %p75 = scmp.ne.s32.totalorder %s66, %s67
    %p76 = scmp.eq.s32.totalorder %s14, 0
    %p77 = por %p75, %p76
    %p78 = scmp.ne.s32.totalorder %s66, %s67
    %p79 = scmp.eq.s32.totalorder %s15, 3
    %p80 = por %p78, %p79
    %p82 = scmp.ne.s32.totalorder %s67, %s81
    %p83 = scmp.eq.s32.totalorder %s15, 0
    %p84 = por %p82, %p83
    %s85 = ssub.s32 %s9, %s16
    %p86 = scmp.eq.s32.totalorder %s85, 0
    %s88 = sadd.s32 %s87, 1
    %s89 = scalar_select %p86, %s87, %s88
    %p92 = pneg %p86
    %p93 = scmp.eq.s32.totalorder %s9, 3
    %p94 = por %p92, %p93
    %p95 = scmp.ne.s32.totalorder %s87, %s90
    %p96 = scmp.eq.s32.totalorder %s9, 0
    %p97 = por %p95, %p96
    %p98 = scmp.ne.s32.totalorder %s87, %s90
    %p99 = scmp.eq.s32.totalorder %s14, 3
    %p100 = por %p98, %p99
    %p101 = scmp.ne.s32.totalorder %s90, %s91
    %p102 = scmp.eq.s32.totalorder %s14, 0
    %p103 = por %p101, %p102
    %p104 = scmp.ne.s32.totalorder %s90, %s91
    %p105 = scmp.eq.s32.totalorder %s15, 3
    %p106 = por %p104, %p105
    %p108 = scmp.ne.s32.totalorder %s91, %s107
    %p109 = scmp.eq.s32.totalorder %s15, 0
    %p110 = por %p108, %p109
    %p111 = scmp.le.s32.totalorder 1, %s9
    %p112 = scmp.lt.s32.totalorder %s9, 5
    %p113 = pnand %p111, %p112
    %p114 = pneg %p113
    // Predicated region
    $region9: #{generator_forward.37} parent=5 // pred_check
      _
    $region10: #{generator_forward.37} parent=5 // pred_check_branch
      %116 = sbr.rel (%p113) target = $region12
    $region11: #{generator_forward.37} parent=5 // pred_region
      %s117 = ssub.s32 %s9, 1
      // Predicated region
      $region13: #{generator_forward.37} parent=11 // pred_check
        %p118 = pneg %p56
      $region14: #{generator_forward.37} parent=11 // pred_check_branch
        %120 = sbr.rel (%p118) target = $region16
      $region15: #{generator_forward.37} parent=11 // pred_region
        _
      $region16: #{generator_forward.37} parent=11 // pred_fallthru
        _
      // Predicated region
      $region17: #{generator_forward.37} parent=11 // pred_check
        %p121 = pneg %p77
      $region18: #{generator_forward.37} parent=11 // pred_check_branch
        %123 = sbr.rel (%p121) target = $region20
      $region19: #{generator_forward.37} parent=11 // pred_region
        _
      $region20: #{generator_forward.37} parent=11 // pred_fallthru
        _
    $region12: #{generator_forward.37} parent=5 // pred_fallthru
      _
    %p124 = scmp.lt.s32.totalorder %s9, 4
    // Predicated region
    $region21: #{generator_forward.37} parent=5 // pred_check
      %p125 = pneg %p124
    $region22: #{generator_forward.37} parent=5 // pred_check_branch
      %127 = sbr.rel (%p125) target = $region24
    $region23: #{generator_forward.37} parent=5 // pred_region
      // Predicated region
      $region25: #{generator_forward.37} parent=23 // pred_check
        %p128 = pneg %p29
      $region26: #{generator_forward.37} parent=23 // pred_check_branch
        %130 = sbr.rel (%p128) target = $region28
      $region27: #{generator_forward.37} parent=23 // pred_region
        %s131 = smul.u32 64, %s9
        %p132 = scmp.lt.s32.totalorder %s131, 255
        %s133 = scalar_select %p132, %s131, 255
        %s134 = smul.addr %s133, 8
        %s135 = scalar_lea.vmem %s0, %s134
        %s136 = smul.u32 64, %s9
      $region28: #{generator_forward.37} parent=23 // pred_fallthru
        _
    $region24: #{generator_forward.37} parent=5 // pred_fallthru
      _
    %p137 = scmp.le.s32.totalorder 1, %s9
    %p138 = scmp.lt.s32.totalorder %s9, 5
    %p139 = pnand %p137, %p138
    %p140 = pneg %p139
    // Predicated region
    $region29: #{generator_forward.37} parent=5 // pred_check
      _
    $region30: #{generator_forward.37} parent=5 // pred_check_branch
      %142 = sbr.rel (%p139) target = $region32
    $region31: #{generator_forward.37} parent=5 // pred_region
      %s143 = ssub.s32 %s9, 1
      %s144 = smul.u32 64, %s14
      %p145 = scmp.lt.s32.totalorder %s144, 255
      %s146 = scalar_select %p145, %s144, 255
      %s147 = smul.addr %s146, 8
      %s148 = scalar_lea.vmem %s0, %s147
      %p149 = pneg %p35
      %p150 = pneg %p32
      %p151 = pneg %p56
      %p152 = pneg %p53
      %p153 = pneg %p77
      %p154 = pneg %p74
      %p155 = pneg %p103
      %p156 = pneg %p100
      %s157 = smul.u32 64, %s14
      %p158 = scmp.lt.s32.totalorder %s157, 255
      %s159 = scalar_select %p158, %s157, 255
      %s160 = smul.addr %s159, 8
      %s161 = scalar_lea.vmem %s3, %s160
      %s162 = smul.u32 64, %s14
      %p163 = scmp.lt.s32.totalorder %s162, 255
      %s164 = scalar_select %p163, %s162, 255
      %s165 = smul.addr %s164, 8
      %s166 = scalar_lea.vmem %s0, %s165
      %s167 = smul.u32 64, %s14
      %s168 = smul.u32 64, %s14
      %p169 = scmp.lt.s32.totalorder %s168, 255
      %s170 = scalar_select %p169, %s168, 255
      %s171 = smul.addr %s170, 8
      %s172 = scalar_lea.vmem %s3, %s171
      %s173 = smul.u32 64, %s14
      %v174 = vld [vmem:[%s166] sm:$0xff]
      %v175 = vld [vmem:[%s166 + $0x8] sm:$0xff]
      %v176 = vld [vmem:[%s166 + $0x10] sm:$0xff]
      %v177 = vld [vmem:[%s166 + $0x18] sm:$0xff]
      %v178 = vld [vmem:[%s166 + $0x20] sm:$0xff]
      %v179 = vld [vmem:[%s166 + $0x28] sm:$0xff]
      %v180 = vld [vmem:[%s166 + $0x30] sm:$0xff]
      %v181 = vld [vmem:[%s166 + $0x38] sm:$0xff]
      %v182 = vld [vmem:[%s166 + $0x40] sm:$0xff]
      %v183 = vld [vmem:[%s166 + $0x48] sm:$0xff]
      %v184 = vld [vmem:[%s166 + $0x50] sm:$0xff]
      %v185 = vld [vmem:[%s166 + $0x58] sm:$0xff]
      %v186 = vld [vmem:[%s166 + $0x60] sm:$0xff]
      %v187 = vld [vmem:[%s166 + $0x68] sm:$0xff]
      %v188 = vld [vmem:[%s166 + $0x70] sm:$0xff]
      %v189 = vld [vmem:[%s166 + $0x78] sm:$0xff]
      %v190 = vld [vmem:[%s166 + $0x80] sm:$0xff]
      %v191 = vld [vmem:[%s166 + $0x88] sm:$0xff]
      %v192 = vld [vmem:[%s166 + $0x90] sm:$0xff]
      %v193 = vld [vmem:[%s166 + $0x98] sm:$0xff]
      %v194 = vld [vmem:[%s166 + $0xa0] sm:$0xff]
      %v195 = vld [vmem:[%s166 + $0xa8] sm:$0xff]
      %v196 = vld [vmem:[%s166 + $0xb0] sm:$0xff]
      %v197 = vld [vmem:[%s166 + $0xb8] sm:$0xff]
      %v198 = vld [vmem:[%s166 + $0xc0] sm:$0xff]
      %v199 = vld [vmem:[%s166 + $0xc8] sm:$0xff]
      %v200 = vld [vmem:[%s166 + $0xd0] sm:$0xff]
      %v201 = vld [vmem:[%s166 + $0xd8] sm:$0xff]
      %v202 = vld [vmem:[%s166 + $0xe0] sm:$0xff]
      %v203 = vld [vmem:[%s166 + $0xe8] sm:$0xff]
      %v204 = vld [vmem:[%s166 + $0xf0] sm:$0xff]
      %v205 = vld [vmem:[%s166 + $0xf8] sm:$0xff]
      %v206 = vld [vmem:[%s166 + $0x100] sm:$0xff]
      %v207 = vld [vmem:[%s166 + $0x108] sm:$0xff]
      %v208 = vld [vmem:[%s166 + $0x110] sm:$0xff]
      %v209 = vld [vmem:[%s166 + $0x118] sm:$0xff]
      %v210 = vld [vmem:[%s166 + $0x120] sm:$0xff]
      %v211 = vld [vmem:[%s166 + $0x128] sm:$0xff]
      %v212 = vld [vmem:[%s166 + $0x130] sm:$0xff]
      %v213 = vld [vmem:[%s166 + $0x138] sm:$0xff]
      %v214 = vld [vmem:[%s166 + $0x140] sm:$0xff]
      %v215 = vld [vmem:[%s166 + $0x148] sm:$0xff]
      %v216 = vld [vmem:[%s166 + $0x150] sm:$0xff]
      %v217 = vld [vmem:[%s166 + $0x158] sm:$0xff]
      %v218 = vld [vmem:[%s166 + $0x160] sm:$0xff]
      %v219 = vld [vmem:[%s166 + $0x168] sm:$0xff]
      %v220 = vld [vmem:[%s166 + $0x170] sm:$0xff]
      %v221 = vld [vmem:[%s166 + $0x178] sm:$0xff]
      %v222 = vld [vmem:[%s166 + $0x180] sm:$0xff]
      %v223 = vld [vmem:[%s166 + $0x188] sm:$0xff]
      %v224 = vld [vmem:[%s166 + $0x190] sm:$0xff]
      %v225 = vld [vmem:[%s166 + $0x198] sm:$0xff]
      %v226 = vld [vmem:[%s166 + $0x1a0] sm:$0xff]
      %v227 = vld [vmem:[%s166 + $0x1a8] sm:$0xff]
      %v228 = vld [vmem:[%s166 + $0x1b0] sm:$0xff]
      %v229 = vld [vmem:[%s166 + $0x1b8] sm:$0xff]
      %v230 = vld [vmem:[%s166 + $0x1c0] sm:$0xff]
      %v231 = vld [vmem:[%s166 + $0x1c8] sm:$0xff]
      %v232 = vld [vmem:[%s166 + $0x1d0] sm:$0xff]
      %v233 = vld [vmem:[%s166 + $0x1d8] sm:$0xff]
      %v234 = vld [vmem:[%s166 + $0x1e0] sm:$0xff]
      %v235 = vld [vmem:[%s166 + $0x1e8] sm:$0xff]
      %v236 = vld [vmem:[%s166 + $0x1f0] sm:$0xff]
      %v237 = vld [vmem:[%s166 + $0x1f8] sm:$0xff]
      %v238 = vld [vmem:[%s1] sm:$0x1]
      %v240 = vperm.slane %v238, 0
      %v242 = vmul.f32 %v174, %v240
      %v243 = vmul.f32 %v175, %v240
      %v244 = vmul.f32 %v176, %v240
      %v245 = vmul.f32 %v177, %v240
      %v246 = vmul.f32 %v178, %v240
      %v247 = vmul.f32 %v179, %v240
      %v248 = vmul.f32 %v180, %v240
      %v249 = vmul.f32 %v181, %v240
      %v250 = vmul.f32 %v182, %v240
      %v251 = vmul.f32 %v183, %v240
      %v252 = vmul.f32 %v184, %v240
      %v253 = vmul.f32 %v185, %v240
      %v254 = vmul.f32 %v186, %v240
      %v255 = vmul.f32 %v187, %v240
      %v256 = vmul.f32 %v188, %v240
      %v257 = vmul.f32 %v189, %v240
      %v258 = vmul.f32 %v190, %v240
      %v259 = vmul.f32 %v191, %v240
      %v260 = vmul.f32 %v192, %v240
      %v261 = vmul.f32 %v193, %v240
      %v262 = vmul.f32 %v194, %v240
      %v263 = vmul.f32 %v195, %v240
      %v264 = vmul.f32 %v196, %v240
      %v265 = vmul.f32 %v197, %v240
      %v266 = vmul.f32 %v198, %v240
      %v267 = vmul.f32 %v199, %v240
      %v268 = vmul.f32 %v200, %v240
      %v269 = vmul.f32 %v201, %v240
      %v270 = vmul.f32 %v202, %v240
      %v271 = vmul.f32 %v203, %v240
      %v272 = vmul.f32 %v204, %v240
      %v273 = vmul.f32 %v205, %v240
      %v274 = vmul.f32 %v206, %v240
      %v275 = vmul.f32 %v207, %v240
      %v276 = vmul.f32 %v208, %v240
      %v277 = vmul.f32 %v209, %v240
      %v278 = vmul.f32 %v210, %v240
      %v279 = vmul.f32 %v211, %v240
      %v280 = vmul.f32 %v212, %v240
      %v281 = vmul.f32 %v213, %v240
      %v282 = vmul.f32 %v214, %v240
      %v283 = vmul.f32 %v215, %v240
      %v284 = vmul.f32 %v216, %v240
      %v285 = vmul.f32 %v217, %v240
      %v286 = vmul.f32 %v218, %v240
      %v287 = vmul.f32 %v219, %v240
      %v288 = vmul.f32 %v220, %v240
      %v289 = vmul.f32 %v221, %v240
      %v290 = vmul.f32 %v222, %v240
      %v291 = vmul.f32 %v223, %v240
      %v292 = vmul.f32 %v224, %v240
      %v293 = vmul.f32 %v225, %v240
      %v294 = vmul.f32 %v226, %v240
      %v295 = vmul.f32 %v227, %v240
      %v296 = vmul.f32 %v228, %v240
      %v297 = vmul.f32 %v229, %v240
      %v298 = vmul.f32 %v230, %v240
      %v299 = vmul.f32 %v231, %v240
      %v300 = vmul.f32 %v232, %v240
      %v301 = vmul.f32 %v233, %v240
      %v302 = vmul.f32 %v234, %v240
      %v303 = vmul.f32 %v235, %v240
      %v304 = vmul.f32 %v236, %v240
      %v305 = vmul.f32 %v237, %v240
      %v306 = vld [vmem:[%s2] sm:$0x1]
      %v308 = vperm.slane %v306, 0
      %v310 = vadd.f32 %v242, %v308
      %v311 = vadd.f32 %v243, %v308
      %v312 = vadd.f32 %v244, %v308
      %v313 = vadd.f32 %v245, %v308
      %v314 = vadd.f32 %v246, %v308
      %v315 = vadd.f32 %v247, %v308
      %v316 = vadd.f32 %v248, %v308
      %v317 = vadd.f32 %v249, %v308
      %v318 = vadd.f32 %v250, %v308
      %v319 = vadd.f32 %v251, %v308
      %v320 = vadd.f32 %v252, %v308
      %v321 = vadd.f32 %v253, %v308
      %v322 = vadd.f32 %v254, %v308
      %v323 = vadd.f32 %v255, %v308
      %v324 = vadd.f32 %v256, %v308
      %v325 = vadd.f32 %v257, %v308
      %v326 = vadd.f32 %v258, %v308
      %v327 = vadd.f32 %v259, %v308
      %v328 = vadd.f32 %v260, %v308
      %v329 = vadd.f32 %v261, %v308
      %v330 = vadd.f32 %v262, %v308
      %v331 = vadd.f32 %v263, %v308
      %v332 = vadd.f32 %v264, %v308
      %v333 = vadd.f32 %v265, %v308
      %v334 = vadd.f32 %v266, %v308
      %v335 = vadd.f32 %v267, %v308
      %v336 = vadd.f32 %v268, %v308
      %v337 = vadd.f32 %v269, %v308
      %v338 = vadd.f32 %v270, %v308
      %v339 = vadd.f32 %v271, %v308
      %v340 = vadd.f32 %v272, %v308
      %v341 = vadd.f32 %v273, %v308
      %v342 = vadd.f32 %v274, %v308
      %v343 = vadd.f32 %v275, %v308
      %v344 = vadd.f32 %v276, %v308
      %v345 = vadd.f32 %v277, %v308
      %v346 = vadd.f32 %v278, %v308
      %v347 = vadd.f32 %v279, %v308
      %v348 = vadd.f32 %v280, %v308
      %v349 = vadd.f32 %v281, %v308
      %v350 = vadd.f32 %v282, %v308
      %v351 = vadd.f32 %v283, %v308
      %v352 = vadd.f32 %v284, %v308
      %v353 = vadd.f32 %v285, %v308
      %v354 = vadd.f32 %v286, %v308
      %v355 = vadd.f32 %v287, %v308
      %v356 = vadd.f32 %v288, %v308
      %v357 = vadd.f32 %v289, %v308
      %v358 = vadd.f32 %v290, %v308
      %v359 = vadd.f32 %v291, %v308
      %v360 = vadd.f32 %v292, %v308
      %v361 = vadd.f32 %v293, %v308
      %v362 = vadd.f32 %v294, %v308
      %v363 = vadd.f32 %v295, %v308
      %v364 = vadd.f32 %v296, %v308
      %v365 = vadd.f32 %v297, %v308
      %v366 = vadd.f32 %v298, %v308
      %v367 = vadd.f32 %v299, %v308
      %v368 = vadd.f32 %v300, %v308
      %v369 = vadd.f32 %v301, %v308
      %v370 = vadd.f32 %v302, %v308
      %v371 = vadd.f32 %v303, %v308
      %v372 = vadd.f32 %v304, %v308
      %v373 = vadd.f32 %v305, %v308
      %v374 = vtanh.pop %v310
      %v375 = vtanh.pop %v311
      %v376 = vtanh.pop %v312
      %v377 = vtanh.pop %v313
      %v378 = vtanh.pop %v314
      %v379 = vtanh.pop %v315
      %v380 = vtanh.pop %v316
      %v381 = vtanh.pop %v317
      %v382 = vtanh.pop %v318
      %v383 = vtanh.pop %v319
      %v384 = vtanh.pop %v320
      %v385 = vtanh.pop %v321
      %v386 = vtanh.pop %v322
      %v387 = vtanh.pop %v323
      %v388 = vtanh.pop %v324
      %v389 = vtanh.pop %v325
      %v390 = vtanh.pop %v326
      %v391 = vtanh.pop %v327
      %v392 = vtanh.pop %v328
      %v393 = vtanh.pop %v329
      %v394 = vtanh.pop %v330
      %v395 = vtanh.pop %v331
      %v396 = vtanh.pop %v332
      %v397 = vtanh.pop %v333
      %v398 = vtanh.pop %v334
      %v399 = vtanh.pop %v335
      %v400 = vtanh.pop %v336
      %v401 = vtanh.pop %v337
      %v402 = vtanh.pop %v338
      %v403 = vtanh.pop %v339
      %v404 = vtanh.pop %v340
      %v405 = vtanh.pop %v341
      %v406 = vtanh.pop %v342
      %v407 = vtanh.pop %v343
      %v408 = vtanh.pop %v344
      %v409 = vtanh.pop %v345
      %v410 = vtanh.pop %v346
      %v411 = vtanh.pop %v347
      %v412 = vtanh.pop %v348
      %v413 = vtanh.pop %v349
      %v414 = vtanh.pop %v350
      %v415 = vtanh.pop %v351
      %v416 = vtanh.pop %v352
      %v417 = vtanh.pop %v353
      %v418 = vtanh.pop %v354
      %v419 = vtanh.pop %v355
      %v420 = vtanh.pop %v356
      %v421 = vtanh.pop %v357
      %v422 = vtanh.pop %v358
      %v423 = vtanh.pop %v359
      %v424 = vtanh.pop %v360
      %v425 = vtanh.pop %v361
      %v426 = vtanh.pop %v362
      %v427 = vtanh.pop %v363
      %v428 = vtanh.pop %v364
      %v429 = vtanh.pop %v365
      %v430 = vtanh.pop %v366
      %v431 = vtanh.pop %v367
      %v432 = vtanh.pop %v368
      %v433 = vtanh.pop %v369
      %v434 = vtanh.pop %v370
      %v435 = vtanh.pop %v371
      %v436 = vtanh.pop %v372
      %v437 = vtanh.pop %v373
      %vm438 = vcmask 23552
      %439 = vst.msk [vmem:[%s172] sm:$0xff] %vm438, %v374
      %440 = vst.msk [vmem:[%s172 + $0x8] sm:$0xff] %vm438, %v375
      %441 = vst.msk [vmem:[%s172 + $0x10] sm:$0xff] %vm438, %v376
      %442 = vst.msk [vmem:[%s172 + $0x18] sm:$0xff] %vm438, %v377
      %443 = vst.msk [vmem:[%s172 + $0x20] sm:$0xff] %vm438, %v378
      %444 = vst.msk [vmem:[%s172 + $0x28] sm:$0xff] %vm438, %v379
      %445 = vst.msk [vmem:[%s172 + $0x30] sm:$0xff] %vm438, %v380
      %446 = vst.msk [vmem:[%s172 + $0x38] sm:$0xff] %vm438, %v381
      %447 = vst.msk [vmem:[%s172 + $0x40] sm:$0xff] %vm438, %v382
      %448 = vst.msk [vmem:[%s172 + $0x48] sm:$0xff] %vm438, %v383
      %449 = vst.msk [vmem:[%s172 + $0x50] sm:$0xff] %vm438, %v384
      %450 = vst.msk [vmem:[%s172 + $0x58] sm:$0xff] %vm438, %v385
      %451 = vst.msk [vmem:[%s172 + $0x60] sm:$0xff] %vm438, %v386
      %452 = vst.msk [vmem:[%s172 + $0x68] sm:$0xff] %vm438, %v387
      %453 = vst.msk [vmem:[%s172 + $0x70] sm:$0xff] %vm438, %v388
      %454 = vst.msk [vmem:[%s172 + $0x78] sm:$0xff] %vm438, %v389
      %455 = vst.msk [vmem:[%s172 + $0x80] sm:$0xff] %vm438, %v390
      %456 = vst.msk [vmem:[%s172 + $0x88] sm:$0xff] %vm438, %v391
      %457 = vst.msk [vmem:[%s172 + $0x90] sm:$0xff] %vm438, %v392
      %458 = vst.msk [vmem:[%s172 + $0x98] sm:$0xff] %vm438, %v393
      %459 = vst.msk [vmem:[%s172 + $0xa0] sm:$0xff] %vm438, %v394
      %460 = vst.msk [vmem:[%s172 + $0xa8] sm:$0xff] %vm438, %v395
      %461 = vst.msk [vmem:[%s172 + $0xb0] sm:$0xff] %vm438, %v396
      %462 = vst.msk [vmem:[%s172 + $0xb8] sm:$0xff] %vm438, %v397
      %463 = vst.msk [vmem:[%s172 + $0xc0] sm:$0xff] %vm438, %v398
      %464 = vst.msk [vmem:[%s172 + $0xc8] sm:$0xff] %vm438, %v399
      %465 = vst.msk [vmem:[%s172 + $0xd0] sm:$0xff] %vm438, %v400
      %466 = vst.msk [vmem:[%s172 + $0xd8] sm:$0xff] %vm438, %v401
      %467 = vst.msk [vmem:[%s172 + $0xe0] sm:$0xff] %vm438, %v402
      %468 = vst.msk [vmem:[%s172 + $0xe8] sm:$0xff] %vm438, %v403
      %469 = vst.msk [vmem:[%s172 + $0xf0] sm:$0xff] %vm438, %v404
      %470 = vst.msk [vmem:[%s172 + $0xf8] sm:$0xff] %vm438, %v405
      %471 = vst.msk [vmem:[%s172 + $0x100] sm:$0xff] %vm438, %v406
      %472 = vst.msk [vmem:[%s172 + $0x108] sm:$0xff] %vm438, %v407
      %473 = vst.msk [vmem:[%s172 + $0x110] sm:$0xff] %vm438, %v408
      %474 = vst.msk [vmem:[%s172 + $0x118] sm:$0xff] %vm438, %v409
      %475 = vst.msk [vmem:[%s172 + $0x120] sm:$0xff] %vm438, %v410
      %476 = vst.msk [vmem:[%s172 + $0x128] sm:$0xff] %vm438, %v411
      %477 = vst.msk [vmem:[%s172 + $0x130] sm:$0xff] %vm438, %v412
      %478 = vst.msk [vmem:[%s172 + $0x138] sm:$0xff] %vm438, %v413
      %479 = vst.msk [vmem:[%s172 + $0x140] sm:$0xff] %vm438, %v414
      %480 = vst.msk [vmem:[%s172 + $0x148] sm:$0xff] %vm438, %v415
      %481 = vst.msk [vmem:[%s172 + $0x150] sm:$0xff] %vm438, %v416
      %482 = vst.msk [vmem:[%s172 + $0x158] sm:$0xff] %vm438, %v417
      %483 = vst.msk [vmem:[%s172 + $0x160] sm:$0xff] %vm438, %v418
      %484 = vst.msk [vmem:[%s172 + $0x168] sm:$0xff] %vm438, %v419
      %485 = vst.msk [vmem:[%s172 + $0x170] sm:$0xff] %vm438, %v420
      %486 = vst.msk [vmem:[%s172 + $0x178] sm:$0xff] %vm438, %v421
      %487 = vst.msk [vmem:[%s172 + $0x180] sm:$0xff] %vm438, %v422
      %488 = vst.msk [vmem:[%s172 + $0x188] sm:$0xff] %vm438, %v423
      %489 = vst.msk [vmem:[%s172 + $0x190] sm:$0xff] %vm438, %v424
      %490 = vst.msk [vmem:[%s172 + $0x198] sm:$0xff] %vm438, %v425
      %491 = vst.msk [vmem:[%s172 + $0x1a0] sm:$0xff] %vm438, %v426
      %492 = vst.msk [vmem:[%s172 + $0x1a8] sm:$0xff] %vm438, %v427
      %493 = vst.msk [vmem:[%s172 + $0x1b0] sm:$0xff] %vm438, %v428
      %494 = vst.msk [vmem:[%s172 + $0x1b8] sm:$0xff] %vm438, %v429
      %495 = vst.msk [vmem:[%s172 + $0x1c0] sm:$0xff] %vm438, %v430
      %496 = vst.msk [vmem:[%s172 + $0x1c8] sm:$0xff] %vm438, %v431
      %497 = vst.msk [vmem:[%s172 + $0x1d0] sm:$0xff] %vm438, %v432
      %498 = vst.msk [vmem:[%s172 + $0x1d8] sm:$0xff] %vm438, %v433
      %499 = vst.msk [vmem:[%s172 + $0x1e0] sm:$0xff] %vm438, %v434
      %500 = vst.msk [vmem:[%s172 + $0x1e8] sm:$0xff] %vm438, %v435
      %501 = vst.msk [vmem:[%s172 + $0x1f0] sm:$0xff] %vm438, %v436
      %502 = vst.msk [vmem:[%s172 + $0x1f8] sm:$0xff] %vm438, %v437
      %s503 = smul.u32 64, %s14
      %p504 = scmp.lt.s32.totalorder %s503, 255
      %s505 = scalar_select %p504, %s503, 255
      %s506 = smul.addr %s505, 8
      %s507 = scalar_lea.vmem %s3, %s506
      // Predicated region
      $region33: #{generator_forward.37} parent=31 // pred_check
        %p508 = pneg %p100
      $region34: #{generator_forward.37} parent=31 // pred_check_branch
        %510 = sbr.rel (%p508) target = $region36
      $region35: #{generator_forward.37} parent=31 // pred_region
        %s511 = smul.u32 64, %s14
      $region36: #{generator_forward.37} parent=31 // pred_fallthru
        _
    $region32: #{generator_forward.37} parent=5 // pred_fallthru
      _
    %p512 = scmp.le.s32.totalorder 2, %s9
    // Predicated region
    $region37: #{generator_forward.37} parent=5 // pred_check
      %p513 = pneg %p512
    $region38: #{generator_forward.37} parent=5 // pred_check_branch
      %515 = sbr.rel (%p513) target = $region40
    $region39: #{generator_forward.37} parent=5 // pred_region
      %s516 = ssub.s32 %s9, 2
      // Predicated region
      $region41: #{generator_forward.37} parent=39 // pred_check
        %p517 = pneg %p106
      $region42: #{generator_forward.37} parent=39 // pred_check_branch
        %519 = sbr.rel (%p517) target = $region44
      $region43: #{generator_forward.37} parent=39 // pred_region
        %s520 = smul.u32 64, %s15
        %p521 = scmp.lt.s32.totalorder %s520, 255
        %s522 = scalar_select %p521, %s520, 255
        %s523 = smul.addr %s522, 8
        %s524 = scalar_lea.vmem %s3, %s523
      $region44: #{generator_forward.37} parent=39 // pred_fallthru
        _
    $region40: #{generator_forward.37} parent=5 // pred_fallthru
      _
  $region6: #{generator_forward.37} parent=0 // loop_footer
    %s13 = sadd.s32 1, %s9
  $region7: #{generator_forward.37} parent=0 // loop_footer_branch
    %8 = sbr.rel target = $region3
  $region8: #{generator_forward.37} parent=0 // loop_exit
    _

</llo_original>
